<compile_context>
chip_gen: v6e
topology: v6e:2x2x1
jax: 0.10.0
libtpu: 0.0.40
codegen_flags: <defaults>
</compile_context>

<pallas_src>
import functools

import jax
import jax.numpy as jnp
from jax import lax
from jax.experimental import pallas as pl
from jax.experimental.pallas import tpu as pltpu


def _round_up(x, m):
    return (x + m - 1) // m * m


def _cdap_token_score_kernel(q_ref, s_ref, w_ref, b_ref, lmask_ref, out_ref,
                             *, compute_dtype):
    """One query-token tile against all (resident) support tokens.

    q_ref:     [TQ,  Bp]  raw query token embeddings (compute_dtype)
    s_ref:     [STp, Dp]  fc1-projected support tokens (compute_dtype, resident)
    w_ref:     [Bp,  Dp]  fc1 weight (compute_dtype, resident)
    b_ref:     [1,   Dp]  fc1 bias (f32, resident)
    lmask_ref: [Lp, STp]  multiplicative per-label support mask (f32 0/1, resident)
    out_ref:   [Lp,  TQ]  -||proto_l(q) - q||^2, label-major (lane-dense in TQ)
    """
    cd = compute_dtype
    lp, tq = out_ref.shape
    stp, dp = s_ref.shape

    # fc1 projection of the query tile (MXU, f32 accumulation).
    q = jnp.dot(q_ref[...], w_ref[...],
                preferred_element_type=jnp.float32) + b_ref[...]          # [TQ, Dp]
    s = s_ref[...]                                                        # [STp, Dp]
    lmask = lmask_ref[...]                                                # [Lp, STp]

    # Shared attention logits against ALL support tokens; contract last dims
    # directly (no in-kernel s.T transpose / XLU work).
    logits = lax.dot_general(q.astype(cd), s, (((1,), (1,)), ((), ())),
                             preferred_element_type=jnp.float32)          # [TQ, STp]

    # Single max / exp pass.  Max is taken over valid support columns only;
    # exp argument clamped <= 0 so padded / zero-valid cases stay finite.
    any_valid = jnp.max(lmask, axis=0, keepdims=True)                     # [1, STp]
    mx = jnp.max(jnp.where(any_valid > 0.0, logits, jnp.float32(-1e30)),
                 axis=-1, keepdims=True)                                  # [TQ, 1]
    e = jnp.exp(jnp.minimum(logits - mx, 0.0)) * any_valid                # [TQ, STp]

    # All-label softmax denominators in ONE small MXU matmul:
    #   denom[l, q] = sum_s lmask[l, s] * e[q, s]
    lmask_cd = lmask.astype(cd)
    e_cd = e.astype(cd)
    denom = lax.dot_general(lmask_cd, e_cd, (((1,), (1,)), ((), ())),
                            preferred_element_type=jnp.float32)           # [Lp, TQ]
    inv = 1.0 / jnp.maximum(denom, 1e-12)        # exact reciprocal on tiny tile

    # Batched per-label prototype matmul: one [Lp*TQ, STp] @ [STp, Dp] MXU call
    # (one result drain, one bf16 cast pass over the attention weights).
    p = (e_cd[None, :, :] * lmask_cd[:, None, :]).reshape(lp * tq, stp)   # cd
    proto = jnp.dot(p, s, preferred_element_type=jnp.float32).reshape(lp, tq, dp)

    d = proto * inv[:, :, None] - q[None, :, :]                           # [Lp, TQ, Dp]
    out_ref[...] = -jnp.sum(d * d, axis=-1)      # [Lp, TQ] label-major, lane-dense


def cdap_token_scores(q_tok, s_proj, w_fc1, b_fc1, label_mask, *,
                      tq=128, pad_to=256, compute_dtype=jnp.bfloat16):
    """q_tok: [QT, B] raw query tokens; s_proj: [ST, D] fc1-projected support.

    Returns [QT, L] scores  (-||proto_l(q) - q||^2).
    """
    QT, B = q_tok.shape
    ST, D = s_proj.shape
    L = label_mask.shape[0]
    cd = compute_dtype

    # MXU / lane friendly zero-padding (semantics-preserving: padded support
    # rows are masked out, padded B/D columns contribute exact zeros).
    # pad_to=256 fills the 256-wide MXU on v6e/v7x and is also 128-aligned for v5e.
    QTp = _round_up(max(QT, tq), tq)
    STp = _round_up(max(ST, pad_to), pad_to)
    Bp = _round_up(max(B, pad_to), pad_to)
    Dp = _round_up(max(D, pad_to), pad_to)
    Lp = _round_up(max(L, 8), 8)

    q_p = jnp.pad(q_tok.astype(cd), ((0, QTp - QT), (0, Bp - B)))
    s_p = jnp.pad(s_proj.astype(cd), ((0, STp - ST), (0, Dp - D)))
    w_p = jnp.pad(w_fc1.astype(cd), ((0, Bp - B), (0, Dp - D)))
    b_p = jnp.pad(b_fc1.astype(jnp.float32).reshape(1, -1), ((0, 0), (0, Dp - D)))
    m_p = jnp.pad(label_mask.astype(jnp.float32), ((0, Lp - L), (0, STp - ST)))

    kernel = functools.partial(_cdap_token_score_kernel, compute_dtype=cd)

    # VMEM budget: resident blocks (conservatively x2 buffers) + pipelined
    # query/output tiles + per-tile intermediates, clamped to chip capacity.
    csz = jnp.dtype(cd).itemsize
    budget = (2 * ((STp * Dp + Bp * Dp) * csz + Dp * 4 + Lp * STp * 4)   # resident
              + 2 * (tq * Bp * csz + Lp * tq * 4)                        # pipelined tiles
              + tq * Dp * 4                                              # q (f32)
              + 2 * tq * STp * 4                                         # logits + e (f32)
              + Lp * tq * STp * csz                                      # batched P
              + 2 * Lp * tq * Dp * 4)                                    # proto + diff (f32)
    try:
        phys = pltpu.get_tpu_info().vmem_capacity_bytes
    except Exception:  # conservative: v7x has 64 MiB per TC
        phys = 64 * 1024 * 1024
    vmem_limit = int(min(max(budget + (8 << 20), 16 << 20), int(phys * 0.9)))

    def run(single_buffer_resident):
        def resident(shape):
            nd = len(shape)
            idx = lambda i, _nd=nd: (0,) * _nd
            if single_buffer_resident:
                # Grid-invariant blocks don't need double-buffering.
                return pl.BlockSpec(shape, idx, pipeline_mode=pl.Buffered(1))
            return pl.BlockSpec(shape, idx)

        out = pl.pallas_call(
            kernel,
            out_shape=jax.ShapeDtypeStruct((Lp, QTp), jnp.float32),
            grid_spec=pltpu.PrefetchScalarGridSpec(
                num_scalar_prefetch=0,
                grid=(QTp // tq,),
                in_specs=[
                    pl.BlockSpec((tq, Bp), lambda i: (i, 0)),  # query tile (pipelined)
                    resident((STp, Dp)),                       # projected support
                    resident((Bp, Dp)),                        # fc1 weight
                    resident((1, Dp)),                         # fc1 bias
                    resident((Lp, STp)),                       # label mask
                ],
                out_specs=pl.BlockSpec((Lp, tq), lambda i: (0, i)),
            ),
            compiler_params=pltpu.CompilerParams(
                dimension_semantics=("parallel",),             # shard QT tiles across TCs
                vmem_limit_bytes=vmem_limit,
            ),
        )(q_p, s_p, w_p, b_p, m_p)
        return jax.block_until_ready(out)

    try:
        out = run(True)      # single-buffer the grid-invariant resident blocks
    except Exception:
        out = run(False)     # fall back if this Pallas build rejects Buffered(1)

    return out[:L, :QT].T                                      # [QT, L]


def cdap_forward(q_bert, s_bert, q_mask, s_mask, q_tags, s_tags,
                 w_fc1, b_fc1, num_labels, weight=1.0,
                 compute_dtype=jnp.bfloat16, tq=128):
    """Glue mirroring the token-level branch of CDAP.forward (eval mode)."""
    Qs, T, B = q_bert.shape
    Ss = s_bert.shape[0]
    q_tok = q_bert.reshape(Qs * T, B)
    s_tok = s_bert.reshape(Ss * T, B)

    cd = compute_dtype
    # Support projection fc1(s) computed once in XLA (hoisted out of the
    # per-query-tile kernel path).
    s_proj = jnp.dot(s_tok.astype(cd), w_fc1.astype(cd),
                     preferred_element_type=jnp.float32) + b_fc1.astype(jnp.float32)

    # Per-label multiplicative 0/1 mask over support tokens (mask==0 -> usable).
    s_valid = jnp.logical_not(s_mask).reshape(-1)
    s_tag_flat = s_tags.reshape(-1)
    label_mask = ((s_tag_flat[None, :] == jnp.arange(num_labels)[:, None])
                  & s_valid[None, :]).astype(jnp.float32)

    scores = cdap_token_scores(q_tok, s_proj, w_fc1, b_fc1, label_mask,
                               tq=tq, compute_dtype=cd)        # [QT, L]

    # CrossEntropyLoss(ignore_index=-1) over un-masked query tokens (* opt.weight).
    q_valid = jnp.logical_not(q_mask).reshape(-1)
    q_tag_flat = q_tags.reshape(-1)
    valid = q_valid & (q_tag_flat != -1)
    logp = jax.nn.log_softmax(scores, axis=-1)
    tgt = jnp.clip(q_tag_flat, 0, num_labels - 1)
    nll = -jnp.take_along_axis(logp, tgt[:, None], axis=-1)[:, 0]
    loss = jnp.sum(jnp.where(valid, nll, 0.0)) / jnp.maximum(jnp.sum(valid), 1) * weight

    pred_token = jnp.argmax(scores, axis=-1)                   # pred4episode
    return {"pred_logit": scores, "pred_token": pred_token,
            "loss": loss, "valid_query_tokens": valid}


def _reference_scores(q_tok, s_tok, w_fc1, b_fc1, label_mask,
                      compute_dtype=jnp.bfloat16):
    """Pure-JAX reference of the same math (same precision choices)."""
    cd = compute_dtype
    w = w_fc1.astype(cd)
    b = b_fc1.astype(jnp.float32)
    q = jnp.dot(q_tok.astype(cd), w, preferred_element_type=jnp.float32) + b
    s = (jnp.dot(s_tok.astype(cd), w, preferred_element_type=jnp.float32) + b).astype(cd)
    logits = lax.dot_general(q.astype(cd), s, (((1,), (1,)), ((), ())),
                             preferred_element_type=jnp.float32)
    any_valid = jnp.max(label_mask, axis=0, keepdims=True)
    mx = jnp.max(jnp.where(any_valid > 0.0, logits, jnp.float32(-1e30)),
                 axis=-1, keepdims=True)
    e = jnp.exp(jnp.minimum(logits - mx, 0.0)) * any_valid
    lm_cd = label_mask.astype(cd)
    e_cd = e.astype(cd)
    denom = lax.dot_general(lm_cd, e_cd, (((1,), (1,)), ((), ())),
                            preferred_element_type=jnp.float32)            # [L, QT]
    inv = 1.0 / jnp.maximum(denom, 1e-12)
    L, ST = label_mask.shape
    QT = q.shape[0]
    p = (e_cd[None, :, :] * lm_cd[:, None, :]).reshape(L * QT, ST)
    proto = jnp.dot(p, s, preferred_element_type=jnp.float32).reshape(L, QT, -1)
    d = proto * inv[:, :, None] - q[None, :, :]
    return -jnp.sum(d * d, axis=-1).T                                      # [QT, L]


if __name__ == "__main__":
    # Small synthetic shapes: 2 support sentences, 2 query sentences,
    # seq=16, stand-in BERT hidden=32, fc1 hidden=16, 3 labels.
    Qs, Ss, T, B, D, L = 2, 2, 16, 32, 16, 3

    key = jax.random.PRNGKey(0)
    k1, k2, k3, k4 = jax.random.split(key, 4)
    s_bert = jax.random.normal(k1, (Ss, T, B), dtype=jnp.float32)
    q_bert = jax.random.normal(k2, (Qs, T, B), dtype=jnp.float32)
    w_fc1 = 0.05 * jax.random.normal(k3, (B, D), dtype=jnp.float32)
    b_fc1 = 0.01 * jax.random.normal(k4, (D,), dtype=jnp.float32)

    # masks: True for CLS (pos 0), SEP (pos 12), and padding (pos >= 13)
    pos = jnp.arange(T)
    sent_mask = (pos == 0) | (pos >= 12)                       # [T]
    s_mask = jnp.broadcast_to(sent_mask, (Ss, T))
    q_mask = jnp.broadcast_to(sent_mask, (Qs, T))

    # seq_tag_expand: labels 0..L-1 cycling on valid tokens, -1 elsewhere
    sent_tags = jnp.where(sent_mask, -1, pos % L)               # [T]
    s_tags = jnp.broadcast_to(sent_tags, (Ss, T))
    q_tags = jnp.broadcast_to(sent_tags, (Qs, T))

    # label mask for the pure-JAX reference
    s_valid = jnp.logical_not(s_mask).reshape(-1)
    label_mask = ((s_tags.reshape(-1)[None, :] == jnp.arange(L)[:, None])
                  & s_valid[None, :]).astype(jnp.float32)

    # Run in both f32 and bf16 (MXU-input) modes and check against reference.
    for cd, tol in ((jnp.float32, 2e-2), (jnp.bfloat16, 3e-2)):
        out = cdap_forward(q_bert, s_bert, q_mask, s_mask, q_tags, s_tags,
                           w_fc1, b_fc1, num_labels=L, weight=1.0,
                           compute_dtype=cd)
        jax.block_until_ready(out)
        ref = _reference_scores(q_bert.reshape(-1, B), s_bert.reshape(-1, B),
                                w_fc1, b_fc1, label_mask, compute_dtype=cd)
        assert jnp.allclose(out["pred_logit"], ref, rtol=tol, atol=tol), \
            f"mismatch vs reference ({cd})"
        assert bool(jnp.isfinite(out["loss"])), "non-finite loss"

    print("KERNEL_OK")
</pallas_src>

<mosaic_0001>
module attributes {stable_mosaic.version = 11 : i64} {
  func.func @_cdap_token_score_kernel(%arg0: i32, %arg1: memref<128x256xf32, #tpu.memory_space<vmem>>, %arg2: memref<256x256xf32, #tpu.memory_space<vmem>>, %arg3: memref<256x256xf32, #tpu.memory_space<vmem>>, %arg4: memref<1x256xf32, #tpu.memory_space<vmem>>, %arg5: memref<8x256xf32, #tpu.memory_space<vmem>>, %arg6: memref<8x128xf32, #tpu.memory_space<vmem>>) attributes {dimension_semantics = [#tpu.dimension_semantics<parallel>], iteration_bounds = array<i64: 1>, scalar_prefetch = 0 : i64, scratch_operands = 0 : i64, tpu.core_type = #tpu.core_type<tc>, window_params = [{transform_indices = @transform_0, window_bounds = array<i64: 128, 256>}, {pipeline_mode = #tpu.pipeline_mode<synchronous>, transform_indices = @transform_1, window_bounds = array<i64: 256, 256>}, {pipeline_mode = #tpu.pipeline_mode<synchronous>, transform_indices = @transform_2, window_bounds = array<i64: 256, 256>}, {pipeline_mode = #tpu.pipeline_mode<synchronous>, transform_indices = @transform_3, window_bounds = array<i64: 1, 256>}, {pipeline_mode = #tpu.pipeline_mode<synchronous>, transform_indices = @transform_4, window_bounds = array<i64: 8, 256>}, {transform_indices = @transform_5, window_bounds = array<i64: 8, 128>}]} {
    %c0 = arith.constant 0 : index
    %c0_0 = arith.constant 0 : index
    %0 = vector.load %arg1[%c0, %c0_0] : memref<128x256xf32, #tpu.memory_space<vmem>>, vector<128x256xf32>
    %c0_1 = arith.constant 0 : index
    %c0_2 = arith.constant 0 : index
    %1 = vector.load %arg3[%c0_1, %c0_2] : memref<256x256xf32, #tpu.memory_space<vmem>>, vector<256x256xf32>
    %cst = arith.constant dense<0.000000e+00> : vector<128x256xf32>
    %2 = tpu.matmul %0, %1, %cst {dimension_numbers = #tpu.dot_dimension_numbers<[1], [0], [0], [1], [0, 0, 1, 1], [], []>} : vector<128x256xf32>, vector<256x256xf32>, vector<128x256xf32> -> vector<128x256xf32>
    %c0_3 = arith.constant 0 : index
    %c0_4 = arith.constant 0 : index
    %3 = vector.load %arg4[%c0_3, %c0_4] : memref<1x256xf32, #tpu.memory_space<vmem>>, vector<1x256xf32>
    %4 = vector.broadcast %3 : vector<1x256xf32> to vector<128x256xf32>
    %5 = arith.addf %2, %4 : vector<128x256xf32>
    %c0_5 = arith.constant 0 : index
    %c0_6 = arith.constant 0 : index
    %6 = vector.load %arg2[%c0_5, %c0_6] : memref<256x256xf32, #tpu.memory_space<vmem>>, vector<256x256xf32>
    %c0_7 = arith.constant 0 : index
    %c0_8 = arith.constant 0 : index
    %7 = vector.load %arg5[%c0_7, %c0_8] : memref<8x256xf32, #tpu.memory_space<vmem>>, vector<8x256xf32>
    %cst_9 = arith.constant dense<0.000000e+00> : vector<128x256xf32>
    %8 = tpu.matmul %5, %6, %cst_9 {dimension_numbers = #tpu.dot_dimension_numbers<[1], [1], [0], [0], [0, 0, 1, 0], [], []>} : vector<128x256xf32>, vector<256x256xf32>, vector<128x256xf32> -> vector<128x256xf32>
    %cst_10 = arith.constant dense<0xFF800000> : vector<256xf32>
    %9 = vector.multi_reduction <maximumf>, %7, %cst_10 [0] : vector<8x256xf32> to vector<256xf32>
    %10 = vector.shape_cast %9 : vector<256xf32> to vector<1x256xf32>
    %cst_11 = arith.constant 0.000000e+00 : f32
    %11 = vector.broadcast %cst_11 : f32 to vector<1x256xf32>
    %12 = arith.cmpf ogt, %10, %11 : vector<1x256xf32>
    %cst_12 = arith.constant -1.000000e+30 : f32
    %13 = vector.shape_cast %12 : vector<1x256xi1> to vector<1x256xi1>
    %14 = vector.broadcast %13 : vector<1x256xi1> to vector<128x256xi1>
    %15 = vector.broadcast %cst_12 : f32 to vector<128x256xf32>
    %16 = arith.select %14, %8, %15 : vector<128x256xi1>, vector<128x256xf32>
    %cst_13 = arith.constant dense<0xFF800000> : vector<128xf32>
    %17 = vector.multi_reduction <maximumf>, %16, %cst_13 [1] : vector<128x256xf32> to vector<128xf32>
    %18 = vector.shape_cast %17 : vector<128xf32> to vector<128x1xf32>
    %19 = vector.broadcast %18 : vector<128x1xf32> to vector<128x256xf32>
    %20 = arith.subf %8, %19 : vector<128x256xf32>
    %cst_14 = arith.constant 0.000000e+00 : f32
    %21 = vector.broadcast %cst_14 : f32 to vector<128x256xf32>
    %22 = arith.minimumf %20, %21 : vector<128x256xf32>
    %23 = math.exp %22 : vector<128x256xf32>
    %24 = vector.broadcast %10 : vector<1x256xf32> to vector<128x256xf32>
    %25 = arith.mulf %23, %24 : vector<128x256xf32>
    %cst_15 = arith.constant dense<0.000000e+00> : vector<8x128xf32>
    %26 = tpu.matmul %7, %25, %cst_15 {dimension_numbers = #tpu.dot_dimension_numbers<[1], [1], [0], [0], [0, 0, 1, 0], [], []>} : vector<8x256xf32>, vector<128x256xf32>, vector<8x128xf32> -> vector<8x128xf32>
    %cst_16 = arith.constant 9.99999996E-13 : f32
    %27 = vector.broadcast %cst_16 : f32 to vector<8x128xf32>
    %28 = arith.maximumf %26, %27 : vector<8x128xf32>
    %cst_17 = arith.constant 1.000000e+00 : f32
    %29 = vector.broadcast %cst_17 : f32 to vector<8x128xf32>
    %30 = arith.divf %29, %28 : vector<8x128xf32>
    %31 = vector.shape_cast %25 : vector<128x256xf32> to vector<1x128x256xf32>
    %32 = vector.shape_cast %7 : vector<8x256xf32> to vector<8x1x256xf32>
    %33 = vector.broadcast %31 : vector<1x128x256xf32> to vector<8x128x256xf32>
    %34 = vector.broadcast %32 : vector<8x1x256xf32> to vector<8x128x256xf32>
    %35 = arith.mulf %33, %34 : vector<8x128x256xf32>
    %36 = vector.shape_cast %35 : vector<8x128x256xf32> to vector<1024x256xf32>
    %cst_18 = arith.constant dense<0.000000e+00> : vector<1024x256xf32>
    %37 = tpu.matmul %36, %6, %cst_18 {dimension_numbers = #tpu.dot_dimension_numbers<[1], [0], [0], [1], [0, 0, 1, 1], [], []>} : vector<1024x256xf32>, vector<256x256xf32>, vector<1024x256xf32> -> vector<1024x256xf32>
    %38 = vector.shape_cast %37 : vector<1024x256xf32> to vector<8x128x256xf32>
    %39 = vector.shape_cast %30 : vector<8x128xf32> to vector<8x128x1xf32>
    %40 = vector.broadcast %39 : vector<8x128x1xf32> to vector<8x128x256xf32>
    %41 = arith.mulf %38, %40 : vector<8x128x256xf32>
    %42 = vector.shape_cast %5 : vector<128x256xf32> to vector<1x128x256xf32>
    %43 = vector.broadcast %42 : vector<1x128x256xf32> to vector<8x128x256xf32>
    %44 = arith.subf %41, %43 : vector<8x128x256xf32>
    %45 = arith.mulf %44, %44 : vector<8x128x256xf32>
    %cst_19 = arith.constant dense<0.000000e+00> : vector<8x128xf32>
    %46 = vector.multi_reduction <add>, %45, %cst_19 [2] : vector<8x128x256xf32> to vector<8x128xf32>
    %cst_20 = arith.constant 0.000000e+00 : f32
    %47 = vector.broadcast %cst_20 : f32 to vector<8x128xf32>
    %48 = arith.subf %47, %46 : vector<8x128xf32>
    %c0_21 = arith.constant 0 : index
    %c0_22 = arith.constant 0 : index
    %49 = vector.load %arg6[%c0_21, %c0_22] : memref<8x128xf32, #tpu.memory_space<vmem>>, vector<8x128xf32>
    tpu.vector_store %arg6[%c0_21, %c0_22], %48 {strides = array<i32>} : memref<8x128xf32, #tpu.memory_space<vmem>>, vector<8x128xf32>,
    return
  }
  func.func @transform_0(%arg0: i32) -> (i32, i32) {
    %c0_i32 = arith.constant 0 : i32
    %c0_i32_0 = arith.constant 0 : i32
    return %arg0, %c0_i32 : i32, i32
  }
  func.func @transform_1(%arg0: i32) -> (i32, i32) {
    %c0_i32 = arith.constant 0 : i32
    %c0_i32_0 = arith.constant 0 : i32
    %c0_i32_1 = arith.constant 0 : i32
    return %c0_i32, %c0_i32_0 : i32, i32
  }
  func.func @transform_2(%arg0: i32) -> (i32, i32) {
    %c0_i32 = arith.constant 0 : i32
    %c0_i32_0 = arith.constant 0 : i32
    %c0_i32_1 = arith.constant 0 : i32
    return %c0_i32, %c0_i32_0 : i32, i32
  }
  func.func @transform_3(%arg0: i32) -> (i32, i32) {
    %c0_i32 = arith.constant 0 : i32
    %c0_i32_0 = arith.constant 0 : i32
    %c0_i32_1 = arith.constant 0 : i32
    return %c0_i32, %c0_i32_0 : i32, i32
  }
  func.func @transform_4(%arg0: i32) -> (i32, i32) {
    %c0_i32 = arith.constant 0 : i32
    %c0_i32_0 = arith.constant 0 : i32
    %c0_i32_1 = arith.constant 0 : i32
    return %c0_i32, %c0_i32_0 : i32, i32
  }
  func.func @transform_5(%arg0: i32) -> (i32, i32) {
    %c0_i32 = arith.constant 0 : i32
    %c0_i32_0 = arith.constant 0 : i32
    return %c0_i32, %arg0 : i32, i32
  }
}

module attributes {stable_mosaic.version = 11 : i64} {
  func.func @_cdap_token_score_kernel(%arg0: i32, %arg1: memref<128x256xf32, #tpu.memory_space<vmem>>, %arg2: memref<256x256xf32, #tpu.memory_space<vmem>>, %arg3: memref<256x256xf32, #tpu.memory_space<vmem>>, %arg4: memref<1x256xf32, #tpu.memory_space<vmem>>, %arg5: memref<8x256xf32, #tpu.memory_space<vmem>>, %arg6: memref<8x128xf32, #tpu.memory_space<vmem>>) attributes {dimension_semantics = [#tpu.dimension_semantics<parallel>], iteration_bounds = array<i64: 1>, scalar_prefetch = 0 : i64, scratch_operands = 0 : i64, tpu.core_type = #tpu.core_type<tc>, window_params = [{transform_indices = @transform_0, window_bounds = array<i64: 128, 256>}, {pipeline_mode = #tpu.pipeline_mode<synchronous>, transform_indices = @transform_1, window_bounds = array<i64: 256, 256>}, {pipeline_mode = #tpu.pipeline_mode<synchronous>, transform_indices = @transform_2, window_bounds = array<i64: 256, 256>}, {pipeline_mode = #tpu.pipeline_mode<synchronous>, transform_indices = @transform_3, window_bounds = array<i64: 1, 256>}, {pipeline_mode = #tpu.pipeline_mode<synchronous>, transform_indices = @transform_4, window_bounds = array<i64: 8, 256>}, {transform_indices = @transform_5, window_bounds = array<i64: 8, 128>}]} {
    %c0 = arith.constant 0 : index
    %c0_0 = arith.constant 0 : index
    %0 = vector.load %arg1[%c0, %c0_0] : memref<128x256xf32, #tpu.memory_space<vmem>>, vector<128x256xf32>
    %c0_1 = arith.constant 0 : index
    %c0_2 = arith.constant 0 : index
    %1 = vector.load %arg3[%c0_1, %c0_2] : memref<256x256xf32, #tpu.memory_space<vmem>>, vector<256x256xf32>
    %cst = arith.constant dense<0.000000e+00> : vector<128x256xf32>
    %2 = tpu.matmul %0, %1, %cst {dimension_numbers = #tpu.dot_dimension_numbers<[1], [0], [0], [1], [0, 0, 1, 1], [], []>} : vector<128x256xf32>, vector<256x256xf32>, vector<128x256xf32> -> vector<128x256xf32>
    %c0_3 = arith.constant 0 : index
    %c0_4 = arith.constant 0 : index
    %3 = vector.load %arg4[%c0_3, %c0_4] : memref<1x256xf32, #tpu.memory_space<vmem>>, vector<1x256xf32>
    %4 = vector.broadcast %3 : vector<1x256xf32> to vector<128x256xf32>
    %5 = arith.addf %2, %4 : vector<128x256xf32>
    %c0_5 = arith.constant 0 : index
    %c0_6 = arith.constant 0 : index
    %6 = vector.load %arg2[%c0_5, %c0_6] : memref<256x256xf32, #tpu.memory_space<vmem>>, vector<256x256xf32>
    %c0_7 = arith.constant 0 : index
    %c0_8 = arith.constant 0 : index
    %7 = vector.load %arg5[%c0_7, %c0_8] : memref<8x256xf32, #tpu.memory_space<vmem>>, vector<8x256xf32>
    %cst_9 = arith.constant dense<0.000000e+00> : vector<128x256xf32>
    %8 = tpu.matmul %5, %6, %cst_9 {dimension_numbers = #tpu.dot_dimension_numbers<[1], [1], [0], [0], [0, 0, 1, 0], [], []>} : vector<128x256xf32>, vector<256x256xf32>, vector<128x256xf32> -> vector<128x256xf32>
    %cst_10 = arith.constant dense<0xFF800000> : vector<256xf32>
    %9 = vector.multi_reduction <maximumf>, %7, %cst_10 [0] : vector<8x256xf32> to vector<256xf32>
    %10 = vector.shape_cast %9 : vector<256xf32> to vector<1x256xf32>
    %cst_11 = arith.constant 0.000000e+00 : f32
    %11 = vector.broadcast %cst_11 : f32 to vector<1x256xf32>
    %12 = arith.cmpf ogt, %10, %11 : vector<1x256xf32>
    %cst_12 = arith.constant -1.000000e+30 : f32
    %13 = vector.shape_cast %12 : vector<1x256xi1> to vector<1x256xi1>
    %14 = vector.broadcast %13 : vector<1x256xi1> to vector<128x256xi1>
    %15 = vector.broadcast %cst_12 : f32 to vector<128x256xf32>
    %16 = arith.select %14, %8, %15 : vector<128x256xi1>, vector<128x256xf32>
    %cst_13 = arith.constant dense<0xFF800000> : vector<128xf32>
    %17 = vector.multi_reduction <maximumf>, %16, %cst_13 [1] : vector<128x256xf32> to vector<128xf32>
    %18 = vector.shape_cast %17 : vector<128xf32> to vector<128x1xf32>
    %19 = vector.broadcast %18 : vector<128x1xf32> to vector<128x256xf32>
    %20 = arith.subf %8, %19 : vector<128x256xf32>
    %cst_14 = arith.constant 0.000000e+00 : f32
    %21 = vector.broadcast %cst_14 : f32 to vector<128x256xf32>
    %22 = arith.minimumf %20, %21 : vector<128x256xf32>
    %23 = math.exp %22 : vector<128x256xf32>
    %24 = vector.broadcast %10 : vector<1x256xf32> to vector<128x256xf32>
    %25 = arith.mulf %23, %24 : vector<128x256xf32>
    %cst_15 = arith.constant dense<0.000000e+00> : vector<8x128xf32>
    %26 = tpu.matmul %7, %25, %cst_15 {dimension_numbers = #tpu.dot_dimension_numbers<[1], [1], [0], [0], [0, 0, 1, 0], [], []>} : vector<8x256xf32>, vector<128x256xf32>, vector<8x128xf32> -> vector<8x128xf32>
    %cst_16 = arith.constant 9.99999996E-13 : f32
    %27 = vector.broadcast %cst_16 : f32 to vector<8x128xf32>
    %28 = arith.maximumf %26, %27 : vector<8x128xf32>
    %cst_17 = arith.constant 1.000000e+00 : f32
    %29 = vector.broadcast %cst_17 : f32 to vector<8x128xf32>
    %30 = arith.divf %29, %28 : vector<8x128xf32>
    %31 = vector.shape_cast %25 : vector<128x256xf32> to vector<1x128x256xf32>
    %32 = vector.shape_cast %7 : vector<8x256xf32> to vector<8x1x256xf32>
    %33 = vector.broadcast %31 : vector<1x128x256xf32> to vector<8x128x256xf32>
    %34 = vector.broadcast %32 : vector<8x1x256xf32> to vector<8x128x256xf32>
    %35 = arith.mulf %33, %34 : vector<8x128x256xf32>
    %36 = vector.shape_cast %35 : vector<8x128x256xf32> to vector<1024x256xf32>
    %cst_18 = arith.constant dense<0.000000e+00> : vector<1024x256xf32>
    %37 = tpu.matmul %36, %6, %cst_18 {dimension_numbers = #tpu.dot_dimension_numbers<[1], [0], [0], [1], [0, 0, 1, 1], [], []>} : vector<1024x256xf32>, vector<256x256xf32>, vector<1024x256xf32> -> vector<1024x256xf32>
    %38 = vector.shape_cast %37 : vector<1024x256xf32> to vector<8x128x256xf32>
    %39 = vector.shape_cast %30 : vector<8x128xf32> to vector<8x128x1xf32>
    %40 = vector.broadcast %39 : vector<8x128x1xf32> to vector<8x128x256xf32>
    %41 = arith.mulf %38, %40 : vector<8x128x256xf32>
    %42 = vector.shape_cast %5 : vector<128x256xf32> to vector<1x128x256xf32>
    %43 = vector.broadcast %42 : vector<1x128x256xf32> to vector<8x128x256xf32>
    %44 = arith.subf %41, %43 : vector<8x128x256xf32>
    %45 = arith.mulf %44, %44 : vector<8x128x256xf32>
    %cst_19 = arith.constant dense<0.000000e+00> : vector<8x128xf32>
    %46 = vector.multi_reduction <add>, %45, %cst_19 [2] : vector<8x128x256xf32> to vector<8x128xf32>
    %cst_20 = arith.constant 0.000000e+00 : f32
    %47 = vector.broadcast %cst_20 : f32 to vector<8x128xf32>
    %48 = arith.subf %47, %46 : vector<8x128xf32>
    %c0_21 = arith.constant 0 : index
    %c0_22 = arith.constant 0 : index
    %49 = vector.load %arg6[%c0_21, %c0_22] : memref<8x128xf32, #tpu.memory_space<vmem>>, vector<8x128xf32>
    tpu.vector_store %arg6[%c0_21, %c0_22], %48 {strides = array<i32>} : memref<8x128xf32, #tpu.memory_space<vmem>>, vector<8x128xf32>,
    return
  }
  func.func @transform_0(%arg0: i32) -> (i32, i32) {
    %c0_i32 = arith.constant 0 : i32
    %c0_i32_0 = arith.constant 0 : i32
    return %arg0, %c0_i32 : i32, i32
  }
  func.func @transform_1(%arg0: i32) -> (i32, i32) {
    %c0_i32 = arith.constant 0 : i32
    %c0_i32_0 = arith.constant 0 : i32
    %c0_i32_1 = arith.constant 0 : i32
    return %c0_i32, %c0_i32_0 : i32, i32
  }
  func.func @transform_2(%arg0: i32) -> (i32, i32) {
    %c0_i32 = arith.constant 0 : i32
    %c0_i32_0 = arith.constant 0 : i32
    %c0_i32_1 = arith.constant 0 : i32
    return %c0_i32, %c0_i32_0 : i32, i32
  }
  func.func @transform_3(%arg0: i32) -> (i32, i32) {
    %c0_i32 = arith.constant 0 : i32
    %c0_i32_0 = arith.constant 0 : i32
    %c0_i32_1 = arith.constant 0 : i32
    return %c0_i32, %c0_i32_0 : i32, i32
  }
  func.func @transform_4(%arg0: i32) -> (i32, i32) {
    %c0_i32 = arith.constant 0 : i32
    %c0_i32_0 = arith.constant 0 : i32
    %c0_i32_1 = arith.constant 0 : i32
    return %c0_i32, %c0_i32_0 : i32, i32
  }
  func.func @transform_5(%arg0: i32) -> (i32, i32) {
    %c0_i32 = arith.constant 0 : i32
    %c0_i32_0 = arith.constant 0 : i32
    return %c0_i32, %arg0 : i32, i32
  }
}

</mosaic_0001>

<llo_original>
// kernel: tpu_custom_call.1
$region0: #{tpu_custom_call.1}
  #allocation0 [shape = 'u32[]', space=smem, size = 0x4, offset = 0x4, fixed_abs, tag = 'smem constant byte address 0x4 - core index']
  #allocation1 [shape = 'u32[144,128]{1,0:T(1,128)}', space=vmem, size = 0x12000, scoped, tag = 'internal scratch']
  %s0 = inlined_call_operand.hbm [shape: f32[128,256], index: 0, kind: input, shape index: {}]
  %s1 = inlined_call_operand.hbm [shape: f32[256,256], index: 1, kind: input, shape index: {}]
  %s2 = inlined_call_operand.hbm [shape: f32[256,256], index: 2, kind: input, shape index: {}]
  %s3 = inlined_call_operand.vmem [shape: f32[1,256], index: 3, kind: input, shape index: {}]
  %s4 = inlined_call_operand.hbm [shape: f32[8,256], index: 4, kind: input, shape index: {}]
  %s5 = inlined_call_operand.hbm [shape: f32[8,128], index: 5, kind: output, shape index: {}]
  %s6 = sld [smem:[#allocation0]]
  $region46: #{tpu_custom_call.1} parent=0
    _
  %s8 = ssub.s32 1, %s6
  %s9 = scalar_select 0, %s8, %s6
  $region1: #{tpu_custom_call.1} parent=0
    #allocation2 [shape = 'u8[131072]{0}', space=vmem, size = 0x20000, scoped, tag = 'input window, operand 0, single buffered']
    #allocation3 [shape = 's32[1]{0}', space=sflag, size = 0x4, scoped, tag = 'scoped memory for tpu_custom_call.1']
    #allocation4 [shape = 's32[1]{0}', space=sflag, size = 0x4, scoped, tag = 'scoped memory for tpu_custom_call.1']
    #allocation5 [shape = 'u8[262144]{0}', space=vmem, size = 0x40000, scoped, tag = 'input window, operand 1, single buffered']
    #allocation6 [shape = 's32[1]{0}', space=sflag, size = 0x4, scoped, tag = 'scoped memory for tpu_custom_call.1']
    #allocation7 [shape = 'u8[262144]{0}', space=vmem, size = 0x40000, scoped, tag = 'input window, operand 2, single buffered']
    #allocation8 [shape = 'u8[8192]{0}', space=vmem, size = 0x2000, scoped, tag = 'input window, operand 4, single buffered']
    #allocation9 [shape = 's32[1]{0}', space=sflag, size = 0x4, scoped, tag = 'scoped memory for tpu_custom_call.1']
    #allocation10 [shape = 'u8[4096]{0}', space=vmem, size = 0x1000, scoped, tag = 'output window, operand 0, single buffered']
    %10 = vsyncpa [#allocation3], 0
    %11 = vsyncpa [#allocation6], 0
    %12 = vsyncpa [#allocation9], 0
    %13 = vsyncpa [#allocation4], 0
    // Predicated region
    $region2: #{tpu_custom_call.1} parent=1 // pred_check
      _
    $region3: #{tpu_custom_call.1} parent=1 // pred_check_branch
      %15 = sbr.rel (0) target = $region5
    $region4: #{tpu_custom_call.1} parent=1 // pred_region
      %s17 = ssub.s32 4096, 4096
      %18 = vsyncadd [#allocation3], %s17
      %s19 = sshll.u32 [#allocation2], 4
      %s20 = int_to_ptr.vmem [resolvable:$true] %s19
      %25 = dma.hbm_to_vmem [thread:$0]  %s0, 4096, %s20, [#allocation3], 256, 256, 16
    $region5: #{tpu_custom_call.1} parent=1 // pred_fallthru
      _
    // Predicated region
    $region6: #{tpu_custom_call.1} parent=1 // pred_check
      _
    $region7: #{tpu_custom_call.1} parent=1 // pred_check_branch
      %27 = sbr.rel (0) target = $region9
    $region8: #{tpu_custom_call.1} parent=1 // pred_region
      %s29 = ssub.s32 8192, 8192
      %30 = vsyncadd [#allocation6], %s29
      %s31 = sshll.u32 [#allocation5], 4
      %s32 = int_to_ptr.vmem [resolvable:$true] %s31
      %37 = dma.hbm_to_vmem [thread:$0]  %s1, 8192, %s32, [#allocation6], 256, 256, 16
    $region9: #{tpu_custom_call.1} parent=1 // pred_fallthru
      _
    // Predicated region
    $region10: #{tpu_custom_call.1} parent=1 // pred_check
      _
    $region11: #{tpu_custom_call.1} parent=1 // pred_check_branch
      %39 = sbr.rel (0) target = $region13
    $region12: #{tpu_custom_call.1} parent=1 // pred_region
      %s41 = ssub.s32 8192, 8192
      %42 = vsyncadd [#allocation6], %s41
      %s43 = sshll.u32 [#allocation7], 4
      %s44 = int_to_ptr.vmem [resolvable:$true] %s43
      %49 = dma.hbm_to_vmem [thread:$0]  %s2, 8192, %s44, [#allocation6], 256, 256, 16
    $region13: #{tpu_custom_call.1} parent=1 // pred_fallthru
      _
    // Predicated region
    $region14: #{tpu_custom_call.1} parent=1 // pred_check
      _
    $region15: #{tpu_custom_call.1} parent=1 // pred_check_branch
      %51 = sbr.rel (0) target = $region17
    $region16: #{tpu_custom_call.1} parent=1 // pred_region
      _
    $region17: #{tpu_custom_call.1} parent=1 // pred_fallthru
      _
    // Predicated region
    $region18: #{tpu_custom_call.1} parent=1 // pred_check
      _
    $region19: #{tpu_custom_call.1} parent=1 // pred_check_branch
      %53 = sbr.rel (0) target = $region21
    $region20: #{tpu_custom_call.1} parent=1 // pred_region
      %s55 = ssub.s32 256, 256
      %56 = vsyncadd [#allocation9], %s55
      %s58 = sshll.u32 [#allocation8], 4
      %s59 = int_to_ptr.vmem [resolvable:$true] %s58
      %61 = dma.hbm_to_vmem [thread:$0]  %s4, 256, %s59, [#allocation9]
    $region21: #{tpu_custom_call.1} parent=1 // pred_fallthru
      _
    // Predicated region
    $region22: #{tpu_custom_call.1} parent=1 // pred_check
      _
    $region23: #{tpu_custom_call.1} parent=1 // pred_check_branch
      %63 = sbr.rel (0) target = $region25
    $region24: #{tpu_custom_call.1} parent=1 // pred_region
      %64 = dma.done [#allocation3], 4096
    $region25: #{tpu_custom_call.1} parent=1 // pred_fallthru
      _
    // Predicated region
    $region26: #{tpu_custom_call.1} parent=1 // pred_check
      _
    $region27: #{tpu_custom_call.1} parent=1 // pred_check_branch
      %66 = sbr.rel (0) target = $region29
    $region28: #{tpu_custom_call.1} parent=1 // pred_region
      %67 = dma.done [#allocation6], 8192
    $region29: #{tpu_custom_call.1} parent=1 // pred_fallthru
      _
    // Predicated region
    $region30: #{tpu_custom_call.1} parent=1 // pred_check
      _
    $region31: #{tpu_custom_call.1} parent=1 // pred_check_branch
      %69 = sbr.rel (0) target = $region33
    $region32: #{tpu_custom_call.1} parent=1 // pred_region
      %70 = dma.done [#allocation6], 8192
    $region33: #{tpu_custom_call.1} parent=1 // pred_fallthru
      _
    // Predicated region
    $region34: #{tpu_custom_call.1} parent=1 // pred_check
      _
    $region35: #{tpu_custom_call.1} parent=1 // pred_check_branch
      %72 = sbr.rel (0) target = $region37
    $region36: #{tpu_custom_call.1} parent=1 // pred_region
      %73 = dma.done [#allocation9], 256
    $region37: #{tpu_custom_call.1} parent=1 // pred_fallthru
      _
    %v74 = vld [vmem:[#allocation2] sm:$0xff]
    %v75 = vld [vmem:[#allocation2 + $0x8] sm:$0xff]
    %v76 = vld [vmem:[#allocation2 + $0x10] sm:$0xff]
    %v77 = vld [vmem:[#allocation2 + $0x18] sm:$0xff]
    %v78 = vld [vmem:[#allocation2 + $0x20] sm:$0xff]
    %v79 = vld [vmem:[#allocation2 + $0x28] sm:$0xff]
    %v80 = vld [vmem:[#allocation2 + $0x30] sm:$0xff]
    %v81 = vld [vmem:[#allocation2 + $0x38] sm:$0xff]
    %v82 = vld [vmem:[#allocation2 + $0x40] sm:$0xff]
    %v83 = vld [vmem:[#allocation2 + $0x48] sm:$0xff]
    %v84 = vld [vmem:[#allocation2 + $0x50] sm:$0xff]
    %v85 = vld [vmem:[#allocation2 + $0x58] sm:$0xff]
    %v86 = vld [vmem:[#allocation2 + $0x60] sm:$0xff]
    %v87 = vld [vmem:[#allocation2 + $0x68] sm:$0xff]
    %v88 = vld [vmem:[#allocation2 + $0x70] sm:$0xff]
    %v89 = vld [vmem:[#allocation2 + $0x78] sm:$0xff]
    %v90 = vld [vmem:[#allocation2 + $0x80] sm:$0xff]
    %v91 = vld [vmem:[#allocation2 + $0x88] sm:$0xff]
    %v92 = vld [vmem:[#allocation2 + $0x90] sm:$0xff]
    %v93 = vld [vmem:[#allocation2 + $0x98] sm:$0xff]
    %v94 = vld [vmem:[#allocation2 + $0xa0] sm:$0xff]
    %v95 = vld [vmem:[#allocation2 + $0xa8] sm:$0xff]
    %v96 = vld [vmem:[#allocation2 + $0xb0] sm:$0xff]
    %v97 = vld [vmem:[#allocation2 + $0xb8] sm:$0xff]
    %v98 = vld [vmem:[#allocation2 + $0xc0] sm:$0xff]
    %v99 = vld [vmem:[#allocation2 + $0xc8] sm:$0xff]
    %v100 = vld [vmem:[#allocation2 + $0xd0] sm:$0xff]
    %v101 = vld [vmem:[#allocation2 + $0xd8] sm:$0xff]
    %v102 = vld [vmem:[#allocation2 + $0xe0] sm:$0xff]
    %v103 = vld [vmem:[#allocation2 + $0xe8] sm:$0xff]
    %v104 = vld [vmem:[#allocation2 + $0xf0] sm:$0xff]
    %v105 = vld [vmem:[#allocation2 + $0xf8] sm:$0xff]
    %v106 = vld [vmem:[#allocation7] sm:$0xff]
    %v107 = vld [vmem:[#allocation7 + $0x8] sm:$0xff]
    %v108 = vld [vmem:[#allocation7 + $0x10] sm:$0xff]
    %v109 = vld [vmem:[#allocation7 + $0x18] sm:$0xff]
    %v110 = vld [vmem:[#allocation7 + $0x20] sm:$0xff]
    %v111 = vld [vmem:[#allocation7 + $0x28] sm:$0xff]
    %v112 = vld [vmem:[#allocation7 + $0x30] sm:$0xff]
    %v113 = vld [vmem:[#allocation7 + $0x38] sm:$0xff]
    %v114 = vld [vmem:[#allocation7 + $0x40] sm:$0xff]
    %v115 = vld [vmem:[#allocation7 + $0x48] sm:$0xff]
    %v116 = vld [vmem:[#allocation7 + $0x50] sm:$0xff]
    %v117 = vld [vmem:[#allocation7 + $0x58] sm:$0xff]
    %v118 = vld [vmem:[#allocation7 + $0x60] sm:$0xff]
    %v119 = vld [vmem:[#allocation7 + $0x68] sm:$0xff]
    %v120 = vld [vmem:[#allocation7 + $0x70] sm:$0xff]
    %v121 = vld [vmem:[#allocation7 + $0x78] sm:$0xff]
    %v122 = vld [vmem:[#allocation7 + $0x80] sm:$0xff]
    %v123 = vld [vmem:[#allocation7 + $0x88] sm:$0xff]
    %v124 = vld [vmem:[#allocation7 + $0x90] sm:$0xff]
    %v125 = vld [vmem:[#allocation7 + $0x98] sm:$0xff]
    %v126 = vld [vmem:[#allocation7 + $0xa0] sm:$0xff]
    %v127 = vld [vmem:[#allocation7 + $0xa8] sm:$0xff]
    %v128 = vld [vmem:[#allocation7 + $0xb0] sm:$0xff]
    %v129 = vld [vmem:[#allocation7 + $0xb8] sm:$0xff]
    %v130 = vld [vmem:[#allocation7 + $0xc0] sm:$0xff]
    %v131 = vld [vmem:[#allocation7 + $0xc8] sm:$0xff]
    %v132 = vld [vmem:[#allocation7 + $0xd0] sm:$0xff]
    %v133 = vld [vmem:[#allocation7 + $0xd8] sm:$0xff]
    %v134 = vld [vmem:[#allocation7 + $0xe0] sm:$0xff]
    %v135 = vld [vmem:[#allocation7 + $0xe8] sm:$0xff]
    %v136 = vld [vmem:[#allocation7 + $0xf0] sm:$0xff]
    %v137 = vld [vmem:[#allocation7 + $0xf8] sm:$0xff]
    %v138 = vld [vmem:[#allocation7 + $0x100] sm:$0xff]
    %v139 = vld [vmem:[#allocation7 + $0x108] sm:$0xff]
    %v140 = vld [vmem:[#allocation7 + $0x110] sm:$0xff]
    %v141 = vld [vmem:[#allocation7 + $0x118] sm:$0xff]
    %v142 = vld [vmem:[#allocation7 + $0x120] sm:$0xff]
    %v143 = vld [vmem:[#allocation7 + $0x128] sm:$0xff]
    %v144 = vld [vmem:[#allocation7 + $0x130] sm:$0xff]
    %v145 = vld [vmem:[#allocation7 + $0x138] sm:$0xff]
    %v146 = vld [vmem:[#allocation7 + $0x140] sm:$0xff]
    %v147 = vld [vmem:[#allocation7 + $0x148] sm:$0xff]
    %v148 = vld [vmem:[#allocation7 + $0x150] sm:$0xff]
    %v149 = vld [vmem:[#allocation7 + $0x158] sm:$0xff]
    %v150 = vld [vmem:[#allocation7 + $0x160] sm:$0xff]
    %v151 = vld [vmem:[#allocation7 + $0x168] sm:$0xff]
    %v152 = vld [vmem:[#allocation7 + $0x170] sm:$0xff]
    %v153 = vld [vmem:[#allocation7 + $0x178] sm:$0xff]
    %v154 = vld [vmem:[#allocation7 + $0x180] sm:$0xff]
    %v155 = vld [vmem:[#allocation7 + $0x188] sm:$0xff]
    %v156 = vld [vmem:[#allocation7 + $0x190] sm:$0xff]
    %v157 = vld [vmem:[#allocation7 + $0x198] sm:$0xff]
    %v158 = vld [vmem:[#allocation7 + $0x1a0] sm:$0xff]
    %v159 = vld [vmem:[#allocation7 + $0x1a8] sm:$0xff]
    %v160 = vld [vmem:[#allocation7 + $0x1b0] sm:$0xff]
    %v161 = vld [vmem:[#allocation7 + $0x1b8] sm:$0xff]
    %v162 = vld [vmem:[#allocation7 + $0x1c0] sm:$0xff]
    %v163 = vld [vmem:[#allocation7 + $0x1c8] sm:$0xff]
    %v164 = vld [vmem:[#allocation7 + $0x1d0] sm:$0xff]
    %v165 = vld [vmem:[#allocation7 + $0x1d8] sm:$0xff]
    %v166 = vld [vmem:[#allocation7 + $0x1e0] sm:$0xff]
    %v167 = vld [vmem:[#allocation7 + $0x1e8] sm:$0xff]
    %v168 = vld [vmem:[#allocation7 + $0x1f0] sm:$0xff]
    %v169 = vld [vmem:[#allocation7 + $0x1f8] sm:$0xff]
    %v170 = vld [vmem:[%s3] sm:$0x3]
    %v172 = vlaneseq
    %v173 = vshrl.u32 %v172, 7
    %v174 = vsub.s32 0, %v173
    %v175 = vrot.slane %v170, %v174
    %v176 = vlaneseq
    %v177 = vshrl.u32 %v176, 7
    %v178 = vsub.s32 1, %v177
    %v179 = vrot.slane %v170, %v178
    %182 = vmatprep.subr.mxu0 %v137
    %183 = vmatpush1.msra.mxu0 %v136
    %184 = vmatprep.subr.mxu0 %v135
    %185 = vmatpush1.msra.mxu0 %v134
    %186 = vmatprep.subr.mxu0 %v133
    %187 = vmatpush1.msra.mxu0 %v132
    %188 = vmatprep.subr.mxu0 %v131
    %189 = vmatpush1.msra.mxu0 %v130
    %190 = vmatprep.subr.mxu0 %v129
    %191 = vmatpush1.msra.mxu0 %v128
    %192 = vmatprep.subr.mxu0 %v127
    %193 = vmatpush1.msra.mxu0 %v126
    %194 = vmatprep.subr.mxu0 %v125
    %195 = vmatpush1.msra.mxu0 %v124
    %196 = vmatprep.subr.mxu0 %v123
    %197 = vmatpush1.msra.mxu0 %v122
    %198 = vmatprep.subr.mxu0 %v121
    %199 = vmatpush1.msra.mxu0 %v120
    %200 = vmatprep.subr.mxu0 %v119
    %201 = vmatpush1.msra.mxu0 %v118
    %202 = vmatprep.subr.mxu0 %v117
    %203 = vmatpush1.msra.mxu0 %v116
    %204 = vmatprep.subr.mxu0 %v115
    %205 = vmatpush1.msra.mxu0 %v114
    %206 = vmatprep.subr.mxu0 %v113
    %207 = vmatpush1.msra.mxu0 %v112
    %208 = vmatprep.subr.mxu0 %v111
    %209 = vmatpush1.msra.mxu0 %v110
    %210 = vmatprep.subr.mxu0 %v109
    %211 = vmatpush1.msra.mxu0 %v108
    %212 = vmatprep.subr.mxu0 %v107
    %213 = vmatpush1.msra.mxu0 %v106
    %214 = vmatprep.subr.mxu0 %v169
    %215 = vmatpush2.msra.mxu0 %v168
    %216 = vmatprep.subr.mxu0 %v167
    %217 = vmatpush2.msra.mxu0 %v166
    %218 = vmatprep.subr.mxu0 %v165
    %219 = vmatpush2.msra.mxu0 %v164
    %220 = vmatprep.subr.mxu0 %v163
    %221 = vmatpush2.msra.mxu0 %v162
    %222 = vmatprep.subr.mxu0 %v161
    %223 = vmatpush2.msra.mxu0 %v160
    %224 = vmatprep.subr.mxu0 %v159
    %225 = vmatpush2.msra.mxu0 %v158
    %226 = vmatprep.subr.mxu0 %v157
    %227 = vmatpush2.msra.mxu0 %v156
    %228 = vmatprep.subr.mxu0 %v155
    %229 = vmatpush2.msra.mxu0 %v154
    %230 = vmatprep.subr.mxu0 %v153
    %231 = vmatpush2.msra.mxu0 %v152
    %232 = vmatprep.subr.mxu0 %v151
    %233 = vmatpush2.msra.mxu0 %v150
    %234 = vmatprep.subr.mxu0 %v149
    %235 = vmatpush2.msra.mxu0 %v148
    %236 = vmatprep.subr.mxu0 %v147
    %237 = vmatpush2.msra.mxu0 %v146
    %238 = vmatprep.subr.mxu0 %v145
    %239 = vmatpush2.msra.mxu0 %v144
    %240 = vmatprep.subr.mxu0 %v143
    %241 = vmatpush2.msra.mxu0 %v142
    %242 = vmatprep.subr.mxu0 %v141
    %243 = vmatpush2.msra.mxu0 %v140
    %244 = vmatprep.subr.mxu0 %v139
    %245 = vmatpush2.msra.mxu0 %v138
    %246 = vmatprep.mubr.f32.mxu0 %v75
    %247 = vmatmul.mubr.f32.gmra.mxu0 %v74
    %v248 = vpop.f32.mrf.mxu0
    %v249 = vadd.f32 %v175, %v248
    %v250 = vpop.f32.mrf.mxu0
    %v251 = vadd.f32 %v179, %v250
    %252 = vmatprep.mubr.f32.mxu0 %v77
    %253 = vmatmul.mubr.f32.gmra.mxu0 %v76
    %v254 = vpop.f32.mrf.mxu0
    %v255 = vadd.f32 %v175, %v254
    %v256 = vpop.f32.mrf.mxu0
    %v257 = vadd.f32 %v179, %v256
    %258 = vmatprep.mubr.f32.mxu0 %v79
    %259 = vmatmul.mubr.f32.gmra.mxu0 %v78
    %v260 = vpop.f32.mrf.mxu0
    %v261 = vadd.f32 %v175, %v260
    %v262 = vpop.f32.mrf.mxu0
    %v263 = vadd.f32 %v179, %v262
    %264 = vmatprep.mubr.f32.mxu0 %v81
    %265 = vmatmul.mubr.f32.gmra.mxu0 %v80
    %v266 = vpop.f32.mrf.mxu0
    %v267 = vadd.f32 %v175, %v266
    %v268 = vpop.f32.mrf.mxu0
    %v269 = vadd.f32 %v179, %v268
    %270 = vmatprep.mubr.f32.mxu0 %v83
    %271 = vmatmul.mubr.f32.gmra.mxu0 %v82
    %v272 = vpop.f32.mrf.mxu0
    %v273 = vadd.f32 %v175, %v272
    %v274 = vpop.f32.mrf.mxu0
    %v275 = vadd.f32 %v179, %v274
    %276 = vmatprep.mubr.f32.mxu0 %v85
    %277 = vmatmul.mubr.f32.gmra.mxu0 %v84
    %v278 = vpop.f32.mrf.mxu0
    %v279 = vadd.f32 %v175, %v278
    %v280 = vpop.f32.mrf.mxu0
    %v281 = vadd.f32 %v179, %v280
    %282 = vmatprep.mubr.f32.mxu0 %v87
    %283 = vmatmul.mubr.f32.gmra.mxu0 %v86
    %v284 = vpop.f32.mrf.mxu0
    %v285 = vadd.f32 %v175, %v284
    %v286 = vpop.f32.mrf.mxu0
    %v287 = vadd.f32 %v179, %v286
    %288 = vmatprep.mubr.f32.mxu0 %v89
    %289 = vmatmul.mubr.f32.gmra.mxu0 %v88
    %v290 = vpop.f32.mrf.mxu0
    %v291 = vadd.f32 %v175, %v290
    %v292 = vpop.f32.mrf.mxu0
    %v293 = vadd.f32 %v179, %v292
    %294 = vmatprep.mubr.f32.mxu0 %v91
    %295 = vmatmul.mubr.f32.gmra.mxu0 %v90
    %v296 = vpop.f32.mrf.mxu0
    %v297 = vadd.f32 %v175, %v296
    %v298 = vpop.f32.mrf.mxu0
    %v299 = vadd.f32 %v179, %v298
    %300 = vmatprep.mubr.f32.mxu0 %v93
    %301 = vmatmul.mubr.f32.gmra.mxu0 %v92
    %v302 = vpop.f32.mrf.mxu0
    %v303 = vadd.f32 %v175, %v302
    %v304 = vpop.f32.mrf.mxu0
    %v305 = vadd.f32 %v179, %v304
    %306 = vmatprep.mubr.f32.mxu0 %v95
    %307 = vmatmul.mubr.f32.gmra.mxu0 %v94
    %v308 = vpop.f32.mrf.mxu0
    %v309 = vadd.f32 %v175, %v308
    %v310 = vpop.f32.mrf.mxu0
    %v311 = vadd.f32 %v179, %v310
    %312 = vmatprep.mubr.f32.mxu0 %v97
    %313 = vmatmul.mubr.f32.gmra.mxu0 %v96
    %v314 = vpop.f32.mrf.mxu0
    %v315 = vadd.f32 %v175, %v314
    %v316 = vpop.f32.mrf.mxu0
    %v317 = vadd.f32 %v179, %v316
    %318 = vmatprep.mubr.f32.mxu0 %v99
    %319 = vmatmul.mubr.f32.gmra.mxu0 %v98
    %v320 = vpop.f32.mrf.mxu0
    %v321 = vadd.f32 %v175, %v320
    %v322 = vpop.f32.mrf.mxu0
    %v323 = vadd.f32 %v179, %v322
    %324 = vmatprep.mubr.f32.mxu0 %v101
    %325 = vmatmul.mubr.f32.gmra.mxu0 %v100
    %v326 = vpop.f32.mrf.mxu0
    %v327 = vadd.f32 %v175, %v326
    %v328 = vpop.f32.mrf.mxu0
    %v329 = vadd.f32 %v179, %v328
    %330 = vmatprep.mubr.f32.mxu0 %v103
    %331 = vmatmul.mubr.f32.gmra.mxu0 %v102
    %v332 = vpop.f32.mrf.mxu0
    %v333 = vadd.f32 %v175, %v332
    %v334 = vpop.f32.mrf.mxu0
    %v335 = vadd.f32 %v179, %v334
    %336 = vmatprep.mubr.f32.mxu0 %v105
    %337 = vmatmul.mubr.f32.gmra.mxu0 %v104
    %v338 = vpop.f32.mrf.mxu0
    %v339 = vadd.f32 %v175, %v338
    %v340 = vpop.f32.mrf.mxu0
    %v341 = vadd.f32 %v179, %v340
    %342 = vdwg.mxu0
    %v343 = vld [vmem:[#allocation5] sm:$0xff]
    %v344 = vld [vmem:[#allocation5 + $0x8] sm:$0xff]
    %v345 = vld [vmem:[#allocation5 + $0x10] sm:$0xff]
    %v346 = vld [vmem:[#allocation5 + $0x18] sm:$0xff]
    %v347 = vld [vmem:[#allocation5 + $0x20] sm:$0xff]
    %v348 = vld [vmem:[#allocation5 + $0x28] sm:$0xff]
    %v349 = vld [vmem:[#allocation5 + $0x30] sm:$0xff]
    %v350 = vld [vmem:[#allocation5 + $0x38] sm:$0xff]
    %v351 = vld [vmem:[#allocation5 + $0x40] sm:$0xff]
    %v352 = vld [vmem:[#allocation5 + $0x48] sm:$0xff]
    %v353 = vld [vmem:[#allocation5 + $0x50] sm:$0xff]
    %v354 = vld [vmem:[#allocation5 + $0x58] sm:$0xff]
    %v355 = vld [vmem:[#allocation5 + $0x60] sm:$0xff]
    %v356 = vld [vmem:[#allocation5 + $0x68] sm:$0xff]
    %v357 = vld [vmem:[#allocation5 + $0x70] sm:$0xff]
    %v358 = vld [vmem:[#allocation5 + $0x78] sm:$0xff]
    %v359 = vld [vmem:[#allocation5 + $0x80] sm:$0xff]
    %v360 = vld [vmem:[#allocation5 + $0x88] sm:$0xff]
    %v361 = vld [vmem:[#allocation5 + $0x90] sm:$0xff]
    %v362 = vld [vmem:[#allocation5 + $0x98] sm:$0xff]
    %v363 = vld [vmem:[#allocation5 + $0xa0] sm:$0xff]
    %v364 = vld [vmem:[#allocation5 + $0xa8] sm:$0xff]
    %v365 = vld [vmem:[#allocation5 + $0xb0] sm:$0xff]
    %v366 = vld [vmem:[#allocation5 + $0xb8] sm:$0xff]
    %v367 = vld [vmem:[#allocation5 + $0xc0] sm:$0xff]
    %v368 = vld [vmem:[#allocation5 + $0xc8] sm:$0xff]
    %v369 = vld [vmem:[#allocation5 + $0xd0] sm:$0xff]
    %v370 = vld [vmem:[#allocation5 + $0xd8] sm:$0xff]
    %v371 = vld [vmem:[#allocation5 + $0xe0] sm:$0xff]
    %v372 = vld [vmem:[#allocation5 + $0xe8] sm:$0xff]
    %v373 = vld [vmem:[#allocation5 + $0xf0] sm:$0xff]
    %v374 = vld [vmem:[#allocation5 + $0xf8] sm:$0xff]
    %v375 = vld [vmem:[#allocation5 + $0x100] sm:$0xff]
    %v376 = vld [vmem:[#allocation5 + $0x108] sm:$0xff]
    %v377 = vld [vmem:[#allocation5 + $0x110] sm:$0xff]
    %v378 = vld [vmem:[#allocation5 + $0x118] sm:$0xff]
    %v379 = vld [vmem:[#allocation5 + $0x120] sm:$0xff]
    %v380 = vld [vmem:[#allocation5 + $0x128] sm:$0xff]
    %v381 = vld [vmem:[#allocation5 + $0x130] sm:$0xff]
    %v382 = vld [vmem:[#allocation5 + $0x138] sm:$0xff]
    %v383 = vld [vmem:[#allocation5 + $0x140] sm:$0xff]
    %v384 = vld [vmem:[#allocation5 + $0x148] sm:$0xff]
    %v385 = vld [vmem:[#allocation5 + $0x150] sm:$0xff]
    %v386 = vld [vmem:[#allocation5 + $0x158] sm:$0xff]
    %v387 = vld [vmem:[#allocation5 + $0x160] sm:$0xff]
    %v388 = vld [vmem:[#allocation5 + $0x168] sm:$0xff]
    %v389 = vld [vmem:[#allocation5 + $0x170] sm:$0xff]
    %v390 = vld [vmem:[#allocation5 + $0x178] sm:$0xff]
    %v391 = vld [vmem:[#allocation5 + $0x180] sm:$0xff]
    %v392 = vld [vmem:[#allocation5 + $0x188] sm:$0xff]
    %v393 = vld [vmem:[#allocation5 + $0x190] sm:$0xff]
    %v394 = vld [vmem:[#allocation5 + $0x198] sm:$0xff]
    %v395 = vld [vmem:[#allocation5 + $0x1a0] sm:$0xff]
    %v396 = vld [vmem:[#allocation5 + $0x1a8] sm:$0xff]
    %v397 = vld [vmem:[#allocation5 + $0x1b0] sm:$0xff]
    %v398 = vld [vmem:[#allocation5 + $0x1b8] sm:$0xff]
    %v399 = vld [vmem:[#allocation5 + $0x1c0] sm:$0xff]
    %v400 = vld [vmem:[#allocation5 + $0x1c8] sm:$0xff]
    %v401 = vld [vmem:[#allocation5 + $0x1d0] sm:$0xff]
    %v402 = vld [vmem:[#allocation5 + $0x1d8] sm:$0xff]
    %v403 = vld [vmem:[#allocation5 + $0x1e0] sm:$0xff]
    %v404 = vld [vmem:[#allocation5 + $0x1e8] sm:$0xff]
    %v405 = vld [vmem:[#allocation5 + $0x1f0] sm:$0xff]
    %v406 = vld [vmem:[#allocation5 + $0x1f8] sm:$0xff]
    %v407 = vld [vmem:[#allocation8] sm:$0xff]
    %v408 = vld [vmem:[#allocation8 + $0x8] sm:$0xff]
    %409 = vmatprep.subr.mxu0 %v374
    %410 = vmatpush1.xpose.msra.mxu0 %v373
    %411 = vmatprep.subr.mxu0 %v372
    %412 = vmatpush1.xpose.msra.mxu0 %v371
    %413 = vmatprep.subr.mxu0 %v370
    %414 = vmatpush1.xpose.msra.mxu0 %v369
    %415 = vmatprep.subr.mxu0 %v368
    %416 = vmatpush1.xpose.msra.mxu0 %v367
    %417 = vmatprep.subr.mxu0 %v366
    %418 = vmatpush1.xpose.msra.mxu0 %v365
    %419 = vmatprep.subr.mxu0 %v364
    %420 = vmatpush1.xpose.msra.mxu0 %v363
    %421 = vmatprep.subr.mxu0 %v362
    %422 = vmatpush1.xpose.msra.mxu0 %v361
    %423 = vmatprep.subr.mxu0 %v360
    %424 = vmatpush1.xpose.msra.mxu0 %v359
    %425 = vmatprep.subr.mxu0 %v358
    %426 = vmatpush1.xpose.msra.mxu0 %v357
    %427 = vmatprep.subr.mxu0 %v356
    %428 = vmatpush1.xpose.msra.mxu0 %v355
    %429 = vmatprep.subr.mxu0 %v354
    %430 = vmatpush1.xpose.msra.mxu0 %v353
    %431 = vmatprep.subr.mxu0 %v352
    %432 = vmatpush1.xpose.msra.mxu0 %v351
    %433 = vmatprep.subr.mxu0 %v350
    %434 = vmatpush1.xpose.msra.mxu0 %v349
    %435 = vmatprep.subr.mxu0 %v348
    %436 = vmatpush1.xpose.msra.mxu0 %v347
    %437 = vmatprep.subr.mxu0 %v346
    %438 = vmatpush1.xpose.msra.mxu0 %v345
    %439 = vmatprep.subr.mxu0 %v344
    %440 = vmatpush1.xpose.msra.mxu0 %v343
    %441 = vmatprep.subr.mxu0 %v406
    %442 = vmatpush2.xpose.msra.mxu0 %v405
    %443 = vmatprep.subr.mxu0 %v404
    %444 = vmatpush2.xpose.msra.mxu0 %v403
    %445 = vmatprep.subr.mxu0 %v402
    %446 = vmatpush2.xpose.msra.mxu0 %v401
    %447 = vmatprep.subr.mxu0 %v400
    %448 = vmatpush2.xpose.msra.mxu0 %v399
    %449 = vmatprep.subr.mxu0 %v398
    %450 = vmatpush2.xpose.msra.mxu0 %v397
    %451 = vmatprep.subr.mxu0 %v396
    %452 = vmatpush2.xpose.msra.mxu0 %v395
    %453 = vmatprep.subr.mxu0 %v394
    %454 = vmatpush2.xpose.msra.mxu0 %v393
    %455 = vmatprep.subr.mxu0 %v392
    %456 = vmatpush2.xpose.msra.mxu0 %v391
    %457 = vmatprep.subr.mxu0 %v390
    %458 = vmatpush2.xpose.msra.mxu0 %v389
    %459 = vmatprep.subr.mxu0 %v388
    %460 = vmatpush2.xpose.msra.mxu0 %v387
    %461 = vmatprep.subr.mxu0 %v386
    %462 = vmatpush2.xpose.msra.mxu0 %v385
    %463 = vmatprep.subr.mxu0 %v384
    %464 = vmatpush2.xpose.msra.mxu0 %v383
    %465 = vmatprep.subr.mxu0 %v382
    %466 = vmatpush2.xpose.msra.mxu0 %v381
    %467 = vmatprep.subr.mxu0 %v380
    %468 = vmatpush2.xpose.msra.mxu0 %v379
    %469 = vmatprep.subr.mxu0 %v378
    %470 = vmatpush2.xpose.msra.mxu0 %v377
    %471 = vmatprep.subr.mxu0 %v376
    %472 = vmatpush2.xpose.msra.mxu0 %v375
    %473 = vmatprep.mubr.f32.mxu0 %v251
    %474 = vmatmul.mubr.f32.gmra.mxu0 %v249
    %v475 = vpop.f32.mrf.mxu0
    %v476 = vadd.f32 0.0, %v475
    %v477 = vpop.f32.mrf.mxu0
    %v478 = vadd.f32 0.0, %v477
    %479 = vmatprep.mubr.f32.mxu0 %v257
    %480 = vmatmul.mubr.f32.gmra.mxu0 %v255
    %v481 = vpop.f32.mrf.mxu0
    %v482 = vadd.f32 0.0, %v481
    %v483 = vpop.f32.mrf.mxu0
    %v484 = vadd.f32 0.0, %v483
    %485 = vmatprep.mubr.f32.mxu0 %v263
    %486 = vmatmul.mubr.f32.gmra.mxu0 %v261
    %v487 = vpop.f32.mrf.mxu0
    %v488 = vadd.f32 0.0, %v487
    %v489 = vpop.f32.mrf.mxu0
    %v490 = vadd.f32 0.0, %v489
    %491 = vmatprep.mubr.f32.mxu0 %v269
    %492 = vmatmul.mubr.f32.gmra.mxu0 %v267
    %v493 = vpop.f32.mrf.mxu0
    %v494 = vadd.f32 0.0, %v493
    %v495 = vpop.f32.mrf.mxu0
    %v496 = vadd.f32 0.0, %v495
    %497 = vmatprep.mubr.f32.mxu0 %v275
    %498 = vmatmul.mubr.f32.gmra.mxu0 %v273
    %v499 = vpop.f32.mrf.mxu0
    %v500 = vadd.f32 0.0, %v499
    %v501 = vpop.f32.mrf.mxu0
    %v502 = vadd.f32 0.0, %v501
    %503 = vmatprep.mubr.f32.mxu0 %v281
    %504 = vmatmul.mubr.f32.gmra.mxu0 %v279
    %v505 = vpop.f32.mrf.mxu0
    %v506 = vadd.f32 0.0, %v505
    %v507 = vpop.f32.mrf.mxu0
    %v508 = vadd.f32 0.0, %v507
    %509 = vmatprep.mubr.f32.mxu0 %v287
    %510 = vmatmul.mubr.f32.gmra.mxu0 %v285
    %v511 = vpop.f32.mrf.mxu0
    %v512 = vadd.f32 0.0, %v511
    %v513 = vpop.f32.mrf.mxu0
    %v514 = vadd.f32 0.0, %v513
    %515 = vmatprep.mubr.f32.mxu0 %v293
    %516 = vmatmul.mubr.f32.gmra.mxu0 %v291
    %v517 = vpop.f32.mrf.mxu0
    %v518 = vadd.f32 0.0, %v517
    %v519 = vpop.f32.mrf.mxu0
    %v520 = vadd.f32 0.0, %v519
    %521 = vmatprep.mubr.f32.mxu0 %v299
    %522 = vmatmul.mubr.f32.gmra.mxu0 %v297
    %v523 = vpop.f32.mrf.mxu0
    %v524 = vadd.f32 0.0, %v523
    %v525 = vpop.f32.mrf.mxu0
    %v526 = vadd.f32 0.0, %v525
    %527 = vmatprep.mubr.f32.mxu0 %v305
    %528 = vmatmul.mubr.f32.gmra.mxu0 %v303
    %v529 = vpop.f32.mrf.mxu0
    %v530 = vadd.f32 0.0, %v529
    %v531 = vpop.f32.mrf.mxu0
    %v532 = vadd.f32 0.0, %v531
    %533 = vmatprep.mubr.f32.mxu0 %v311
    %534 = vmatmul.mubr.f32.gmra.mxu0 %v309
    %v535 = vpop.f32.mrf.mxu0
    %v536 = vadd.f32 0.0, %v535
    %v537 = vpop.f32.mrf.mxu0
    %v538 = vadd.f32 0.0, %v537
    %539 = vmatprep.mubr.f32.mxu0 %v317
    %540 = vmatmul.mubr.f32.gmra.mxu0 %v315
    %v541 = vpop.f32.mrf.mxu0
    %v542 = vadd.f32 0.0, %v541
    %v543 = vpop.f32.mrf.mxu0
    %v544 = vadd.f32 0.0, %v543
    %545 = vmatprep.mubr.f32.mxu0 %v323
    %546 = vmatmul.mubr.f32.gmra.mxu0 %v321
    %v547 = vpop.f32.mrf.mxu0
    %v548 = vadd.f32 0.0, %v547
    %v549 = vpop.f32.mrf.mxu0
    %v550 = vadd.f32 0.0, %v549
    %551 = vmatprep.mubr.f32.mxu0 %v329
    %552 = vmatmul.mubr.f32.gmra.mxu0 %v327
    %v553 = vpop.f32.mrf.mxu0
    %v554 = vadd.f32 0.0, %v553
    %v555 = vpop.f32.mrf.mxu0
    %v556 = vadd.f32 0.0, %v555
    %557 = vmatprep.mubr.f32.mxu0 %v335
    %558 = vmatmul.mubr.f32.gmra.mxu0 %v333
    %v559 = vpop.f32.mrf.mxu0
    %v560 = vadd.f32 0.0, %v559
    %v561 = vpop.f32.mrf.mxu0
    %v562 = vadd.f32 0.0, %v561
    %563 = vmatprep.mubr.f32.mxu0 %v341
    %564 = vmatmul.mubr.f32.gmra.mxu0 %v339
    %v565 = vpop.f32.mrf.mxu0
    %v566 = vadd.f32 0.0, %v565
    %v567 = vpop.f32.mrf.mxu0
    %v568 = vadd.f32 0.0, %v567
    %569 = vdwg.mxu0
    %v570 = vrot.slane %v407, 4
    %v571 = vmax.f32 %v407, %v570
    %v572 = vrot.slane %v571, 2
    %v573 = vmax.f32 %v571, %v572
    %v574 = vrot.slane %v573, 1
    %v575 = vmax.f32 %v573, %v574
    %v576 = vrot.slane %v408, 4
    %v577 = vmax.f32 %v408, %v576
    %v578 = vrot.slane %v577, 2
    %v579 = vmax.f32 %v577, %v578
    %v580 = vrot.slane %v579, 1
    %v581 = vmax.f32 %v579, %v580
    %vm582 = vcmp.gt.f32.partialorder %v575, 0.0
    %vm583 = vcmp.gt.f32.partialorder %v581, 0.0
    %v584 = vsel %vm582, 1, 0
    %v585 = vsel %vm583, 1, 0
    %vm586 = vcmp.eq.s32.totalorder %v584, 1
    %vm587 = vcmp.eq.s32.totalorder %v585, 1
    %v588 = vsel %vm586, %v476, -1e+30
    %v589 = vsel %vm587, %v478, -1e+30
    %v590 = vsel %vm586, %v482, -1e+30
    %v591 = vsel %vm587, %v484, -1e+30
    %v592 = vsel %vm586, %v488, -1e+30
    %v593 = vsel %vm587, %v490, -1e+30
    %v594 = vsel %vm586, %v494, -1e+30
    %v595 = vsel %vm587, %v496, -1e+30
    %v596 = vsel %vm586, %v500, -1e+30
    %v597 = vsel %vm587, %v502, -1e+30
    %v598 = vsel %vm586, %v506, -1e+30
    %v599 = vsel %vm587, %v508, -1e+30
    %v600 = vsel %vm586, %v512, -1e+30
    %v601 = vsel %vm587, %v514, -1e+30
    %v602 = vsel %vm586, %v518, -1e+30
    %v603 = vsel %vm587, %v520, -1e+30
    %v604 = vsel %vm586, %v524, -1e+30
    %v605 = vsel %vm587, %v526, -1e+30
    %v606 = vsel %vm586, %v530, -1e+30
    %v607 = vsel %vm587, %v532, -1e+30
    %v608 = vsel %vm586, %v536, -1e+30
    %v609 = vsel %vm587, %v538, -1e+30
    %v610 = vsel %vm586, %v542, -1e+30
    %v611 = vsel %vm587, %v544, -1e+30
    %v612 = vsel %vm586, %v548, -1e+30
    %v613 = vsel %vm587, %v550, -1e+30
    %v614 = vsel %vm586, %v554, -1e+30
    %v615 = vsel %vm587, %v556, -1e+30
    %v616 = vsel %vm586, %v560, -1e+30
    %v617 = vsel %vm587, %v562, -1e+30
    %v618 = vsel %vm586, %v566, -1e+30
    %v619 = vsel %vm587, %v568, -1e+30
    %v620 = vmax.f32 %v588, %v589
    %621 = vmax.xlane.f32.xlu0 %v620
    %v622 = vpop.xlane.xlu0 %621
    %v623 = vmax.f32 %v590, %v591
    %624 = vmax.xlane.f32.xlu0 %v623
    %v625 = vpop.xlane.xlu0 %624
    %v626 = vmax.f32 %v592, %v593
    %627 = vmax.xlane.f32.xlu0 %v626
    %v628 = vpop.xlane.xlu0 %627
    %v629 = vmax.f32 %v594, %v595
    %630 = vmax.xlane.f32.xlu0 %v629
    %v631 = vpop.xlane.xlu0 %630
    %v632 = vmax.f32 %v596, %v597
    %633 = vmax.xlane.f32.xlu0 %v632
    %v634 = vpop.xlane.xlu0 %633
    %v635 = vmax.f32 %v598, %v599
    %636 = vmax.xlane.f32.xlu0 %v635
    %v637 = vpop.xlane.xlu0 %636
    %v638 = vmax.f32 %v600, %v601
    %639 = vmax.xlane.f32.xlu0 %v638
    %v640 = vpop.xlane.xlu0 %639
    %v641 = vmax.f32 %v602, %v603
    %642 = vmax.xlane.f32.xlu0 %v641
    %v643 = vpop.xlane.xlu0 %642
    %v644 = vmax.f32 %v604, %v605
    %645 = vmax.xlane.f32.xlu0 %v644
    %v646 = vpop.xlane.xlu0 %645
    %v647 = vmax.f32 %v606, %v607
    %648 = vmax.xlane.f32.xlu0 %v647
    %v649 = vpop.xlane.xlu0 %648
    %v650 = vmax.f32 %v608, %v609
    %651 = vmax.xlane.f32.xlu0 %v650
    %v652 = vpop.xlane.xlu0 %651
    %v653 = vmax.f32 %v610, %v611
    %654 = vmax.xlane.f32.xlu0 %v653
    %v655 = vpop.xlane.xlu0 %654
    %v656 = vmax.f32 %v612, %v613
    %657 = vmax.xlane.f32.xlu0 %v656
    %v658 = vpop.xlane.xlu0 %657
    %v659 = vmax.f32 %v614, %v615
    %660 = vmax.xlane.f32.xlu0 %v659
    %v661 = vpop.xlane.xlu0 %660
    %v662 = vmax.f32 %v616, %v617
    %663 = vmax.xlane.f32.xlu0 %v662
    %v664 = vpop.xlane.xlu0 %663
    %v665 = vmax.f32 %v618, %v619
    %666 = vmax.xlane.f32.xlu0 %v665
    %v667 = vpop.xlane.xlu0 %666
    %v668 = vsub.f32 %v476, %v622
    %v669 = vsub.f32 %v478, %v622
    %v670 = vsub.f32 %v482, %v625
    %v671 = vsub.f32 %v484, %v625
    %v672 = vsub.f32 %v488, %v628
    %v673 = vsub.f32 %v490, %v628
    %v674 = vsub.f32 %v494, %v631
    %v675 = vsub.f32 %v496, %v631
    %v676 = vsub.f32 %v500, %v634
    %v677 = vsub.f32 %v502, %v634
    %v678 = vsub.f32 %v506, %v637
    %v679 = vsub.f32 %v508, %v637
    %v680 = vsub.f32 %v512, %v640
    %v681 = vsub.f32 %v514, %v640
    %v682 = vsub.f32 %v518, %v643
    %v683 = vsub.f32 %v520, %v643
    %v684 = vsub.f32 %v524, %v646
    %v685 = vsub.f32 %v526, %v646
    %v686 = vsub.f32 %v530, %v649
    %v687 = vsub.f32 %v532, %v649
    %v688 = vsub.f32 %v536, %v652
    %v689 = vsub.f32 %v538, %v652
    %v690 = vsub.f32 %v542, %v655
    %v691 = vsub.f32 %v544, %v655
    %v692 = vsub.f32 %v548, %v658
    %v693 = vsub.f32 %v550, %v658
    %v694 = vsub.f32 %v554, %v661
    %v695 = vsub.f32 %v556, %v661
    %v696 = vsub.f32 %v560, %v664
    %v697 = vsub.f32 %v562, %v664
    %v698 = vsub.f32 %v566, %v667
    %v699 = vsub.f32 %v568, %v667
    %v700 = vmin.f32 %v668, 0.0
    %v701 = vmin.f32 %v669, 0.0
    %v702 = vmin.f32 %v670, 0.0
    %v703 = vmin.f32 %v671, 0.0
    %v704 = vmin.f32 %v672, 0.0
    %v705 = vmin.f32 %v673, 0.0
    %v706 = vmin.f32 %v674, 0.0
    %v707 = vmin.f32 %v675, 0.0
    %v708 = vmin.f32 %v676, 0.0
    %v709 = vmin.f32 %v677, 0.0
    %v710 = vmin.f32 %v678, 0.0
    %v711 = vmin.f32 %v679, 0.0
    %v712 = vmin.f32 %v680, 0.0
    %v713 = vmin.f32 %v681, 0.0
    %v714 = vmin.f32 %v682, 0.0
    %v715 = vmin.f32 %v683, 0.0
    %v716 = vmin.f32 %v684, 0.0
    %v717 = vmin.f32 %v685, 0.0
    %v718 = vmin.f32 %v686, 0.0
    %v719 = vmin.f32 %v687, 0.0
    %v720 = vmin.f32 %v688, 0.0
    %v721 = vmin.f32 %v689, 0.0
    %v722 = vmin.f32 %v690, 0.0
    %v723 = vmin.f32 %v691, 0.0
    %v724 = vmin.f32 %v692, 0.0
    %v725 = vmin.f32 %v693, 0.0
    %v726 = vmin.f32 %v694, 0.0
    %v727 = vmin.f32 %v695, 0.0
    %v728 = vmin.f32 %v696, 0.0
    %v729 = vmin.f32 %v697, 0.0
    %v730 = vmin.f32 %v698, 0.0
    %v731 = vmin.f32 %v699, 0.0
    %v732 = vmul.f32 %v700, 1.442695
    %v733 = vpow.pop %v732
    %v734 = vmul.f32 %v701, 1.442695
    %v735 = vpow.pop %v734
    %v736 = vmul.f32 %v702, 1.442695
    %v737 = vpow.pop %v736
    %v738 = vmul.f32 %v703, 1.442695
    %v739 = vpow.pop %v738
    %v740 = vmul.f32 %v704, 1.442695
    %v741 = vpow.pop %v740
    %v742 = vmul.f32 %v705, 1.442695
    %v743 = vpow.pop %v742
    %v744 = vmul.f32 %v706, 1.442695
    %v745 = vpow.pop %v744
    %v746 = vmul.f32 %v707, 1.442695
    %v747 = vpow.pop %v746
    %v748 = vmul.f32 %v708, 1.442695
    %v749 = vpow.pop %v748
    %v750 = vmul.f32 %v709, 1.442695
    %v751 = vpow.pop %v750
    %v752 = vmul.f32 %v710, 1.442695
    %v753 = vpow.pop %v752
    %v754 = vmul.f32 %v711, 1.442695
    %v755 = vpow.pop %v754
    %v756 = vmul.f32 %v712, 1.442695
    %v757 = vpow.pop %v756
    %v758 = vmul.f32 %v713, 1.442695
    %v759 = vpow.pop %v758
    %v760 = vmul.f32 %v714, 1.442695
    %v761 = vpow.pop %v760
    %v762 = vmul.f32 %v715, 1.442695
    %v763 = vpow.pop %v762
    %v764 = vmul.f32 %v716, 1.442695
    %v765 = vpow.pop %v764
    %v766 = vmul.f32 %v717, 1.442695
    %v767 = vpow.pop %v766
    %v768 = vmul.f32 %v718, 1.442695
    %v769 = vpow.pop %v768
    %v770 = vmul.f32 %v719, 1.442695
    %v771 = vpow.pop %v770
    %v772 = vmul.f32 %v720, 1.442695
    %v773 = vpow.pop %v772
    %v774 = vmul.f32 %v721, 1.442695
    %v775 = vpow.pop %v774
    %v776 = vmul.f32 %v722, 1.442695
    %v777 = vpow.pop %v776
    %v778 = vmul.f32 %v723, 1.442695
    %v779 = vpow.pop %v778
    %v780 = vmul.f32 %v724, 1.442695
    %v781 = vpow.pop %v780
    %v782 = vmul.f32 %v725, 1.442695
    %v783 = vpow.pop %v782
    %v784 = vmul.f32 %v726, 1.442695
    %v785 = vpow.pop %v784
    %v786 = vmul.f32 %v727, 1.442695
    %v787 = vpow.pop %v786
    %v788 = vmul.f32 %v728, 1.442695
    %v789 = vpow.pop %v788
    %v790 = vmul.f32 %v729, 1.442695
    %v791 = vpow.pop %v790
    %v792 = vmul.f32 %v730, 1.442695
    %v793 = vpow.pop %v792
    %v794 = vmul.f32 %v731, 1.442695
    %v795 = vpow.pop %v794
    %v796 = vmul.f32 %v733, %v575
    %v797 = vmul.f32 %v735, %v581
    %v798 = vmul.f32 %v737, %v575
    %v799 = vmul.f32 %v739, %v581
    %v800 = vmul.f32 %v741, %v575
    %v801 = vmul.f32 %v743, %v581
    %v802 = vmul.f32 %v745, %v575
    %v803 = vmul.f32 %v747, %v581
    %v804 = vmul.f32 %v749, %v575
    %v805 = vmul.f32 %v751, %v581
    %v806 = vmul.f32 %v753, %v575
    %v807 = vmul.f32 %v755, %v581
    %v808 = vmul.f32 %v757, %v575
    %v809 = vmul.f32 %v759, %v581
    %v810 = vmul.f32 %v761, %v575
    %v811 = vmul.f32 %v763, %v581
    %v812 = vmul.f32 %v765, %v575
    %v813 = vmul.f32 %v767, %v581
    %v814 = vmul.f32 %v769, %v575
    %v815 = vmul.f32 %v771, %v581
    %v816 = vmul.f32 %v773, %v575
    %v817 = vmul.f32 %v775, %v581
    %v818 = vmul.f32 %v777, %v575
    %v819 = vmul.f32 %v779, %v581
    %v820 = vmul.f32 %v781, %v575
    %v821 = vmul.f32 %v783, %v581
    %v822 = vmul.f32 %v785, %v575
    %v823 = vmul.f32 %v787, %v581
    %v824 = vmul.f32 %v789, %v575
    %v825 = vmul.f32 %v791, %v581
    %v826 = vmul.f32 %v793, %v575
    %v827 = vmul.f32 %v795, %v581
    %828 = vmatprep.subr.mxu0 %v827
    %829 = vmatpush1.xpose.msra.mxu0 %v826
    %830 = vmatprep.subr.mxu0 %v825
    %831 = vmatpush1.xpose.msra.mxu0 %v824
    %832 = vmatprep.subr.mxu0 %v823
    %833 = vmatpush1.xpose.msra.mxu0 %v822
    %834 = vmatprep.subr.mxu0 %v821
    %835 = vmatpush1.xpose.msra.mxu0 %v820
    %836 = vmatprep.subr.mxu0 %v819
    %837 = vmatpush1.xpose.msra.mxu0 %v818
    %838 = vmatprep.subr.mxu0 %v817
    %839 = vmatpush1.xpose.msra.mxu0 %v816
    %840 = vmatprep.subr.mxu0 %v815
    %841 = vmatpush1.xpose.msra.mxu0 %v814
    %842 = vmatprep.subr.mxu0 %v813
    %843 = vmatpush1.xpose.msra.mxu0 %v812
    %844 = vmatprep.subr.mxu0 %v811
    %845 = vmatpush1.xpose.msra.mxu0 %v810
    %846 = vmatprep.subr.mxu0 %v809
    %847 = vmatpush1.xpose.msra.mxu0 %v808
    %848 = vmatprep.subr.mxu0 %v807
    %849 = vmatpush1.xpose.msra.mxu0 %v806
    %850 = vmatprep.subr.mxu0 %v805
    %851 = vmatpush1.xpose.msra.mxu0 %v804
    %852 = vmatprep.subr.mxu0 %v803
    %853 = vmatpush1.xpose.msra.mxu0 %v802
    %854 = vmatprep.subr.mxu0 %v801
    %855 = vmatpush1.xpose.msra.mxu0 %v800
    %856 = vmatprep.subr.mxu0 %v799
    %857 = vmatpush1.xpose.msra.mxu0 %v798
    %858 = vmatprep.subr.mxu0 %v797
    %859 = vmatpush1.xpose.msra.mxu0 %v796
    %860 = vmatprep.subr.mxu0 0.0
    %861 = vmatpush2.xpose.msra.mxu0 0.0
    %862 = vmatprep.subr.mxu0 0.0
    %863 = vmatpush2.xpose.msra.mxu0 0.0
    %864 = vmatprep.subr.mxu0 0.0
    %865 = vmatpush2.xpose.msra.mxu0 0.0
    %866 = vmatprep.subr.mxu0 0.0
    %867 = vmatpush2.xpose.msra.mxu0 0.0
    %868 = vmatprep.subr.mxu0 0.0
    %869 = vmatpush2.xpose.msra.mxu0 0.0
    %870 = vmatprep.subr.mxu0 0.0
    %871 = vmatpush2.xpose.msra.mxu0 0.0
    %872 = vmatprep.subr.mxu0 0.0
    %873 = vmatpush2.xpose.msra.mxu0 0.0
    %874 = vmatprep.subr.mxu0 0.0
    %875 = vmatpush2.xpose.msra.mxu0 0.0
    %876 = vmatprep.subr.mxu0 0.0
    %877 = vmatpush2.xpose.msra.mxu0 0.0
    %878 = vmatprep.subr.mxu0 0.0
    %879 = vmatpush2.xpose.msra.mxu0 0.0
    %880 = vmatprep.subr.mxu0 0.0
    %881 = vmatpush2.xpose.msra.mxu0 0.0
    %882 = vmatprep.subr.mxu0 0.0
    %883 = vmatpush2.xpose.msra.mxu0 0.0
    %884 = vmatprep.subr.mxu0 0.0
    %885 = vmatpush2.xpose.msra.mxu0 0.0
    %886 = vmatprep.subr.mxu0 0.0
    %887 = vmatpush2.xpose.msra.mxu0 0.0
    %888 = vmatprep.subr.mxu0 0.0
    %889 = vmatpush2.xpose.msra.mxu0 0.0
    %890 = vmatprep.subr.mxu0 0.0
    %891 = vmatpush2.xpose.msra.mxu0 0.0
    %892 = vmatprep.mubr.f32.mxu0 %v408
    %893 = vmatmul.mubr.f32.gmra.mxu0 %v407
    %v894 = vpop.f32.mrf.mxu0
    %v895 = vadd.f32 0.0, %v894
    %v896 = vpop.f32.mrf.mxu0
    %897 = vdwg.mxu0
    %v898 = vmax.f32 %v895, 1e-12
    %v899 = vrcp.pop %v898
    %v900 = vmul.f32 1.0, %v899
    %v903 = vcombine.low %v407, %v408
    %v904 = vcombine.high %v407, %v408
    %v906 = vunpack.c.l.s4 1966171168
    %v907 = vunpack.c.0.s8 %v906
    %v908 = vlaneseq
    %v909 = vshrl.u32 %v908, 7
    %v910 = vsub.s32 %v907, %v909
    %v911 = vrot.slane %v903, %v910
    %v913 = vunpack.c.l.s4 1966171168
    %v914 = vunpack.c.0.s8 %v913
    %v915 = vlaneseq
    %v916 = vshrl.u32 %v915, 7
    %v917 = vsub.s32 %v914, %v916
    %v918 = vrot.slane %v904, %v917
    %v919 = vcombine.high %v911, %v911
    %v920 = vcombine.high %v918, %v918
    %v922 = vunpack.c.l.s4 1966171168
    %v923 = vunpack.c.0.s8 %v922
    %v924 = vlaneseq
    %v925 = vshrl.u32 %v924, 7
    %v926 = vsub.s32 %v923, %v925
    %v927 = vrot.slane %v911, %v926
    %v929 = vunpack.c.l.s4 1966171168
    %v930 = vunpack.c.0.s8 %v929
    %v931 = vlaneseq
    %v932 = vshrl.u32 %v931, 7
    %v933 = vsub.s32 %v930, %v932
    %v934 = vrot.slane %v918, %v933
    %v936 = vunpack.c.l.s4 1966171168
    %v937 = vunpack.c.0.s8 %v936
    %v938 = vlaneseq
    %v939 = vshrl.u32 %v938, 7
    %v940 = vsub.s32 %v937, %v939
    %v941 = vrot.slane %v919, %v940
    %v943 = vunpack.c.l.s4 1966171168
    %v944 = vunpack.c.0.s8 %v943
    %v945 = vlaneseq
    %v946 = vshrl.u32 %v945, 7
    %v947 = vsub.s32 %v944, %v946
    %v948 = vrot.slane %v920, %v947
    %v949 = vcombine.high %v927, %v927
    %v950 = vcombine.high %v934, %v934
    %v951 = vcombine.high %v941, %v941
    %v952 = vcombine.high %v948, %v948
    %v953 = vlaneseq
    %v954 = vshrl.u32 %v953, 7
    %v955 = vsub.s32 0, %v954
    %v956 = vrot.slane %v927, %v955
    %v957 = vlaneseq
    %v958 = vshrl.u32 %v957, 7
    %v959 = vsub.s32 1, %v958
    %v960 = vrot.slane %v927, %v959
    %v961 = vlaneseq
    %v962 = vshrl.u32 %v961, 7
    %v963 = vsub.s32 0, %v962
    %v964 = vrot.slane %v941, %v963
    %v965 = vlaneseq
    %v966 = vshrl.u32 %v965, 7
    %v967 = vsub.s32 1, %v966
    %v968 = vrot.slane %v941, %v967
    %v969 = vlaneseq
    %v970 = vshrl.u32 %v969, 7
    %v971 = vsub.s32 0, %v970
    %v972 = vrot.slane %v949, %v971
    %v973 = vlaneseq
    %v974 = vshrl.u32 %v973, 7
    %v975 = vsub.s32 1, %v974
    %v976 = vrot.slane %v949, %v975
    %v977 = vlaneseq
    %v978 = vshrl.u32 %v977, 7
    %v979 = vsub.s32 0, %v978
    %v980 = vrot.slane %v951, %v979
    %v981 = vlaneseq
    %v982 = vshrl.u32 %v981, 7
    %v983 = vsub.s32 1, %v982
    %v984 = vrot.slane %v951, %v983
    %v985 = vlaneseq
    %v986 = vshrl.u32 %v985, 7
    %v987 = vsub.s32 0, %v986
    %v988 = vrot.slane %v934, %v987
    %v989 = vlaneseq
    %v990 = vshrl.u32 %v989, 7
    %v991 = vsub.s32 1, %v990
    %v992 = vrot.slane %v934, %v991
    %v993 = vlaneseq
    %v994 = vshrl.u32 %v993, 7
    %v995 = vsub.s32 0, %v994
    %v996 = vrot.slane %v948, %v995
    %v997 = vlaneseq
    %v998 = vshrl.u32 %v997, 7
    %v999 = vsub.s32 1, %v998
    %v1000 = vrot.slane %v948, %v999
    %v1001 = vlaneseq
    %v1002 = vshrl.u32 %v1001, 7
    %v1003 = vsub.s32 0, %v1002
    %v1004 = vrot.slane %v950, %v1003
    %v1005 = vlaneseq
    %v1006 = vshrl.u32 %v1005, 7
    %v1007 = vsub.s32 1, %v1006
    %v1008 = vrot.slane %v950, %v1007
    %v1009 = vlaneseq
    %v1010 = vshrl.u32 %v1009, 7
    %v1011 = vsub.s32 0, %v1010
    %v1012 = vrot.slane %v952, %v1011
    %v1013 = vlaneseq
    %v1014 = vshrl.u32 %v1013, 7
    %v1015 = vsub.s32 1, %v1014
    %v1016 = vrot.slane %v952, %v1015
    %v1033 = vmul.f32 %v796, %v956
    %v1034 = vmul.f32 %v797, %v960
    %v1035 = vmul.f32 %v798, %v956
    %v1036 = vmul.f32 %v799, %v960
    %v1037 = vmul.f32 %v800, %v956
    %v1038 = vmul.f32 %v801, %v960
    %v1039 = vmul.f32 %v802, %v956
    %v1040 = vmul.f32 %v803, %v960
    %v1041 = vmul.f32 %v804, %v956
    %v1042 = vmul.f32 %v805, %v960
    %v1043 = vmul.f32 %v806, %v956
    %v1044 = vmul.f32 %v807, %v960
    %v1045 = vmul.f32 %v808, %v956
    %v1046 = vmul.f32 %v809, %v960
    %v1047 = vmul.f32 %v810, %v956
    %v1048 = vmul.f32 %v811, %v960
    %v1049 = vmul.f32 %v812, %v956
    %v1050 = vmul.f32 %v813, %v960
    %v1051 = vmul.f32 %v814, %v956
    %v1052 = vmul.f32 %v815, %v960
    %v1053 = vmul.f32 %v816, %v956
    %v1054 = vmul.f32 %v817, %v960
    %v1055 = vmul.f32 %v818, %v956
    %v1056 = vmul.f32 %v819, %v960
    %v1057 = vmul.f32 %v820, %v956
    %v1058 = vmul.f32 %v821, %v960
    %v1059 = vmul.f32 %v822, %v956
    %v1060 = vmul.f32 %v823, %v960
    %v1061 = vmul.f32 %v824, %v956
    %v1062 = vmul.f32 %v825, %v960
    %v1063 = vmul.f32 %v826, %v956
    %v1064 = vmul.f32 %v827, %v960
    %v1065 = vmul.f32 %v796, %v964
    %v1066 = vmul.f32 %v797, %v968
    %v1067 = vmul.f32 %v798, %v964
    %v1068 = vmul.f32 %v799, %v968
    %v1069 = vmul.f32 %v800, %v964
    %v1070 = vmul.f32 %v801, %v968
    %v1071 = vmul.f32 %v802, %v964
    %v1072 = vmul.f32 %v803, %v968
    %v1073 = vmul.f32 %v804, %v964
    %v1074 = vmul.f32 %v805, %v968
    %v1075 = vmul.f32 %v806, %v964
    %v1076 = vmul.f32 %v807, %v968
    %v1077 = vmul.f32 %v808, %v964
    %v1078 = vmul.f32 %v809, %v968
    %v1079 = vmul.f32 %v810, %v964
    %v1080 = vmul.f32 %v811, %v968
    %v1081 = vmul.f32 %v812, %v964
    %v1082 = vmul.f32 %v813, %v968
    %v1083 = vmul.f32 %v814, %v964
    %v1084 = vmul.f32 %v815, %v968
    %v1085 = vmul.f32 %v816, %v964
    %v1086 = vmul.f32 %v817, %v968
    %v1087 = vmul.f32 %v818, %v964
    %v1088 = vmul.f32 %v819, %v968
    %v1089 = vmul.f32 %v820, %v964
    %v1090 = vmul.f32 %v821, %v968
    %v1091 = vmul.f32 %v822, %v964
    %v1092 = vmul.f32 %v823, %v968
    %v1093 = vmul.f32 %v824, %v964
    %v1094 = vmul.f32 %v825, %v968
    %v1095 = vmul.f32 %v826, %v964
    %v1096 = vmul.f32 %v827, %v968
    %v1097 = vmul.f32 %v796, %v972
    %v1098 = vmul.f32 %v797, %v976
    %v1099 = vmul.f32 %v798, %v972
    %v1100 = vmul.f32 %v799, %v976
    %v1101 = vmul.f32 %v800, %v972
    %v1102 = vmul.f32 %v801, %v976
    %v1103 = vmul.f32 %v802, %v972
    %v1104 = vmul.f32 %v803, %v976
    %v1105 = vmul.f32 %v804, %v972
    %v1106 = vmul.f32 %v805, %v976
    %v1107 = vmul.f32 %v806, %v972
    %v1108 = vmul.f32 %v807, %v976
    %v1109 = vmul.f32 %v808, %v972
    %v1110 = vmul.f32 %v809, %v976
    %v1111 = vmul.f32 %v810, %v972
    %v1112 = vmul.f32 %v811, %v976
    %v1113 = vmul.f32 %v812, %v972
    %v1114 = vmul.f32 %v813, %v976
    %v1115 = vmul.f32 %v814, %v972
    %v1116 = vmul.f32 %v815, %v976
    %v1117 = vmul.f32 %v816, %v972
    %v1118 = vmul.f32 %v817, %v976
    %v1119 = vmul.f32 %v818, %v972
    %v1120 = vmul.f32 %v819, %v976
    %v1121 = vmul.f32 %v820, %v972
    %v1122 = vmul.f32 %v821, %v976
    %v1123 = vmul.f32 %v822, %v972
    %v1124 = vmul.f32 %v823, %v976
    %v1125 = vmul.f32 %v824, %v972
    %v1126 = vmul.f32 %v825, %v976
    %v1127 = vmul.f32 %v826, %v972
    %v1128 = vmul.f32 %v827, %v976
    %v1129 = vmul.f32 %v796, %v980
    %v1130 = vmul.f32 %v797, %v984
    %v1131 = vmul.f32 %v798, %v980
    %v1132 = vmul.f32 %v799, %v984
    %v1133 = vmul.f32 %v800, %v980
    %v1134 = vmul.f32 %v801, %v984
    %v1135 = vmul.f32 %v802, %v980
    %v1136 = vmul.f32 %v803, %v984
    %v1137 = vmul.f32 %v804, %v980
    %v1138 = vmul.f32 %v805, %v984
    %v1139 = vmul.f32 %v806, %v980
    %v1140 = vmul.f32 %v807, %v984
    %v1141 = vmul.f32 %v808, %v980
    %v1142 = vmul.f32 %v809, %v984
    %v1143 = vmul.f32 %v810, %v980
    %v1144 = vmul.f32 %v811, %v984
    %v1145 = vmul.f32 %v812, %v980
    %v1146 = vmul.f32 %v813, %v984
    %v1147 = vmul.f32 %v814, %v980
    %v1148 = vmul.f32 %v815, %v984
    %v1149 = vmul.f32 %v816, %v980
    %v1150 = vmul.f32 %v817, %v984
    %v1151 = vmul.f32 %v818, %v980
    %v1152 = vmul.f32 %v819, %v984
    %v1153 = vmul.f32 %v820, %v980
    %v1154 = vmul.f32 %v821, %v984
    %v1155 = vmul.f32 %v822, %v980
    %v1156 = vmul.f32 %v823, %v984
    %v1157 = vmul.f32 %v824, %v980
    %v1158 = vmul.f32 %v825, %v984
    %v1159 = vmul.f32 %v826, %v980
    %v1160 = vmul.f32 %v827, %v984
    %v1161 = vmul.f32 %v796, %v988
    %v1162 = vmul.f32 %v797, %v992
    %v1163 = vmul.f32 %v798, %v988
    %v1164 = vmul.f32 %v799, %v992
    %v1165 = vmul.f32 %v800, %v988
    %v1166 = vmul.f32 %v801, %v992
    %v1167 = vmul.f32 %v802, %v988
    %v1168 = vmul.f32 %v803, %v992
    %v1169 = vmul.f32 %v804, %v988
    %v1170 = vmul.f32 %v805, %v992
    %v1171 = vmul.f32 %v806, %v988
    %v1172 = vmul.f32 %v807, %v992
    %v1173 = vmul.f32 %v808, %v988
    %v1174 = vmul.f32 %v809, %v992
    %v1175 = vmul.f32 %v810, %v988
    %v1176 = vmul.f32 %v811, %v992
    %v1177 = vmul.f32 %v812, %v988
    %v1178 = vmul.f32 %v813, %v992
    %v1179 = vmul.f32 %v814, %v988
    %v1180 = vmul.f32 %v815, %v992
    %v1181 = vmul.f32 %v816, %v988
    %v1182 = vmul.f32 %v817, %v992
    %v1183 = vmul.f32 %v818, %v988
    %v1184 = vmul.f32 %v819, %v992
    %v1185 = vmul.f32 %v820, %v988
    %v1186 = vmul.f32 %v821, %v992
    %v1187 = vmul.f32 %v822, %v988
    %v1188 = vmul.f32 %v823, %v992
    %v1189 = vmul.f32 %v824, %v988
    %v1190 = vmul.f32 %v825, %v992
    %v1191 = vmul.f32 %v826, %v988
    %v1192 = vmul.f32 %v827, %v992
    %v1193 = vmul.f32 %v796, %v996
    %v1194 = vmul.f32 %v797, %v1000
    %v1195 = vmul.f32 %v798, %v996
    %v1196 = vmul.f32 %v799, %v1000
    %v1197 = vmul.f32 %v800, %v996
    %v1198 = vmul.f32 %v801, %v1000
    %v1199 = vmul.f32 %v802, %v996
    %v1200 = vmul.f32 %v803, %v1000
    %v1201 = vmul.f32 %v804, %v996
    %v1202 = vmul.f32 %v805, %v1000
    %v1203 = vmul.f32 %v806, %v996
    %v1204 = vmul.f32 %v807, %v1000
    %v1205 = vmul.f32 %v808, %v996
    %v1206 = vmul.f32 %v809, %v1000
    %v1207 = vmul.f32 %v810, %v996
    %v1208 = vmul.f32 %v811, %v1000
    %v1209 = vmul.f32 %v812, %v996
    %v1210 = vmul.f32 %v813, %v1000
    %v1211 = vmul.f32 %v814, %v996
    %v1212 = vmul.f32 %v815, %v1000
    %v1213 = vmul.f32 %v816, %v996
    %v1214 = vmul.f32 %v817, %v1000
    %v1215 = vmul.f32 %v818, %v996
    %v1216 = vmul.f32 %v819, %v1000
    %v1217 = vmul.f32 %v820, %v996
    %v1218 = vmul.f32 %v821, %v1000
    %v1219 = vmul.f32 %v822, %v996
    %v1220 = vmul.f32 %v823, %v1000
    %v1221 = vmul.f32 %v824, %v996
    %v1222 = vmul.f32 %v825, %v1000
    %v1223 = vmul.f32 %v826, %v996
    %v1224 = vmul.f32 %v827, %v1000
    %v1225 = vmul.f32 %v796, %v1004
    %v1226 = vmul.f32 %v797, %v1008
    %v1227 = vmul.f32 %v798, %v1004
    %v1228 = vmul.f32 %v799, %v1008
    %v1229 = vmul.f32 %v800, %v1004
    %v1230 = vmul.f32 %v801, %v1008
    %v1231 = vmul.f32 %v802, %v1004
    %v1232 = vmul.f32 %v803, %v1008
    %v1233 = vmul.f32 %v804, %v1004
    %v1234 = vmul.f32 %v805, %v1008
    %v1235 = vmul.f32 %v806, %v1004
    %v1236 = vmul.f32 %v807, %v1008
    %v1237 = vmul.f32 %v808, %v1004
    %v1238 = vmul.f32 %v809, %v1008
    %v1239 = vmul.f32 %v810, %v1004
    %v1240 = vmul.f32 %v811, %v1008
    %v1241 = vmul.f32 %v812, %v1004
    %v1242 = vmul.f32 %v813, %v1008
    %v1243 = vmul.f32 %v814, %v1004
    %v1244 = vmul.f32 %v815, %v1008
    %v1245 = vmul.f32 %v816, %v1004
    %v1246 = vmul.f32 %v817, %v1008
    %v1247 = vmul.f32 %v818, %v1004
    %v1248 = vmul.f32 %v819, %v1008
    %v1249 = vmul.f32 %v820, %v1004
    %v1250 = vmul.f32 %v821, %v1008
    %v1251 = vmul.f32 %v822, %v1004
    %v1252 = vmul.f32 %v823, %v1008
    %v1253 = vmul.f32 %v824, %v1004
    %v1254 = vmul.f32 %v825, %v1008
    %v1255 = vmul.f32 %v826, %v1004
    %v1256 = vmul.f32 %v827, %v1008
    %v1257 = vmul.f32 %v796, %v1012
    %v1258 = vmul.f32 %v797, %v1016
    %v1259 = vmul.f32 %v798, %v1012
    %v1260 = vmul.f32 %v799, %v1016
    %v1261 = vmul.f32 %v800, %v1012
    %v1262 = vmul.f32 %v801, %v1016
    %v1263 = vmul.f32 %v802, %v1012
    %v1264 = vmul.f32 %v803, %v1016
    %v1265 = vmul.f32 %v804, %v1012
    %v1266 = vmul.f32 %v805, %v1016
    %v1267 = vmul.f32 %v806, %v1012
    %v1268 = vmul.f32 %v807, %v1016
    %v1269 = vmul.f32 %v808, %v1012
    %v1270 = vmul.f32 %v809, %v1016
    %v1271 = vmul.f32 %v810, %v1012
    %v1272 = vmul.f32 %v811, %v1016
    %v1273 = vmul.f32 %v812, %v1012
    %v1274 = vmul.f32 %v813, %v1016
    %v1275 = vmul.f32 %v814, %v1012
    %v1276 = vmul.f32 %v815, %v1016
    %v1277 = vmul.f32 %v816, %v1012
    %v1278 = vmul.f32 %v817, %v1016
    %v1279 = vmul.f32 %v818, %v1012
    %v1280 = vmul.f32 %v819, %v1016
    %v1281 = vmul.f32 %v820, %v1012
    %v1282 = vmul.f32 %v821, %v1016
    %v1283 = vmul.f32 %v822, %v1012
    %v1284 = vmul.f32 %v823, %v1016
    %v1285 = vmul.f32 %v824, %v1012
    %v1286 = vmul.f32 %v825, %v1016
    %v1287 = vmul.f32 %v826, %v1012
    %v1288 = vmul.f32 %v827, %v1016
    %1289 = vmatprep.subr.mxu0 %v374
    %1290 = vmatpush1.msra.mxu0 %v373
    %1291 = vmatprep.subr.mxu0 %v372
    %1292 = vmatpush1.msra.mxu0 %v371
    %1293 = vmatprep.subr.mxu0 %v370
    %1294 = vmatpush1.msra.mxu0 %v369
    %1295 = vmatprep.subr.mxu0 %v368
    %1296 = vmatpush1.msra.mxu0 %v367
    %1297 = vmatprep.subr.mxu0 %v366
    %1298 = vmatpush1.msra.mxu0 %v365
    %1299 = vmatprep.subr.mxu0 %v364
    %1300 = vmatpush1.msra.mxu0 %v363
    %1301 = vmatprep.subr.mxu0 %v362
    %1302 = vmatpush1.msra.mxu0 %v361
    %1303 = vmatprep.subr.mxu0 %v360
    %1304 = vmatpush1.msra.mxu0 %v359
    %1305 = vmatprep.subr.mxu0 %v358
    %1306 = vmatpush1.msra.mxu0 %v357
    %1307 = vmatprep.subr.mxu0 %v356
    %1308 = vmatpush1.msra.mxu0 %v355
    %1309 = vmatprep.subr.mxu0 %v354
    %1310 = vmatpush1.msra.mxu0 %v353
    %1311 = vmatprep.subr.mxu0 %v352
    %1312 = vmatpush1.msra.mxu0 %v351
    %1313 = vmatprep.subr.mxu0 %v350
    %1314 = vmatpush1.msra.mxu0 %v349
    %1315 = vmatprep.subr.mxu0 %v348
    %1316 = vmatpush1.msra.mxu0 %v347
    %1317 = vmatprep.subr.mxu0 %v346
    %1318 = vmatpush1.msra.mxu0 %v345
    %1319 = vmatprep.subr.mxu0 %v344
    %1320 = vmatpush1.msra.mxu0 %v343
    %1321 = vmatprep.subr.mxu0 %v406
    %1322 = vmatpush2.msra.mxu0 %v405
    %1323 = vmatprep.subr.mxu0 %v404
    %1324 = vmatpush2.msra.mxu0 %v403
    %1325 = vmatprep.subr.mxu0 %v402
    %1326 = vmatpush2.msra.mxu0 %v401
    %1327 = vmatprep.subr.mxu0 %v400
    %1328 = vmatpush2.msra.mxu0 %v399
    %1329 = vmatprep.subr.mxu0 %v398
    %1330 = vmatpush2.msra.mxu0 %v397
    %1331 = vmatprep.subr.mxu0 %v396
    %1332 = vmatpush2.msra.mxu0 %v395
    %1333 = vmatprep.subr.mxu0 %v394
    %1334 = vmatpush2.msra.mxu0 %v393
    %1335 = vmatprep.subr.mxu0 %v392
    %1336 = vmatpush2.msra.mxu0 %v391
    %1337 = vmatprep.subr.mxu0 %v390
    %1338 = vmatpush2.msra.mxu0 %v389
    %1339 = vmatprep.subr.mxu0 %v388
    %1340 = vmatpush2.msra.mxu0 %v387
    %1341 = vmatprep.subr.mxu0 %v386
    %1342 = vmatpush2.msra.mxu0 %v385
    %1343 = vmatprep.subr.mxu0 %v384
    %1344 = vmatpush2.msra.mxu0 %v383
    %1345 = vmatprep.subr.mxu0 %v382
    %1346 = vmatpush2.msra.mxu0 %v381
    %1347 = vmatprep.subr.mxu0 %v380
    %1348 = vmatpush2.msra.mxu0 %v379
    %1349 = vmatprep.subr.mxu0 %v378
    %1350 = vmatpush2.msra.mxu0 %v377
    %1351 = vmatprep.subr.mxu0 %v376
    %1352 = vmatpush2.msra.mxu0 %v375
    %1353 = vmatprep.mubr.f32.mxu0 %v1034
    %1354 = vmatmul.mubr.f32.gmra.mxu0 %v1033
    %v1355 = vpop.f32.mrf.mxu0
    %v1356 = vadd.f32 0.0, %v1355
    %v1357 = vpop.f32.mrf.mxu0
    %v1358 = vadd.f32 0.0, %v1357
    %1359 = vmatprep.mubr.f32.mxu0 %v1036
    %1360 = vmatmul.mubr.f32.gmra.mxu0 %v1035
    %v1361 = vpop.f32.mrf.mxu0
    %v1362 = vadd.f32 0.0, %v1361
    %v1363 = vpop.f32.mrf.mxu0
    %v1364 = vadd.f32 0.0, %v1363
    %1365 = vmatprep.mubr.f32.mxu0 %v1038
    %1366 = vmatmul.mubr.f32.gmra.mxu0 %v1037
    %v1367 = vpop.f32.mrf.mxu0
    %v1368 = vadd.f32 0.0, %v1367
    %v1369 = vpop.f32.mrf.mxu0
    %v1370 = vadd.f32 0.0, %v1369
    %1371 = vmatprep.mubr.f32.mxu0 %v1040
    %1372 = vmatmul.mubr.f32.gmra.mxu0 %v1039
    %v1373 = vpop.f32.mrf.mxu0
    %v1374 = vadd.f32 0.0, %v1373
    %v1375 = vpop.f32.mrf.mxu0
    %v1376 = vadd.f32 0.0, %v1375
    %1377 = vmatprep.mubr.f32.mxu0 %v1042
    %1378 = vmatmul.mubr.f32.gmra.mxu0 %v1041
    %v1379 = vpop.f32.mrf.mxu0
    %v1380 = vadd.f32 0.0, %v1379
    %v1381 = vpop.f32.mrf.mxu0
    %v1382 = vadd.f32 0.0, %v1381
    %1383 = vmatprep.mubr.f32.mxu0 %v1044
    %1384 = vmatmul.mubr.f32.gmra.mxu0 %v1043
    %v1385 = vpop.f32.mrf.mxu0
    %v1386 = vadd.f32 0.0, %v1385
    %v1387 = vpop.f32.mrf.mxu0
    %v1388 = vadd.f32 0.0, %v1387
    %1389 = vmatprep.mubr.f32.mxu0 %v1046
    %1390 = vmatmul.mubr.f32.gmra.mxu0 %v1045
    %v1391 = vpop.f32.mrf.mxu0
    %v1392 = vadd.f32 0.0, %v1391
    %v1393 = vpop.f32.mrf.mxu0
    %v1394 = vadd.f32 0.0, %v1393
    %1395 = vmatprep.mubr.f32.mxu0 %v1048
    %1396 = vmatmul.mubr.f32.gmra.mxu0 %v1047
    %v1397 = vpop.f32.mrf.mxu0
    %v1398 = vadd.f32 0.0, %v1397
    %v1399 = vpop.f32.mrf.mxu0
    %v1400 = vadd.f32 0.0, %v1399
    %1401 = vmatprep.mubr.f32.mxu0 %v1050
    %1402 = vmatmul.mubr.f32.gmra.mxu0 %v1049
    %v1403 = vpop.f32.mrf.mxu0
    %v1404 = vadd.f32 0.0, %v1403
    %v1405 = vpop.f32.mrf.mxu0
    %v1406 = vadd.f32 0.0, %v1405
    %1407 = vmatprep.mubr.f32.mxu0 %v1052
    %1408 = vmatmul.mubr.f32.gmra.mxu0 %v1051
    %v1409 = vpop.f32.mrf.mxu0
    %v1410 = vadd.f32 0.0, %v1409
    %v1411 = vpop.f32.mrf.mxu0
    %v1412 = vadd.f32 0.0, %v1411
    %1413 = vmatprep.mubr.f32.mxu0 %v1054
    %1414 = vmatmul.mubr.f32.gmra.mxu0 %v1053
    %v1415 = vpop.f32.mrf.mxu0
    %v1416 = vadd.f32 0.0, %v1415
    %v1417 = vpop.f32.mrf.mxu0
    %v1418 = vadd.f32 0.0, %v1417
    %1419 = vmatprep.mubr.f32.mxu0 %v1056
    %1420 = vmatmul.mubr.f32.gmra.mxu0 %v1055
    %v1421 = vpop.f32.mrf.mxu0
    %v1422 = vadd.f32 0.0, %v1421
    %v1423 = vpop.f32.mrf.mxu0
    %v1424 = vadd.f32 0.0, %v1423
    %1425 = vmatprep.mubr.f32.mxu0 %v1058
    %1426 = vmatmul.mubr.f32.gmra.mxu0 %v1057
    %v1427 = vpop.f32.mrf.mxu0
    %v1428 = vadd.f32 0.0, %v1427
    %v1429 = vpop.f32.mrf.mxu0
    %v1430 = vadd.f32 0.0, %v1429
    %1431 = vmatprep.mubr.f32.mxu0 %v1060
    %1432 = vmatmul.mubr.f32.gmra.mxu0 %v1059
    %v1433 = vpop.f32.mrf.mxu0
    %v1434 = vadd.f32 0.0, %v1433
    %v1435 = vpop.f32.mrf.mxu0
    %v1436 = vadd.f32 0.0, %v1435
    %1437 = vmatprep.mubr.f32.mxu0 %v1062
    %1438 = vmatmul.mubr.f32.gmra.mxu0 %v1061
    %v1439 = vpop.f32.mrf.mxu0
    %v1440 = vadd.f32 0.0, %v1439
    %v1441 = vpop.f32.mrf.mxu0
    %v1442 = vadd.f32 0.0, %v1441
    %1443 = vmatprep.mubr.f32.mxu0 %v1064
    %1444 = vmatmul.mubr.f32.gmra.mxu0 %v1063
    %v1445 = vpop.f32.mrf.mxu0
    %v1446 = vadd.f32 0.0, %v1445
    %v1447 = vpop.f32.mrf.mxu0
    %v1448 = vadd.f32 0.0, %v1447
    %1449 = vmatprep.mubr.f32.mxu0 %v1066
    %1450 = vmatmul.mubr.f32.gmra.mxu0 %v1065
    %v1451 = vpop.f32.mrf.mxu0
    %v1452 = vadd.f32 0.0, %v1451
    %v1453 = vpop.f32.mrf.mxu0
    %v1454 = vadd.f32 0.0, %v1453
    %1455 = vmatprep.mubr.f32.mxu0 %v1068
    %1456 = vmatmul.mubr.f32.gmra.mxu0 %v1067
    %v1457 = vpop.f32.mrf.mxu0
    %v1458 = vadd.f32 0.0, %v1457
    %v1459 = vpop.f32.mrf.mxu0
    %v1460 = vadd.f32 0.0, %v1459
    %1461 = vmatprep.mubr.f32.mxu0 %v1070
    %1462 = vmatmul.mubr.f32.gmra.mxu0 %v1069
    %v1463 = vpop.f32.mrf.mxu0
    %v1464 = vadd.f32 0.0, %v1463
    %v1465 = vpop.f32.mrf.mxu0
    %v1466 = vadd.f32 0.0, %v1465
    %1467 = vmatprep.mubr.f32.mxu0 %v1072
    %1468 = vmatmul.mubr.f32.gmra.mxu0 %v1071
    %v1469 = vpop.f32.mrf.mxu0
    %v1470 = vadd.f32 0.0, %v1469
    %v1471 = vpop.f32.mrf.mxu0
    %v1472 = vadd.f32 0.0, %v1471
    %1473 = vmatprep.mubr.f32.mxu0 %v1074
    %1474 = vmatmul.mubr.f32.gmra.mxu0 %v1073
    %v1475 = vpop.f32.mrf.mxu0
    %v1476 = vadd.f32 0.0, %v1475
    %v1477 = vpop.f32.mrf.mxu0
    %v1478 = vadd.f32 0.0, %v1477
    %1479 = vmatprep.mubr.f32.mxu0 %v1076
    %1480 = vmatmul.mubr.f32.gmra.mxu0 %v1075
    %v1481 = vpop.f32.mrf.mxu0
    %v1482 = vadd.f32 0.0, %v1481
    %v1483 = vpop.f32.mrf.mxu0
    %v1484 = vadd.f32 0.0, %v1483
    %1485 = vmatprep.mubr.f32.mxu0 %v1078
    %1486 = vmatmul.mubr.f32.gmra.mxu0 %v1077
    %v1487 = vpop.f32.mrf.mxu0
    %v1488 = vadd.f32 0.0, %v1487
    %v1489 = vpop.f32.mrf.mxu0
    %v1490 = vadd.f32 0.0, %v1489
    %1491 = vmatprep.mubr.f32.mxu0 %v1080
    %1492 = vmatmul.mubr.f32.gmra.mxu0 %v1079
    %v1493 = vpop.f32.mrf.mxu0
    %v1494 = vadd.f32 0.0, %v1493
    %v1495 = vpop.f32.mrf.mxu0
    %v1496 = vadd.f32 0.0, %v1495
    %1497 = vmatprep.mubr.f32.mxu0 %v1082
    %1498 = vmatmul.mubr.f32.gmra.mxu0 %v1081
    %v1499 = vpop.f32.mrf.mxu0
    %v1500 = vadd.f32 0.0, %v1499
    %v1501 = vpop.f32.mrf.mxu0
    %v1502 = vadd.f32 0.0, %v1501
    %1503 = vmatprep.mubr.f32.mxu0 %v1084
    %1504 = vmatmul.mubr.f32.gmra.mxu0 %v1083
    %v1505 = vpop.f32.mrf.mxu0
    %v1506 = vadd.f32 0.0, %v1505
    %v1507 = vpop.f32.mrf.mxu0
    %v1508 = vadd.f32 0.0, %v1507
    %1509 = vmatprep.mubr.f32.mxu0 %v1086
    %1510 = vmatmul.mubr.f32.gmra.mxu0 %v1085
    %v1511 = vpop.f32.mrf.mxu0
    %v1512 = vadd.f32 0.0, %v1511
    %v1513 = vpop.f32.mrf.mxu0
    %v1514 = vadd.f32 0.0, %v1513
    %1515 = vmatprep.mubr.f32.mxu0 %v1088
    %1516 = vmatmul.mubr.f32.gmra.mxu0 %v1087
    %v1517 = vpop.f32.mrf.mxu0
    %v1518 = vadd.f32 0.0, %v1517
    %v1519 = vpop.f32.mrf.mxu0
    %v1520 = vadd.f32 0.0, %v1519
    %1521 = vmatprep.mubr.f32.mxu0 %v1090
    %1522 = vmatmul.mubr.f32.gmra.mxu0 %v1089
    %v1523 = vpop.f32.mrf.mxu0
    %v1524 = vadd.f32 0.0, %v1523
    %v1525 = vpop.f32.mrf.mxu0
    %v1526 = vadd.f32 0.0, %v1525
    %1527 = vmatprep.mubr.f32.mxu0 %v1092
    %1528 = vmatmul.mubr.f32.gmra.mxu0 %v1091
    %v1529 = vpop.f32.mrf.mxu0
    %v1530 = vadd.f32 0.0, %v1529
    %v1531 = vpop.f32.mrf.mxu0
    %v1532 = vadd.f32 0.0, %v1531
    %1533 = vmatprep.mubr.f32.mxu0 %v1094
    %1534 = vmatmul.mubr.f32.gmra.mxu0 %v1093
    %v1535 = vpop.f32.mrf.mxu0
    %v1536 = vadd.f32 0.0, %v1535
    %v1537 = vpop.f32.mrf.mxu0
    %v1538 = vadd.f32 0.0, %v1537
    %1539 = vmatprep.mubr.f32.mxu0 %v1096
    %1540 = vmatmul.mubr.f32.gmra.mxu0 %v1095
    %v1541 = vpop.f32.mrf.mxu0
    %v1542 = vadd.f32 0.0, %v1541
    %v1543 = vpop.f32.mrf.mxu0
    %v1544 = vadd.f32 0.0, %v1543
    %1545 = vmatprep.mubr.f32.mxu0 %v1098
    %1546 = vmatmul.mubr.f32.gmra.mxu0 %v1097
    %v1547 = vpop.f32.mrf.mxu0
    %v1548 = vadd.f32 0.0, %v1547
    %v1549 = vpop.f32.mrf.mxu0
    %v1550 = vadd.f32 0.0, %v1549
    %1551 = vmatprep.mubr.f32.mxu0 %v1100
    %1552 = vmatmul.mubr.f32.gmra.mxu0 %v1099
    %v1553 = vpop.f32.mrf.mxu0
    %v1554 = vadd.f32 0.0, %v1553
    %v1555 = vpop.f32.mrf.mxu0
    %v1556 = vadd.f32 0.0, %v1555
    %1557 = vmatprep.mubr.f32.mxu0 %v1102
    %1558 = vmatmul.mubr.f32.gmra.mxu0 %v1101
    %v1559 = vpop.f32.mrf.mxu0
    %v1560 = vadd.f32 0.0, %v1559
    %v1561 = vpop.f32.mrf.mxu0
    %v1562 = vadd.f32 0.0, %v1561
    %1563 = vmatprep.mubr.f32.mxu0 %v1104
    %1564 = vmatmul.mubr.f32.gmra.mxu0 %v1103
    %v1565 = vpop.f32.mrf.mxu0
    %v1566 = vadd.f32 0.0, %v1565
    %v1567 = vpop.f32.mrf.mxu0
    %v1568 = vadd.f32 0.0, %v1567
    %1569 = vmatprep.mubr.f32.mxu0 %v1106
    %1570 = vmatmul.mubr.f32.gmra.mxu0 %v1105
    %v1571 = vpop.f32.mrf.mxu0
    %v1572 = vadd.f32 0.0, %v1571
    %v1573 = vpop.f32.mrf.mxu0
    %v1574 = vadd.f32 0.0, %v1573
    %1575 = vmatprep.mubr.f32.mxu0 %v1108
    %1576 = vmatmul.mubr.f32.gmra.mxu0 %v1107
    %v1577 = vpop.f32.mrf.mxu0
    %v1578 = vadd.f32 0.0, %v1577
    %v1579 = vpop.f32.mrf.mxu0
    %v1580 = vadd.f32 0.0, %v1579
    %1581 = vmatprep.mubr.f32.mxu0 %v1110
    %1582 = vmatmul.mubr.f32.gmra.mxu0 %v1109
    %v1583 = vpop.f32.mrf.mxu0
    %v1584 = vadd.f32 0.0, %v1583
    %v1585 = vpop.f32.mrf.mxu0
    %v1586 = vadd.f32 0.0, %v1585
    %1587 = vmatprep.mubr.f32.mxu0 %v1112
    %1588 = vmatmul.mubr.f32.gmra.mxu0 %v1111
    %v1589 = vpop.f32.mrf.mxu0
    %v1590 = vadd.f32 0.0, %v1589
    %v1591 = vpop.f32.mrf.mxu0
    %v1592 = vadd.f32 0.0, %v1591
    %1593 = vmatprep.mubr.f32.mxu0 %v1114
    %1594 = vmatmul.mubr.f32.gmra.mxu0 %v1113
    %v1595 = vpop.f32.mrf.mxu0
    %v1596 = vadd.f32 0.0, %v1595
    %v1597 = vpop.f32.mrf.mxu0
    %v1598 = vadd.f32 0.0, %v1597
    %1599 = vmatprep.mubr.f32.mxu0 %v1116
    %1600 = vmatmul.mubr.f32.gmra.mxu0 %v1115
    %v1601 = vpop.f32.mrf.mxu0
    %v1602 = vadd.f32 0.0, %v1601
    %v1603 = vpop.f32.mrf.mxu0
    %v1604 = vadd.f32 0.0, %v1603
    %1605 = vmatprep.mubr.f32.mxu0 %v1118
    %1606 = vmatmul.mubr.f32.gmra.mxu0 %v1117
    %v1607 = vpop.f32.mrf.mxu0
    %v1608 = vadd.f32 0.0, %v1607
    %v1609 = vpop.f32.mrf.mxu0
    %v1610 = vadd.f32 0.0, %v1609
    %1611 = vmatprep.mubr.f32.mxu0 %v1120
    %1612 = vmatmul.mubr.f32.gmra.mxu0 %v1119
    %v1613 = vpop.f32.mrf.mxu0
    %v1614 = vadd.f32 0.0, %v1613
    %v1615 = vpop.f32.mrf.mxu0
    %v1616 = vadd.f32 0.0, %v1615
    %1617 = vmatprep.mubr.f32.mxu0 %v1122
    %1618 = vmatmul.mubr.f32.gmra.mxu0 %v1121
    %v1619 = vpop.f32.mrf.mxu0
    %v1620 = vadd.f32 0.0, %v1619
    %v1621 = vpop.f32.mrf.mxu0
    %v1622 = vadd.f32 0.0, %v1621
    %1623 = vmatprep.mubr.f32.mxu0 %v1124
    %1624 = vmatmul.mubr.f32.gmra.mxu0 %v1123
    %v1625 = vpop.f32.mrf.mxu0
    %v1626 = vadd.f32 0.0, %v1625
    %v1627 = vpop.f32.mrf.mxu0
    %v1628 = vadd.f32 0.0, %v1627
    %1629 = vmatprep.mubr.f32.mxu0 %v1126
    %1630 = vmatmul.mubr.f32.gmra.mxu0 %v1125
    %v1631 = vpop.f32.mrf.mxu0
    %v1632 = vadd.f32 0.0, %v1631
    %v1633 = vpop.f32.mrf.mxu0
    %v1634 = vadd.f32 0.0, %v1633
    %1635 = vmatprep.mubr.f32.mxu0 %v1128
    %1636 = vmatmul.mubr.f32.gmra.mxu0 %v1127
    %v1637 = vpop.f32.mrf.mxu0
    %v1638 = vadd.f32 0.0, %v1637
    %v1639 = vpop.f32.mrf.mxu0
    %v1640 = vadd.f32 0.0, %v1639
    %1641 = vmatprep.mubr.f32.mxu0 %v1130
    %1642 = vmatmul.mubr.f32.gmra.mxu0 %v1129
    %v1643 = vpop.f32.mrf.mxu0
    %v1644 = vadd.f32 0.0, %v1643
    %v1645 = vpop.f32.mrf.mxu0
    %v1646 = vadd.f32 0.0, %v1645
    %1647 = vmatprep.mubr.f32.mxu0 %v1132
    %1648 = vmatmul.mubr.f32.gmra.mxu0 %v1131
    %v1649 = vpop.f32.mrf.mxu0
    %v1650 = vadd.f32 0.0, %v1649
    %v1651 = vpop.f32.mrf.mxu0
    %v1652 = vadd.f32 0.0, %v1651
    %1653 = vmatprep.mubr.f32.mxu0 %v1134
    %1654 = vmatmul.mubr.f32.gmra.mxu0 %v1133
    %v1655 = vpop.f32.mrf.mxu0
    %v1656 = vadd.f32 0.0, %v1655
    %v1657 = vpop.f32.mrf.mxu0
    %v1658 = vadd.f32 0.0, %v1657
    %1659 = vmatprep.mubr.f32.mxu0 %v1136
    %1660 = vmatmul.mubr.f32.gmra.mxu0 %v1135
    %v1661 = vpop.f32.mrf.mxu0
    %v1662 = vadd.f32 0.0, %v1661
    %v1663 = vpop.f32.mrf.mxu0
    %v1664 = vadd.f32 0.0, %v1663
    %1665 = vmatprep.mubr.f32.mxu0 %v1138
    %1666 = vmatmul.mubr.f32.gmra.mxu0 %v1137
    %v1667 = vpop.f32.mrf.mxu0
    %v1668 = vadd.f32 0.0, %v1667
    %v1669 = vpop.f32.mrf.mxu0
    %v1670 = vadd.f32 0.0, %v1669
    %1671 = vmatprep.mubr.f32.mxu0 %v1140
    %1672 = vmatmul.mubr.f32.gmra.mxu0 %v1139
    %v1673 = vpop.f32.mrf.mxu0
    %v1674 = vadd.f32 0.0, %v1673
    %v1675 = vpop.f32.mrf.mxu0
    %v1676 = vadd.f32 0.0, %v1675
    %1677 = vmatprep.mubr.f32.mxu0 %v1142
    %1678 = vmatmul.mubr.f32.gmra.mxu0 %v1141
    %v1679 = vpop.f32.mrf.mxu0
    %v1680 = vadd.f32 0.0, %v1679
    %v1681 = vpop.f32.mrf.mxu0
    %v1682 = vadd.f32 0.0, %v1681
    %1683 = vmatprep.mubr.f32.mxu0 %v1144
    %1684 = vmatmul.mubr.f32.gmra.mxu0 %v1143
    %v1685 = vpop.f32.mrf.mxu0
    %v1686 = vadd.f32 0.0, %v1685
    %v1687 = vpop.f32.mrf.mxu0
    %v1688 = vadd.f32 0.0, %v1687
    %1689 = vmatprep.mubr.f32.mxu0 %v1146
    %1690 = vmatmul.mubr.f32.gmra.mxu0 %v1145
    %v1691 = vpop.f32.mrf.mxu0
    %v1692 = vadd.f32 0.0, %v1691
    %v1693 = vpop.f32.mrf.mxu0
    %v1694 = vadd.f32 0.0, %v1693
    %1695 = vmatprep.mubr.f32.mxu0 %v1148
    %1696 = vmatmul.mubr.f32.gmra.mxu0 %v1147
    %v1697 = vpop.f32.mrf.mxu0
    %v1698 = vadd.f32 0.0, %v1697
    %v1699 = vpop.f32.mrf.mxu0
    %v1700 = vadd.f32 0.0, %v1699
    %1701 = vmatprep.mubr.f32.mxu0 %v1150
    %1702 = vmatmul.mubr.f32.gmra.mxu0 %v1149
    %v1703 = vpop.f32.mrf.mxu0
    %v1704 = vadd.f32 0.0, %v1703
    %v1705 = vpop.f32.mrf.mxu0
    %v1706 = vadd.f32 0.0, %v1705
    %1707 = vmatprep.mubr.f32.mxu0 %v1152
    %1708 = vmatmul.mubr.f32.gmra.mxu0 %v1151
    %v1709 = vpop.f32.mrf.mxu0
    %v1710 = vadd.f32 0.0, %v1709
    %v1711 = vpop.f32.mrf.mxu0
    %v1712 = vadd.f32 0.0, %v1711
    %1713 = vmatprep.mubr.f32.mxu0 %v1154
    %1714 = vmatmul.mubr.f32.gmra.mxu0 %v1153
    %v1715 = vpop.f32.mrf.mxu0
    %v1716 = vadd.f32 0.0, %v1715
    %v1717 = vpop.f32.mrf.mxu0
    %v1718 = vadd.f32 0.0, %v1717
    %1719 = vmatprep.mubr.f32.mxu0 %v1156
    %1720 = vmatmul.mubr.f32.gmra.mxu0 %v1155
    %v1721 = vpop.f32.mrf.mxu0
    %v1722 = vadd.f32 0.0, %v1721
    %v1723 = vpop.f32.mrf.mxu0
    %v1724 = vadd.f32 0.0, %v1723
    %1725 = vmatprep.mubr.f32.mxu0 %v1158
    %1726 = vmatmul.mubr.f32.gmra.mxu0 %v1157
    %v1727 = vpop.f32.mrf.mxu0
    %v1728 = vadd.f32 0.0, %v1727
    %v1729 = vpop.f32.mrf.mxu0
    %v1730 = vadd.f32 0.0, %v1729
    %1731 = vmatprep.mubr.f32.mxu0 %v1160
    %1732 = vmatmul.mubr.f32.gmra.mxu0 %v1159
    %v1733 = vpop.f32.mrf.mxu0
    %v1734 = vadd.f32 0.0, %v1733
    %v1735 = vpop.f32.mrf.mxu0
    %v1736 = vadd.f32 0.0, %v1735
    %1737 = vmatprep.mubr.f32.mxu0 %v1162
    %1738 = vmatmul.mubr.f32.gmra.mxu0 %v1161
    %v1739 = vpop.f32.mrf.mxu0
    %v1740 = vadd.f32 0.0, %v1739
    %v1741 = vpop.f32.mrf.mxu0
    %v1742 = vadd.f32 0.0, %v1741
    %1743 = vmatprep.mubr.f32.mxu0 %v1164
    %1744 = vmatmul.mubr.f32.gmra.mxu0 %v1163
    %v1745 = vpop.f32.mrf.mxu0
    %v1746 = vadd.f32 0.0, %v1745
    %v1747 = vpop.f32.mrf.mxu0
    %v1748 = vadd.f32 0.0, %v1747
    %1749 = vmatprep.mubr.f32.mxu0 %v1166
    %1750 = vmatmul.mubr.f32.gmra.mxu0 %v1165
    %v1751 = vpop.f32.mrf.mxu0
    %v1752 = vadd.f32 0.0, %v1751
    %v1753 = vpop.f32.mrf.mxu0
    %v1754 = vadd.f32 0.0, %v1753
    %1755 = vmatprep.mubr.f32.mxu0 %v1168
    %1756 = vmatmul.mubr.f32.gmra.mxu0 %v1167
    %v1757 = vpop.f32.mrf.mxu0
    %v1758 = vadd.f32 0.0, %v1757
    %v1759 = vpop.f32.mrf.mxu0
    %v1760 = vadd.f32 0.0, %v1759
    %1761 = vmatprep.mubr.f32.mxu0 %v1170
    %1762 = vmatmul.mubr.f32.gmra.mxu0 %v1169
    %v1763 = vpop.f32.mrf.mxu0
    %v1764 = vadd.f32 0.0, %v1763
    %v1765 = vpop.f32.mrf.mxu0
    %v1766 = vadd.f32 0.0, %v1765
    %1767 = vmatprep.mubr.f32.mxu0 %v1172
    %1768 = vmatmul.mubr.f32.gmra.mxu0 %v1171
    %v1769 = vpop.f32.mrf.mxu0
    %v1770 = vadd.f32 0.0, %v1769
    %v1771 = vpop.f32.mrf.mxu0
    %v1772 = vadd.f32 0.0, %v1771
    %1773 = vmatprep.mubr.f32.mxu0 %v1174
    %1774 = vmatmul.mubr.f32.gmra.mxu0 %v1173
    %v1775 = vpop.f32.mrf.mxu0
    %v1776 = vadd.f32 0.0, %v1775
    %v1777 = vpop.f32.mrf.mxu0
    %v1778 = vadd.f32 0.0, %v1777
    %1779 = vmatprep.mubr.f32.mxu0 %v1176
    %1780 = vmatmul.mubr.f32.gmra.mxu0 %v1175
    %v1781 = vpop.f32.mrf.mxu0
    %v1782 = vadd.f32 0.0, %v1781
    %v1783 = vpop.f32.mrf.mxu0
    %v1784 = vadd.f32 0.0, %v1783
    %1785 = vmatprep.mubr.f32.mxu0 %v1178
    %1786 = vmatmul.mubr.f32.gmra.mxu0 %v1177
    %v1787 = vpop.f32.mrf.mxu0
    %v1788 = vadd.f32 0.0, %v1787
    %v1789 = vpop.f32.mrf.mxu0
    %v1790 = vadd.f32 0.0, %v1789
    %1791 = vmatprep.mubr.f32.mxu0 %v1180
    %1792 = vmatmul.mubr.f32.gmra.mxu0 %v1179
    %v1793 = vpop.f32.mrf.mxu0
    %v1794 = vadd.f32 0.0, %v1793
    %v1795 = vpop.f32.mrf.mxu0
    %v1796 = vadd.f32 0.0, %v1795
    %1797 = vmatprep.mubr.f32.mxu0 %v1182
    %1798 = vmatmul.mubr.f32.gmra.mxu0 %v1181
    %v1799 = vpop.f32.mrf.mxu0
    %v1800 = vadd.f32 0.0, %v1799
    %v1801 = vpop.f32.mrf.mxu0
    %v1802 = vadd.f32 0.0, %v1801
    %1803 = vmatprep.mubr.f32.mxu0 %v1184
    %1804 = vmatmul.mubr.f32.gmra.mxu0 %v1183
    %v1805 = vpop.f32.mrf.mxu0
    %v1806 = vadd.f32 0.0, %v1805
    %v1807 = vpop.f32.mrf.mxu0
    %v1808 = vadd.f32 0.0, %v1807
    %1809 = vmatprep.mubr.f32.mxu0 %v1186
    %1810 = vmatmul.mubr.f32.gmra.mxu0 %v1185
    %v1811 = vpop.f32.mrf.mxu0
    %v1812 = vadd.f32 0.0, %v1811
    %v1813 = vpop.f32.mrf.mxu0
    %v1814 = vadd.f32 0.0, %v1813
    %1815 = vmatprep.mubr.f32.mxu0 %v1188
    %1816 = vmatmul.mubr.f32.gmra.mxu0 %v1187
    %v1817 = vpop.f32.mrf.mxu0
    %v1818 = vadd.f32 0.0, %v1817
    %v1819 = vpop.f32.mrf.mxu0
    %v1820 = vadd.f32 0.0, %v1819
    %1821 = vmatprep.mubr.f32.mxu0 %v1190
    %1822 = vmatmul.mubr.f32.gmra.mxu0 %v1189
    %v1823 = vpop.f32.mrf.mxu0
    %v1824 = vadd.f32 0.0, %v1823
    %v1825 = vpop.f32.mrf.mxu0
    %v1826 = vadd.f32 0.0, %v1825
    %1827 = vmatprep.mubr.f32.mxu0 %v1192
    %1828 = vmatmul.mubr.f32.gmra.mxu0 %v1191
    %v1829 = vpop.f32.mrf.mxu0
    %v1830 = vadd.f32 0.0, %v1829
    %v1831 = vpop.f32.mrf.mxu0
    %v1832 = vadd.f32 0.0, %v1831
    %1833 = vmatprep.mubr.f32.mxu0 %v1194
    %1834 = vmatmul.mubr.f32.gmra.mxu0 %v1193
    %v1835 = vpop.f32.mrf.mxu0
    %v1836 = vadd.f32 0.0, %v1835
    %v1837 = vpop.f32.mrf.mxu0
    %v1838 = vadd.f32 0.0, %v1837
    %1839 = vmatprep.mubr.f32.mxu0 %v1196
    %1840 = vmatmul.mubr.f32.gmra.mxu0 %v1195
    %v1841 = vpop.f32.mrf.mxu0
    %v1842 = vadd.f32 0.0, %v1841
    %v1843 = vpop.f32.mrf.mxu0
    %v1844 = vadd.f32 0.0, %v1843
    %1845 = vmatprep.mubr.f32.mxu0 %v1198
    %1846 = vmatmul.mubr.f32.gmra.mxu0 %v1197
    %v1847 = vpop.f32.mrf.mxu0
    %v1848 = vadd.f32 0.0, %v1847
    %v1849 = vpop.f32.mrf.mxu0
    %v1850 = vadd.f32 0.0, %v1849
    %1851 = vmatprep.mubr.f32.mxu0 %v1200
    %1852 = vmatmul.mubr.f32.gmra.mxu0 %v1199
    %v1853 = vpop.f32.mrf.mxu0
    %v1854 = vadd.f32 0.0, %v1853
    %v1855 = vpop.f32.mrf.mxu0
    %v1856 = vadd.f32 0.0, %v1855
    %1857 = vmatprep.mubr.f32.mxu0 %v1202
    %1858 = vmatmul.mubr.f32.gmra.mxu0 %v1201
    %v1859 = vpop.f32.mrf.mxu0
    %v1860 = vadd.f32 0.0, %v1859
    %v1861 = vpop.f32.mrf.mxu0
    %v1862 = vadd.f32 0.0, %v1861
    %1863 = vmatprep.mubr.f32.mxu0 %v1204
    %1864 = vmatmul.mubr.f32.gmra.mxu0 %v1203
    %v1865 = vpop.f32.mrf.mxu0
    %v1866 = vadd.f32 0.0, %v1865
    %v1867 = vpop.f32.mrf.mxu0
    %v1868 = vadd.f32 0.0, %v1867
    %1869 = vmatprep.mubr.f32.mxu0 %v1206
    %1870 = vmatmul.mubr.f32.gmra.mxu0 %v1205
    %v1871 = vpop.f32.mrf.mxu0
    %v1872 = vadd.f32 0.0, %v1871
    %v1873 = vpop.f32.mrf.mxu0
    %v1874 = vadd.f32 0.0, %v1873
    %1875 = vmatprep.mubr.f32.mxu0 %v1208
    %1876 = vmatmul.mubr.f32.gmra.mxu0 %v1207
    %v1877 = vpop.f32.mrf.mxu0
    %v1878 = vadd.f32 0.0, %v1877
    %v1879 = vpop.f32.mrf.mxu0
    %v1880 = vadd.f32 0.0, %v1879
    %1881 = vmatprep.mubr.f32.mxu0 %v1210
    %1882 = vmatmul.mubr.f32.gmra.mxu0 %v1209
    %v1883 = vpop.f32.mrf.mxu0
    %v1884 = vadd.f32 0.0, %v1883
    %v1885 = vpop.f32.mrf.mxu0
    %v1886 = vadd.f32 0.0, %v1885
    %1887 = vmatprep.mubr.f32.mxu0 %v1212
    %1888 = vmatmul.mubr.f32.gmra.mxu0 %v1211
    %v1889 = vpop.f32.mrf.mxu0
    %v1890 = vadd.f32 0.0, %v1889
    %v1891 = vpop.f32.mrf.mxu0
    %v1892 = vadd.f32 0.0, %v1891
    %1893 = vmatprep.mubr.f32.mxu0 %v1214
    %1894 = vmatmul.mubr.f32.gmra.mxu0 %v1213
    %v1895 = vpop.f32.mrf.mxu0
    %v1896 = vadd.f32 0.0, %v1895
    %v1897 = vpop.f32.mrf.mxu0
    %v1898 = vadd.f32 0.0, %v1897
    %1899 = vmatprep.mubr.f32.mxu0 %v1216
    %1900 = vmatmul.mubr.f32.gmra.mxu0 %v1215
    %v1901 = vpop.f32.mrf.mxu0
    %v1902 = vadd.f32 0.0, %v1901
    %v1903 = vpop.f32.mrf.mxu0
    %v1904 = vadd.f32 0.0, %v1903
    %1905 = vmatprep.mubr.f32.mxu0 %v1218
    %1906 = vmatmul.mubr.f32.gmra.mxu0 %v1217
    %v1907 = vpop.f32.mrf.mxu0
    %v1908 = vadd.f32 0.0, %v1907
    %v1909 = vpop.f32.mrf.mxu0
    %v1910 = vadd.f32 0.0, %v1909
    %1911 = vmatprep.mubr.f32.mxu0 %v1220
    %1912 = vmatmul.mubr.f32.gmra.mxu0 %v1219
    %v1913 = vpop.f32.mrf.mxu0
    %v1914 = vadd.f32 0.0, %v1913
    %v1915 = vpop.f32.mrf.mxu0
    %v1916 = vadd.f32 0.0, %v1915
    %1917 = vmatprep.mubr.f32.mxu0 %v1222
    %1918 = vmatmul.mubr.f32.gmra.mxu0 %v1221
    %v1919 = vpop.f32.mrf.mxu0
    %v1920 = vadd.f32 0.0, %v1919
    %v1921 = vpop.f32.mrf.mxu0
    %v1922 = vadd.f32 0.0, %v1921
    %1923 = vmatprep.mubr.f32.mxu0 %v1224
    %1924 = vmatmul.mubr.f32.gmra.mxu0 %v1223
    %v1925 = vpop.f32.mrf.mxu0
    %v1926 = vadd.f32 0.0, %v1925
    %v1927 = vpop.f32.mrf.mxu0
    %v1928 = vadd.f32 0.0, %v1927
    %1929 = vmatprep.mubr.f32.mxu0 %v1226
    %1930 = vmatmul.mubr.f32.gmra.mxu0 %v1225
    %v1931 = vpop.f32.mrf.mxu0
    %v1932 = vadd.f32 0.0, %v1931
    %v1933 = vpop.f32.mrf.mxu0
    %v1934 = vadd.f32 0.0, %v1933
    %1935 = vmatprep.mubr.f32.mxu0 %v1228
    %1936 = vmatmul.mubr.f32.gmra.mxu0 %v1227
    %v1937 = vpop.f32.mrf.mxu0
    %v1938 = vadd.f32 0.0, %v1937
    %v1939 = vpop.f32.mrf.mxu0
    %v1940 = vadd.f32 0.0, %v1939
    %1941 = vmatprep.mubr.f32.mxu0 %v1230
    %1942 = vmatmul.mubr.f32.gmra.mxu0 %v1229
    %v1943 = vpop.f32.mrf.mxu0
    %v1944 = vadd.f32 0.0, %v1943
    %v1945 = vpop.f32.mrf.mxu0
    %v1946 = vadd.f32 0.0, %v1945
    %1947 = vmatprep.mubr.f32.mxu0 %v1232
    %1948 = vmatmul.mubr.f32.gmra.mxu0 %v1231
    %v1949 = vpop.f32.mrf.mxu0
    %v1950 = vadd.f32 0.0, %v1949
    %v1951 = vpop.f32.mrf.mxu0
    %v1952 = vadd.f32 0.0, %v1951
    %1953 = vmatprep.mubr.f32.mxu0 %v1234
    %1954 = vmatmul.mubr.f32.gmra.mxu0 %v1233
    %v1955 = vpop.f32.mrf.mxu0
    %v1956 = vadd.f32 0.0, %v1955
    %v1957 = vpop.f32.mrf.mxu0
    %v1958 = vadd.f32 0.0, %v1957
    %1959 = vmatprep.mubr.f32.mxu0 %v1236
    %1960 = vmatmul.mubr.f32.gmra.mxu0 %v1235
    %v1961 = vpop.f32.mrf.mxu0
    %v1962 = vadd.f32 0.0, %v1961
    %v1963 = vpop.f32.mrf.mxu0
    %v1964 = vadd.f32 0.0, %v1963
    %1965 = vmatprep.mubr.f32.mxu0 %v1238
    %1966 = vmatmul.mubr.f32.gmra.mxu0 %v1237
    %v1967 = vpop.f32.mrf.mxu0
    %v1968 = vadd.f32 0.0, %v1967
    %v1969 = vpop.f32.mrf.mxu0
    %v1970 = vadd.f32 0.0, %v1969
    %1971 = vmatprep.mubr.f32.mxu0 %v1240
    %1972 = vmatmul.mubr.f32.gmra.mxu0 %v1239
    %v1973 = vpop.f32.mrf.mxu0
    %v1974 = vadd.f32 0.0, %v1973
    %v1975 = vpop.f32.mrf.mxu0
    %v1976 = vadd.f32 0.0, %v1975
    %1977 = vmatprep.mubr.f32.mxu0 %v1242
    %1978 = vmatmul.mubr.f32.gmra.mxu0 %v1241
    %v1979 = vpop.f32.mrf.mxu0
    %v1980 = vadd.f32 0.0, %v1979
    %v1981 = vpop.f32.mrf.mxu0
    %v1982 = vadd.f32 0.0, %v1981
    %1983 = vmatprep.mubr.f32.mxu0 %v1244
    %1984 = vmatmul.mubr.f32.gmra.mxu0 %v1243
    %v1985 = vpop.f32.mrf.mxu0
    %v1986 = vadd.f32 0.0, %v1985
    %v1987 = vpop.f32.mrf.mxu0
    %v1988 = vadd.f32 0.0, %v1987
    %1989 = vmatprep.mubr.f32.mxu0 %v1246
    %1990 = vmatmul.mubr.f32.gmra.mxu0 %v1245
    %v1991 = vpop.f32.mrf.mxu0
    %v1992 = vadd.f32 0.0, %v1991
    %v1993 = vpop.f32.mrf.mxu0
    %v1994 = vadd.f32 0.0, %v1993
    %1995 = vmatprep.mubr.f32.mxu0 %v1248
    %1996 = vmatmul.mubr.f32.gmra.mxu0 %v1247
    %v1997 = vpop.f32.mrf.mxu0
    %v1998 = vadd.f32 0.0, %v1997
    %v1999 = vpop.f32.mrf.mxu0
    %v2000 = vadd.f32 0.0, %v1999
    %2001 = vmatprep.mubr.f32.mxu0 %v1250
    %2002 = vmatmul.mubr.f32.gmra.mxu0 %v1249
    %v2003 = vpop.f32.mrf.mxu0
    %v2004 = vadd.f32 0.0, %v2003
    %v2005 = vpop.f32.mrf.mxu0
    %v2006 = vadd.f32 0.0, %v2005
    %2007 = vmatprep.mubr.f32.mxu0 %v1252
    %2008 = vmatmul.mubr.f32.gmra.mxu0 %v1251
    %v2009 = vpop.f32.mrf.mxu0
    %v2010 = vadd.f32 0.0, %v2009
    %v2011 = vpop.f32.mrf.mxu0
    %v2012 = vadd.f32 0.0, %v2011
    %2013 = vmatprep.mubr.f32.mxu0 %v1254
    %2014 = vmatmul.mubr.f32.gmra.mxu0 %v1253
    %v2015 = vpop.f32.mrf.mxu0
    %v2016 = vadd.f32 0.0, %v2015
    %v2017 = vpop.f32.mrf.mxu0
    %v2018 = vadd.f32 0.0, %v2017
    %2019 = vmatprep.mubr.f32.mxu0 %v1256
    %2020 = vmatmul.mubr.f32.gmra.mxu0 %v1255
    %v2021 = vpop.f32.mrf.mxu0
    %v2022 = vadd.f32 0.0, %v2021
    %v2023 = vpop.f32.mrf.mxu0
    %v2024 = vadd.f32 0.0, %v2023
    %2025 = vmatprep.mubr.f32.mxu0 %v1258
    %2026 = vmatmul.mubr.f32.gmra.mxu0 %v1257
    %v2027 = vpop.f32.mrf.mxu0
    %v2028 = vadd.f32 0.0, %v2027
    %v2029 = vpop.f32.mrf.mxu0
    %v2030 = vadd.f32 0.0, %v2029
    %2031 = vmatprep.mubr.f32.mxu0 %v1260
    %2032 = vmatmul.mubr.f32.gmra.mxu0 %v1259
    %v2033 = vpop.f32.mrf.mxu0
    %v2034 = vadd.f32 0.0, %v2033
    %v2035 = vpop.f32.mrf.mxu0
    %v2036 = vadd.f32 0.0, %v2035
    %2037 = vmatprep.mubr.f32.mxu0 %v1262
    %2038 = vmatmul.mubr.f32.gmra.mxu0 %v1261
    %v2039 = vpop.f32.mrf.mxu0
    %v2040 = vadd.f32 0.0, %v2039
    %v2041 = vpop.f32.mrf.mxu0
    %v2042 = vadd.f32 0.0, %v2041
    %2043 = vmatprep.mubr.f32.mxu0 %v1264
    %2044 = vmatmul.mubr.f32.gmra.mxu0 %v1263
    %v2045 = vpop.f32.mrf.mxu0
    %v2046 = vadd.f32 0.0, %v2045
    %v2047 = vpop.f32.mrf.mxu0
    %v2048 = vadd.f32 0.0, %v2047
    %2049 = vmatprep.mubr.f32.mxu0 %v1266
    %2050 = vmatmul.mubr.f32.gmra.mxu0 %v1265
    %v2051 = vpop.f32.mrf.mxu0
    %v2052 = vadd.f32 0.0, %v2051
    %v2053 = vpop.f32.mrf.mxu0
    %v2054 = vadd.f32 0.0, %v2053
    %2055 = vmatprep.mubr.f32.mxu0 %v1268
    %2056 = vmatmul.mubr.f32.gmra.mxu0 %v1267
    %v2057 = vpop.f32.mrf.mxu0
    %v2058 = vadd.f32 0.0, %v2057
    %v2059 = vpop.f32.mrf.mxu0
    %v2060 = vadd.f32 0.0, %v2059
    %2061 = vmatprep.mubr.f32.mxu0 %v1270
    %2062 = vmatmul.mubr.f32.gmra.mxu0 %v1269
    %v2063 = vpop.f32.mrf.mxu0
    %v2064 = vadd.f32 0.0, %v2063
    %v2065 = vpop.f32.mrf.mxu0
    %v2066 = vadd.f32 0.0, %v2065
    %2067 = vmatprep.mubr.f32.mxu0 %v1272
    %2068 = vmatmul.mubr.f32.gmra.mxu0 %v1271
    %v2069 = vpop.f32.mrf.mxu0
    %v2070 = vadd.f32 0.0, %v2069
    %v2071 = vpop.f32.mrf.mxu0
    %v2072 = vadd.f32 0.0, %v2071
    %2073 = vmatprep.mubr.f32.mxu0 %v1274
    %2074 = vmatmul.mubr.f32.gmra.mxu0 %v1273
    %v2075 = vpop.f32.mrf.mxu0
    %v2076 = vadd.f32 0.0, %v2075
    %v2077 = vpop.f32.mrf.mxu0
    %v2078 = vadd.f32 0.0, %v2077
    %2079 = vmatprep.mubr.f32.mxu0 %v1276
    %2080 = vmatmul.mubr.f32.gmra.mxu0 %v1275
    %v2081 = vpop.f32.mrf.mxu0
    %v2082 = vadd.f32 0.0, %v2081
    %v2083 = vpop.f32.mrf.mxu0
    %v2084 = vadd.f32 0.0, %v2083
    %2085 = vmatprep.mubr.f32.mxu0 %v1278
    %2086 = vmatmul.mubr.f32.gmra.mxu0 %v1277
    %v2087 = vpop.f32.mrf.mxu0
    %v2088 = vadd.f32 0.0, %v2087
    %v2089 = vpop.f32.mrf.mxu0
    %v2090 = vadd.f32 0.0, %v2089
    %2091 = vmatprep.mubr.f32.mxu0 %v1280
    %2092 = vmatmul.mubr.f32.gmra.mxu0 %v1279
    %v2093 = vpop.f32.mrf.mxu0
    %v2094 = vadd.f32 0.0, %v2093
    %v2095 = vpop.f32.mrf.mxu0
    %v2096 = vadd.f32 0.0, %v2095
    %2097 = vmatprep.mubr.f32.mxu0 %v1282
    %2098 = vmatmul.mubr.f32.gmra.mxu0 %v1281
    %v2099 = vpop.f32.mrf.mxu0
    %v2100 = vadd.f32 0.0, %v2099
    %v2101 = vpop.f32.mrf.mxu0
    %v2102 = vadd.f32 0.0, %v2101
    %2103 = vmatprep.mubr.f32.mxu0 %v1284
    %2104 = vmatmul.mubr.f32.gmra.mxu0 %v1283
    %v2105 = vpop.f32.mrf.mxu0
    %v2106 = vadd.f32 0.0, %v2105
    %v2107 = vpop.f32.mrf.mxu0
    %v2108 = vadd.f32 0.0, %v2107
    %2109 = vmatprep.mubr.f32.mxu0 %v1286
    %2110 = vmatmul.mubr.f32.gmra.mxu0 %v1285
    %v2111 = vpop.f32.mrf.mxu0
    %v2112 = vadd.f32 0.0, %v2111
    %v2113 = vpop.f32.mrf.mxu0
    %v2114 = vadd.f32 0.0, %v2113
    %2115 = vmatprep.mubr.f32.mxu0 %v1288
    %2116 = vmatmul.mubr.f32.gmra.mxu0 %v1287
    %v2117 = vpop.f32.mrf.mxu0
    %v2118 = vadd.f32 0.0, %v2117
    %v2119 = vpop.f32.mrf.mxu0
    %v2120 = vadd.f32 0.0, %v2119
    %2121 = vdwg.mxu0
    %v2122 = vlaneseq
    %v2123 = vshrl.u32 %v2122, 7
    %v2124 = vsub.s32 0, %v2123
    %v2125 = vrot.slane %v900, %v2124
    %2127 = vbcast.lane.b32.xlu0 %v2125, 256
    %v2128 = vpop.permute.xlu0 %2127
    %s2130 = sor.u32 256, 8
    %2131 = vbcast.lane.b32.xlu0 %v2125, %s2130
    %v2132 = vpop.permute.xlu0 %2131
    %s2134 = sor.u32 256, 16
    %2135 = vbcast.lane.b32.xlu0 %v2125, %s2134
    %v2136 = vpop.permute.xlu0 %2135
    %s2138 = sor.u32 256, 24
    %2139 = vbcast.lane.b32.xlu0 %v2125, %s2138
    %v2140 = vpop.permute.xlu0 %2139
    %s2142 = sor.u32 256, 32
    %2143 = vbcast.lane.b32.xlu0 %v2125, %s2142
    %v2144 = vpop.permute.xlu0 %2143
    %s2146 = sor.u32 256, 40
    %2147 = vbcast.lane.b32.xlu0 %v2125, %s2146
    %v2148 = vpop.permute.xlu0 %2147
    %s2150 = sor.u32 256, 48
    %2151 = vbcast.lane.b32.xlu0 %v2125, %s2150
    %v2152 = vpop.permute.xlu0 %2151
    %s2154 = sor.u32 256, 56
    %2155 = vbcast.lane.b32.xlu0 %v2125, %s2154
    %v2156 = vpop.permute.xlu0 %2155
    %s2158 = sor.u32 256, 64
    %2159 = vbcast.lane.b32.xlu0 %v2125, %s2158
    %v2160 = vpop.permute.xlu0 %2159
    %s2162 = sor.u32 256, 72
    %2163 = vbcast.lane.b32.xlu0 %v2125, %s2162
    %v2164 = vpop.permute.xlu0 %2163
    %s2166 = sor.u32 256, 80
    %2167 = vbcast.lane.b32.xlu0 %v2125, %s2166
    %v2168 = vpop.permute.xlu0 %2167
    %s2170 = sor.u32 256, 88
    %2171 = vbcast.lane.b32.xlu0 %v2125, %s2170
    %v2172 = vpop.permute.xlu0 %2171
    %s2174 = sor.u32 256, 96
    %2175 = vbcast.lane.b32.xlu0 %v2125, %s2174
    %v2176 = vpop.permute.xlu0 %2175
    %s2178 = sor.u32 256, 104
    %2179 = vbcast.lane.b32.xlu0 %v2125, %s2178
    %v2180 = vpop.permute.xlu0 %2179
    %s2182 = sor.u32 256, 112
    %2183 = vbcast.lane.b32.xlu0 %v2125, %s2182
    %v2184 = vpop.permute.xlu0 %2183
    %s2186 = sor.u32 256, 120
    %2187 = vbcast.lane.b32.xlu0 %v2125, %s2186
    %v2188 = vpop.permute.xlu0 %2187
    %v2189 = vlaneseq
    %v2190 = vshrl.u32 %v2189, 7
    %v2191 = vsub.s32 1, %v2190
    %v2192 = vrot.slane %v900, %v2191
    %2194 = vbcast.lane.b32.xlu0 %v2192, 256
    %v2195 = vpop.permute.xlu0 %2194
    %s2197 = sor.u32 256, 8
    %2198 = vbcast.lane.b32.xlu0 %v2192, %s2197
    %v2199 = vpop.permute.xlu0 %2198
    %s2201 = sor.u32 256, 16
    %2202 = vbcast.lane.b32.xlu0 %v2192, %s2201
    %v2203 = vpop.permute.xlu0 %2202
    %s2205 = sor.u32 256, 24
    %2206 = vbcast.lane.b32.xlu0 %v2192, %s2205
    %v2207 = vpop.permute.xlu0 %2206
    %s2209 = sor.u32 256, 32
    %2210 = vbcast.lane.b32.xlu0 %v2192, %s2209
    %v2211 = vpop.permute.xlu0 %2210
    %s2213 = sor.u32 256, 40
    %2214 = vbcast.lane.b32.xlu0 %v2192, %s2213
    %v2215 = vpop.permute.xlu0 %2214
    %s2217 = sor.u32 256, 48
    %2218 = vbcast.lane.b32.xlu0 %v2192, %s2217
    %v2219 = vpop.permute.xlu0 %2218
    %s2221 = sor.u32 256, 56
    %2222 = vbcast.lane.b32.xlu0 %v2192, %s2221
    %v2223 = vpop.permute.xlu0 %2222
    %s2225 = sor.u32 256, 64
    %2226 = vbcast.lane.b32.xlu0 %v2192, %s2225
    %v2227 = vpop.permute.xlu0 %2226
    %s2229 = sor.u32 256, 72
    %2230 = vbcast.lane.b32.xlu0 %v2192, %s2229
    %v2231 = vpop.permute.xlu0 %2230
    %s2233 = sor.u32 256, 80
    %2234 = vbcast.lane.b32.xlu0 %v2192, %s2233
    %v2235 = vpop.permute.xlu0 %2234
    %s2237 = sor.u32 256, 88
    %2238 = vbcast.lane.b32.xlu0 %v2192, %s2237
    %v2239 = vpop.permute.xlu0 %2238
    %s2241 = sor.u32 256, 96
    %2242 = vbcast.lane.b32.xlu0 %v2192, %s2241
    %v2243 = vpop.permute.xlu0 %2242
    %s2245 = sor.u32 256, 104
    %2246 = vbcast.lane.b32.xlu0 %v2192, %s2245
    %v2247 = vpop.permute.xlu0 %2246
    %s2249 = sor.u32 256, 112
    %2250 = vbcast.lane.b32.xlu0 %v2192, %s2249
    %v2251 = vpop.permute.xlu0 %2250
    %s2253 = sor.u32 256, 120
    %2254 = vbcast.lane.b32.xlu0 %v2192, %s2253
    %v2255 = vpop.permute.xlu0 %2254
    %v2256 = vlaneseq
    %v2257 = vshrl.u32 %v2256, 7
    %v2258 = vsub.s32 2, %v2257
    %v2259 = vrot.slane %v900, %v2258
    %2261 = vbcast.lane.b32.xlu0 %v2259, 256
    %v2262 = vpop.permute.xlu0 %2261
    %s2264 = sor.u32 256, 8
    %2265 = vbcast.lane.b32.xlu0 %v2259, %s2264
    %v2266 = vpop.permute.xlu0 %2265
    %s2268 = sor.u32 256, 16
    %2269 = vbcast.lane.b32.xlu0 %v2259, %s2268
    %v2270 = vpop.permute.xlu0 %2269
    %s2272 = sor.u32 256, 24
    %2273 = vbcast.lane.b32.xlu0 %v2259, %s2272
    %v2274 = vpop.permute.xlu0 %2273
    %s2276 = sor.u32 256, 32
    %2277 = vbcast.lane.b32.xlu0 %v2259, %s2276
    %v2278 = vpop.permute.xlu0 %2277
    %s2280 = sor.u32 256, 40
    %2281 = vbcast.lane.b32.xlu0 %v2259, %s2280
    %v2282 = vpop.permute.xlu0 %2281
    %s2284 = sor.u32 256, 48
    %2285 = vbcast.lane.b32.xlu0 %v2259, %s2284
    %v2286 = vpop.permute.xlu0 %2285
    %s2288 = sor.u32 256, 56
    %2289 = vbcast.lane.b32.xlu0 %v2259, %s2288
    %v2290 = vpop.permute.xlu0 %2289
    %s2292 = sor.u32 256, 64
    %2293 = vbcast.lane.b32.xlu0 %v2259, %s2292
    %v2294 = vpop.permute.xlu0 %2293
    %s2296 = sor.u32 256, 72
    %2297 = vbcast.lane.b32.xlu0 %v2259, %s2296
    %v2298 = vpop.permute.xlu0 %2297
    %s2300 = sor.u32 256, 80
    %2301 = vbcast.lane.b32.xlu0 %v2259, %s2300
    %v2302 = vpop.permute.xlu0 %2301
    %s2304 = sor.u32 256, 88
    %2305 = vbcast.lane.b32.xlu0 %v2259, %s2304
    %v2306 = vpop.permute.xlu0 %2305
    %s2308 = sor.u32 256, 96
    %2309 = vbcast.lane.b32.xlu0 %v2259, %s2308
    %v2310 = vpop.permute.xlu0 %2309
    %s2312 = sor.u32 256, 104
    %2313 = vbcast.lane.b32.xlu0 %v2259, %s2312
    %v2314 = vpop.permute.xlu0 %2313
    %s2316 = sor.u32 256, 112
    %2317 = vbcast.lane.b32.xlu0 %v2259, %s2316
    %v2318 = vpop.permute.xlu0 %2317
    %s2320 = sor.u32 256, 120
    %2321 = vbcast.lane.b32.xlu0 %v2259, %s2320
    %v2322 = vpop.permute.xlu0 %2321
    %v2323 = vlaneseq
    %v2324 = vshrl.u32 %v2323, 7
    %v2325 = vsub.s32 3, %v2324
    %v2326 = vrot.slane %v900, %v2325
    %2328 = vbcast.lane.b32.xlu0 %v2326, 256
    %v2329 = vpop.permute.xlu0 %2328
    %s2331 = sor.u32 256, 8
    %2332 = vbcast.lane.b32.xlu0 %v2326, %s2331
    %v2333 = vpop.permute.xlu0 %2332
    %s2335 = sor.u32 256, 16
    %2336 = vbcast.lane.b32.xlu0 %v2326, %s2335
    %v2337 = vpop.permute.xlu0 %2336
    %s2339 = sor.u32 256, 24
    %2340 = vbcast.lane.b32.xlu0 %v2326, %s2339
    %v2341 = vpop.permute.xlu0 %2340
    %s2343 = sor.u32 256, 32
    %2344 = vbcast.lane.b32.xlu0 %v2326, %s2343
    %v2345 = vpop.permute.xlu0 %2344
    %s2347 = sor.u32 256, 40
    %2348 = vbcast.lane.b32.xlu0 %v2326, %s2347
    %v2349 = vpop.permute.xlu0 %2348
    %s2351 = sor.u32 256, 48
    %2352 = vbcast.lane.b32.xlu0 %v2326, %s2351
    %v2353 = vpop.permute.xlu0 %2352
    %s2355 = sor.u32 256, 56
    %2356 = vbcast.lane.b32.xlu0 %v2326, %s2355
    %v2357 = vpop.permute.xlu0 %2356
    %s2359 = sor.u32 256, 64
    %2360 = vbcast.lane.b32.xlu0 %v2326, %s2359
    %v2361 = vpop.permute.xlu0 %2360
    %s2363 = sor.u32 256, 72
    %2364 = vbcast.lane.b32.xlu0 %v2326, %s2363
    %v2365 = vpop.permute.xlu0 %2364
    %s2367 = sor.u32 256, 80
    %2368 = vbcast.lane.b32.xlu0 %v2326, %s2367
    %v2369 = vpop.permute.xlu0 %2368
    %s2371 = sor.u32 256, 88
    %2372 = vbcast.lane.b32.xlu0 %v2326, %s2371
    %v2373 = vpop.permute.xlu0 %2372
    %s2375 = sor.u32 256, 96
    %2376 = vbcast.lane.b32.xlu0 %v2326, %s2375
    %v2377 = vpop.permute.xlu0 %2376
    %s2379 = sor.u32 256, 104
    %2380 = vbcast.lane.b32.xlu0 %v2326, %s2379
    %v2381 = vpop.permute.xlu0 %2380
    %s2383 = sor.u32 256, 112
    %2384 = vbcast.lane.b32.xlu0 %v2326, %s2383
    %v2385 = vpop.permute.xlu0 %2384
    %s2387 = sor.u32 256, 120
    %2388 = vbcast.lane.b32.xlu0 %v2326, %s2387
    %v2389 = vpop.permute.xlu0 %2388
    %v2390 = vlaneseq
    %v2391 = vshrl.u32 %v2390, 7
    %v2392 = vsub.s32 4, %v2391
    %v2393 = vrot.slane %v900, %v2392
    %2395 = vbcast.lane.b32.xlu0 %v2393, 256
    %v2396 = vpop.permute.xlu0 %2395
    %s2398 = sor.u32 256, 8
    %2399 = vbcast.lane.b32.xlu0 %v2393, %s2398
    %v2400 = vpop.permute.xlu0 %2399
    %s2402 = sor.u32 256, 16
    %2403 = vbcast.lane.b32.xlu0 %v2393, %s2402
    %v2404 = vpop.permute.xlu0 %2403
    %s2406 = sor.u32 256, 24
    %2407 = vbcast.lane.b32.xlu0 %v2393, %s2406
    %v2408 = vpop.permute.xlu0 %2407
    %s2410 = sor.u32 256, 32
    %2411 = vbcast.lane.b32.xlu0 %v2393, %s2410
    %v2412 = vpop.permute.xlu0 %2411
    %s2414 = sor.u32 256, 40
    %2415 = vbcast.lane.b32.xlu0 %v2393, %s2414
    %v2416 = vpop.permute.xlu0 %2415
    %s2418 = sor.u32 256, 48
    %2419 = vbcast.lane.b32.xlu0 %v2393, %s2418
    %v2420 = vpop.permute.xlu0 %2419
    %s2422 = sor.u32 256, 56
    %2423 = vbcast.lane.b32.xlu0 %v2393, %s2422
    %v2424 = vpop.permute.xlu0 %2423
    %s2426 = sor.u32 256, 64
    %2427 = vbcast.lane.b32.xlu0 %v2393, %s2426
    %v2428 = vpop.permute.xlu0 %2427
    %s2430 = sor.u32 256, 72
    %2431 = vbcast.lane.b32.xlu0 %v2393, %s2430
    %v2432 = vpop.permute.xlu0 %2431
    %s2434 = sor.u32 256, 80
    %2435 = vbcast.lane.b32.xlu0 %v2393, %s2434
    %v2436 = vpop.permute.xlu0 %2435
    %s2438 = sor.u32 256, 88
    %2439 = vbcast.lane.b32.xlu0 %v2393, %s2438
    %v2440 = vpop.permute.xlu0 %2439
    %s2442 = sor.u32 256, 96
    %2443 = vbcast.lane.b32.xlu0 %v2393, %s2442
    %v2444 = vpop.permute.xlu0 %2443
    %s2446 = sor.u32 256, 104
    %2447 = vbcast.lane.b32.xlu0 %v2393, %s2446
    %v2448 = vpop.permute.xlu0 %2447
    %s2450 = sor.u32 256, 112
    %2451 = vbcast.lane.b32.xlu0 %v2393, %s2450
    %v2452 = vpop.permute.xlu0 %2451
    %s2454 = sor.u32 256, 120
    %2455 = vbcast.lane.b32.xlu0 %v2393, %s2454
    %v2456 = vpop.permute.xlu0 %2455
    %v2457 = vlaneseq
    %v2458 = vshrl.u32 %v2457, 7
    %v2459 = vsub.s32 5, %v2458
    %v2460 = vrot.slane %v900, %v2459
    %2462 = vbcast.lane.b32.xlu0 %v2460, 256
    %v2463 = vpop.permute.xlu0 %2462
    %s2465 = sor.u32 256, 8
    %2466 = vbcast.lane.b32.xlu0 %v2460, %s2465
    %v2467 = vpop.permute.xlu0 %2466
    %s2469 = sor.u32 256, 16
    %2470 = vbcast.lane.b32.xlu0 %v2460, %s2469
    %v2471 = vpop.permute.xlu0 %2470
    %s2473 = sor.u32 256, 24
    %2474 = vbcast.lane.b32.xlu0 %v2460, %s2473
    %v2475 = vpop.permute.xlu0 %2474
    %s2477 = sor.u32 256, 32
    %2478 = vbcast.lane.b32.xlu0 %v2460, %s2477
    %v2479 = vpop.permute.xlu0 %2478
    %s2481 = sor.u32 256, 40
    %2482 = vbcast.lane.b32.xlu0 %v2460, %s2481
    %v2483 = vpop.permute.xlu0 %2482
    %s2485 = sor.u32 256, 48
    %2486 = vbcast.lane.b32.xlu0 %v2460, %s2485
    %v2487 = vpop.permute.xlu0 %2486
    %s2489 = sor.u32 256, 56
    %2490 = vbcast.lane.b32.xlu0 %v2460, %s2489
    %v2491 = vpop.permute.xlu0 %2490
    %s2493 = sor.u32 256, 64
    %2494 = vbcast.lane.b32.xlu0 %v2460, %s2493
    %v2495 = vpop.permute.xlu0 %2494
    %s2497 = sor.u32 256, 72
    %2498 = vbcast.lane.b32.xlu0 %v2460, %s2497
    %v2499 = vpop.permute.xlu0 %2498
    %s2501 = sor.u32 256, 80
    %2502 = vbcast.lane.b32.xlu0 %v2460, %s2501
    %v2503 = vpop.permute.xlu0 %2502
    %s2505 = sor.u32 256, 88
    %2506 = vbcast.lane.b32.xlu0 %v2460, %s2505
    %v2507 = vpop.permute.xlu0 %2506
    %s2509 = sor.u32 256, 96
    %2510 = vbcast.lane.b32.xlu0 %v2460, %s2509
    %v2511 = vpop.permute.xlu0 %2510
    %s2513 = sor.u32 256, 104
    %2514 = vbcast.lane.b32.xlu0 %v2460, %s2513
    %v2515 = vpop.permute.xlu0 %2514
    %s2517 = sor.u32 256, 112
    %2518 = vbcast.lane.b32.xlu0 %v2460, %s2517
    %v2519 = vpop.permute.xlu0 %2518
    %s2521 = sor.u32 256, 120
    %2522 = vbcast.lane.b32.xlu0 %v2460, %s2521
    %v2523 = vpop.permute.xlu0 %2522
    %v2524 = vlaneseq
    %v2525 = vshrl.u32 %v2524, 7
    %v2526 = vsub.s32 6, %v2525
    %v2527 = vrot.slane %v900, %v2526
    %2529 = vbcast.lane.b32.xlu0 %v2527, 256
    %v2530 = vpop.permute.xlu0 %2529
    %s2532 = sor.u32 256, 8
    %2533 = vbcast.lane.b32.xlu0 %v2527, %s2532
    %v2534 = vpop.permute.xlu0 %2533
    %s2536 = sor.u32 256, 16
    %2537 = vbcast.lane.b32.xlu0 %v2527, %s2536
    %v2538 = vpop.permute.xlu0 %2537
    %s2540 = sor.u32 256, 24
    %2541 = vbcast.lane.b32.xlu0 %v2527, %s2540
    %v2542 = vpop.permute.xlu0 %2541
    %s2544 = sor.u32 256, 32
    %2545 = vbcast.lane.b32.xlu0 %v2527, %s2544
    %v2546 = vpop.permute.xlu0 %2545
    %s2548 = sor.u32 256, 40
    %2549 = vbcast.lane.b32.xlu0 %v2527, %s2548
    %v2550 = vpop.permute.xlu0 %2549
    %s2552 = sor.u32 256, 48
    %2553 = vbcast.lane.b32.xlu0 %v2527, %s2552
    %v2554 = vpop.permute.xlu0 %2553
    %s2556 = sor.u32 256, 56
    %2557 = vbcast.lane.b32.xlu0 %v2527, %s2556
    %v2558 = vpop.permute.xlu0 %2557
    %s2560 = sor.u32 256, 64
    %2561 = vbcast.lane.b32.xlu0 %v2527, %s2560
    %v2562 = vpop.permute.xlu0 %2561
    %s2564 = sor.u32 256, 72
    %2565 = vbcast.lane.b32.xlu0 %v2527, %s2564
    %v2566 = vpop.permute.xlu0 %2565
    %s2568 = sor.u32 256, 80
    %2569 = vbcast.lane.b32.xlu0 %v2527, %s2568
    %v2570 = vpop.permute.xlu0 %2569
    %s2572 = sor.u32 256, 88
    %2573 = vbcast.lane.b32.xlu0 %v2527, %s2572
    %v2574 = vpop.permute.xlu0 %2573
    %s2576 = sor.u32 256, 96
    %2577 = vbcast.lane.b32.xlu0 %v2527, %s2576
    %v2578 = vpop.permute.xlu0 %2577
    %s2580 = sor.u32 256, 104
    %2581 = vbcast.lane.b32.xlu0 %v2527, %s2580
    %v2582 = vpop.permute.xlu0 %2581
    %s2584 = sor.u32 256, 112
    %2585 = vbcast.lane.b32.xlu0 %v2527, %s2584
    %v2586 = vpop.permute.xlu0 %2585
    %s2588 = sor.u32 256, 120
    %2589 = vbcast.lane.b32.xlu0 %v2527, %s2588
    %v2590 = vpop.permute.xlu0 %2589
    %v2591 = vlaneseq
    %v2592 = vshrl.u32 %v2591, 7
    %v2593 = vsub.s32 7, %v2592
    %v2594 = vrot.slane %v900, %v2593
    %2596 = vbcast.lane.b32.xlu0 %v2594, 256
    %v2597 = vpop.permute.xlu0 %2596
    %s2599 = sor.u32 256, 8
    %2600 = vbcast.lane.b32.xlu0 %v2594, %s2599
    %v2601 = vpop.permute.xlu0 %2600
    %s2603 = sor.u32 256, 16
    %2604 = vbcast.lane.b32.xlu0 %v2594, %s2603
    %v2605 = vpop.permute.xlu0 %2604
    %s2607 = sor.u32 256, 24
    %2608 = vbcast.lane.b32.xlu0 %v2594, %s2607
    %v2609 = vpop.permute.xlu0 %2608
    %s2611 = sor.u32 256, 32
    %2612 = vbcast.lane.b32.xlu0 %v2594, %s2611
    %v2613 = vpop.permute.xlu0 %2612
    %s2615 = sor.u32 256, 40
    %2616 = vbcast.lane.b32.xlu0 %v2594, %s2615
    %v2617 = vpop.permute.xlu0 %2616
    %s2619 = sor.u32 256, 48
    %2620 = vbcast.lane.b32.xlu0 %v2594, %s2619
    %v2621 = vpop.permute.xlu0 %2620
    %s2623 = sor.u32 256, 56
    %2624 = vbcast.lane.b32.xlu0 %v2594, %s2623
    %v2625 = vpop.permute.xlu0 %2624
    %s2627 = sor.u32 256, 64
    %2628 = vbcast.lane.b32.xlu0 %v2594, %s2627
    %v2629 = vpop.permute.xlu0 %2628
    %s2631 = sor.u32 256, 72
    %2632 = vbcast.lane.b32.xlu0 %v2594, %s2631
    %v2633 = vpop.permute.xlu0 %2632
    %s2635 = sor.u32 256, 80
    %2636 = vbcast.lane.b32.xlu0 %v2594, %s2635
    %v2637 = vpop.permute.xlu0 %2636
    %s2639 = sor.u32 256, 88
    %2640 = vbcast.lane.b32.xlu0 %v2594, %s2639
    %v2641 = vpop.permute.xlu0 %2640
    %s2643 = sor.u32 256, 96
    %2644 = vbcast.lane.b32.xlu0 %v2594, %s2643
    %v2645 = vpop.permute.xlu0 %2644
    %s2647 = sor.u32 256, 104
    %2648 = vbcast.lane.b32.xlu0 %v2594, %s2647
    %v2649 = vpop.permute.xlu0 %2648
    %s2651 = sor.u32 256, 112
    %2652 = vbcast.lane.b32.xlu0 %v2594, %s2651
    %v2653 = vpop.permute.xlu0 %2652
    %s2655 = sor.u32 256, 120
    %2656 = vbcast.lane.b32.xlu0 %v2594, %s2655
    %v2657 = vpop.permute.xlu0 %2656
    %v2658 = vmul.f32 %v1356, %v2128
    %v2659 = vmul.f32 %v1358, %v2128
    %v2660 = vmul.f32 %v1362, %v2132
    %v2661 = vmul.f32 %v1364, %v2132
    %v2662 = vmul.f32 %v1368, %v2136
    %v2663 = vmul.f32 %v1370, %v2136
    %v2664 = vmul.f32 %v1374, %v2140
    %v2665 = vmul.f32 %v1376, %v2140
    %v2666 = vmul.f32 %v1380, %v2144
    %v2667 = vmul.f32 %v1382, %v2144
    %v2668 = vmul.f32 %v1386, %v2148
    %v2669 = vmul.f32 %v1388, %v2148
    %v2670 = vmul.f32 %v1392, %v2152
    %v2671 = vmul.f32 %v1394, %v2152
    %v2672 = vmul.f32 %v1398, %v2156
    %v2673 = vmul.f32 %v1400, %v2156
    %v2674 = vmul.f32 %v1404, %v2160
    %v2675 = vmul.f32 %v1406, %v2160
    %v2676 = vmul.f32 %v1410, %v2164
    %v2677 = vmul.f32 %v1412, %v2164
    %v2678 = vmul.f32 %v1416, %v2168
    %v2679 = vmul.f32 %v1418, %v2168
    %v2680 = vmul.f32 %v1422, %v2172
    %v2681 = vmul.f32 %v1424, %v2172
    %v2682 = vmul.f32 %v1428, %v2176
    %v2683 = vmul.f32 %v1430, %v2176
    %v2684 = vmul.f32 %v1434, %v2180
    %v2685 = vmul.f32 %v1436, %v2180
    %v2686 = vmul.f32 %v1440, %v2184
    %v2687 = vmul.f32 %v1442, %v2184
    %v2688 = vmul.f32 %v1446, %v2188
    %v2689 = vmul.f32 %v1448, %v2188
    %v2690 = vmul.f32 %v1452, %v2195
    %v2691 = vmul.f32 %v1454, %v2195
    %v2692 = vmul.f32 %v1458, %v2199
    %v2693 = vmul.f32 %v1460, %v2199
    %v2694 = vmul.f32 %v1464, %v2203
    %v2695 = vmul.f32 %v1466, %v2203
    %v2696 = vmul.f32 %v1470, %v2207
    %v2697 = vmul.f32 %v1472, %v2207
    %v2698 = vmul.f32 %v1476, %v2211
    %v2699 = vmul.f32 %v1478, %v2211
    %v2700 = vmul.f32 %v1482, %v2215
    %v2701 = vmul.f32 %v1484, %v2215
    %v2702 = vmul.f32 %v1488, %v2219
    %v2703 = vmul.f32 %v1490, %v2219
    %v2704 = vmul.f32 %v1494, %v2223
    %v2705 = vmul.f32 %v1496, %v2223
    %v2706 = vmul.f32 %v1500, %v2227
    %v2707 = vmul.f32 %v1502, %v2227
    %v2708 = vmul.f32 %v1506, %v2231
    %v2709 = vmul.f32 %v1508, %v2231
    %v2710 = vmul.f32 %v1512, %v2235
    %v2711 = vmul.f32 %v1514, %v2235
    %v2712 = vmul.f32 %v1518, %v2239
    %v2713 = vmul.f32 %v1520, %v2239
    %v2714 = vmul.f32 %v1524, %v2243
    %v2715 = vmul.f32 %v1526, %v2243
    %v2716 = vmul.f32 %v1530, %v2247
    %v2717 = vmul.f32 %v1532, %v2247
    %v2718 = vmul.f32 %v1536, %v2251
    %v2719 = vmul.f32 %v1538, %v2251
    %v2720 = vmul.f32 %v1542, %v2255
    %v2721 = vmul.f32 %v1544, %v2255
    %v2722 = vmul.f32 %v1548, %v2262
    %v2723 = vmul.f32 %v1550, %v2262
    %v2724 = vmul.f32 %v1554, %v2266
    %v2725 = vmul.f32 %v1556, %v2266
    %v2726 = vmul.f32 %v1560, %v2270
    %v2727 = vmul.f32 %v1562, %v2270
    %v2728 = vmul.f32 %v1566, %v2274
    %v2729 = vmul.f32 %v1568, %v2274
    %v2730 = vmul.f32 %v1572, %v2278
    %v2731 = vmul.f32 %v1574, %v2278
    %v2732 = vmul.f32 %v1578, %v2282
    %v2733 = vmul.f32 %v1580, %v2282
    %v2734 = vmul.f32 %v1584, %v2286
    %v2735 = vmul.f32 %v1586, %v2286
    %v2736 = vmul.f32 %v1590, %v2290
    %v2737 = vmul.f32 %v1592, %v2290
    %v2738 = vmul.f32 %v1596, %v2294
    %v2739 = vmul.f32 %v1598, %v2294
    %v2740 = vmul.f32 %v1602, %v2298
    %v2741 = vmul.f32 %v1604, %v2298
    %v2742 = vmul.f32 %v1608, %v2302
    %v2743 = vmul.f32 %v1610, %v2302
    %v2744 = vmul.f32 %v1614, %v2306
    %v2745 = vmul.f32 %v1616, %v2306
    %v2746 = vmul.f32 %v1620, %v2310
    %v2747 = vmul.f32 %v1622, %v2310
    %v2748 = vmul.f32 %v1626, %v2314
    %v2749 = vmul.f32 %v1628, %v2314
    %v2750 = vmul.f32 %v1632, %v2318
    %v2751 = vmul.f32 %v1634, %v2318
    %v2752 = vmul.f32 %v1638, %v2322
    %v2753 = vmul.f32 %v1640, %v2322
    %v2754 = vmul.f32 %v1644, %v2329
    %v2755 = vmul.f32 %v1646, %v2329
    %v2756 = vmul.f32 %v1650, %v2333
    %v2757 = vmul.f32 %v1652, %v2333
    %v2758 = vmul.f32 %v1656, %v2337
    %v2759 = vmul.f32 %v1658, %v2337
    %v2760 = vmul.f32 %v1662, %v2341
    %v2761 = vmul.f32 %v1664, %v2341
    %v2762 = vmul.f32 %v1668, %v2345
    %v2763 = vmul.f32 %v1670, %v2345
    %v2764 = vmul.f32 %v1674, %v2349
    %v2765 = vmul.f32 %v1676, %v2349
    %v2766 = vmul.f32 %v1680, %v2353
    %v2767 = vmul.f32 %v1682, %v2353
    %v2768 = vmul.f32 %v1686, %v2357
    %v2769 = vmul.f32 %v1688, %v2357
    %v2770 = vmul.f32 %v1692, %v2361
    %v2771 = vmul.f32 %v1694, %v2361
    %v2772 = vmul.f32 %v1698, %v2365
    %v2773 = vmul.f32 %v1700, %v2365
    %v2774 = vmul.f32 %v1704, %v2369
    %v2775 = vmul.f32 %v1706, %v2369
    %v2776 = vmul.f32 %v1710, %v2373
    %v2777 = vmul.f32 %v1712, %v2373
    %v2778 = vmul.f32 %v1716, %v2377
    %v2779 = vmul.f32 %v1718, %v2377
    %v2780 = vmul.f32 %v1722, %v2381
    %v2781 = vmul.f32 %v1724, %v2381
    %v2782 = vmul.f32 %v1728, %v2385
    %v2783 = vmul.f32 %v1730, %v2385
    %v2784 = vmul.f32 %v1734, %v2389
    %v2785 = vmul.f32 %v1736, %v2389
    %v2786 = vmul.f32 %v1740, %v2396
    %v2787 = vmul.f32 %v1742, %v2396
    %v2788 = vmul.f32 %v1746, %v2400
    %v2789 = vmul.f32 %v1748, %v2400
    %v2790 = vmul.f32 %v1752, %v2404
    %v2791 = vmul.f32 %v1754, %v2404
    %v2792 = vmul.f32 %v1758, %v2408
    %v2793 = vmul.f32 %v1760, %v2408
    %v2794 = vmul.f32 %v1764, %v2412
    %v2795 = vmul.f32 %v1766, %v2412
    %v2796 = vmul.f32 %v1770, %v2416
    %v2797 = vmul.f32 %v1772, %v2416
    %v2798 = vmul.f32 %v1776, %v2420
    %v2799 = vmul.f32 %v1778, %v2420
    %v2800 = vmul.f32 %v1782, %v2424
    %v2801 = vmul.f32 %v1784, %v2424
    %v2802 = vmul.f32 %v1788, %v2428
    %v2803 = vmul.f32 %v1790, %v2428
    %v2804 = vmul.f32 %v1794, %v2432
    %v2805 = vmul.f32 %v1796, %v2432
    %v2806 = vmul.f32 %v1800, %v2436
    %v2807 = vmul.f32 %v1802, %v2436
    %v2808 = vmul.f32 %v1806, %v2440
    %v2809 = vmul.f32 %v1808, %v2440
    %v2810 = vmul.f32 %v1812, %v2444
    %v2811 = vmul.f32 %v1814, %v2444
    %v2812 = vmul.f32 %v1818, %v2448
    %v2813 = vmul.f32 %v1820, %v2448
    %v2814 = vmul.f32 %v1824, %v2452
    %v2815 = vmul.f32 %v1826, %v2452
    %v2816 = vmul.f32 %v1830, %v2456
    %v2817 = vmul.f32 %v1832, %v2456
    %v2818 = vmul.f32 %v1836, %v2463
    %v2819 = vmul.f32 %v1838, %v2463
    %v2820 = vmul.f32 %v1842, %v2467
    %v2821 = vmul.f32 %v1844, %v2467
    %v2822 = vmul.f32 %v1848, %v2471
    %v2823 = vmul.f32 %v1850, %v2471
    %v2824 = vmul.f32 %v1854, %v2475
    %v2825 = vmul.f32 %v1856, %v2475
    %v2826 = vmul.f32 %v1860, %v2479
    %v2827 = vmul.f32 %v1862, %v2479
    %v2828 = vmul.f32 %v1866, %v2483
    %v2829 = vmul.f32 %v1868, %v2483
    %v2830 = vmul.f32 %v1872, %v2487
    %v2831 = vmul.f32 %v1874, %v2487
    %v2832 = vmul.f32 %v1878, %v2491
    %v2833 = vmul.f32 %v1880, %v2491
    %v2834 = vmul.f32 %v1884, %v2495
    %v2835 = vmul.f32 %v1886, %v2495
    %v2836 = vmul.f32 %v1890, %v2499
    %v2837 = vmul.f32 %v1892, %v2499
    %v2838 = vmul.f32 %v1896, %v2503
    %v2839 = vmul.f32 %v1898, %v2503
    %v2840 = vmul.f32 %v1902, %v2507
    %v2841 = vmul.f32 %v1904, %v2507
    %v2842 = vmul.f32 %v1908, %v2511
    %v2843 = vmul.f32 %v1910, %v2511
    %v2844 = vmul.f32 %v1914, %v2515
    %v2845 = vmul.f32 %v1916, %v2515
    %v2846 = vmul.f32 %v1920, %v2519
    %v2847 = vmul.f32 %v1922, %v2519
    %v2848 = vmul.f32 %v1926, %v2523
    %v2849 = vmul.f32 %v1928, %v2523
    %v2850 = vmul.f32 %v1932, %v2530
    %v2851 = vmul.f32 %v1934, %v2530
    %v2852 = vmul.f32 %v1938, %v2534
    %v2853 = vmul.f32 %v1940, %v2534
    %v2854 = vmul.f32 %v1944, %v2538
    %v2855 = vmul.f32 %v1946, %v2538
    %v2856 = vmul.f32 %v1950, %v2542
    %v2857 = vmul.f32 %v1952, %v2542
    %v2858 = vmul.f32 %v1956, %v2546
    %v2859 = vmul.f32 %v1958, %v2546
    %v2860 = vmul.f32 %v1962, %v2550
    %v2861 = vmul.f32 %v1964, %v2550
    %v2862 = vmul.f32 %v1968, %v2554
    %v2863 = vmul.f32 %v1970, %v2554
    %v2864 = vmul.f32 %v1974, %v2558
    %v2865 = vmul.f32 %v1976, %v2558
    %v2866 = vmul.f32 %v1980, %v2562
    %v2867 = vmul.f32 %v1982, %v2562
    %v2868 = vmul.f32 %v1986, %v2566
    %v2869 = vmul.f32 %v1988, %v2566
    %v2870 = vmul.f32 %v1992, %v2570
    %v2871 = vmul.f32 %v1994, %v2570
    %v2872 = vmul.f32 %v1998, %v2574
    %v2873 = vmul.f32 %v2000, %v2574
    %v2874 = vmul.f32 %v2004, %v2578
    %v2875 = vmul.f32 %v2006, %v2578
    %v2876 = vmul.f32 %v2010, %v2582
    %v2877 = vmul.f32 %v2012, %v2582
    %v2878 = vmul.f32 %v2016, %v2586
    %v2879 = vmul.f32 %v2018, %v2586
    %v2880 = vmul.f32 %v2022, %v2590
    %v2881 = vmul.f32 %v2024, %v2590
    %v2882 = vmul.f32 %v2028, %v2597
    %v2883 = vmul.f32 %v2030, %v2597
    %v2884 = vmul.f32 %v2034, %v2601
    %v2885 = vmul.f32 %v2036, %v2601
    %v2886 = vmul.f32 %v2040, %v2605
    %v2887 = vmul.f32 %v2042, %v2605
    %v2888 = vmul.f32 %v2046, %v2609
    %v2889 = vmul.f32 %v2048, %v2609
    %v2890 = vmul.f32 %v2052, %v2613
    %v2891 = vmul.f32 %v2054, %v2613
    %v2892 = vmul.f32 %v2058, %v2617
    %v2893 = vmul.f32 %v2060, %v2617
    %v2894 = vmul.f32 %v2064, %v2621
    %v2895 = vmul.f32 %v2066, %v2621
    %v2896 = vmul.f32 %v2070, %v2625
    %v2897 = vmul.f32 %v2072, %v2625
    %v2898 = vmul.f32 %v2076, %v2629
    %v2899 = vmul.f32 %v2078, %v2629
    %v2900 = vmul.f32 %v2082, %v2633
    %v2901 = vmul.f32 %v2084, %v2633
    %v2902 = vmul.f32 %v2088, %v2637
    %v2903 = vmul.f32 %v2090, %v2637
    %v2904 = vmul.f32 %v2094, %v2641
    %v2905 = vmul.f32 %v2096, %v2641
    %v2906 = vmul.f32 %v2100, %v2645
    %v2907 = vmul.f32 %v2102, %v2645
    %v2908 = vmul.f32 %v2106, %v2649
    %v2909 = vmul.f32 %v2108, %v2649
    %v2910 = vmul.f32 %v2112, %v2653
    %v2911 = vmul.f32 %v2114, %v2653
    %v2912 = vmul.f32 %v2118, %v2657
    %v2913 = vmul.f32 %v2120, %v2657
    %v2914 = vsub.f32 %v2658, %v249
    %v2915 = vsub.f32 %v2659, %v251
    %v2916 = vsub.f32 %v2660, %v255
    %v2917 = vsub.f32 %v2661, %v257
    %v2918 = vsub.f32 %v2662, %v261
    %v2919 = vsub.f32 %v2663, %v263
    %v2920 = vsub.f32 %v2664, %v267
    %v2921 = vsub.f32 %v2665, %v269
    %v2922 = vsub.f32 %v2666, %v273
    %v2923 = vsub.f32 %v2667, %v275
    %v2924 = vsub.f32 %v2668, %v279
    %v2925 = vsub.f32 %v2669, %v281
    %v2926 = vsub.f32 %v2670, %v285
    %v2927 = vsub.f32 %v2671, %v287
    %v2928 = vsub.f32 %v2672, %v291
    %v2929 = vsub.f32 %v2673, %v293
    %v2930 = vsub.f32 %v2674, %v297
    %v2931 = vsub.f32 %v2675, %v299
    %v2932 = vsub.f32 %v2676, %v303
    %v2933 = vsub.f32 %v2677, %v305
    %v2934 = vsub.f32 %v2678, %v309
    %v2935 = vsub.f32 %v2679, %v311
    %v2936 = vsub.f32 %v2680, %v315
    %v2937 = vsub.f32 %v2681, %v317
    %v2938 = vsub.f32 %v2682, %v321
    %v2939 = vsub.f32 %v2683, %v323
    %v2940 = vsub.f32 %v2684, %v327
    %v2941 = vsub.f32 %v2685, %v329
    %v2942 = vsub.f32 %v2686, %v333
    %v2943 = vsub.f32 %v2687, %v335
    %v2944 = vsub.f32 %v2688, %v339
    %v2945 = vsub.f32 %v2689, %v341
    %v2946 = vsub.f32 %v2690, %v249
    %v2947 = vsub.f32 %v2691, %v251
    %v2948 = vsub.f32 %v2692, %v255
    %v2949 = vsub.f32 %v2693, %v257
    %v2950 = vsub.f32 %v2694, %v261
    %v2951 = vsub.f32 %v2695, %v263
    %v2952 = vsub.f32 %v2696, %v267
    %v2953 = vsub.f32 %v2697, %v269
    %v2954 = vsub.f32 %v2698, %v273
    %v2955 = vsub.f32 %v2699, %v275
    %v2956 = vsub.f32 %v2700, %v279
    %v2957 = vsub.f32 %v2701, %v281
    %v2958 = vsub.f32 %v2702, %v285
    %v2959 = vsub.f32 %v2703, %v287
    %v2960 = vsub.f32 %v2704, %v291
    %v2961 = vsub.f32 %v2705, %v293
    %v2962 = vsub.f32 %v2706, %v297
    %v2963 = vsub.f32 %v2707, %v299
    %v2964 = vsub.f32 %v2708, %v303
    %v2965 = vsub.f32 %v2709, %v305
    %v2966 = vsub.f32 %v2710, %v309
    %v2967 = vsub.f32 %v2711, %v311
    %v2968 = vsub.f32 %v2712, %v315
    %v2969 = vsub.f32 %v2713, %v317
    %v2970 = vsub.f32 %v2714, %v321
    %v2971 = vsub.f32 %v2715, %v323
    %v2972 = vsub.f32 %v2716, %v327
    %v2973 = vsub.f32 %v2717, %v329
    %v2974 = vsub.f32 %v2718, %v333
    %v2975 = vsub.f32 %v2719, %v335
    %v2976 = vsub.f32 %v2720, %v339
    %v2977 = vsub.f32 %v2721, %v341
    %v2978 = vsub.f32 %v2722, %v249
    %v2979 = vsub.f32 %v2723, %v251
    %v2980 = vsub.f32 %v2724, %v255
    %v2981 = vsub.f32 %v2725, %v257
    %v2982 = vsub.f32 %v2726, %v261
    %v2983 = vsub.f32 %v2727, %v263
    %v2984 = vsub.f32 %v2728, %v267
    %v2985 = vsub.f32 %v2729, %v269
    %v2986 = vsub.f32 %v2730, %v273
    %v2987 = vsub.f32 %v2731, %v275
    %v2988 = vsub.f32 %v2732, %v279
    %v2989 = vsub.f32 %v2733, %v281
    %v2990 = vsub.f32 %v2734, %v285
    %v2991 = vsub.f32 %v2735, %v287
    %v2992 = vsub.f32 %v2736, %v291
    %v2993 = vsub.f32 %v2737, %v293
    %v2994 = vsub.f32 %v2738, %v297
    %v2995 = vsub.f32 %v2739, %v299
    %v2996 = vsub.f32 %v2740, %v303
    %v2997 = vsub.f32 %v2741, %v305
    %v2998 = vsub.f32 %v2742, %v309
    %v2999 = vsub.f32 %v2743, %v311
    %v3000 = vsub.f32 %v2744, %v315
    %v3001 = vsub.f32 %v2745, %v317
    %v3002 = vsub.f32 %v2746, %v321
    %v3003 = vsub.f32 %v2747, %v323
    %v3004 = vsub.f32 %v2748, %v327
    %v3005 = vsub.f32 %v2749, %v329
    %v3006 = vsub.f32 %v2750, %v333
    %v3007 = vsub.f32 %v2751, %v335
    %v3008 = vsub.f32 %v2752, %v339
    %v3009 = vsub.f32 %v2753, %v341
    %v3010 = vsub.f32 %v2754, %v249
    %v3011 = vsub.f32 %v2755, %v251
    %v3012 = vsub.f32 %v2756, %v255
    %v3013 = vsub.f32 %v2757, %v257
    %v3014 = vsub.f32 %v2758, %v261
    %v3015 = vsub.f32 %v2759, %v263
    %v3016 = vsub.f32 %v2760, %v267
    %v3017 = vsub.f32 %v2761, %v269
    %v3018 = vsub.f32 %v2762, %v273
    %v3019 = vsub.f32 %v2763, %v275
    %v3020 = vsub.f32 %v2764, %v279
    %v3021 = vsub.f32 %v2765, %v281
    %v3022 = vsub.f32 %v2766, %v285
    %v3023 = vsub.f32 %v2767, %v287
    %v3024 = vsub.f32 %v2768, %v291
    %v3025 = vsub.f32 %v2769, %v293
    %v3026 = vsub.f32 %v2770, %v297
    %v3027 = vsub.f32 %v2771, %v299
    %v3028 = vsub.f32 %v2772, %v303
    %v3029 = vsub.f32 %v2773, %v305
    %v3030 = vsub.f32 %v2774, %v309
    %v3031 = vsub.f32 %v2775, %v311
    %v3032 = vsub.f32 %v2776, %v315
    %v3033 = vsub.f32 %v2777, %v317
    %v3034 = vsub.f32 %v2778, %v321
    %v3035 = vsub.f32 %v2779, %v323
    %v3036 = vsub.f32 %v2780, %v327
    %v3037 = vsub.f32 %v2781, %v329
    %v3038 = vsub.f32 %v2782, %v333
    %v3039 = vsub.f32 %v2783, %v335
    %v3040 = vsub.f32 %v2784, %v339
    %v3041 = vsub.f32 %v2785, %v341
    %v3042 = vsub.f32 %v2786, %v249
    %v3043 = vsub.f32 %v2787, %v251
    %v3044 = vsub.f32 %v2788, %v255
    %v3045 = vsub.f32 %v2789, %v257
    %v3046 = vsub.f32 %v2790, %v261
    %v3047 = vsub.f32 %v2791, %v263
    %v3048 = vsub.f32 %v2792, %v267
    %v3049 = vsub.f32 %v2793, %v269
    %v3050 = vsub.f32 %v2794, %v273
    %v3051 = vsub.f32 %v2795, %v275
    %v3052 = vsub.f32 %v2796, %v279
    %v3053 = vsub.f32 %v2797, %v281
    %v3054 = vsub.f32 %v2798, %v285
    %v3055 = vsub.f32 %v2799, %v287
    %v3056 = vsub.f32 %v2800, %v291
    %v3057 = vsub.f32 %v2801, %v293
    %v3058 = vsub.f32 %v2802, %v297
    %v3059 = vsub.f32 %v2803, %v299
    %v3060 = vsub.f32 %v2804, %v303
    %v3061 = vsub.f32 %v2805, %v305
    %v3062 = vsub.f32 %v2806, %v309
    %v3063 = vsub.f32 %v2807, %v311
    %v3064 = vsub.f32 %v2808, %v315
    %v3065 = vsub.f32 %v2809, %v317
    %v3066 = vsub.f32 %v2810, %v321
    %v3067 = vsub.f32 %v2811, %v323
    %v3068 = vsub.f32 %v2812, %v327
    %v3069 = vsub.f32 %v2813, %v329
    %v3070 = vsub.f32 %v2814, %v333
    %v3071 = vsub.f32 %v2815, %v335
    %v3072 = vsub.f32 %v2816, %v339
    %v3073 = vsub.f32 %v2817, %v341
    %v3074 = vsub.f32 %v2818, %v249
    %v3075 = vsub.f32 %v2819, %v251
    %v3076 = vsub.f32 %v2820, %v255
    %v3077 = vsub.f32 %v2821, %v257
    %v3078 = vsub.f32 %v2822, %v261
    %v3079 = vsub.f32 %v2823, %v263
    %v3080 = vsub.f32 %v2824, %v267
    %v3081 = vsub.f32 %v2825, %v269
    %v3082 = vsub.f32 %v2826, %v273
    %v3083 = vsub.f32 %v2827, %v275
    %v3084 = vsub.f32 %v2828, %v279
    %v3085 = vsub.f32 %v2829, %v281
    %v3086 = vsub.f32 %v2830, %v285
    %v3087 = vsub.f32 %v2831, %v287
    %v3088 = vsub.f32 %v2832, %v291
    %v3089 = vsub.f32 %v2833, %v293
    %v3090 = vsub.f32 %v2834, %v297
    %v3091 = vsub.f32 %v2835, %v299
    %v3092 = vsub.f32 %v2836, %v303
    %v3093 = vsub.f32 %v2837, %v305
    %v3094 = vsub.f32 %v2838, %v309
    %v3095 = vsub.f32 %v2839, %v311
    %v3096 = vsub.f32 %v2840, %v315
    %v3097 = vsub.f32 %v2841, %v317
    %v3098 = vsub.f32 %v2842, %v321
    %v3099 = vsub.f32 %v2843, %v323
    %v3100 = vsub.f32 %v2844, %v327
    %v3101 = vsub.f32 %v2845, %v329
    %v3102 = vsub.f32 %v2846, %v333
    %v3103 = vsub.f32 %v2847, %v335
    %v3104 = vsub.f32 %v2848, %v339
    %v3105 = vsub.f32 %v2849, %v341
    %v3106 = vsub.f32 %v2850, %v249
    %v3107 = vsub.f32 %v2851, %v251
    %v3108 = vsub.f32 %v2852, %v255
    %v3109 = vsub.f32 %v2853, %v257
    %v3110 = vsub.f32 %v2854, %v261
    %v3111 = vsub.f32 %v2855, %v263
    %v3112 = vsub.f32 %v2856, %v267
    %v3113 = vsub.f32 %v2857, %v269
    %v3114 = vsub.f32 %v2858, %v273
    %v3115 = vsub.f32 %v2859, %v275
    %v3116 = vsub.f32 %v2860, %v279
    %v3117 = vsub.f32 %v2861, %v281
    %v3118 = vsub.f32 %v2862, %v285
    %v3119 = vsub.f32 %v2863, %v287
    %v3120 = vsub.f32 %v2864, %v291
    %v3121 = vsub.f32 %v2865, %v293
    %v3122 = vsub.f32 %v2866, %v297
    %v3123 = vsub.f32 %v2867, %v299
    %v3124 = vsub.f32 %v2868, %v303
    %v3125 = vsub.f32 %v2869, %v305
    %v3126 = vsub.f32 %v2870, %v309
    %v3127 = vsub.f32 %v2871, %v311
    %v3128 = vsub.f32 %v2872, %v315
    %v3129 = vsub.f32 %v2873, %v317
    %v3130 = vsub.f32 %v2874, %v321
    %v3131 = vsub.f32 %v2875, %v323
    %v3132 = vsub.f32 %v2876, %v327
    %v3133 = vsub.f32 %v2877, %v329
    %v3134 = vsub.f32 %v2878, %v333
    %v3135 = vsub.f32 %v2879, %v335
    %v3136 = vsub.f32 %v2880, %v339
    %v3137 = vsub.f32 %v2881, %v341
    %v3138 = vsub.f32 %v2882, %v249
    %v3139 = vsub.f32 %v2883, %v251
    %v3140 = vsub.f32 %v2884, %v255
    %v3141 = vsub.f32 %v2885, %v257
    %v3142 = vsub.f32 %v2886, %v261
    %v3143 = vsub.f32 %v2887, %v263
    %v3144 = vsub.f32 %v2888, %v267
    %v3145 = vsub.f32 %v2889, %v269
    %v3146 = vsub.f32 %v2890, %v273
    %v3147 = vsub.f32 %v2891, %v275
    %v3148 = vsub.f32 %v2892, %v279
    %v3149 = vsub.f32 %v2893, %v281
    %v3150 = vsub.f32 %v2894, %v285
    %v3151 = vsub.f32 %v2895, %v287
    %v3152 = vsub.f32 %v2896, %v291
    %v3153 = vsub.f32 %v2897, %v293
    %v3154 = vsub.f32 %v2898, %v297
    %v3155 = vsub.f32 %v2899, %v299
    %v3156 = vsub.f32 %v2900, %v303
    %v3157 = vsub.f32 %v2901, %v305
    %v3158 = vsub.f32 %v2902, %v309
    %v3159 = vsub.f32 %v2903, %v311
    %v3160 = vsub.f32 %v2904, %v315
    %v3161 = vsub.f32 %v2905, %v317
    %v3162 = vsub.f32 %v2906, %v321
    %v3163 = vsub.f32 %v2907, %v323
    %v3164 = vsub.f32 %v2908, %v327
    %v3165 = vsub.f32 %v2909, %v329
    %v3166 = vsub.f32 %v2910, %v333
    %v3167 = vsub.f32 %v2911, %v335
    %v3168 = vsub.f32 %v2912, %v339
    %v3169 = vsub.f32 %v2913, %v341
    %v3170 = vmul.f32 %v2914, %v2914
    %v3171 = vmul.f32 %v2915, %v2915
    %v3172 = vmul.f32 %v2916, %v2916
    %v3173 = vmul.f32 %v2917, %v2917
    %v3174 = vmul.f32 %v2918, %v2918
    %v3175 = vmul.f32 %v2919, %v2919
    %v3176 = vmul.f32 %v2920, %v2920
    %v3177 = vmul.f32 %v2921, %v2921
    %v3178 = vmul.f32 %v2922, %v2922
    %v3179 = vmul.f32 %v2923, %v2923
    %v3180 = vmul.f32 %v2924, %v2924
    %v3181 = vmul.f32 %v2925, %v2925
    %v3182 = vmul.f32 %v2926, %v2926
    %v3183 = vmul.f32 %v2927, %v2927
    %v3184 = vmul.f32 %v2928, %v2928
    %v3185 = vmul.f32 %v2929, %v2929
    %v3186 = vmul.f32 %v2930, %v2930
    %v3187 = vmul.f32 %v2931, %v2931
    %v3188 = vmul.f32 %v2932, %v2932
    %v3189 = vmul.f32 %v2933, %v2933
    %v3190 = vmul.f32 %v2934, %v2934
    %v3191 = vmul.f32 %v2935, %v2935
    %v3192 = vmul.f32 %v2936, %v2936
    %v3193 = vmul.f32 %v2937, %v2937
    %v3194 = vmul.f32 %v2938, %v2938
    %v3195 = vmul.f32 %v2939, %v2939
    %v3196 = vmul.f32 %v2940, %v2940
    %v3197 = vmul.f32 %v2941, %v2941
    %v3198 = vmul.f32 %v2942, %v2942
    %v3199 = vmul.f32 %v2943, %v2943
    %v3200 = vmul.f32 %v2944, %v2944
    %v3201 = vmul.f32 %v2945, %v2945
    %v3202 = vmul.f32 %v2946, %v2946
    %v3203 = vmul.f32 %v2947, %v2947
    %v3204 = vmul.f32 %v2948, %v2948
    %v3205 = vmul.f32 %v2949, %v2949
    %v3206 = vmul.f32 %v2950, %v2950
    %v3207 = vmul.f32 %v2951, %v2951
    %v3208 = vmul.f32 %v2952, %v2952
    %v3209 = vmul.f32 %v2953, %v2953
    %v3210 = vmul.f32 %v2954, %v2954
    %v3211 = vmul.f32 %v2955, %v2955
    %v3212 = vmul.f32 %v2956, %v2956
    %v3213 = vmul.f32 %v2957, %v2957
    %v3214 = vmul.f32 %v2958, %v2958
    %v3215 = vmul.f32 %v2959, %v2959
    %v3216 = vmul.f32 %v2960, %v2960
    %v3217 = vmul.f32 %v2961, %v2961
    %v3218 = vmul.f32 %v2962, %v2962
    %v3219 = vmul.f32 %v2963, %v2963
    %v3220 = vmul.f32 %v2964, %v2964
    %v3221 = vmul.f32 %v2965, %v2965
    %v3222 = vmul.f32 %v2966, %v2966
    %v3223 = vmul.f32 %v2967, %v2967
    %v3224 = vmul.f32 %v2968, %v2968
    %v3225 = vmul.f32 %v2969, %v2969
    %v3226 = vmul.f32 %v2970, %v2970
    %v3227 = vmul.f32 %v2971, %v2971
    %v3228 = vmul.f32 %v2972, %v2972
    %v3229 = vmul.f32 %v2973, %v2973
    %v3230 = vmul.f32 %v2974, %v2974
    %v3231 = vmul.f32 %v2975, %v2975
    %v3232 = vmul.f32 %v2976, %v2976
    %v3233 = vmul.f32 %v2977, %v2977
    %v3234 = vmul.f32 %v2978, %v2978
    %v3235 = vmul.f32 %v2979, %v2979
    %v3236 = vmul.f32 %v2980, %v2980
    %v3237 = vmul.f32 %v2981, %v2981
    %v3238 = vmul.f32 %v2982, %v2982
    %v3239 = vmul.f32 %v2983, %v2983
    %v3240 = vmul.f32 %v2984, %v2984
    %v3241 = vmul.f32 %v2985, %v2985
    %v3242 = vmul.f32 %v2986, %v2986
    %v3243 = vmul.f32 %v2987, %v2987
    %v3244 = vmul.f32 %v2988, %v2988
    %v3245 = vmul.f32 %v2989, %v2989
    %v3246 = vmul.f32 %v2990, %v2990
    %v3247 = vmul.f32 %v2991, %v2991
    %v3248 = vmul.f32 %v2992, %v2992
    %v3249 = vmul.f32 %v2993, %v2993
    %v3250 = vmul.f32 %v2994, %v2994
    %v3251 = vmul.f32 %v2995, %v2995
    %v3252 = vmul.f32 %v2996, %v2996
    %v3253 = vmul.f32 %v2997, %v2997
    %v3254 = vmul.f32 %v2998, %v2998
    %v3255 = vmul.f32 %v2999, %v2999
    %v3256 = vmul.f32 %v3000, %v3000
    %v3257 = vmul.f32 %v3001, %v3001
    %v3258 = vmul.f32 %v3002, %v3002
    %v3259 = vmul.f32 %v3003, %v3003
    %v3260 = vmul.f32 %v3004, %v3004
    %v3261 = vmul.f32 %v3005, %v3005
    %v3262 = vmul.f32 %v3006, %v3006
    %v3263 = vmul.f32 %v3007, %v3007
    %v3264 = vmul.f32 %v3008, %v3008
    %v3265 = vmul.f32 %v3009, %v3009
    %v3266 = vmul.f32 %v3010, %v3010
    %v3267 = vmul.f32 %v3011, %v3011
    %v3268 = vmul.f32 %v3012, %v3012
    %v3269 = vmul.f32 %v3013, %v3013
    %v3270 = vmul.f32 %v3014, %v3014
    %v3271 = vmul.f32 %v3015, %v3015
    %v3272 = vmul.f32 %v3016, %v3016
    %v3273 = vmul.f32 %v3017, %v3017
    %v3274 = vmul.f32 %v3018, %v3018
    %v3275 = vmul.f32 %v3019, %v3019
    %v3276 = vmul.f32 %v3020, %v3020
    %v3277 = vmul.f32 %v3021, %v3021
    %v3278 = vmul.f32 %v3022, %v3022
    %v3279 = vmul.f32 %v3023, %v3023
    %v3280 = vmul.f32 %v3024, %v3024
    %v3281 = vmul.f32 %v3025, %v3025
    %v3282 = vmul.f32 %v3026, %v3026
    %v3283 = vmul.f32 %v3027, %v3027
    %v3284 = vmul.f32 %v3028, %v3028
    %v3285 = vmul.f32 %v3029, %v3029
    %v3286 = vmul.f32 %v3030, %v3030
    %v3287 = vmul.f32 %v3031, %v3031
    %v3288 = vmul.f32 %v3032, %v3032
    %v3289 = vmul.f32 %v3033, %v3033
    %v3290 = vmul.f32 %v3034, %v3034
    %v3291 = vmul.f32 %v3035, %v3035
    %v3292 = vmul.f32 %v3036, %v3036
    %v3293 = vmul.f32 %v3037, %v3037
    %v3294 = vmul.f32 %v3038, %v3038
    %v3295 = vmul.f32 %v3039, %v3039
    %v3296 = vmul.f32 %v3040, %v3040
    %v3297 = vmul.f32 %v3041, %v3041
    %v3298 = vmul.f32 %v3042, %v3042
    %v3299 = vmul.f32 %v3043, %v3043
    %v3300 = vmul.f32 %v3044, %v3044
    %v3301 = vmul.f32 %v3045, %v3045
    %v3302 = vmul.f32 %v3046, %v3046
    %v3303 = vmul.f32 %v3047, %v3047
    %v3304 = vmul.f32 %v3048, %v3048
    %v3305 = vmul.f32 %v3049, %v3049
    %v3306 = vmul.f32 %v3050, %v3050
    %v3307 = vmul.f32 %v3051, %v3051
    %v3308 = vmul.f32 %v3052, %v3052
    %v3309 = vmul.f32 %v3053, %v3053
    %v3310 = vmul.f32 %v3054, %v3054
    %v3311 = vmul.f32 %v3055, %v3055
    %v3312 = vmul.f32 %v3056, %v3056
    %v3313 = vmul.f32 %v3057, %v3057
    %v3314 = vmul.f32 %v3058, %v3058
    %v3315 = vmul.f32 %v3059, %v3059
    %v3316 = vmul.f32 %v3060, %v3060
    %v3317 = vmul.f32 %v3061, %v3061
    %v3318 = vmul.f32 %v3062, %v3062
    %v3319 = vmul.f32 %v3063, %v3063
    %v3320 = vmul.f32 %v3064, %v3064
    %v3321 = vmul.f32 %v3065, %v3065
    %v3322 = vmul.f32 %v3066, %v3066
    %v3323 = vmul.f32 %v3067, %v3067
    %v3324 = vmul.f32 %v3068, %v3068
    %v3325 = vmul.f32 %v3069, %v3069
    %v3326 = vmul.f32 %v3070, %v3070
    %v3327 = vmul.f32 %v3071, %v3071
    %v3328 = vmul.f32 %v3072, %v3072
    %v3329 = vmul.f32 %v3073, %v3073
    %v3330 = vmul.f32 %v3074, %v3074
    %v3331 = vmul.f32 %v3075, %v3075
    %v3332 = vmul.f32 %v3076, %v3076
    %v3333 = vmul.f32 %v3077, %v3077
    %v3334 = vmul.f32 %v3078, %v3078
    %v3335 = vmul.f32 %v3079, %v3079
    %v3336 = vmul.f32 %v3080, %v3080
    %v3337 = vmul.f32 %v3081, %v3081
    %v3338 = vmul.f32 %v3082, %v3082
    %v3339 = vmul.f32 %v3083, %v3083
    %v3340 = vmul.f32 %v3084, %v3084
    %v3341 = vmul.f32 %v3085, %v3085
    %v3342 = vmul.f32 %v3086, %v3086
    %v3343 = vmul.f32 %v3087, %v3087
    %v3344 = vmul.f32 %v3088, %v3088
    %v3345 = vmul.f32 %v3089, %v3089
    %v3346 = vmul.f32 %v3090, %v3090
    %v3347 = vmul.f32 %v3091, %v3091
    %v3348 = vmul.f32 %v3092, %v3092
    %v3349 = vmul.f32 %v3093, %v3093
    %v3350 = vmul.f32 %v3094, %v3094
    %v3351 = vmul.f32 %v3095, %v3095
    %v3352 = vmul.f32 %v3096, %v3096
    %v3353 = vmul.f32 %v3097, %v3097
    %v3354 = vmul.f32 %v3098, %v3098
    %v3355 = vmul.f32 %v3099, %v3099
    %v3356 = vmul.f32 %v3100, %v3100
    %v3357 = vmul.f32 %v3101, %v3101
    %v3358 = vmul.f32 %v3102, %v3102
    %v3359 = vmul.f32 %v3103, %v3103
    %v3360 = vmul.f32 %v3104, %v3104
    %v3361 = vmul.f32 %v3105, %v3105
    %v3362 = vmul.f32 %v3106, %v3106
    %v3363 = vmul.f32 %v3107, %v3107
    %v3364 = vmul.f32 %v3108, %v3108
    %v3365 = vmul.f32 %v3109, %v3109
    %v3366 = vmul.f32 %v3110, %v3110
    %v3367 = vmul.f32 %v3111, %v3111
    %v3368 = vmul.f32 %v3112, %v3112
    %v3369 = vmul.f32 %v3113, %v3113
    %v3370 = vmul.f32 %v3114, %v3114
    %v3371 = vmul.f32 %v3115, %v3115
    %v3372 = vmul.f32 %v3116, %v3116
    %v3373 = vmul.f32 %v3117, %v3117
    %v3374 = vmul.f32 %v3118, %v3118
    %v3375 = vmul.f32 %v3119, %v3119
    %v3376 = vmul.f32 %v3120, %v3120
    %v3377 = vmul.f32 %v3121, %v3121
    %v3378 = vmul.f32 %v3122, %v3122
    %v3379 = vmul.f32 %v3123, %v3123
    %v3380 = vmul.f32 %v3124, %v3124
    %v3381 = vmul.f32 %v3125, %v3125
    %v3382 = vmul.f32 %v3126, %v3126
    %v3383 = vmul.f32 %v3127, %v3127
    %v3384 = vmul.f32 %v3128, %v3128
    %v3385 = vmul.f32 %v3129, %v3129
    %v3386 = vmul.f32 %v3130, %v3130
    %v3387 = vmul.f32 %v3131, %v3131
    %v3388 = vmul.f32 %v3132, %v3132
    %v3389 = vmul.f32 %v3133, %v3133
    %v3390 = vmul.f32 %v3134, %v3134
    %v3391 = vmul.f32 %v3135, %v3135
    %v3392 = vmul.f32 %v3136, %v3136
    %v3393 = vmul.f32 %v3137, %v3137
    %v3394 = vmul.f32 %v3138, %v3138
    %v3395 = vmul.f32 %v3139, %v3139
    %v3396 = vmul.f32 %v3140, %v3140
    %v3397 = vmul.f32 %v3141, %v3141
    %v3398 = vmul.f32 %v3142, %v3142
    %v3399 = vmul.f32 %v3143, %v3143
    %v3400 = vmul.f32 %v3144, %v3144
    %v3401 = vmul.f32 %v3145, %v3145
    %v3402 = vmul.f32 %v3146, %v3146
    %v3403 = vmul.f32 %v3147, %v3147
    %v3404 = vmul.f32 %v3148, %v3148
    %v3405 = vmul.f32 %v3149, %v3149
    %v3406 = vmul.f32 %v3150, %v3150
    %v3407 = vmul.f32 %v3151, %v3151
    %v3408 = vmul.f32 %v3152, %v3152
    %v3409 = vmul.f32 %v3153, %v3153
    %v3410 = vmul.f32 %v3154, %v3154
    %v3411 = vmul.f32 %v3155, %v3155
    %v3412 = vmul.f32 %v3156, %v3156
    %v3413 = vmul.f32 %v3157, %v3157
    %v3414 = vmul.f32 %v3158, %v3158
    %v3415 = vmul.f32 %v3159, %v3159
    %v3416 = vmul.f32 %v3160, %v3160
    %v3417 = vmul.f32 %v3161, %v3161
    %v3418 = vmul.f32 %v3162, %v3162
    %v3419 = vmul.f32 %v3163, %v3163
    %v3420 = vmul.f32 %v3164, %v3164
    %v3421 = vmul.f32 %v3165, %v3165
    %v3422 = vmul.f32 %v3166, %v3166
    %v3423 = vmul.f32 %v3167, %v3167
    %v3424 = vmul.f32 %v3168, %v3168
    %v3425 = vmul.f32 %v3169, %v3169
    %v3426 = vadd.f32 %v3170, %v3171
    %3427 = vadd.xlane.f32.xlu0 %v3426
    %v3428 = vpop.xlane.xlu0 %3427
    %v3429 = vadd.f32 %v3172, %v3173
    %3430 = vadd.xlane.f32.xlu0 %v3429
    %v3431 = vpop.xlane.xlu0 %3430
    %v3432 = vadd.f32 %v3174, %v3175
    %3433 = vadd.xlane.f32.xlu0 %v3432
    %v3434 = vpop.xlane.xlu0 %3433
    %v3435 = vadd.f32 %v3176, %v3177
    %3436 = vadd.xlane.f32.xlu0 %v3435
    %v3437 = vpop.xlane.xlu0 %3436
    %v3438 = vadd.f32 %v3178, %v3179
    %3439 = vadd.xlane.f32.xlu0 %v3438
    %v3440 = vpop.xlane.xlu0 %3439
    %v3441 = vadd.f32 %v3180, %v3181
    %3442 = vadd.xlane.f32.xlu0 %v3441
    %v3443 = vpop.xlane.xlu0 %3442
    %v3444 = vadd.f32 %v3182, %v3183
    %3445 = vadd.xlane.f32.xlu0 %v3444
    %v3446 = vpop.xlane.xlu0 %3445
    %v3447 = vadd.f32 %v3184, %v3185
    %3448 = vadd.xlane.f32.xlu0 %v3447
    %v3449 = vpop.xlane.xlu0 %3448
    %v3450 = vadd.f32 %v3186, %v3187
    %3451 = vadd.xlane.f32.xlu0 %v3450
    %v3452 = vpop.xlane.xlu0 %3451
    %v3453 = vadd.f32 %v3188, %v3189
    %3454 = vadd.xlane.f32.xlu0 %v3453
    %v3455 = vpop.xlane.xlu0 %3454
    %v3456 = vadd.f32 %v3190, %v3191
    %3457 = vadd.xlane.f32.xlu0 %v3456
    %v3458 = vpop.xlane.xlu0 %3457
    %v3459 = vadd.f32 %v3192, %v3193
    %3460 = vadd.xlane.f32.xlu0 %v3459
    %v3461 = vpop.xlane.xlu0 %3460
    %v3462 = vadd.f32 %v3194, %v3195
    %3463 = vadd.xlane.f32.xlu0 %v3462
    %v3464 = vpop.xlane.xlu0 %3463
    %v3465 = vadd.f32 %v3196, %v3197
    %3466 = vadd.xlane.f32.xlu0 %v3465
    %v3467 = vpop.xlane.xlu0 %3466
    %v3468 = vadd.f32 %v3198, %v3199
    %3469 = vadd.xlane.f32.xlu0 %v3468
    %v3470 = vpop.xlane.xlu0 %3469
    %v3471 = vadd.f32 %v3200, %v3201
    %3472 = vadd.xlane.f32.xlu0 %v3471
    %v3473 = vpop.xlane.xlu0 %3472
    %v3474 = vadd.f32 %v3202, %v3203
    %3475 = vadd.xlane.f32.xlu0 %v3474
    %v3476 = vpop.xlane.xlu0 %3475
    %v3477 = vadd.f32 %v3204, %v3205
    %3478 = vadd.xlane.f32.xlu0 %v3477
    %v3479 = vpop.xlane.xlu0 %3478
    %v3480 = vadd.f32 %v3206, %v3207
    %3481 = vadd.xlane.f32.xlu0 %v3480
    %v3482 = vpop.xlane.xlu0 %3481
    %v3483 = vadd.f32 %v3208, %v3209
    %3484 = vadd.xlane.f32.xlu0 %v3483
    %v3485 = vpop.xlane.xlu0 %3484
    %v3486 = vadd.f32 %v3210, %v3211
    %3487 = vadd.xlane.f32.xlu0 %v3486
    %v3488 = vpop.xlane.xlu0 %3487
    %v3489 = vadd.f32 %v3212, %v3213
    %3490 = vadd.xlane.f32.xlu0 %v3489
    %v3491 = vpop.xlane.xlu0 %3490
    %v3492 = vadd.f32 %v3214, %v3215
    %3493 = vadd.xlane.f32.xlu0 %v3492
    %v3494 = vpop.xlane.xlu0 %3493
    %v3495 = vadd.f32 %v3216, %v3217
    %3496 = vadd.xlane.f32.xlu0 %v3495
    %v3497 = vpop.xlane.xlu0 %3496
    %v3498 = vadd.f32 %v3218, %v3219
    %3499 = vadd.xlane.f32.xlu0 %v3498
    %v3500 = vpop.xlane.xlu0 %3499
    %v3501 = vadd.f32 %v3220, %v3221
    %3502 = vadd.xlane.f32.xlu0 %v3501
    %v3503 = vpop.xlane.xlu0 %3502
    %v3504 = vadd.f32 %v3222, %v3223
    %3505 = vadd.xlane.f32.xlu0 %v3504
    %v3506 = vpop.xlane.xlu0 %3505
    %v3507 = vadd.f32 %v3224, %v3225
    %3508 = vadd.xlane.f32.xlu0 %v3507
    %v3509 = vpop.xlane.xlu0 %3508
    %v3510 = vadd.f32 %v3226, %v3227
    %3511 = vadd.xlane.f32.xlu0 %v3510
    %v3512 = vpop.xlane.xlu0 %3511
    %v3513 = vadd.f32 %v3228, %v3229
    %3514 = vadd.xlane.f32.xlu0 %v3513
    %v3515 = vpop.xlane.xlu0 %3514
    %v3516 = vadd.f32 %v3230, %v3231
    %3517 = vadd.xlane.f32.xlu0 %v3516
    %v3518 = vpop.xlane.xlu0 %3517
    %v3519 = vadd.f32 %v3232, %v3233
    %3520 = vadd.xlane.f32.xlu0 %v3519
    %v3521 = vpop.xlane.xlu0 %3520
    %v3522 = vadd.f32 %v3234, %v3235
    %3523 = vadd.xlane.f32.xlu0 %v3522
    %v3524 = vpop.xlane.xlu0 %3523
    %v3525 = vadd.f32 %v3236, %v3237
    %3526 = vadd.xlane.f32.xlu0 %v3525
    %v3527 = vpop.xlane.xlu0 %3526
    %v3528 = vadd.f32 %v3238, %v3239
    %3529 = vadd.xlane.f32.xlu0 %v3528
    %v3530 = vpop.xlane.xlu0 %3529
    %v3531 = vadd.f32 %v3240, %v3241
    %3532 = vadd.xlane.f32.xlu0 %v3531
    %v3533 = vpop.xlane.xlu0 %3532
    %v3534 = vadd.f32 %v3242, %v3243
    %3535 = vadd.xlane.f32.xlu0 %v3534
    %v3536 = vpop.xlane.xlu0 %3535
    %v3537 = vadd.f32 %v3244, %v3245
    %3538 = vadd.xlane.f32.xlu0 %v3537
    %v3539 = vpop.xlane.xlu0 %3538
    %v3540 = vadd.f32 %v3246, %v3247
    %3541 = vadd.xlane.f32.xlu0 %v3540
    %v3542 = vpop.xlane.xlu0 %3541
    %v3543 = vadd.f32 %v3248, %v3249
    %3544 = vadd.xlane.f32.xlu0 %v3543
    %v3545 = vpop.xlane.xlu0 %3544
    %v3546 = vadd.f32 %v3250, %v3251
    %3547 = vadd.xlane.f32.xlu0 %v3546
    %v3548 = vpop.xlane.xlu0 %3547
    %v3549 = vadd.f32 %v3252, %v3253
    %3550 = vadd.xlane.f32.xlu0 %v3549
    %v3551 = vpop.xlane.xlu0 %3550
    %v3552 = vadd.f32 %v3254, %v3255
    %3553 = vadd.xlane.f32.xlu0 %v3552
    %v3554 = vpop.xlane.xlu0 %3553
    %v3555 = vadd.f32 %v3256, %v3257
    %3556 = vadd.xlane.f32.xlu0 %v3555
    %v3557 = vpop.xlane.xlu0 %3556
    %v3558 = vadd.f32 %v3258, %v3259
    %3559 = vadd.xlane.f32.xlu0 %v3558
    %v3560 = vpop.xlane.xlu0 %3559
    %v3561 = vadd.f32 %v3260, %v3261
    %3562 = vadd.xlane.f32.xlu0 %v3561
    %v3563 = vpop.xlane.xlu0 %3562
    %v3564 = vadd.f32 %v3262, %v3263
    %3565 = vadd.xlane.f32.xlu0 %v3564
    %v3566 = vpop.xlane.xlu0 %3565
    %v3567 = vadd.f32 %v3264, %v3265
    %3568 = vadd.xlane.f32.xlu0 %v3567
    %v3569 = vpop.xlane.xlu0 %3568
    %v3570 = vadd.f32 %v3266, %v3267
    %3571 = vadd.xlane.f32.xlu0 %v3570
    %v3572 = vpop.xlane.xlu0 %3571
    %v3573 = vadd.f32 %v3268, %v3269
    %3574 = vadd.xlane.f32.xlu0 %v3573
    %v3575 = vpop.xlane.xlu0 %3574
    %v3576 = vadd.f32 %v3270, %v3271
    %3577 = vadd.xlane.f32.xlu0 %v3576
    %v3578 = vpop.xlane.xlu0 %3577
    %v3579 = vadd.f32 %v3272, %v3273
    %3580 = vadd.xlane.f32.xlu0 %v3579
    %v3581 = vpop.xlane.xlu0 %3580
    %v3582 = vadd.f32 %v3274, %v3275
    %3583 = vadd.xlane.f32.xlu0 %v3582
    %v3584 = vpop.xlane.xlu0 %3583
    %v3585 = vadd.f32 %v3276, %v3277
    %3586 = vadd.xlane.f32.xlu0 %v3585
    %v3587 = vpop.xlane.xlu0 %3586
    %v3588 = vadd.f32 %v3278, %v3279
    %3589 = vadd.xlane.f32.xlu0 %v3588
    %v3590 = vpop.xlane.xlu0 %3589
    %v3591 = vadd.f32 %v3280, %v3281
    %3592 = vadd.xlane.f32.xlu0 %v3591
    %v3593 = vpop.xlane.xlu0 %3592
    %v3594 = vadd.f32 %v3282, %v3283
    %3595 = vadd.xlane.f32.xlu0 %v3594
    %v3596 = vpop.xlane.xlu0 %3595
    %v3597 = vadd.f32 %v3284, %v3285
    %3598 = vadd.xlane.f32.xlu0 %v3597
    %v3599 = vpop.xlane.xlu0 %3598
    %v3600 = vadd.f32 %v3286, %v3287
    %3601 = vadd.xlane.f32.xlu0 %v3600
    %v3602 = vpop.xlane.xlu0 %3601
    %v3603 = vadd.f32 %v3288, %v3289
    %3604 = vadd.xlane.f32.xlu0 %v3603
    %v3605 = vpop.xlane.xlu0 %3604
    %v3606 = vadd.f32 %v3290, %v3291
    %3607 = vadd.xlane.f32.xlu0 %v3606
    %v3608 = vpop.xlane.xlu0 %3607
    %v3609 = vadd.f32 %v3292, %v3293
    %3610 = vadd.xlane.f32.xlu0 %v3609
    %v3611 = vpop.xlane.xlu0 %3610
    %v3612 = vadd.f32 %v3294, %v3295
    %3613 = vadd.xlane.f32.xlu0 %v3612
    %v3614 = vpop.xlane.xlu0 %3613
    %v3615 = vadd.f32 %v3296, %v3297
    %3616 = vadd.xlane.f32.xlu0 %v3615
    %v3617 = vpop.xlane.xlu0 %3616
    %v3618 = vadd.f32 %v3298, %v3299
    %3619 = vadd.xlane.f32.xlu0 %v3618
    %v3620 = vpop.xlane.xlu0 %3619
    %v3621 = vadd.f32 %v3300, %v3301
    %3622 = vadd.xlane.f32.xlu0 %v3621
    %v3623 = vpop.xlane.xlu0 %3622
    %v3624 = vadd.f32 %v3302, %v3303
    %3625 = vadd.xlane.f32.xlu0 %v3624
    %v3626 = vpop.xlane.xlu0 %3625
    %v3627 = vadd.f32 %v3304, %v3305
    %3628 = vadd.xlane.f32.xlu0 %v3627
    %v3629 = vpop.xlane.xlu0 %3628
    %v3630 = vadd.f32 %v3306, %v3307
    %3631 = vadd.xlane.f32.xlu0 %v3630
    %v3632 = vpop.xlane.xlu0 %3631
    %v3633 = vadd.f32 %v3308, %v3309
    %3634 = vadd.xlane.f32.xlu0 %v3633
    %v3635 = vpop.xlane.xlu0 %3634
    %v3636 = vadd.f32 %v3310, %v3311
    %3637 = vadd.xlane.f32.xlu0 %v3636
    %v3638 = vpop.xlane.xlu0 %3637
    %v3639 = vadd.f32 %v3312, %v3313
    %3640 = vadd.xlane.f32.xlu0 %v3639
    %v3641 = vpop.xlane.xlu0 %3640
    %v3642 = vadd.f32 %v3314, %v3315
    %3643 = vadd.xlane.f32.xlu0 %v3642
    %v3644 = vpop.xlane.xlu0 %3643
    %v3645 = vadd.f32 %v3316, %v3317
    %3646 = vadd.xlane.f32.xlu0 %v3645
    %v3647 = vpop.xlane.xlu0 %3646
    %v3648 = vadd.f32 %v3318, %v3319
    %3649 = vadd.xlane.f32.xlu0 %v3648
    %v3650 = vpop.xlane.xlu0 %3649
    %v3651 = vadd.f32 %v3320, %v3321
    %3652 = vadd.xlane.f32.xlu0 %v3651
    %v3653 = vpop.xlane.xlu0 %3652
    %v3654 = vadd.f32 %v3322, %v3323
    %3655 = vadd.xlane.f32.xlu0 %v3654
    %v3656 = vpop.xlane.xlu0 %3655
    %v3657 = vadd.f32 %v3324, %v3325
    %3658 = vadd.xlane.f32.xlu0 %v3657
    %v3659 = vpop.xlane.xlu0 %3658
    %v3660 = vadd.f32 %v3326, %v3327
    %3661 = vadd.xlane.f32.xlu0 %v3660
    %v3662 = vpop.xlane.xlu0 %3661
    %v3663 = vadd.f32 %v3328, %v3329
    %3664 = vadd.xlane.f32.xlu0 %v3663
    %v3665 = vpop.xlane.xlu0 %3664
    %v3666 = vadd.f32 %v3330, %v3331
    %3667 = vadd.xlane.f32.xlu0 %v3666
    %v3668 = vpop.xlane.xlu0 %3667
    %v3669 = vadd.f32 %v3332, %v3333
    %3670 = vadd.xlane.f32.xlu0 %v3669
    %v3671 = vpop.xlane.xlu0 %3670
    %v3672 = vadd.f32 %v3334, %v3335
    %3673 = vadd.xlane.f32.xlu0 %v3672
    %v3674 = vpop.xlane.xlu0 %3673
    %v3675 = vadd.f32 %v3336, %v3337
    %3676 = vadd.xlane.f32.xlu0 %v3675
    %v3677 = vpop.xlane.xlu0 %3676
    %v3678 = vadd.f32 %v3338, %v3339
    %3679 = vadd.xlane.f32.xlu0 %v3678
    %v3680 = vpop.xlane.xlu0 %3679
    %v3681 = vadd.f32 %v3340, %v3341
    %3682 = vadd.xlane.f32.xlu0 %v3681
    %v3683 = vpop.xlane.xlu0 %3682
    %v3684 = vadd.f32 %v3342, %v3343
    %3685 = vadd.xlane.f32.xlu0 %v3684
    %v3686 = vpop.xlane.xlu0 %3685
    %v3687 = vadd.f32 %v3344, %v3345
    %3688 = vadd.xlane.f32.xlu0 %v3687
    %v3689 = vpop.xlane.xlu0 %3688
    %v3690 = vadd.f32 %v3346, %v3347
    %3691 = vadd.xlane.f32.xlu0 %v3690
    %v3692 = vpop.xlane.xlu0 %3691
    %v3693 = vadd.f32 %v3348, %v3349
    %3694 = vadd.xlane.f32.xlu0 %v3693
    %v3695 = vpop.xlane.xlu0 %3694
    %v3696 = vadd.f32 %v3350, %v3351
    %3697 = vadd.xlane.f32.xlu0 %v3696
    %v3698 = vpop.xlane.xlu0 %3697
    %v3699 = vadd.f32 %v3352, %v3353
    %3700 = vadd.xlane.f32.xlu0 %v3699
    %v3701 = vpop.xlane.xlu0 %3700
    %v3702 = vadd.f32 %v3354, %v3355
    %3703 = vadd.xlane.f32.xlu0 %v3702
    %v3704 = vpop.xlane.xlu0 %3703
    %v3705 = vadd.f32 %v3356, %v3357
    %3706 = vadd.xlane.f32.xlu0 %v3705
    %v3707 = vpop.xlane.xlu0 %3706
    %v3708 = vadd.f32 %v3358, %v3359
    %3709 = vadd.xlane.f32.xlu0 %v3708
    %v3710 = vpop.xlane.xlu0 %3709
    %v3711 = vadd.f32 %v3360, %v3361
    %3712 = vadd.xlane.f32.xlu0 %v3711
    %v3713 = vpop.xlane.xlu0 %3712
    %v3714 = vadd.f32 %v3362, %v3363
    %3715 = vadd.xlane.f32.xlu0 %v3714
    %v3716 = vpop.xlane.xlu0 %3715
    %v3717 = vadd.f32 %v3364, %v3365
    %3718 = vadd.xlane.f32.xlu0 %v3717
    %v3719 = vpop.xlane.xlu0 %3718
    %v3720 = vadd.f32 %v3366, %v3367
    %3721 = vadd.xlane.f32.xlu0 %v3720
    %v3722 = vpop.xlane.xlu0 %3721
    %v3723 = vadd.f32 %v3368, %v3369
    %3724 = vadd.xlane.f32.xlu0 %v3723
    %v3725 = vpop.xlane.xlu0 %3724
    %v3726 = vadd.f32 %v3370, %v3371
    %3727 = vadd.xlane.f32.xlu0 %v3726
    %v3728 = vpop.xlane.xlu0 %3727
    %v3729 = vadd.f32 %v3372, %v3373
    %3730 = vadd.xlane.f32.xlu0 %v3729
    %v3731 = vpop.xlane.xlu0 %3730
    %v3732 = vadd.f32 %v3374, %v3375
    %3733 = vadd.xlane.f32.xlu0 %v3732
    %v3734 = vpop.xlane.xlu0 %3733
    %v3735 = vadd.f32 %v3376, %v3377
    %3736 = vadd.xlane.f32.xlu0 %v3735
    %v3737 = vpop.xlane.xlu0 %3736
    %v3738 = vadd.f32 %v3378, %v3379
    %3739 = vadd.xlane.f32.xlu0 %v3738
    %v3740 = vpop.xlane.xlu0 %3739
    %v3741 = vadd.f32 %v3380, %v3381
    %3742 = vadd.xlane.f32.xlu0 %v3741
    %v3743 = vpop.xlane.xlu0 %3742
    %v3744 = vadd.f32 %v3382, %v3383
    %3745 = vadd.xlane.f32.xlu0 %v3744
    %v3746 = vpop.xlane.xlu0 %3745
    %v3747 = vadd.f32 %v3384, %v3385
    %3748 = vadd.xlane.f32.xlu0 %v3747
    %v3749 = vpop.xlane.xlu0 %3748
    %v3750 = vadd.f32 %v3386, %v3387
    %3751 = vadd.xlane.f32.xlu0 %v3750
    %v3752 = vpop.xlane.xlu0 %3751
    %v3753 = vadd.f32 %v3388, %v3389
    %3754 = vadd.xlane.f32.xlu0 %v3753
    %v3755 = vpop.xlane.xlu0 %3754
    %v3756 = vadd.f32 %v3390, %v3391
    %3757 = vadd.xlane.f32.xlu0 %v3756
    %v3758 = vpop.xlane.xlu0 %3757
    %v3759 = vadd.f32 %v3392, %v3393
    %3760 = vadd.xlane.f32.xlu0 %v3759
    %v3761 = vpop.xlane.xlu0 %3760
    %v3762 = vadd.f32 %v3394, %v3395
    %3763 = vadd.xlane.f32.xlu0 %v3762
    %v3764 = vpop.xlane.xlu0 %3763
    %v3765 = vadd.f32 %v3396, %v3397
    %3766 = vadd.xlane.f32.xlu0 %v3765
    %v3767 = vpop.xlane.xlu0 %3766
    %v3768 = vadd.f32 %v3398, %v3399
    %3769 = vadd.xlane.f32.xlu0 %v3768
    %v3770 = vpop.xlane.xlu0 %3769
    %v3771 = vadd.f32 %v3400, %v3401
    %3772 = vadd.xlane.f32.xlu0 %v3771
    %v3773 = vpop.xlane.xlu0 %3772
    %v3774 = vadd.f32 %v3402, %v3403
    %3775 = vadd.xlane.f32.xlu0 %v3774
    %v3776 = vpop.xlane.xlu0 %3775
    %v3777 = vadd.f32 %v3404, %v3405
    %3778 = vadd.xlane.f32.xlu0 %v3777
    %v3779 = vpop.xlane.xlu0 %3778
    %v3780 = vadd.f32 %v3406, %v3407
    %3781 = vadd.xlane.f32.xlu0 %v3780
    %v3782 = vpop.xlane.xlu0 %3781
    %v3783 = vadd.f32 %v3408, %v3409
    %3784 = vadd.xlane.f32.xlu0 %v3783
    %v3785 = vpop.xlane.xlu0 %3784
    %v3786 = vadd.f32 %v3410, %v3411
    %3787 = vadd.xlane.f32.xlu0 %v3786
    %v3788 = vpop.xlane.xlu0 %3787
    %v3789 = vadd.f32 %v3412, %v3413
    %3790 = vadd.xlane.f32.xlu0 %v3789
    %v3791 = vpop.xlane.xlu0 %3790
    %v3792 = vadd.f32 %v3414, %v3415
    %3793 = vadd.xlane.f32.xlu0 %v3792
    %v3794 = vpop.xlane.xlu0 %3793
    %v3795 = vadd.f32 %v3416, %v3417
    %3796 = vadd.xlane.f32.xlu0 %v3795
    %v3797 = vpop.xlane.xlu0 %3796
    %v3798 = vadd.f32 %v3418, %v3419
    %3799 = vadd.xlane.f32.xlu0 %v3798
    %v3800 = vpop.xlane.xlu0 %3799
    %v3801 = vadd.f32 %v3420, %v3421
    %3802 = vadd.xlane.f32.xlu0 %v3801
    %v3803 = vpop.xlane.xlu0 %3802
    %v3804 = vadd.f32 %v3422, %v3423
    %3805 = vadd.xlane.f32.xlu0 %v3804
    %v3806 = vpop.xlane.xlu0 %3805
    %v3807 = vadd.f32 %v3424, %v3425
    %3808 = vadd.xlane.f32.xlu0 %v3807
    %v3809 = vpop.xlane.xlu0 %3808
    %v3810 = vsub.f32 0.0, %v3428
    %v3811 = vsub.f32 0.0, %v3431
    %v3812 = vsub.f32 0.0, %v3434
    %v3813 = vsub.f32 0.0, %v3437
    %v3814 = vsub.f32 0.0, %v3440
    %v3815 = vsub.f32 0.0, %v3443
    %v3816 = vsub.f32 0.0, %v3446
    %v3817 = vsub.f32 0.0, %v3449
    %v3818 = vsub.f32 0.0, %v3452
    %v3819 = vsub.f32 0.0, %v3455
    %v3820 = vsub.f32 0.0, %v3458
    %v3821 = vsub.f32 0.0, %v3461
    %v3822 = vsub.f32 0.0, %v3464
    %v3823 = vsub.f32 0.0, %v3467
    %v3824 = vsub.f32 0.0, %v3470
    %v3825 = vsub.f32 0.0, %v3473
    %v3826 = vsub.f32 0.0, %v3476
    %v3827 = vsub.f32 0.0, %v3479
    %v3828 = vsub.f32 0.0, %v3482
    %v3829 = vsub.f32 0.0, %v3485
    %v3830 = vsub.f32 0.0, %v3488
    %v3831 = vsub.f32 0.0, %v3491
    %v3832 = vsub.f32 0.0, %v3494
    %v3833 = vsub.f32 0.0, %v3497
    %v3834 = vsub.f32 0.0, %v3500
    %v3835 = vsub.f32 0.0, %v3503
    %v3836 = vsub.f32 0.0, %v3506
    %v3837 = vsub.f32 0.0, %v3509
    %v3838 = vsub.f32 0.0, %v3512
    %v3839 = vsub.f32 0.0, %v3515
    %v3840 = vsub.f32 0.0, %v3518
    %v3841 = vsub.f32 0.0, %v3521
    %v3842 = vsub.f32 0.0, %v3524
    %v3843 = vsub.f32 0.0, %v3527
    %v3844 = vsub.f32 0.0, %v3530
    %v3845 = vsub.f32 0.0, %v3533
    %v3846 = vsub.f32 0.0, %v3536
    %v3847 = vsub.f32 0.0, %v3539
    %v3848 = vsub.f32 0.0, %v3542
    %v3849 = vsub.f32 0.0, %v3545
    %v3850 = vsub.f32 0.0, %v3548
    %v3851 = vsub.f32 0.0, %v3551
    %v3852 = vsub.f32 0.0, %v3554
    %v3853 = vsub.f32 0.0, %v3557
    %v3854 = vsub.f32 0.0, %v3560
    %v3855 = vsub.f32 0.0, %v3563
    %v3856 = vsub.f32 0.0, %v3566
    %v3857 = vsub.f32 0.0, %v3569
    %v3858 = vsub.f32 0.0, %v3572
    %v3859 = vsub.f32 0.0, %v3575
    %v3860 = vsub.f32 0.0, %v3578
    %v3861 = vsub.f32 0.0, %v3581
    %v3862 = vsub.f32 0.0, %v3584
    %v3863 = vsub.f32 0.0, %v3587
    %v3864 = vsub.f32 0.0, %v3590
    %v3865 = vsub.f32 0.0, %v3593
    %v3866 = vsub.f32 0.0, %v3596
    %v3867 = vsub.f32 0.0, %v3599
    %v3868 = vsub.f32 0.0, %v3602
    %v3869 = vsub.f32 0.0, %v3605
    %v3870 = vsub.f32 0.0, %v3608
    %v3871 = vsub.f32 0.0, %v3611
    %v3872 = vsub.f32 0.0, %v3614
    %v3873 = vsub.f32 0.0, %v3617
    %v3874 = vsub.f32 0.0, %v3620
    %v3875 = vsub.f32 0.0, %v3623
    %v3876 = vsub.f32 0.0, %v3626
    %v3877 = vsub.f32 0.0, %v3629
    %v3878 = vsub.f32 0.0, %v3632
    %v3879 = vsub.f32 0.0, %v3635
    %v3880 = vsub.f32 0.0, %v3638
    %v3881 = vsub.f32 0.0, %v3641
    %v3882 = vsub.f32 0.0, %v3644
    %v3883 = vsub.f32 0.0, %v3647
    %v3884 = vsub.f32 0.0, %v3650
    %v3885 = vsub.f32 0.0, %v3653
    %v3886 = vsub.f32 0.0, %v3656
    %v3887 = vsub.f32 0.0, %v3659
    %v3888 = vsub.f32 0.0, %v3662
    %v3889 = vsub.f32 0.0, %v3665
    %v3890 = vsub.f32 0.0, %v3668
    %v3891 = vsub.f32 0.0, %v3671
    %v3892 = vsub.f32 0.0, %v3674
    %v3893 = vsub.f32 0.0, %v3677
    %v3894 = vsub.f32 0.0, %v3680
    %v3895 = vsub.f32 0.0, %v3683
    %v3896 = vsub.f32 0.0, %v3686
    %v3897 = vsub.f32 0.0, %v3689
    %v3898 = vsub.f32 0.0, %v3692
    %v3899 = vsub.f32 0.0, %v3695
    %v3900 = vsub.f32 0.0, %v3698
    %v3901 = vsub.f32 0.0, %v3701
    %v3902 = vsub.f32 0.0, %v3704
    %v3903 = vsub.f32 0.0, %v3707
    %v3904 = vsub.f32 0.0, %v3710
    %v3905 = vsub.f32 0.0, %v3713
    %v3906 = vsub.f32 0.0, %v3716
    %v3907 = vsub.f32 0.0, %v3719
    %v3908 = vsub.f32 0.0, %v3722
    %v3909 = vsub.f32 0.0, %v3725
    %v3910 = vsub.f32 0.0, %v3728
    %v3911 = vsub.f32 0.0, %v3731
    %v3912 = vsub.f32 0.0, %v3734
    %v3913 = vsub.f32 0.0, %v3737
    %v3914 = vsub.f32 0.0, %v3740
    %v3915 = vsub.f32 0.0, %v3743
    %v3916 = vsub.f32 0.0, %v3746
    %v3917 = vsub.f32 0.0, %v3749
    %v3918 = vsub.f32 0.0, %v3752
    %v3919 = vsub.f32 0.0, %v3755
    %v3920 = vsub.f32 0.0, %v3758
    %v3921 = vsub.f32 0.0, %v3761
    %v3922 = vsub.f32 0.0, %v3764
    %v3923 = vsub.f32 0.0, %v3767
    %v3924 = vsub.f32 0.0, %v3770
    %v3925 = vsub.f32 0.0, %v3773
    %v3926 = vsub.f32 0.0, %v3776
    %v3927 = vsub.f32 0.0, %v3779
    %v3928 = vsub.f32 0.0, %v3782
    %v3929 = vsub.f32 0.0, %v3785
    %v3930 = vsub.f32 0.0, %v3788
    %v3931 = vsub.f32 0.0, %v3791
    %v3932 = vsub.f32 0.0, %v3794
    %v3933 = vsub.f32 0.0, %v3797
    %v3934 = vsub.f32 0.0, %v3800
    %v3935 = vsub.f32 0.0, %v3803
    %v3936 = vsub.f32 0.0, %v3806
    %v3937 = vsub.f32 0.0, %v3809
    %v4066 = vlaneseq
    %v4067 = vand.u32 %v4066, 127
    %v4068 = vlaneseq
    %v4069 = vshrl.u32 %v4068, 7
    %v4070 = vsub.s32 %v4067, %v4069
    %v4071 = vrot.slane %v3810, %v4070
    %v4072 = vadd.s32 %v4067, 4294967288
    %v4073 = vlaneseq
    %v4074 = vshrl.u32 %v4073, 7
    %v4075 = vsub.s32 %v4072, %v4074
    %v4076 = vrot.slane %v3811, %v4075
    %vm4077 = vcmask 130112
    %v4078 = vsel %vm4077, %v4076, %v4071
    %v4079 = vadd.s32 %v4067, 4294967280
    %v4080 = vlaneseq
    %v4081 = vshrl.u32 %v4080, 7
    %v4082 = vsub.s32 %v4079, %v4081
    %v4083 = vrot.slane %v3812, %v4082
    %vm4084 = vcmask 195712
    %v4085 = vsel %vm4084, %v4083, %v4078
    %v4086 = vadd.s32 %v4067, 4294967272
    %v4087 = vlaneseq
    %v4088 = vshrl.u32 %v4087, 7
    %v4089 = vsub.s32 %v4086, %v4088
    %v4090 = vrot.slane %v3813, %v4089
    %vm4091 = vcmask 261312
    %v4092 = vsel %vm4091, %v4090, %v4085
    %v4093 = vadd.s32 %v4067, 4294967264
    %v4094 = vlaneseq
    %v4095 = vshrl.u32 %v4094, 7
    %v4096 = vsub.s32 %v4093, %v4095
    %v4097 = vrot.slane %v3814, %v4096
    %vm4098 = vcmask 326912
    %v4099 = vsel %vm4098, %v4097, %v4092
    %v4100 = vadd.s32 %v4067, 4294967256
    %v4101 = vlaneseq
    %v4102 = vshrl.u32 %v4101, 7
    %v4103 = vsub.s32 %v4100, %v4102
    %v4104 = vrot.slane %v3815, %v4103
    %vm4105 = vcmask 392512
    %v4106 = vsel %vm4105, %v4104, %v4099
    %v4107 = vadd.s32 %v4067, 4294967248
    %v4108 = vlaneseq
    %v4109 = vshrl.u32 %v4108, 7
    %v4110 = vsub.s32 %v4107, %v4109
    %v4111 = vrot.slane %v3816, %v4110
    %vm4112 = vcmask 458112
    %v4113 = vsel %vm4112, %v4111, %v4106
    %v4114 = vadd.s32 %v4067, 4294967240
    %v4115 = vlaneseq
    %v4116 = vshrl.u32 %v4115, 7
    %v4117 = vsub.s32 %v4114, %v4116
    %v4118 = vrot.slane %v3817, %v4117
    %vm4119 = vcmask 523712
    %v4120 = vsel %vm4119, %v4118, %v4113
    %v4121 = vadd.s32 %v4067, 4294967232
    %v4122 = vlaneseq
    %v4123 = vshrl.u32 %v4122, 7
    %v4124 = vsub.s32 %v4121, %v4123
    %v4125 = vrot.slane %v3818, %v4124
    %vm4126 = vcmask 589312
    %v4127 = vsel %vm4126, %v4125, %v4120
    %v4128 = vadd.s32 %v4067, 4294967224
    %v4129 = vlaneseq
    %v4130 = vshrl.u32 %v4129, 7
    %v4131 = vsub.s32 %v4128, %v4130
    %v4132 = vrot.slane %v3819, %v4131
    %vm4133 = vcmask 654912
    %v4134 = vsel %vm4133, %v4132, %v4127
    %v4135 = vadd.s32 %v4067, 4294967216
    %v4136 = vlaneseq
    %v4137 = vshrl.u32 %v4136, 7
    %v4138 = vsub.s32 %v4135, %v4137
    %v4139 = vrot.slane %v3820, %v4138
    %vm4140 = vcmask 720512
    %v4141 = vsel %vm4140, %v4139, %v4134
    %v4142 = vadd.s32 %v4067, 4294967208
    %v4143 = vlaneseq
    %v4144 = vshrl.u32 %v4143, 7
    %v4145 = vsub.s32 %v4142, %v4144
    %v4146 = vrot.slane %v3821, %v4145
    %vm4147 = vcmask 786112
    %v4148 = vsel %vm4147, %v4146, %v4141
    %v4149 = vadd.s32 %v4067, 4294967200
    %v4150 = vlaneseq
    %v4151 = vshrl.u32 %v4150, 7
    %v4152 = vsub.s32 %v4149, %v4151
    %v4153 = vrot.slane %v3822, %v4152
    %vm4154 = vcmask 851712
    %v4155 = vsel %vm4154, %v4153, %v4148
    %v4156 = vadd.s32 %v4067, 4294967192
    %v4157 = vlaneseq
    %v4158 = vshrl.u32 %v4157, 7
    %v4159 = vsub.s32 %v4156, %v4158
    %v4160 = vrot.slane %v3823, %v4159
    %vm4161 = vcmask 917312
    %v4162 = vsel %vm4161, %v4160, %v4155
    %v4163 = vadd.s32 %v4067, 4294967184
    %v4164 = vlaneseq
    %v4165 = vshrl.u32 %v4164, 7
    %v4166 = vsub.s32 %v4163, %v4165
    %v4167 = vrot.slane %v3824, %v4166
    %vm4168 = vcmask 982912
    %v4169 = vsel %vm4168, %v4167, %v4162
    %v4170 = vadd.s32 %v4067, 4294967176
    %v4171 = vlaneseq
    %v4172 = vshrl.u32 %v4171, 7
    %v4173 = vsub.s32 %v4170, %v4172
    %v4174 = vrot.slane %v3825, %v4173
    %vm4175 = vcmask 1048512
    %v4176 = vsel %vm4175, %v4174, %v4169
    %v4177 = vlaneseq
    %v4178 = vshrl.u32 %v4177, 7
    %v4179 = vsub.s32 %v4067, %v4178
    %v4180 = vrot.slane %v3826, %v4179
    %v4181 = vlaneseq
    %v4182 = vshrl.u32 %v4181, 7
    %v4183 = vsub.s32 %v4072, %v4182
    %v4184 = vrot.slane %v3827, %v4183
    %v4185 = vsel %vm4077, %v4184, %v4180
    %v4186 = vlaneseq
    %v4187 = vshrl.u32 %v4186, 7
    %v4188 = vsub.s32 %v4079, %v4187
    %v4189 = vrot.slane %v3828, %v4188
    %v4190 = vsel %vm4084, %v4189, %v4185
    %v4191 = vlaneseq
    %v4192 = vshrl.u32 %v4191, 7
    %v4193 = vsub.s32 %v4086, %v4192
    %v4194 = vrot.slane %v3829, %v4193
    %v4195 = vsel %vm4091, %v4194, %v4190
    %v4196 = vlaneseq
    %v4197 = vshrl.u32 %v4196, 7
    %v4198 = vsub.s32 %v4093, %v4197
    %v4199 = vrot.slane %v3830, %v4198
    %v4200 = vsel %vm4098, %v4199, %v4195
    %v4201 = vlaneseq
    %v4202 = vshrl.u32 %v4201, 7
    %v4203 = vsub.s32 %v4100, %v4202
    %v4204 = vrot.slane %v3831, %v4203
    %v4205 = vsel %vm4105, %v4204, %v4200
    %v4206 = vlaneseq
    %v4207 = vshrl.u32 %v4206, 7
    %v4208 = vsub.s32 %v4107, %v4207
    %v4209 = vrot.slane %v3832, %v4208
    %v4210 = vsel %vm4112, %v4209, %v4205
    %v4211 = vlaneseq
    %v4212 = vshrl.u32 %v4211, 7
    %v4213 = vsub.s32 %v4114, %v4212
    %v4214 = vrot.slane %v3833, %v4213
    %v4215 = vsel %vm4119, %v4214, %v4210
    %v4216 = vlaneseq
    %v4217 = vshrl.u32 %v4216, 7
    %v4218 = vsub.s32 %v4121, %v4217
    %v4219 = vrot.slane %v3834, %v4218
    %v4220 = vsel %vm4126, %v4219, %v4215
    %v4221 = vlaneseq
    %v4222 = vshrl.u32 %v4221, 7
    %v4223 = vsub.s32 %v4128, %v4222
    %v4224 = vrot.slane %v3835, %v4223
    %v4225 = vsel %vm4133, %v4224, %v4220
    %v4226 = vlaneseq
    %v4227 = vshrl.u32 %v4226, 7
    %v4228 = vsub.s32 %v4135, %v4227
    %v4229 = vrot.slane %v3836, %v4228
    %v4230 = vsel %vm4140, %v4229, %v4225
    %v4231 = vlaneseq
    %v4232 = vshrl.u32 %v4231, 7
    %v4233 = vsub.s32 %v4142, %v4232
    %v4234 = vrot.slane %v3837, %v4233
    %v4235 = vsel %vm4147, %v4234, %v4230
    %v4236 = vlaneseq
    %v4237 = vshrl.u32 %v4236, 7
    %v4238 = vsub.s32 %v4149, %v4237
    %v4239 = vrot.slane %v3838, %v4238
    %v4240 = vsel %vm4154, %v4239, %v4235
    %v4241 = vlaneseq
    %v4242 = vshrl.u32 %v4241, 7
    %v4243 = vsub.s32 %v4156, %v4242
    %v4244 = vrot.slane %v3839, %v4243
    %v4245 = vsel %vm4161, %v4244, %v4240
    %v4246 = vlaneseq
    %v4247 = vshrl.u32 %v4246, 7
    %v4248 = vsub.s32 %v4163, %v4247
    %v4249 = vrot.slane %v3840, %v4248
    %v4250 = vsel %vm4168, %v4249, %v4245
    %v4251 = vlaneseq
    %v4252 = vshrl.u32 %v4251, 7
    %v4253 = vsub.s32 %v4170, %v4252
    %v4254 = vrot.slane %v3841, %v4253
    %v4255 = vsel %vm4175, %v4254, %v4250
    %v4256 = vlaneseq
    %v4257 = vshrl.u32 %v4256, 7
    %v4258 = vsub.s32 %v4067, %v4257
    %v4259 = vrot.slane %v3842, %v4258
    %v4260 = vlaneseq
    %v4261 = vshrl.u32 %v4260, 7
    %v4262 = vsub.s32 %v4072, %v4261
    %v4263 = vrot.slane %v3843, %v4262
    %v4264 = vsel %vm4077, %v4263, %v4259
    %v4265 = vlaneseq
    %v4266 = vshrl.u32 %v4265, 7
    %v4267 = vsub.s32 %v4079, %v4266
    %v4268 = vrot.slane %v3844, %v4267
    %v4269 = vsel %vm4084, %v4268, %v4264
    %v4270 = vlaneseq
    %v4271 = vshrl.u32 %v4270, 7
    %v4272 = vsub.s32 %v4086, %v4271
    %v4273 = vrot.slane %v3845, %v4272
    %v4274 = vsel %vm4091, %v4273, %v4269
    %v4275 = vlaneseq
    %v4276 = vshrl.u32 %v4275, 7
    %v4277 = vsub.s32 %v4093, %v4276
    %v4278 = vrot.slane %v3846, %v4277
    %v4279 = vsel %vm4098, %v4278, %v4274
    %v4280 = vlaneseq
    %v4281 = vshrl.u32 %v4280, 7
    %v4282 = vsub.s32 %v4100, %v4281
    %v4283 = vrot.slane %v3847, %v4282
    %v4284 = vsel %vm4105, %v4283, %v4279
    %v4285 = vlaneseq
    %v4286 = vshrl.u32 %v4285, 7
    %v4287 = vsub.s32 %v4107, %v4286
    %v4288 = vrot.slane %v3848, %v4287
    %v4289 = vsel %vm4112, %v4288, %v4284
    %v4290 = vlaneseq
    %v4291 = vshrl.u32 %v4290, 7
    %v4292 = vsub.s32 %v4114, %v4291
    %v4293 = vrot.slane %v3849, %v4292
    %v4294 = vsel %vm4119, %v4293, %v4289
    %v4295 = vlaneseq
    %v4296 = vshrl.u32 %v4295, 7
    %v4297 = vsub.s32 %v4121, %v4296
    %v4298 = vrot.slane %v3850, %v4297
    %v4299 = vsel %vm4126, %v4298, %v4294
    %v4300 = vlaneseq
    %v4301 = vshrl.u32 %v4300, 7
    %v4302 = vsub.s32 %v4128, %v4301
    %v4303 = vrot.slane %v3851, %v4302
    %v4304 = vsel %vm4133, %v4303, %v4299
    %v4305 = vlaneseq
    %v4306 = vshrl.u32 %v4305, 7
    %v4307 = vsub.s32 %v4135, %v4306
    %v4308 = vrot.slane %v3852, %v4307
    %v4309 = vsel %vm4140, %v4308, %v4304
    %v4310 = vlaneseq
    %v4311 = vshrl.u32 %v4310, 7
    %v4312 = vsub.s32 %v4142, %v4311
    %v4313 = vrot.slane %v3853, %v4312
    %v4314 = vsel %vm4147, %v4313, %v4309
    %v4315 = vlaneseq
    %v4316 = vshrl.u32 %v4315, 7
    %v4317 = vsub.s32 %v4149, %v4316
    %v4318 = vrot.slane %v3854, %v4317
    %v4319 = vsel %vm4154, %v4318, %v4314
    %v4320 = vlaneseq
    %v4321 = vshrl.u32 %v4320, 7
    %v4322 = vsub.s32 %v4156, %v4321
    %v4323 = vrot.slane %v3855, %v4322
    %v4324 = vsel %vm4161, %v4323, %v4319
    %v4325 = vlaneseq
    %v4326 = vshrl.u32 %v4325, 7
    %v4327 = vsub.s32 %v4163, %v4326
    %v4328 = vrot.slane %v3856, %v4327
    %v4329 = vsel %vm4168, %v4328, %v4324
    %v4330 = vlaneseq
    %v4331 = vshrl.u32 %v4330, 7
    %v4332 = vsub.s32 %v4170, %v4331
    %v4333 = vrot.slane %v3857, %v4332
    %v4334 = vsel %vm4175, %v4333, %v4329
    %v4335 = vlaneseq
    %v4336 = vshrl.u32 %v4335, 7
    %v4337 = vsub.s32 %v4067, %v4336
    %v4338 = vrot.slane %v3858, %v4337
    %v4339 = vlaneseq
    %v4340 = vshrl.u32 %v4339, 7
    %v4341 = vsub.s32 %v4072, %v4340
    %v4342 = vrot.slane %v3859, %v4341
    %v4343 = vsel %vm4077, %v4342, %v4338
    %v4344 = vlaneseq
    %v4345 = vshrl.u32 %v4344, 7
    %v4346 = vsub.s32 %v4079, %v4345
    %v4347 = vrot.slane %v3860, %v4346
    %v4348 = vsel %vm4084, %v4347, %v4343
    %v4349 = vlaneseq
    %v4350 = vshrl.u32 %v4349, 7
    %v4351 = vsub.s32 %v4086, %v4350
    %v4352 = vrot.slane %v3861, %v4351
    %v4353 = vsel %vm4091, %v4352, %v4348
    %v4354 = vlaneseq
    %v4355 = vshrl.u32 %v4354, 7
    %v4356 = vsub.s32 %v4093, %v4355
    %v4357 = vrot.slane %v3862, %v4356
    %v4358 = vsel %vm4098, %v4357, %v4353
    %v4359 = vlaneseq
    %v4360 = vshrl.u32 %v4359, 7
    %v4361 = vsub.s32 %v4100, %v4360
    %v4362 = vrot.slane %v3863, %v4361
    %v4363 = vsel %vm4105, %v4362, %v4358
    %v4364 = vlaneseq
    %v4365 = vshrl.u32 %v4364, 7
    %v4366 = vsub.s32 %v4107, %v4365
    %v4367 = vrot.slane %v3864, %v4366
    %v4368 = vsel %vm4112, %v4367, %v4363
    %v4369 = vlaneseq
    %v4370 = vshrl.u32 %v4369, 7
    %v4371 = vsub.s32 %v4114, %v4370
    %v4372 = vrot.slane %v3865, %v4371
    %v4373 = vsel %vm4119, %v4372, %v4368
    %v4374 = vlaneseq
    %v4375 = vshrl.u32 %v4374, 7
    %v4376 = vsub.s32 %v4121, %v4375
    %v4377 = vrot.slane %v3866, %v4376
    %v4378 = vsel %vm4126, %v4377, %v4373
    %v4379 = vlaneseq
    %v4380 = vshrl.u32 %v4379, 7
    %v4381 = vsub.s32 %v4128, %v4380
    %v4382 = vrot.slane %v3867, %v4381
    %v4383 = vsel %vm4133, %v4382, %v4378
    %v4384 = vlaneseq
    %v4385 = vshrl.u32 %v4384, 7
    %v4386 = vsub.s32 %v4135, %v4385
    %v4387 = vrot.slane %v3868, %v4386
    %v4388 = vsel %vm4140, %v4387, %v4383
    %v4389 = vlaneseq
    %v4390 = vshrl.u32 %v4389, 7
    %v4391 = vsub.s32 %v4142, %v4390
    %v4392 = vrot.slane %v3869, %v4391
    %v4393 = vsel %vm4147, %v4392, %v4388
    %v4394 = vlaneseq
    %v4395 = vshrl.u32 %v4394, 7
    %v4396 = vsub.s32 %v4149, %v4395
    %v4397 = vrot.slane %v3870, %v4396
    %v4398 = vsel %vm4154, %v4397, %v4393
    %v4399 = vlaneseq
    %v4400 = vshrl.u32 %v4399, 7
    %v4401 = vsub.s32 %v4156, %v4400
    %v4402 = vrot.slane %v3871, %v4401
    %v4403 = vsel %vm4161, %v4402, %v4398
    %v4404 = vlaneseq
    %v4405 = vshrl.u32 %v4404, 7
    %v4406 = vsub.s32 %v4163, %v4405
    %v4407 = vrot.slane %v3872, %v4406
    %v4408 = vsel %vm4168, %v4407, %v4403
    %v4409 = vlaneseq
    %v4410 = vshrl.u32 %v4409, 7
    %v4411 = vsub.s32 %v4170, %v4410
    %v4412 = vrot.slane %v3873, %v4411
    %v4413 = vsel %vm4175, %v4412, %v4408
    %v4414 = vlaneseq
    %v4415 = vshrl.u32 %v4414, 7
    %v4416 = vsub.s32 %v4067, %v4415
    %v4417 = vrot.slane %v3874, %v4416
    %v4418 = vlaneseq
    %v4419 = vshrl.u32 %v4418, 7
    %v4420 = vsub.s32 %v4072, %v4419
    %v4421 = vrot.slane %v3875, %v4420
    %v4422 = vsel %vm4077, %v4421, %v4417
    %v4423 = vlaneseq
    %v4424 = vshrl.u32 %v4423, 7
    %v4425 = vsub.s32 %v4079, %v4424
    %v4426 = vrot.slane %v3876, %v4425
    %v4427 = vsel %vm4084, %v4426, %v4422
    %v4428 = vlaneseq
    %v4429 = vshrl.u32 %v4428, 7
    %v4430 = vsub.s32 %v4086, %v4429
    %v4431 = vrot.slane %v3877, %v4430
    %v4432 = vsel %vm4091, %v4431, %v4427
    %v4433 = vlaneseq
    %v4434 = vshrl.u32 %v4433, 7
    %v4435 = vsub.s32 %v4093, %v4434
    %v4436 = vrot.slane %v3878, %v4435
    %v4437 = vsel %vm4098, %v4436, %v4432
    %v4438 = vlaneseq
    %v4439 = vshrl.u32 %v4438, 7
    %v4440 = vsub.s32 %v4100, %v4439
    %v4441 = vrot.slane %v3879, %v4440
    %v4442 = vsel %vm4105, %v4441, %v4437
    %v4443 = vlaneseq
    %v4444 = vshrl.u32 %v4443, 7
    %v4445 = vsub.s32 %v4107, %v4444
    %v4446 = vrot.slane %v3880, %v4445
    %v4447 = vsel %vm4112, %v4446, %v4442
    %v4448 = vlaneseq
    %v4449 = vshrl.u32 %v4448, 7
    %v4450 = vsub.s32 %v4114, %v4449
    %v4451 = vrot.slane %v3881, %v4450
    %v4452 = vsel %vm4119, %v4451, %v4447
    %v4453 = vlaneseq
    %v4454 = vshrl.u32 %v4453, 7
    %v4455 = vsub.s32 %v4121, %v4454
    %v4456 = vrot.slane %v3882, %v4455
    %v4457 = vsel %vm4126, %v4456, %v4452
    %v4458 = vlaneseq
    %v4459 = vshrl.u32 %v4458, 7
    %v4460 = vsub.s32 %v4128, %v4459
    %v4461 = vrot.slane %v3883, %v4460
    %v4462 = vsel %vm4133, %v4461, %v4457
    %v4463 = vlaneseq
    %v4464 = vshrl.u32 %v4463, 7
    %v4465 = vsub.s32 %v4135, %v4464
    %v4466 = vrot.slane %v3884, %v4465
    %v4467 = vsel %vm4140, %v4466, %v4462
    %v4468 = vlaneseq
    %v4469 = vshrl.u32 %v4468, 7
    %v4470 = vsub.s32 %v4142, %v4469
    %v4471 = vrot.slane %v3885, %v4470
    %v4472 = vsel %vm4147, %v4471, %v4467
    %v4473 = vlaneseq
    %v4474 = vshrl.u32 %v4473, 7
    %v4475 = vsub.s32 %v4149, %v4474
    %v4476 = vrot.slane %v3886, %v4475
    %v4477 = vsel %vm4154, %v4476, %v4472
    %v4478 = vlaneseq
    %v4479 = vshrl.u32 %v4478, 7
    %v4480 = vsub.s32 %v4156, %v4479
    %v4481 = vrot.slane %v3887, %v4480
    %v4482 = vsel %vm4161, %v4481, %v4477
    %v4483 = vlaneseq
    %v4484 = vshrl.u32 %v4483, 7
    %v4485 = vsub.s32 %v4163, %v4484
    %v4486 = vrot.slane %v3888, %v4485
    %v4487 = vsel %vm4168, %v4486, %v4482
    %v4488 = vlaneseq
    %v4489 = vshrl.u32 %v4488, 7
    %v4490 = vsub.s32 %v4170, %v4489
    %v4491 = vrot.slane %v3889, %v4490
    %v4492 = vsel %vm4175, %v4491, %v4487
    %v4493 = vlaneseq
    %v4494 = vshrl.u32 %v4493, 7
    %v4495 = vsub.s32 %v4067, %v4494
    %v4496 = vrot.slane %v3890, %v4495
    %v4497 = vlaneseq
    %v4498 = vshrl.u32 %v4497, 7
    %v4499 = vsub.s32 %v4072, %v4498
    %v4500 = vrot.slane %v3891, %v4499
    %v4501 = vsel %vm4077, %v4500, %v4496
    %v4502 = vlaneseq
    %v4503 = vshrl.u32 %v4502, 7
    %v4504 = vsub.s32 %v4079, %v4503
    %v4505 = vrot.slane %v3892, %v4504
    %v4506 = vsel %vm4084, %v4505, %v4501
    %v4507 = vlaneseq
    %v4508 = vshrl.u32 %v4507, 7
    %v4509 = vsub.s32 %v4086, %v4508
    %v4510 = vrot.slane %v3893, %v4509
    %v4511 = vsel %vm4091, %v4510, %v4506
    %v4512 = vlaneseq
    %v4513 = vshrl.u32 %v4512, 7
    %v4514 = vsub.s32 %v4093, %v4513
    %v4515 = vrot.slane %v3894, %v4514
    %v4516 = vsel %vm4098, %v4515, %v4511
    %v4517 = vlaneseq
    %v4518 = vshrl.u32 %v4517, 7
    %v4519 = vsub.s32 %v4100, %v4518
    %v4520 = vrot.slane %v3895, %v4519
    %v4521 = vsel %vm4105, %v4520, %v4516
    %v4522 = vlaneseq
    %v4523 = vshrl.u32 %v4522, 7
    %v4524 = vsub.s32 %v4107, %v4523
    %v4525 = vrot.slane %v3896, %v4524
    %v4526 = vsel %vm4112, %v4525, %v4521
    %v4527 = vlaneseq
    %v4528 = vshrl.u32 %v4527, 7
    %v4529 = vsub.s32 %v4114, %v4528
    %v4530 = vrot.slane %v3897, %v4529
    %v4531 = vsel %vm4119, %v4530, %v4526
    %v4532 = vlaneseq
    %v4533 = vshrl.u32 %v4532, 7
    %v4534 = vsub.s32 %v4121, %v4533
    %v4535 = vrot.slane %v3898, %v4534
    %v4536 = vsel %vm4126, %v4535, %v4531
    %v4537 = vlaneseq
    %v4538 = vshrl.u32 %v4537, 7
    %v4539 = vsub.s32 %v4128, %v4538
    %v4540 = vrot.slane %v3899, %v4539
    %v4541 = vsel %vm4133, %v4540, %v4536
    %v4542 = vlaneseq
    %v4543 = vshrl.u32 %v4542, 7
    %v4544 = vsub.s32 %v4135, %v4543
    %v4545 = vrot.slane %v3900, %v4544
    %v4546 = vsel %vm4140, %v4545, %v4541
    %v4547 = vlaneseq
    %v4548 = vshrl.u32 %v4547, 7
    %v4549 = vsub.s32 %v4142, %v4548
    %v4550 = vrot.slane %v3901, %v4549
    %v4551 = vsel %vm4147, %v4550, %v4546
    %v4552 = vlaneseq
    %v4553 = vshrl.u32 %v4552, 7
    %v4554 = vsub.s32 %v4149, %v4553
    %v4555 = vrot.slane %v3902, %v4554
    %v4556 = vsel %vm4154, %v4555, %v4551
    %v4557 = vlaneseq
    %v4558 = vshrl.u32 %v4557, 7
    %v4559 = vsub.s32 %v4156, %v4558
    %v4560 = vrot.slane %v3903, %v4559
    %v4561 = vsel %vm4161, %v4560, %v4556
    %v4562 = vlaneseq
    %v4563 = vshrl.u32 %v4562, 7
    %v4564 = vsub.s32 %v4163, %v4563
    %v4565 = vrot.slane %v3904, %v4564
    %v4566 = vsel %vm4168, %v4565, %v4561
    %v4567 = vlaneseq
    %v4568 = vshrl.u32 %v4567, 7
    %v4569 = vsub.s32 %v4170, %v4568
    %v4570 = vrot.slane %v3905, %v4569
    %v4571 = vsel %vm4175, %v4570, %v4566
    %v4572 = vlaneseq
    %v4573 = vshrl.u32 %v4572, 7
    %v4574 = vsub.s32 %v4067, %v4573
    %v4575 = vrot.slane %v3906, %v4574
    %v4576 = vlaneseq
    %v4577 = vshrl.u32 %v4576, 7
    %v4578 = vsub.s32 %v4072, %v4577
    %v4579 = vrot.slane %v3907, %v4578
    %v4580 = vsel %vm4077, %v4579, %v4575
    %v4581 = vlaneseq
    %v4582 = vshrl.u32 %v4581, 7
    %v4583 = vsub.s32 %v4079, %v4582
    %v4584 = vrot.slane %v3908, %v4583
    %v4585 = vsel %vm4084, %v4584, %v4580
    %v4586 = vlaneseq
    %v4587 = vshrl.u32 %v4586, 7
    %v4588 = vsub.s32 %v4086, %v4587
    %v4589 = vrot.slane %v3909, %v4588
    %v4590 = vsel %vm4091, %v4589, %v4585
    %v4591 = vlaneseq
    %v4592 = vshrl.u32 %v4591, 7
    %v4593 = vsub.s32 %v4093, %v4592
    %v4594 = vrot.slane %v3910, %v4593
    %v4595 = vsel %vm4098, %v4594, %v4590
    %v4596 = vlaneseq
    %v4597 = vshrl.u32 %v4596, 7
    %v4598 = vsub.s32 %v4100, %v4597
    %v4599 = vrot.slane %v3911, %v4598
    %v4600 = vsel %vm4105, %v4599, %v4595
    %v4601 = vlaneseq
    %v4602 = vshrl.u32 %v4601, 7
    %v4603 = vsub.s32 %v4107, %v4602
    %v4604 = vrot.slane %v3912, %v4603
    %v4605 = vsel %vm4112, %v4604, %v4600
    %v4606 = vlaneseq
    %v4607 = vshrl.u32 %v4606, 7
    %v4608 = vsub.s32 %v4114, %v4607
    %v4609 = vrot.slane %v3913, %v4608
    %v4610 = vsel %vm4119, %v4609, %v4605
    %v4611 = vlaneseq
    %v4612 = vshrl.u32 %v4611, 7
    %v4613 = vsub.s32 %v4121, %v4612
    %v4614 = vrot.slane %v3914, %v4613
    %v4615 = vsel %vm4126, %v4614, %v4610
    %v4616 = vlaneseq
    %v4617 = vshrl.u32 %v4616, 7
    %v4618 = vsub.s32 %v4128, %v4617
    %v4619 = vrot.slane %v3915, %v4618
    %v4620 = vsel %vm4133, %v4619, %v4615
    %v4621 = vlaneseq
    %v4622 = vshrl.u32 %v4621, 7
    %v4623 = vsub.s32 %v4135, %v4622
    %v4624 = vrot.slane %v3916, %v4623
    %v4625 = vsel %vm4140, %v4624, %v4620
    %v4626 = vlaneseq
    %v4627 = vshrl.u32 %v4626, 7
    %v4628 = vsub.s32 %v4142, %v4627
    %v4629 = vrot.slane %v3917, %v4628
    %v4630 = vsel %vm4147, %v4629, %v4625
    %v4631 = vlaneseq
    %v4632 = vshrl.u32 %v4631, 7
    %v4633 = vsub.s32 %v4149, %v4632
    %v4634 = vrot.slane %v3918, %v4633
    %v4635 = vsel %vm4154, %v4634, %v4630
    %v4636 = vlaneseq
    %v4637 = vshrl.u32 %v4636, 7
    %v4638 = vsub.s32 %v4156, %v4637
    %v4639 = vrot.slane %v3919, %v4638
    %v4640 = vsel %vm4161, %v4639, %v4635
    %v4641 = vlaneseq
    %v4642 = vshrl.u32 %v4641, 7
    %v4643 = vsub.s32 %v4163, %v4642
    %v4644 = vrot.slane %v3920, %v4643
    %v4645 = vsel %vm4168, %v4644, %v4640
    %v4646 = vlaneseq
    %v4647 = vshrl.u32 %v4646, 7
    %v4648 = vsub.s32 %v4170, %v4647
    %v4649 = vrot.slane %v3921, %v4648
    %v4650 = vsel %vm4175, %v4649, %v4645
    %v4651 = vlaneseq
    %v4652 = vshrl.u32 %v4651, 7
    %v4653 = vsub.s32 %v4067, %v4652
    %v4654 = vrot.slane %v3922, %v4653
    %v4655 = vlaneseq
    %v4656 = vshrl.u32 %v4655, 7
    %v4657 = vsub.s32 %v4072, %v4656
    %v4658 = vrot.slane %v3923, %v4657
    %v4659 = vsel %vm4077, %v4658, %v4654
    %v4660 = vlaneseq
    %v4661 = vshrl.u32 %v4660, 7
    %v4662 = vsub.s32 %v4079, %v4661
    %v4663 = vrot.slane %v3924, %v4662
    %v4664 = vsel %vm4084, %v4663, %v4659
    %v4665 = vlaneseq
    %v4666 = vshrl.u32 %v4665, 7
    %v4667 = vsub.s32 %v4086, %v4666
    %v4668 = vrot.slane %v3925, %v4667
    %v4669 = vsel %vm4091, %v4668, %v4664
    %v4670 = vlaneseq
    %v4671 = vshrl.u32 %v4670, 7
    %v4672 = vsub.s32 %v4093, %v4671
    %v4673 = vrot.slane %v3926, %v4672
    %v4674 = vsel %vm4098, %v4673, %v4669
    %v4675 = vlaneseq
    %v4676 = vshrl.u32 %v4675, 7
    %v4677 = vsub.s32 %v4100, %v4676
    %v4678 = vrot.slane %v3927, %v4677
    %v4679 = vsel %vm4105, %v4678, %v4674
    %v4680 = vlaneseq
    %v4681 = vshrl.u32 %v4680, 7
    %v4682 = vsub.s32 %v4107, %v4681
    %v4683 = vrot.slane %v3928, %v4682
    %v4684 = vsel %vm4112, %v4683, %v4679
    %v4685 = vlaneseq
    %v4686 = vshrl.u32 %v4685, 7
    %v4687 = vsub.s32 %v4114, %v4686
    %v4688 = vrot.slane %v3929, %v4687
    %v4689 = vsel %vm4119, %v4688, %v4684
    %v4690 = vlaneseq
    %v4691 = vshrl.u32 %v4690, 7
    %v4692 = vsub.s32 %v4121, %v4691
    %v4693 = vrot.slane %v3930, %v4692
    %v4694 = vsel %vm4126, %v4693, %v4689
    %v4695 = vlaneseq
    %v4696 = vshrl.u32 %v4695, 7
    %v4697 = vsub.s32 %v4128, %v4696
    %v4698 = vrot.slane %v3931, %v4697
    %v4699 = vsel %vm4133, %v4698, %v4694
    %v4700 = vlaneseq
    %v4701 = vshrl.u32 %v4700, 7
    %v4702 = vsub.s32 %v4135, %v4701
    %v4703 = vrot.slane %v3932, %v4702
    %v4704 = vsel %vm4140, %v4703, %v4699
    %v4705 = vlaneseq
    %v4706 = vshrl.u32 %v4705, 7
    %v4707 = vsub.s32 %v4142, %v4706
    %v4708 = vrot.slane %v3933, %v4707
    %v4709 = vsel %vm4147, %v4708, %v4704
    %v4710 = vlaneseq
    %v4711 = vshrl.u32 %v4710, 7
    %v4712 = vsub.s32 %v4149, %v4711
    %v4713 = vrot.slane %v3934, %v4712
    %v4714 = vsel %vm4154, %v4713, %v4709
    %v4715 = vlaneseq
    %v4716 = vshrl.u32 %v4715, 7
    %v4717 = vsub.s32 %v4156, %v4716
    %v4718 = vrot.slane %v3935, %v4717
    %v4719 = vsel %vm4161, %v4718, %v4714
    %v4720 = vlaneseq
    %v4721 = vshrl.u32 %v4720, 7
    %v4722 = vsub.s32 %v4163, %v4721
    %v4723 = vrot.slane %v3936, %v4722
    %v4724 = vsel %vm4168, %v4723, %v4719
    %v4725 = vlaneseq
    %v4726 = vshrl.u32 %v4725, 7
    %v4727 = vsub.s32 %v4170, %v4726
    %v4728 = vrot.slane %v3937, %v4727
    %v4729 = vsel %vm4175, %v4728, %v4724
    %vm4730 = vcmask 1041409
    %v4731 = vsel %vm4730, %v4255, %v4176
    %vm4732 = vcmask 1042434
    %v4733 = vsel %vm4732, %v4334, %v4731
    %vm4734 = vcmask 1043459
    %v4735 = vsel %vm4734, %v4413, %v4733
    %vm4736 = vcmask 1044484
    %v4737 = vsel %vm4736, %v4492, %v4735
    %vm4738 = vcmask 1045509
    %v4739 = vsel %vm4738, %v4571, %v4737
    %vm4740 = vcmask 1046534
    %v4741 = vsel %vm4740, %v4650, %v4739
    %vm4742 = vcmask 1047559
    %v4743 = vsel %vm4742, %v4729, %v4741
    %4745 = vst [vmem:[#allocation10] sm:$0xff] %v4743
    // Predicated region
    $region38: #{tpu_custom_call.1} parent=1 // pred_check
      _
    $region39: #{tpu_custom_call.1} parent=1 // pred_check_branch
      %4747 = sbr.rel (0) target = $region41
    $region40: #{tpu_custom_call.1} parent=1 // pred_region
      %s4749 = ssub.s32 128, 128
      %4750 = vsyncadd [#allocation4], %s4749
      %s4752 = sshll.u32 [#allocation10], 4
      %s4753 = int_to_ptr.vmem [resolvable:$true] %s4752
      %4755 = dma.vmem_to_hbm [thread:$0]  %s4753, 128, %s5, [#allocation4]
    $region41: #{tpu_custom_call.1} parent=1 // pred_fallthru
      _
    // Predicated region
    $region42: #{tpu_custom_call.1} parent=1 // pred_check
      _
    $region43: #{tpu_custom_call.1} parent=1 // pred_check_branch
      %4757 = sbr.rel (0) target = $region45
    $region44: #{tpu_custom_call.1} parent=1 // pred_region
      %4758 = dma.done [#allocation4], 128
    $region45: #{tpu_custom_call.1} parent=1 // pred_fallthru
      _
    %4759 = vsyncpa [#allocation3], 1
    %4760 = vsyncpa [#allocation6], 1
    %4761 = vsyncpa [#allocation9], 1
    %4762 = vsyncpa [#allocation4], 1

// kernel: tpu_custom_call.1
$region0: #{tpu_custom_call.1}
  #allocation0 [shape = 'u32[]', space=smem, size = 0x4, offset = 0x4, fixed_abs, tag = 'smem constant byte address 0x4 - core index']
  #allocation1 [shape = 'u32[144,128]{1,0:T(1,128)}', space=vmem, size = 0x12000, scoped, tag = 'internal scratch']
  %s0 = inlined_call_operand.hbm [shape: f32[128,256], index: 0, kind: input, shape index: {}]
  %s1 = inlined_call_operand.hbm [shape: f32[256,256], index: 1, kind: input, shape index: {}]
  %s2 = inlined_call_operand.hbm [shape: f32[256,256], index: 2, kind: input, shape index: {}]
  %s3 = inlined_call_operand.vmem [shape: f32[1,256], index: 3, kind: input, shape index: {}]
  %s4 = inlined_call_operand.hbm [shape: f32[8,256], index: 4, kind: input, shape index: {}]
  %s5 = inlined_call_operand.hbm [shape: f32[8,128], index: 5, kind: output, shape index: {}]
  %s6 = sld [smem:[#allocation0]]
  $region46: #{tpu_custom_call.1} parent=0
    _
  %s8 = ssub.s32 1, %s6
  %s9 = scalar_select 0, %s8, %s6
  $region1: #{tpu_custom_call.1} parent=0
    #allocation2 [shape = 'u8[131072]{0}', space=vmem, size = 0x20000, scoped, tag = 'input window, operand 0, single buffered']
    #allocation3 [shape = 's32[1]{0}', space=sflag, size = 0x4, scoped, tag = 'scoped memory for tpu_custom_call.1']
    #allocation4 [shape = 's32[1]{0}', space=sflag, size = 0x4, scoped, tag = 'scoped memory for tpu_custom_call.1']
    #allocation5 [shape = 'u8[262144]{0}', space=vmem, size = 0x40000, scoped, tag = 'input window, operand 1, single buffered']
    #allocation6 [shape = 's32[1]{0}', space=sflag, size = 0x4, scoped, tag = 'scoped memory for tpu_custom_call.1']
    #allocation7 [shape = 'u8[262144]{0}', space=vmem, size = 0x40000, scoped, tag = 'input window, operand 2, single buffered']
    #allocation8 [shape = 'u8[8192]{0}', space=vmem, size = 0x2000, scoped, tag = 'input window, operand 4, single buffered']
    #allocation9 [shape = 's32[1]{0}', space=sflag, size = 0x4, scoped, tag = 'scoped memory for tpu_custom_call.1']
    #allocation10 [shape = 'u8[4096]{0}', space=vmem, size = 0x1000, scoped, tag = 'output window, operand 0, single buffered']
    %10 = vsyncpa [#allocation3], 0
    %11 = vsyncpa [#allocation6], 0
    %12 = vsyncpa [#allocation9], 0
    %13 = vsyncpa [#allocation4], 0
    // Predicated region
    $region2: #{tpu_custom_call.1} parent=1 // pred_check
      _
    $region3: #{tpu_custom_call.1} parent=1 // pred_check_branch
      %15 = sbr.rel (0) target = $region5
    $region4: #{tpu_custom_call.1} parent=1 // pred_region
      %s17 = ssub.s32 4096, 4096
      %18 = vsyncadd [#allocation3], %s17
      %s19 = sshll.u32 [#allocation2], 4
      %s20 = int_to_ptr.vmem [resolvable:$true] %s19
      %25 = dma.hbm_to_vmem [thread:$0]  %s0, 4096, %s20, [#allocation3], 256, 256, 16
    $region5: #{tpu_custom_call.1} parent=1 // pred_fallthru
      _
    // Predicated region
    $region6: #{tpu_custom_call.1} parent=1 // pred_check
      _
    $region7: #{tpu_custom_call.1} parent=1 // pred_check_branch
      %27 = sbr.rel (0) target = $region9
    $region8: #{tpu_custom_call.1} parent=1 // pred_region
      %s29 = ssub.s32 8192, 8192
      %30 = vsyncadd [#allocation6], %s29
      %s31 = sshll.u32 [#allocation5], 4
      %s32 = int_to_ptr.vmem [resolvable:$true] %s31
      %37 = dma.hbm_to_vmem [thread:$0]  %s1, 8192, %s32, [#allocation6], 256, 256, 16
    $region9: #{tpu_custom_call.1} parent=1 // pred_fallthru
      _
    // Predicated region
    $region10: #{tpu_custom_call.1} parent=1 // pred_check
      _
    $region11: #{tpu_custom_call.1} parent=1 // pred_check_branch
      %39 = sbr.rel (0) target = $region13
    $region12: #{tpu_custom_call.1} parent=1 // pred_region
      %s41 = ssub.s32 8192, 8192
      %42 = vsyncadd [#allocation6], %s41
      %s43 = sshll.u32 [#allocation7], 4
      %s44 = int_to_ptr.vmem [resolvable:$true] %s43
      %49 = dma.hbm_to_vmem [thread:$0]  %s2, 8192, %s44, [#allocation6], 256, 256, 16
    $region13: #{tpu_custom_call.1} parent=1 // pred_fallthru
      _
    // Predicated region
    $region14: #{tpu_custom_call.1} parent=1 // pred_check
      _
    $region15: #{tpu_custom_call.1} parent=1 // pred_check_branch
      %51 = sbr.rel (0) target = $region17
    $region16: #{tpu_custom_call.1} parent=1 // pred_region
      _
    $region17: #{tpu_custom_call.1} parent=1 // pred_fallthru
      _
    // Predicated region
    $region18: #{tpu_custom_call.1} parent=1 // pred_check
      _
    $region19: #{tpu_custom_call.1} parent=1 // pred_check_branch
      %53 = sbr.rel (0) target = $region21
    $region20: #{tpu_custom_call.1} parent=1 // pred_region
      %s55 = ssub.s32 256, 256
      %56 = vsyncadd [#allocation9], %s55
      %s58 = sshll.u32 [#allocation8], 4
      %s59 = int_to_ptr.vmem [resolvable:$true] %s58
      %61 = dma.hbm_to_vmem [thread:$0]  %s4, 256, %s59, [#allocation9]
    $region21: #{tpu_custom_call.1} parent=1 // pred_fallthru
      _
    // Predicated region
    $region22: #{tpu_custom_call.1} parent=1 // pred_check
      _
    $region23: #{tpu_custom_call.1} parent=1 // pred_check_branch
      %63 = sbr.rel (0) target = $region25
    $region24: #{tpu_custom_call.1} parent=1 // pred_region
      %64 = dma.done [#allocation3], 4096
    $region25: #{tpu_custom_call.1} parent=1 // pred_fallthru
      _
    // Predicated region
    $region26: #{tpu_custom_call.1} parent=1 // pred_check
      _
    $region27: #{tpu_custom_call.1} parent=1 // pred_check_branch
      %66 = sbr.rel (0) target = $region29
    $region28: #{tpu_custom_call.1} parent=1 // pred_region
      %67 = dma.done [#allocation6], 8192
    $region29: #{tpu_custom_call.1} parent=1 // pred_fallthru
      _
    // Predicated region
    $region30: #{tpu_custom_call.1} parent=1 // pred_check
      _
    $region31: #{tpu_custom_call.1} parent=1 // pred_check_branch
      %69 = sbr.rel (0) target = $region33
    $region32: #{tpu_custom_call.1} parent=1 // pred_region
      %70 = dma.done [#allocation6], 8192
    $region33: #{tpu_custom_call.1} parent=1 // pred_fallthru
      _
    // Predicated region
    $region34: #{tpu_custom_call.1} parent=1 // pred_check
      _
    $region35: #{tpu_custom_call.1} parent=1 // pred_check_branch
      %72 = sbr.rel (0) target = $region37
    $region36: #{tpu_custom_call.1} parent=1 // pred_region
      %73 = dma.done [#allocation9], 256
    $region37: #{tpu_custom_call.1} parent=1 // pred_fallthru
      _
    %v74 = vld [vmem:[#allocation2] sm:$0xff]
    %v75 = vld [vmem:[#allocation2 + $0x8] sm:$0xff]
    %v76 = vld [vmem:[#allocation2 + $0x10] sm:$0xff]
    %v77 = vld [vmem:[#allocation2 + $0x18] sm:$0xff]
    %v78 = vld [vmem:[#allocation2 + $0x20] sm:$0xff]
    %v79 = vld [vmem:[#allocation2 + $0x28] sm:$0xff]
    %v80 = vld [vmem:[#allocation2 + $0x30] sm:$0xff]
    %v81 = vld [vmem:[#allocation2 + $0x38] sm:$0xff]
    %v82 = vld [vmem:[#allocation2 + $0x40] sm:$0xff]
    %v83 = vld [vmem:[#allocation2 + $0x48] sm:$0xff]
    %v84 = vld [vmem:[#allocation2 + $0x50] sm:$0xff]
    %v85 = vld [vmem:[#allocation2 + $0x58] sm:$0xff]
    %v86 = vld [vmem:[#allocation2 + $0x60] sm:$0xff]
    %v87 = vld [vmem:[#allocation2 + $0x68] sm:$0xff]
    %v88 = vld [vmem:[#allocation2 + $0x70] sm:$0xff]
    %v89 = vld [vmem:[#allocation2 + $0x78] sm:$0xff]
    %v90 = vld [vmem:[#allocation2 + $0x80] sm:$0xff]
    %v91 = vld [vmem:[#allocation2 + $0x88] sm:$0xff]
    %v92 = vld [vmem:[#allocation2 + $0x90] sm:$0xff]
    %v93 = vld [vmem:[#allocation2 + $0x98] sm:$0xff]
    %v94 = vld [vmem:[#allocation2 + $0xa0] sm:$0xff]
    %v95 = vld [vmem:[#allocation2 + $0xa8] sm:$0xff]
    %v96 = vld [vmem:[#allocation2 + $0xb0] sm:$0xff]
    %v97 = vld [vmem:[#allocation2 + $0xb8] sm:$0xff]
    %v98 = vld [vmem:[#allocation2 + $0xc0] sm:$0xff]
    %v99 = vld [vmem:[#allocation2 + $0xc8] sm:$0xff]
    %v100 = vld [vmem:[#allocation2 + $0xd0] sm:$0xff]
    %v101 = vld [vmem:[#allocation2 + $0xd8] sm:$0xff]
    %v102 = vld [vmem:[#allocation2 + $0xe0] sm:$0xff]
    %v103 = vld [vmem:[#allocation2 + $0xe8] sm:$0xff]
    %v104 = vld [vmem:[#allocation2 + $0xf0] sm:$0xff]
    %v105 = vld [vmem:[#allocation2 + $0xf8] sm:$0xff]
    %v106 = vld [vmem:[#allocation7] sm:$0xff]
    %v107 = vld [vmem:[#allocation7 + $0x8] sm:$0xff]
    %v108 = vld [vmem:[#allocation7 + $0x10] sm:$0xff]
    %v109 = vld [vmem:[#allocation7 + $0x18] sm:$0xff]
    %v110 = vld [vmem:[#allocation7 + $0x20] sm:$0xff]
    %v111 = vld [vmem:[#allocation7 + $0x28] sm:$0xff]
    %v112 = vld [vmem:[#allocation7 + $0x30] sm:$0xff]
    %v113 = vld [vmem:[#allocation7 + $0x38] sm:$0xff]
    %v114 = vld [vmem:[#allocation7 + $0x40] sm:$0xff]
    %v115 = vld [vmem:[#allocation7 + $0x48] sm:$0xff]
    %v116 = vld [vmem:[#allocation7 + $0x50] sm:$0xff]
    %v117 = vld [vmem:[#allocation7 + $0x58] sm:$0xff]
    %v118 = vld [vmem:[#allocation7 + $0x60] sm:$0xff]
    %v119 = vld [vmem:[#allocation7 + $0x68] sm:$0xff]
    %v120 = vld [vmem:[#allocation7 + $0x70] sm:$0xff]
    %v121 = vld [vmem:[#allocation7 + $0x78] sm:$0xff]
    %v122 = vld [vmem:[#allocation7 + $0x80] sm:$0xff]
    %v123 = vld [vmem:[#allocation7 + $0x88] sm:$0xff]
    %v124 = vld [vmem:[#allocation7 + $0x90] sm:$0xff]
    %v125 = vld [vmem:[#allocation7 + $0x98] sm:$0xff]
    %v126 = vld [vmem:[#allocation7 + $0xa0] sm:$0xff]
    %v127 = vld [vmem:[#allocation7 + $0xa8] sm:$0xff]
    %v128 = vld [vmem:[#allocation7 + $0xb0] sm:$0xff]
    %v129 = vld [vmem:[#allocation7 + $0xb8] sm:$0xff]
    %v130 = vld [vmem:[#allocation7 + $0xc0] sm:$0xff]
    %v131 = vld [vmem:[#allocation7 + $0xc8] sm:$0xff]
    %v132 = vld [vmem:[#allocation7 + $0xd0] sm:$0xff]
    %v133 = vld [vmem:[#allocation7 + $0xd8] sm:$0xff]
    %v134 = vld [vmem:[#allocation7 + $0xe0] sm:$0xff]
    %v135 = vld [vmem:[#allocation7 + $0xe8] sm:$0xff]
    %v136 = vld [vmem:[#allocation7 + $0xf0] sm:$0xff]
    %v137 = vld [vmem:[#allocation7 + $0xf8] sm:$0xff]
    %v138 = vld [vmem:[#allocation7 + $0x100] sm:$0xff]
    %v139 = vld [vmem:[#allocation7 + $0x108] sm:$0xff]
    %v140 = vld [vmem:[#allocation7 + $0x110] sm:$0xff]
    %v141 = vld [vmem:[#allocation7 + $0x118] sm:$0xff]
    %v142 = vld [vmem:[#allocation7 + $0x120] sm:$0xff]
    %v143 = vld [vmem:[#allocation7 + $0x128] sm:$0xff]
    %v144 = vld [vmem:[#allocation7 + $0x130] sm:$0xff]
    %v145 = vld [vmem:[#allocation7 + $0x138] sm:$0xff]
    %v146 = vld [vmem:[#allocation7 + $0x140] sm:$0xff]
    %v147 = vld [vmem:[#allocation7 + $0x148] sm:$0xff]
    %v148 = vld [vmem:[#allocation7 + $0x150] sm:$0xff]
    %v149 = vld [vmem:[#allocation7 + $0x158] sm:$0xff]
    %v150 = vld [vmem:[#allocation7 + $0x160] sm:$0xff]
    %v151 = vld [vmem:[#allocation7 + $0x168] sm:$0xff]
    %v152 = vld [vmem:[#allocation7 + $0x170] sm:$0xff]
    %v153 = vld [vmem:[#allocation7 + $0x178] sm:$0xff]
    %v154 = vld [vmem:[#allocation7 + $0x180] sm:$0xff]
    %v155 = vld [vmem:[#allocation7 + $0x188] sm:$0xff]
    %v156 = vld [vmem:[#allocation7 + $0x190] sm:$0xff]
    %v157 = vld [vmem:[#allocation7 + $0x198] sm:$0xff]
    %v158 = vld [vmem:[#allocation7 + $0x1a0] sm:$0xff]
    %v159 = vld [vmem:[#allocation7 + $0x1a8] sm:$0xff]
    %v160 = vld [vmem:[#allocation7 + $0x1b0] sm:$0xff]
    %v161 = vld [vmem:[#allocation7 + $0x1b8] sm:$0xff]
    %v162 = vld [vmem:[#allocation7 + $0x1c0] sm:$0xff]
    %v163 = vld [vmem:[#allocation7 + $0x1c8] sm:$0xff]
    %v164 = vld [vmem:[#allocation7 + $0x1d0] sm:$0xff]
    %v165 = vld [vmem:[#allocation7 + $0x1d8] sm:$0xff]
    %v166 = vld [vmem:[#allocation7 + $0x1e0] sm:$0xff]
    %v167 = vld [vmem:[#allocation7 + $0x1e8] sm:$0xff]
    %v168 = vld [vmem:[#allocation7 + $0x1f0] sm:$0xff]
    %v169 = vld [vmem:[#allocation7 + $0x1f8] sm:$0xff]
    %v170 = vld [vmem:[%s3] sm:$0x3]
    %v172 = vlaneseq
    %v173 = vshrl.u32 %v172, 7
    %v174 = vsub.s32 0, %v173
    %v175 = vrot.slane %v170, %v174
    %v176 = vlaneseq
    %v177 = vshrl.u32 %v176, 7
    %v178 = vsub.s32 1, %v177
    %v179 = vrot.slane %v170, %v178
    %182 = vmatprep.subr.mxu0 %v137
    %183 = vmatpush1.msra.mxu0 %v136
    %184 = vmatprep.subr.mxu0 %v135
    %185 = vmatpush1.msra.mxu0 %v134
    %186 = vmatprep.subr.mxu0 %v133
    %187 = vmatpush1.msra.mxu0 %v132
    %188 = vmatprep.subr.mxu0 %v131
    %189 = vmatpush1.msra.mxu0 %v130
    %190 = vmatprep.subr.mxu0 %v129
    %191 = vmatpush1.msra.mxu0 %v128
    %192 = vmatprep.subr.mxu0 %v127
    %193 = vmatpush1.msra.mxu0 %v126
    %194 = vmatprep.subr.mxu0 %v125
    %195 = vmatpush1.msra.mxu0 %v124
    %196 = vmatprep.subr.mxu0 %v123
    %197 = vmatpush1.msra.mxu0 %v122
    %198 = vmatprep.subr.mxu0 %v121
    %199 = vmatpush1.msra.mxu0 %v120
    %200 = vmatprep.subr.mxu0 %v119
    %201 = vmatpush1.msra.mxu0 %v118
    %202 = vmatprep.subr.mxu0 %v117
    %203 = vmatpush1.msra.mxu0 %v116
    %204 = vmatprep.subr.mxu0 %v115
    %205 = vmatpush1.msra.mxu0 %v114
    %206 = vmatprep.subr.mxu0 %v113
    %207 = vmatpush1.msra.mxu0 %v112
    %208 = vmatprep.subr.mxu0 %v111
    %209 = vmatpush1.msra.mxu0 %v110
    %210 = vmatprep.subr.mxu0 %v109
    %211 = vmatpush1.msra.mxu0 %v108
    %212 = vmatprep.subr.mxu0 %v107
    %213 = vmatpush1.msra.mxu0 %v106
    %214 = vmatprep.subr.mxu0 %v169
    %215 = vmatpush2.msra.mxu0 %v168
    %216 = vmatprep.subr.mxu0 %v167
    %217 = vmatpush2.msra.mxu0 %v166
    %218 = vmatprep.subr.mxu0 %v165
    %219 = vmatpush2.msra.mxu0 %v164
    %220 = vmatprep.subr.mxu0 %v163
    %221 = vmatpush2.msra.mxu0 %v162
    %222 = vmatprep.subr.mxu0 %v161
    %223 = vmatpush2.msra.mxu0 %v160
    %224 = vmatprep.subr.mxu0 %v159
    %225 = vmatpush2.msra.mxu0 %v158
    %226 = vmatprep.subr.mxu0 %v157
    %227 = vmatpush2.msra.mxu0 %v156
    %228 = vmatprep.subr.mxu0 %v155
    %229 = vmatpush2.msra.mxu0 %v154
    %230 = vmatprep.subr.mxu0 %v153
    %231 = vmatpush2.msra.mxu0 %v152
    %232 = vmatprep.subr.mxu0 %v151
    %233 = vmatpush2.msra.mxu0 %v150
    %234 = vmatprep.subr.mxu0 %v149
    %235 = vmatpush2.msra.mxu0 %v148
    %236 = vmatprep.subr.mxu0 %v147
    %237 = vmatpush2.msra.mxu0 %v146
    %238 = vmatprep.subr.mxu0 %v145
    %239 = vmatpush2.msra.mxu0 %v144
    %240 = vmatprep.subr.mxu0 %v143
    %241 = vmatpush2.msra.mxu0 %v142
    %242 = vmatprep.subr.mxu0 %v141
    %243 = vmatpush2.msra.mxu0 %v140
    %244 = vmatprep.subr.mxu0 %v139
    %245 = vmatpush2.msra.mxu0 %v138
    %246 = vmatprep.mubr.f32.mxu0 %v75
    %247 = vmatmul.mubr.f32.gmra.mxu0 %v74
    %v248 = vpop.f32.mrf.mxu0
    %v249 = vadd.f32 %v175, %v248
    %v250 = vpop.f32.mrf.mxu0
    %v251 = vadd.f32 %v179, %v250
    %252 = vmatprep.mubr.f32.mxu0 %v77
    %253 = vmatmul.mubr.f32.gmra.mxu0 %v76
    %v254 = vpop.f32.mrf.mxu0
    %v255 = vadd.f32 %v175, %v254
    %v256 = vpop.f32.mrf.mxu0
    %v257 = vadd.f32 %v179, %v256
    %258 = vmatprep.mubr.f32.mxu0 %v79
    %259 = vmatmul.mubr.f32.gmra.mxu0 %v78
    %v260 = vpop.f32.mrf.mxu0
    %v261 = vadd.f32 %v175, %v260
    %v262 = vpop.f32.mrf.mxu0
    %v263 = vadd.f32 %v179, %v262
    %264 = vmatprep.mubr.f32.mxu0 %v81
    %265 = vmatmul.mubr.f32.gmra.mxu0 %v80
    %v266 = vpop.f32.mrf.mxu0
    %v267 = vadd.f32 %v175, %v266
    %v268 = vpop.f32.mrf.mxu0
    %v269 = vadd.f32 %v179, %v268
    %270 = vmatprep.mubr.f32.mxu0 %v83
    %271 = vmatmul.mubr.f32.gmra.mxu0 %v82
    %v272 = vpop.f32.mrf.mxu0
    %v273 = vadd.f32 %v175, %v272
    %v274 = vpop.f32.mrf.mxu0
    %v275 = vadd.f32 %v179, %v274
    %276 = vmatprep.mubr.f32.mxu0 %v85
    %277 = vmatmul.mubr.f32.gmra.mxu0 %v84
    %v278 = vpop.f32.mrf.mxu0
    %v279 = vadd.f32 %v175, %v278
    %v280 = vpop.f32.mrf.mxu0
    %v281 = vadd.f32 %v179, %v280
    %282 = vmatprep.mubr.f32.mxu0 %v87
    %283 = vmatmul.mubr.f32.gmra.mxu0 %v86
    %v284 = vpop.f32.mrf.mxu0
    %v285 = vadd.f32 %v175, %v284
    %v286 = vpop.f32.mrf.mxu0
    %v287 = vadd.f32 %v179, %v286
    %288 = vmatprep.mubr.f32.mxu0 %v89
    %289 = vmatmul.mubr.f32.gmra.mxu0 %v88
    %v290 = vpop.f32.mrf.mxu0
    %v291 = vadd.f32 %v175, %v290
    %v292 = vpop.f32.mrf.mxu0
    %v293 = vadd.f32 %v179, %v292
    %294 = vmatprep.mubr.f32.mxu0 %v91
    %295 = vmatmul.mubr.f32.gmra.mxu0 %v90
    %v296 = vpop.f32.mrf.mxu0
    %v297 = vadd.f32 %v175, %v296
    %v298 = vpop.f32.mrf.mxu0
    %v299 = vadd.f32 %v179, %v298
    %300 = vmatprep.mubr.f32.mxu0 %v93
    %301 = vmatmul.mubr.f32.gmra.mxu0 %v92
    %v302 = vpop.f32.mrf.mxu0
    %v303 = vadd.f32 %v175, %v302
    %v304 = vpop.f32.mrf.mxu0
    %v305 = vadd.f32 %v179, %v304
    %306 = vmatprep.mubr.f32.mxu0 %v95
    %307 = vmatmul.mubr.f32.gmra.mxu0 %v94
    %v308 = vpop.f32.mrf.mxu0
    %v309 = vadd.f32 %v175, %v308
    %v310 = vpop.f32.mrf.mxu0
    %v311 = vadd.f32 %v179, %v310
    %312 = vmatprep.mubr.f32.mxu0 %v97
    %313 = vmatmul.mubr.f32.gmra.mxu0 %v96
    %v314 = vpop.f32.mrf.mxu0
    %v315 = vadd.f32 %v175, %v314
    %v316 = vpop.f32.mrf.mxu0
    %v317 = vadd.f32 %v179, %v316
    %318 = vmatprep.mubr.f32.mxu0 %v99
    %319 = vmatmul.mubr.f32.gmra.mxu0 %v98
    %v320 = vpop.f32.mrf.mxu0
    %v321 = vadd.f32 %v175, %v320
    %v322 = vpop.f32.mrf.mxu0
    %v323 = vadd.f32 %v179, %v322
    %324 = vmatprep.mubr.f32.mxu0 %v101
    %325 = vmatmul.mubr.f32.gmra.mxu0 %v100
    %v326 = vpop.f32.mrf.mxu0
    %v327 = vadd.f32 %v175, %v326
    %v328 = vpop.f32.mrf.mxu0
    %v329 = vadd.f32 %v179, %v328
    %330 = vmatprep.mubr.f32.mxu0 %v103
    %331 = vmatmul.mubr.f32.gmra.mxu0 %v102
    %v332 = vpop.f32.mrf.mxu0
    %v333 = vadd.f32 %v175, %v332
    %v334 = vpop.f32.mrf.mxu0
    %v335 = vadd.f32 %v179, %v334
    %336 = vmatprep.mubr.f32.mxu0 %v105
    %337 = vmatmul.mubr.f32.gmra.mxu0 %v104
    %v338 = vpop.f32.mrf.mxu0
    %v339 = vadd.f32 %v175, %v338
    %v340 = vpop.f32.mrf.mxu0
    %v341 = vadd.f32 %v179, %v340
    %342 = vdwg.mxu0
    %v343 = vld [vmem:[#allocation5] sm:$0xff]
    %v344 = vld [vmem:[#allocation5 + $0x8] sm:$0xff]
    %v345 = vld [vmem:[#allocation5 + $0x10] sm:$0xff]
    %v346 = vld [vmem:[#allocation5 + $0x18] sm:$0xff]
    %v347 = vld [vmem:[#allocation5 + $0x20] sm:$0xff]
    %v348 = vld [vmem:[#allocation5 + $0x28] sm:$0xff]
    %v349 = vld [vmem:[#allocation5 + $0x30] sm:$0xff]
    %v350 = vld [vmem:[#allocation5 + $0x38] sm:$0xff]
    %v351 = vld [vmem:[#allocation5 + $0x40] sm:$0xff]
    %v352 = vld [vmem:[#allocation5 + $0x48] sm:$0xff]
    %v353 = vld [vmem:[#allocation5 + $0x50] sm:$0xff]
    %v354 = vld [vmem:[#allocation5 + $0x58] sm:$0xff]
    %v355 = vld [vmem:[#allocation5 + $0x60] sm:$0xff]
    %v356 = vld [vmem:[#allocation5 + $0x68] sm:$0xff]
    %v357 = vld [vmem:[#allocation5 + $0x70] sm:$0xff]
    %v358 = vld [vmem:[#allocation5 + $0x78] sm:$0xff]
    %v359 = vld [vmem:[#allocation5 + $0x80] sm:$0xff]
    %v360 = vld [vmem:[#allocation5 + $0x88] sm:$0xff]
    %v361 = vld [vmem:[#allocation5 + $0x90] sm:$0xff]
    %v362 = vld [vmem:[#allocation5 + $0x98] sm:$0xff]
    %v363 = vld [vmem:[#allocation5 + $0xa0] sm:$0xff]
    %v364 = vld [vmem:[#allocation5 + $0xa8] sm:$0xff]
    %v365 = vld [vmem:[#allocation5 + $0xb0] sm:$0xff]
    %v366 = vld [vmem:[#allocation5 + $0xb8] sm:$0xff]
    %v367 = vld [vmem:[#allocation5 + $0xc0] sm:$0xff]
    %v368 = vld [vmem:[#allocation5 + $0xc8] sm:$0xff]
    %v369 = vld [vmem:[#allocation5 + $0xd0] sm:$0xff]
    %v370 = vld [vmem:[#allocation5 + $0xd8] sm:$0xff]
    %v371 = vld [vmem:[#allocation5 + $0xe0] sm:$0xff]
    %v372 = vld [vmem:[#allocation5 + $0xe8] sm:$0xff]
    %v373 = vld [vmem:[#allocation5 + $0xf0] sm:$0xff]
    %v374 = vld [vmem:[#allocation5 + $0xf8] sm:$0xff]
    %v375 = vld [vmem:[#allocation5 + $0x100] sm:$0xff]
    %v376 = vld [vmem:[#allocation5 + $0x108] sm:$0xff]
    %v377 = vld [vmem:[#allocation5 + $0x110] sm:$0xff]
    %v378 = vld [vmem:[#allocation5 + $0x118] sm:$0xff]
    %v379 = vld [vmem:[#allocation5 + $0x120] sm:$0xff]
    %v380 = vld [vmem:[#allocation5 + $0x128] sm:$0xff]
    %v381 = vld [vmem:[#allocation5 + $0x130] sm:$0xff]
    %v382 = vld [vmem:[#allocation5 + $0x138] sm:$0xff]
    %v383 = vld [vmem:[#allocation5 + $0x140] sm:$0xff]
    %v384 = vld [vmem:[#allocation5 + $0x148] sm:$0xff]
    %v385 = vld [vmem:[#allocation5 + $0x150] sm:$0xff]
    %v386 = vld [vmem:[#allocation5 + $0x158] sm:$0xff]
    %v387 = vld [vmem:[#allocation5 + $0x160] sm:$0xff]
    %v388 = vld [vmem:[#allocation5 + $0x168] sm:$0xff]
    %v389 = vld [vmem:[#allocation5 + $0x170] sm:$0xff]
    %v390 = vld [vmem:[#allocation5 + $0x178] sm:$0xff]
    %v391 = vld [vmem:[#allocation5 + $0x180] sm:$0xff]
    %v392 = vld [vmem:[#allocation5 + $0x188] sm:$0xff]
    %v393 = vld [vmem:[#allocation5 + $0x190] sm:$0xff]
    %v394 = vld [vmem:[#allocation5 + $0x198] sm:$0xff]
    %v395 = vld [vmem:[#allocation5 + $0x1a0] sm:$0xff]
    %v396 = vld [vmem:[#allocation5 + $0x1a8] sm:$0xff]
    %v397 = vld [vmem:[#allocation5 + $0x1b0] sm:$0xff]
    %v398 = vld [vmem:[#allocation5 + $0x1b8] sm:$0xff]
    %v399 = vld [vmem:[#allocation5 + $0x1c0] sm:$0xff]
    %v400 = vld [vmem:[#allocation5 + $0x1c8] sm:$0xff]
    %v401 = vld [vmem:[#allocation5 + $0x1d0] sm:$0xff]
    %v402 = vld [vmem:[#allocation5 + $0x1d8] sm:$0xff]
    %v403 = vld [vmem:[#allocation5 + $0x1e0] sm:$0xff]
    %v404 = vld [vmem:[#allocation5 + $0x1e8] sm:$0xff]
    %v405 = vld [vmem:[#allocation5 + $0x1f0] sm:$0xff]
    %v406 = vld [vmem:[#allocation5 + $0x1f8] sm:$0xff]
    %v407 = vld [vmem:[#allocation8] sm:$0xff]
    %v408 = vld [vmem:[#allocation8 + $0x8] sm:$0xff]
    %409 = vmatprep.subr.mxu0 %v374
    %410 = vmatpush1.xpose.msra.mxu0 %v373
    %411 = vmatprep.subr.mxu0 %v372
    %412 = vmatpush1.xpose.msra.mxu0 %v371
    %413 = vmatprep.subr.mxu0 %v370
    %414 = vmatpush1.xpose.msra.mxu0 %v369
    %415 = vmatprep.subr.mxu0 %v368
    %416 = vmatpush1.xpose.msra.mxu0 %v367
    %417 = vmatprep.subr.mxu0 %v366
    %418 = vmatpush1.xpose.msra.mxu0 %v365
    %419 = vmatprep.subr.mxu0 %v364
    %420 = vmatpush1.xpose.msra.mxu0 %v363
    %421 = vmatprep.subr.mxu0 %v362
    %422 = vmatpush1.xpose.msra.mxu0 %v361
    %423 = vmatprep.subr.mxu0 %v360
    %424 = vmatpush1.xpose.msra.mxu0 %v359
    %425 = vmatprep.subr.mxu0 %v358
    %426 = vmatpush1.xpose.msra.mxu0 %v357
    %427 = vmatprep.subr.mxu0 %v356
    %428 = vmatpush1.xpose.msra.mxu0 %v355
    %429 = vmatprep.subr.mxu0 %v354
    %430 = vmatpush1.xpose.msra.mxu0 %v353
    %431 = vmatprep.subr.mxu0 %v352
    %432 = vmatpush1.xpose.msra.mxu0 %v351
    %433 = vmatprep.subr.mxu0 %v350
    %434 = vmatpush1.xpose.msra.mxu0 %v349
    %435 = vmatprep.subr.mxu0 %v348
    %436 = vmatpush1.xpose.msra.mxu0 %v347
    %437 = vmatprep.subr.mxu0 %v346
    %438 = vmatpush1.xpose.msra.mxu0 %v345
    %439 = vmatprep.subr.mxu0 %v344
    %440 = vmatpush1.xpose.msra.mxu0 %v343
    %441 = vmatprep.subr.mxu0 %v406
    %442 = vmatpush2.xpose.msra.mxu0 %v405
    %443 = vmatprep.subr.mxu0 %v404
    %444 = vmatpush2.xpose.msra.mxu0 %v403
    %445 = vmatprep.subr.mxu0 %v402
    %446 = vmatpush2.xpose.msra.mxu0 %v401
    %447 = vmatprep.subr.mxu0 %v400
    %448 = vmatpush2.xpose.msra.mxu0 %v399
    %449 = vmatprep.subr.mxu0 %v398
    %450 = vmatpush2.xpose.msra.mxu0 %v397
    %451 = vmatprep.subr.mxu0 %v396
    %452 = vmatpush2.xpose.msra.mxu0 %v395
    %453 = vmatprep.subr.mxu0 %v394
    %454 = vmatpush2.xpose.msra.mxu0 %v393
    %455 = vmatprep.subr.mxu0 %v392
    %456 = vmatpush2.xpose.msra.mxu0 %v391
    %457 = vmatprep.subr.mxu0 %v390
    %458 = vmatpush2.xpose.msra.mxu0 %v389
    %459 = vmatprep.subr.mxu0 %v388
    %460 = vmatpush2.xpose.msra.mxu0 %v387
    %461 = vmatprep.subr.mxu0 %v386
    %462 = vmatpush2.xpose.msra.mxu0 %v385
    %463 = vmatprep.subr.mxu0 %v384
    %464 = vmatpush2.xpose.msra.mxu0 %v383
    %465 = vmatprep.subr.mxu0 %v382
    %466 = vmatpush2.xpose.msra.mxu0 %v381
    %467 = vmatprep.subr.mxu0 %v380
    %468 = vmatpush2.xpose.msra.mxu0 %v379
    %469 = vmatprep.subr.mxu0 %v378
    %470 = vmatpush2.xpose.msra.mxu0 %v377
    %471 = vmatprep.subr.mxu0 %v376
    %472 = vmatpush2.xpose.msra.mxu0 %v375
    %473 = vmatprep.mubr.f32.mxu0 %v251
    %474 = vmatmul.mubr.f32.gmra.mxu0 %v249
    %v475 = vpop.f32.mrf.mxu0
    %v476 = vadd.f32 0.0, %v475
    %v477 = vpop.f32.mrf.mxu0
    %v478 = vadd.f32 0.0, %v477
    %479 = vmatprep.mubr.f32.mxu0 %v257
    %480 = vmatmul.mubr.f32.gmra.mxu0 %v255
    %v481 = vpop.f32.mrf.mxu0
    %v482 = vadd.f32 0.0, %v481
    %v483 = vpop.f32.mrf.mxu0
    %v484 = vadd.f32 0.0, %v483
    %485 = vmatprep.mubr.f32.mxu0 %v263
    %486 = vmatmul.mubr.f32.gmra.mxu0 %v261
    %v487 = vpop.f32.mrf.mxu0
    %v488 = vadd.f32 0.0, %v487
    %v489 = vpop.f32.mrf.mxu0
    %v490 = vadd.f32 0.0, %v489
    %491 = vmatprep.mubr.f32.mxu0 %v269
    %492 = vmatmul.mubr.f32.gmra.mxu0 %v267
    %v493 = vpop.f32.mrf.mxu0
    %v494 = vadd.f32 0.0, %v493
    %v495 = vpop.f32.mrf.mxu0
    %v496 = vadd.f32 0.0, %v495
    %497 = vmatprep.mubr.f32.mxu0 %v275
    %498 = vmatmul.mubr.f32.gmra.mxu0 %v273
    %v499 = vpop.f32.mrf.mxu0
    %v500 = vadd.f32 0.0, %v499
    %v501 = vpop.f32.mrf.mxu0
    %v502 = vadd.f32 0.0, %v501
    %503 = vmatprep.mubr.f32.mxu0 %v281
    %504 = vmatmul.mubr.f32.gmra.mxu0 %v279
    %v505 = vpop.f32.mrf.mxu0
    %v506 = vadd.f32 0.0, %v505
    %v507 = vpop.f32.mrf.mxu0
    %v508 = vadd.f32 0.0, %v507
    %509 = vmatprep.mubr.f32.mxu0 %v287
    %510 = vmatmul.mubr.f32.gmra.mxu0 %v285
    %v511 = vpop.f32.mrf.mxu0
    %v512 = vadd.f32 0.0, %v511
    %v513 = vpop.f32.mrf.mxu0
    %v514 = vadd.f32 0.0, %v513
    %515 = vmatprep.mubr.f32.mxu0 %v293
    %516 = vmatmul.mubr.f32.gmra.mxu0 %v291
    %v517 = vpop.f32.mrf.mxu0
    %v518 = vadd.f32 0.0, %v517
    %v519 = vpop.f32.mrf.mxu0
    %v520 = vadd.f32 0.0, %v519
    %521 = vmatprep.mubr.f32.mxu0 %v299
    %522 = vmatmul.mubr.f32.gmra.mxu0 %v297
    %v523 = vpop.f32.mrf.mxu0
    %v524 = vadd.f32 0.0, %v523
    %v525 = vpop.f32.mrf.mxu0
    %v526 = vadd.f32 0.0, %v525
    %527 = vmatprep.mubr.f32.mxu0 %v305
    %528 = vmatmul.mubr.f32.gmra.mxu0 %v303
    %v529 = vpop.f32.mrf.mxu0
    %v530 = vadd.f32 0.0, %v529
    %v531 = vpop.f32.mrf.mxu0
    %v532 = vadd.f32 0.0, %v531
    %533 = vmatprep.mubr.f32.mxu0 %v311
    %534 = vmatmul.mubr.f32.gmra.mxu0 %v309
    %v535 = vpop.f32.mrf.mxu0
    %v536 = vadd.f32 0.0, %v535
    %v537 = vpop.f32.mrf.mxu0
    %v538 = vadd.f32 0.0, %v537
    %539 = vmatprep.mubr.f32.mxu0 %v317
    %540 = vmatmul.mubr.f32.gmra.mxu0 %v315
    %v541 = vpop.f32.mrf.mxu0
    %v542 = vadd.f32 0.0, %v541
    %v543 = vpop.f32.mrf.mxu0
    %v544 = vadd.f32 0.0, %v543
    %545 = vmatprep.mubr.f32.mxu0 %v323
    %546 = vmatmul.mubr.f32.gmra.mxu0 %v321
    %v547 = vpop.f32.mrf.mxu0
    %v548 = vadd.f32 0.0, %v547
    %v549 = vpop.f32.mrf.mxu0
    %v550 = vadd.f32 0.0, %v549
    %551 = vmatprep.mubr.f32.mxu0 %v329
    %552 = vmatmul.mubr.f32.gmra.mxu0 %v327
    %v553 = vpop.f32.mrf.mxu0
    %v554 = vadd.f32 0.0, %v553
    %v555 = vpop.f32.mrf.mxu0
    %v556 = vadd.f32 0.0, %v555
    %557 = vmatprep.mubr.f32.mxu0 %v335
    %558 = vmatmul.mubr.f32.gmra.mxu0 %v333
    %v559 = vpop.f32.mrf.mxu0
    %v560 = vadd.f32 0.0, %v559
    %v561 = vpop.f32.mrf.mxu0
    %v562 = vadd.f32 0.0, %v561
    %563 = vmatprep.mubr.f32.mxu0 %v341
    %564 = vmatmul.mubr.f32.gmra.mxu0 %v339
    %v565 = vpop.f32.mrf.mxu0
    %v566 = vadd.f32 0.0, %v565
    %v567 = vpop.f32.mrf.mxu0
    %v568 = vadd.f32 0.0, %v567
    %569 = vdwg.mxu0
    %v570 = vrot.slane %v407, 4
    %v571 = vmax.f32 %v407, %v570
    %v572 = vrot.slane %v571, 2
    %v573 = vmax.f32 %v571, %v572
    %v574 = vrot.slane %v573, 1
    %v575 = vmax.f32 %v573, %v574
    %v576 = vrot.slane %v408, 4
    %v577 = vmax.f32 %v408, %v576
    %v578 = vrot.slane %v577, 2
    %v579 = vmax.f32 %v577, %v578
    %v580 = vrot.slane %v579, 1
    %v581 = vmax.f32 %v579, %v580
    %vm582 = vcmp.gt.f32.partialorder %v575, 0.0
    %vm583 = vcmp.gt.f32.partialorder %v581, 0.0
    %v584 = vsel %vm582, 1, 0
    %v585 = vsel %vm583, 1, 0
    %vm586 = vcmp.eq.s32.totalorder %v584, 1
    %vm587 = vcmp.eq.s32.totalorder %v585, 1
    %v588 = vsel %vm586, %v476, -1e+30
    %v589 = vsel %vm587, %v478, -1e+30
    %v590 = vsel %vm586, %v482, -1e+30
    %v591 = vsel %vm587, %v484, -1e+30
    %v592 = vsel %vm586, %v488, -1e+30
    %v593 = vsel %vm587, %v490, -1e+30
    %v594 = vsel %vm586, %v494, -1e+30
    %v595 = vsel %vm587, %v496, -1e+30
    %v596 = vsel %vm586, %v500, -1e+30
    %v597 = vsel %vm587, %v502, -1e+30
    %v598 = vsel %vm586, %v506, -1e+30
    %v599 = vsel %vm587, %v508, -1e+30
    %v600 = vsel %vm586, %v512, -1e+30
    %v601 = vsel %vm587, %v514, -1e+30
    %v602 = vsel %vm586, %v518, -1e+30
    %v603 = vsel %vm587, %v520, -1e+30
    %v604 = vsel %vm586, %v524, -1e+30
    %v605 = vsel %vm587, %v526, -1e+30
    %v606 = vsel %vm586, %v530, -1e+30
    %v607 = vsel %vm587, %v532, -1e+30
    %v608 = vsel %vm586, %v536, -1e+30
    %v609 = vsel %vm587, %v538, -1e+30
    %v610 = vsel %vm586, %v542, -1e+30
    %v611 = vsel %vm587, %v544, -1e+30
    %v612 = vsel %vm586, %v548, -1e+30
    %v613 = vsel %vm587, %v550, -1e+30
    %v614 = vsel %vm586, %v554, -1e+30
    %v615 = vsel %vm587, %v556, -1e+30
    %v616 = vsel %vm586, %v560, -1e+30
    %v617 = vsel %vm587, %v562, -1e+30
    %v618 = vsel %vm586, %v566, -1e+30
    %v619 = vsel %vm587, %v568, -1e+30
    %v620 = vmax.f32 %v588, %v589
    %621 = vmax.xlane.f32.xlu0 %v620
    %v622 = vpop.xlane.xlu0 %621
    %v623 = vmax.f32 %v590, %v591
    %624 = vmax.xlane.f32.xlu0 %v623
    %v625 = vpop.xlane.xlu0 %624
    %v626 = vmax.f32 %v592, %v593
    %627 = vmax.xlane.f32.xlu0 %v626
    %v628 = vpop.xlane.xlu0 %627
    %v629 = vmax.f32 %v594, %v595
    %630 = vmax.xlane.f32.xlu0 %v629
    %v631 = vpop.xlane.xlu0 %630
    %v632 = vmax.f32 %v596, %v597
    %633 = vmax.xlane.f32.xlu0 %v632
    %v634 = vpop.xlane.xlu0 %633
    %v635 = vmax.f32 %v598, %v599
    %636 = vmax.xlane.f32.xlu0 %v635
    %v637 = vpop.xlane.xlu0 %636
    %v638 = vmax.f32 %v600, %v601
    %639 = vmax.xlane.f32.xlu0 %v638
    %v640 = vpop.xlane.xlu0 %639
    %v641 = vmax.f32 %v602, %v603
    %642 = vmax.xlane.f32.xlu0 %v641
    %v643 = vpop.xlane.xlu0 %642
    %v644 = vmax.f32 %v604, %v605
    %645 = vmax.xlane.f32.xlu0 %v644
    %v646 = vpop.xlane.xlu0 %645
    %v647 = vmax.f32 %v606, %v607
    %648 = vmax.xlane.f32.xlu0 %v647
    %v649 = vpop.xlane.xlu0 %648
    %v650 = vmax.f32 %v608, %v609
    %651 = vmax.xlane.f32.xlu0 %v650
    %v652 = vpop.xlane.xlu0 %651
    %v653 = vmax.f32 %v610, %v611
    %654 = vmax.xlane.f32.xlu0 %v653
    %v655 = vpop.xlane.xlu0 %654
    %v656 = vmax.f32 %v612, %v613
    %657 = vmax.xlane.f32.xlu0 %v656
    %v658 = vpop.xlane.xlu0 %657
    %v659 = vmax.f32 %v614, %v615
    %660 = vmax.xlane.f32.xlu0 %v659
    %v661 = vpop.xlane.xlu0 %660
    %v662 = vmax.f32 %v616, %v617
    %663 = vmax.xlane.f32.xlu0 %v662
    %v664 = vpop.xlane.xlu0 %663
    %v665 = vmax.f32 %v618, %v619
    %666 = vmax.xlane.f32.xlu0 %v665
    %v667 = vpop.xlane.xlu0 %666
    %v668 = vsub.f32 %v476, %v622
    %v669 = vsub.f32 %v478, %v622
    %v670 = vsub.f32 %v482, %v625
    %v671 = vsub.f32 %v484, %v625
    %v672 = vsub.f32 %v488, %v628
    %v673 = vsub.f32 %v490, %v628
    %v674 = vsub.f32 %v494, %v631
    %v675 = vsub.f32 %v496, %v631
    %v676 = vsub.f32 %v500, %v634
    %v677 = vsub.f32 %v502, %v634
    %v678 = vsub.f32 %v506, %v637
    %v679 = vsub.f32 %v508, %v637
    %v680 = vsub.f32 %v512, %v640
    %v681 = vsub.f32 %v514, %v640
    %v682 = vsub.f32 %v518, %v643
    %v683 = vsub.f32 %v520, %v643
    %v684 = vsub.f32 %v524, %v646
    %v685 = vsub.f32 %v526, %v646
    %v686 = vsub.f32 %v530, %v649
    %v687 = vsub.f32 %v532, %v649
    %v688 = vsub.f32 %v536, %v652
    %v689 = vsub.f32 %v538, %v652
    %v690 = vsub.f32 %v542, %v655
    %v691 = vsub.f32 %v544, %v655
    %v692 = vsub.f32 %v548, %v658
    %v693 = vsub.f32 %v550, %v658
    %v694 = vsub.f32 %v554, %v661
    %v695 = vsub.f32 %v556, %v661
    %v696 = vsub.f32 %v560, %v664
    %v697 = vsub.f32 %v562, %v664
    %v698 = vsub.f32 %v566, %v667
    %v699 = vsub.f32 %v568, %v667
    %v700 = vmin.f32 %v668, 0.0
    %v701 = vmin.f32 %v669, 0.0
    %v702 = vmin.f32 %v670, 0.0
    %v703 = vmin.f32 %v671, 0.0
    %v704 = vmin.f32 %v672, 0.0
    %v705 = vmin.f32 %v673, 0.0
    %v706 = vmin.f32 %v674, 0.0
    %v707 = vmin.f32 %v675, 0.0
    %v708 = vmin.f32 %v676, 0.0
    %v709 = vmin.f32 %v677, 0.0
    %v710 = vmin.f32 %v678, 0.0
    %v711 = vmin.f32 %v679, 0.0
    %v712 = vmin.f32 %v680, 0.0
    %v713 = vmin.f32 %v681, 0.0
    %v714 = vmin.f32 %v682, 0.0
    %v715 = vmin.f32 %v683, 0.0
    %v716 = vmin.f32 %v684, 0.0
    %v717 = vmin.f32 %v685, 0.0
    %v718 = vmin.f32 %v686, 0.0
    %v719 = vmin.f32 %v687, 0.0
    %v720 = vmin.f32 %v688, 0.0
    %v721 = vmin.f32 %v689, 0.0
    %v722 = vmin.f32 %v690, 0.0
    %v723 = vmin.f32 %v691, 0.0
    %v724 = vmin.f32 %v692, 0.0
    %v725 = vmin.f32 %v693, 0.0
    %v726 = vmin.f32 %v694, 0.0
    %v727 = vmin.f32 %v695, 0.0
    %v728 = vmin.f32 %v696, 0.0
    %v729 = vmin.f32 %v697, 0.0
    %v730 = vmin.f32 %v698, 0.0
    %v731 = vmin.f32 %v699, 0.0
    %v732 = vmul.f32 %v700, 1.442695
    %v733 = vpow.pop %v732
    %v734 = vmul.f32 %v701, 1.442695
    %v735 = vpow.pop %v734
    %v736 = vmul.f32 %v702, 1.442695
    %v737 = vpow.pop %v736
    %v738 = vmul.f32 %v703, 1.442695
    %v739 = vpow.pop %v738
    %v740 = vmul.f32 %v704, 1.442695
    %v741 = vpow.pop %v740
    %v742 = vmul.f32 %v705, 1.442695
    %v743 = vpow.pop %v742
    %v744 = vmul.f32 %v706, 1.442695
    %v745 = vpow.pop %v744
    %v746 = vmul.f32 %v707, 1.442695
    %v747 = vpow.pop %v746
    %v748 = vmul.f32 %v708, 1.442695
    %v749 = vpow.pop %v748
    %v750 = vmul.f32 %v709, 1.442695
    %v751 = vpow.pop %v750
    %v752 = vmul.f32 %v710, 1.442695
    %v753 = vpow.pop %v752
    %v754 = vmul.f32 %v711, 1.442695
    %v755 = vpow.pop %v754
    %v756 = vmul.f32 %v712, 1.442695
    %v757 = vpow.pop %v756
    %v758 = vmul.f32 %v713, 1.442695
    %v759 = vpow.pop %v758
    %v760 = vmul.f32 %v714, 1.442695
    %v761 = vpow.pop %v760
    %v762 = vmul.f32 %v715, 1.442695
    %v763 = vpow.pop %v762
    %v764 = vmul.f32 %v716, 1.442695
    %v765 = vpow.pop %v764
    %v766 = vmul.f32 %v717, 1.442695
    %v767 = vpow.pop %v766
    %v768 = vmul.f32 %v718, 1.442695
    %v769 = vpow.pop %v768
    %v770 = vmul.f32 %v719, 1.442695
    %v771 = vpow.pop %v770
    %v772 = vmul.f32 %v720, 1.442695
    %v773 = vpow.pop %v772
    %v774 = vmul.f32 %v721, 1.442695
    %v775 = vpow.pop %v774
    %v776 = vmul.f32 %v722, 1.442695
    %v777 = vpow.pop %v776
    %v778 = vmul.f32 %v723, 1.442695
    %v779 = vpow.pop %v778
    %v780 = vmul.f32 %v724, 1.442695
    %v781 = vpow.pop %v780
    %v782 = vmul.f32 %v725, 1.442695
    %v783 = vpow.pop %v782
    %v784 = vmul.f32 %v726, 1.442695
    %v785 = vpow.pop %v784
    %v786 = vmul.f32 %v727, 1.442695
    %v787 = vpow.pop %v786
    %v788 = vmul.f32 %v728, 1.442695
    %v789 = vpow.pop %v788
    %v790 = vmul.f32 %v729, 1.442695
    %v791 = vpow.pop %v790
    %v792 = vmul.f32 %v730, 1.442695
    %v793 = vpow.pop %v792
    %v794 = vmul.f32 %v731, 1.442695
    %v795 = vpow.pop %v794
    %v796 = vmul.f32 %v733, %v575
    %v797 = vmul.f32 %v735, %v581
    %v798 = vmul.f32 %v737, %v575
    %v799 = vmul.f32 %v739, %v581
    %v800 = vmul.f32 %v741, %v575
    %v801 = vmul.f32 %v743, %v581
    %v802 = vmul.f32 %v745, %v575
    %v803 = vmul.f32 %v747, %v581
    %v804 = vmul.f32 %v749, %v575
    %v805 = vmul.f32 %v751, %v581
    %v806 = vmul.f32 %v753, %v575
    %v807 = vmul.f32 %v755, %v581
    %v808 = vmul.f32 %v757, %v575
    %v809 = vmul.f32 %v759, %v581
    %v810 = vmul.f32 %v761, %v575
    %v811 = vmul.f32 %v763, %v581
    %v812 = vmul.f32 %v765, %v575
    %v813 = vmul.f32 %v767, %v581
    %v814 = vmul.f32 %v769, %v575
    %v815 = vmul.f32 %v771, %v581
    %v816 = vmul.f32 %v773, %v575
    %v817 = vmul.f32 %v775, %v581
    %v818 = vmul.f32 %v777, %v575
    %v819 = vmul.f32 %v779, %v581
    %v820 = vmul.f32 %v781, %v575
    %v821 = vmul.f32 %v783, %v581
    %v822 = vmul.f32 %v785, %v575
    %v823 = vmul.f32 %v787, %v581
    %v824 = vmul.f32 %v789, %v575
    %v825 = vmul.f32 %v791, %v581
    %v826 = vmul.f32 %v793, %v575
    %v827 = vmul.f32 %v795, %v581
    %828 = vmatprep.subr.mxu0 %v827
    %829 = vmatpush1.xpose.msra.mxu0 %v826
    %830 = vmatprep.subr.mxu0 %v825
    %831 = vmatpush1.xpose.msra.mxu0 %v824
    %832 = vmatprep.subr.mxu0 %v823
    %833 = vmatpush1.xpose.msra.mxu0 %v822
    %834 = vmatprep.subr.mxu0 %v821
    %835 = vmatpush1.xpose.msra.mxu0 %v820
    %836 = vmatprep.subr.mxu0 %v819
    %837 = vmatpush1.xpose.msra.mxu0 %v818
    %838 = vmatprep.subr.mxu0 %v817
    %839 = vmatpush1.xpose.msra.mxu0 %v816
    %840 = vmatprep.subr.mxu0 %v815
    %841 = vmatpush1.xpose.msra.mxu0 %v814
    %842 = vmatprep.subr.mxu0 %v813
    %843 = vmatpush1.xpose.msra.mxu0 %v812
    %844 = vmatprep.subr.mxu0 %v811
    %845 = vmatpush1.xpose.msra.mxu0 %v810
    %846 = vmatprep.subr.mxu0 %v809
    %847 = vmatpush1.xpose.msra.mxu0 %v808
    %848 = vmatprep.subr.mxu0 %v807
    %849 = vmatpush1.xpose.msra.mxu0 %v806
    %850 = vmatprep.subr.mxu0 %v805
    %851 = vmatpush1.xpose.msra.mxu0 %v804
    %852 = vmatprep.subr.mxu0 %v803
    %853 = vmatpush1.xpose.msra.mxu0 %v802
    %854 = vmatprep.subr.mxu0 %v801
    %855 = vmatpush1.xpose.msra.mxu0 %v800
    %856 = vmatprep.subr.mxu0 %v799
    %857 = vmatpush1.xpose.msra.mxu0 %v798
    %858 = vmatprep.subr.mxu0 %v797
    %859 = vmatpush1.xpose.msra.mxu0 %v796
    %860 = vmatprep.subr.mxu0 0.0
    %861 = vmatpush2.xpose.msra.mxu0 0.0
    %862 = vmatprep.subr.mxu0 0.0
    %863 = vmatpush2.xpose.msra.mxu0 0.0
    %864 = vmatprep.subr.mxu0 0.0
    %865 = vmatpush2.xpose.msra.mxu0 0.0
    %866 = vmatprep.subr.mxu0 0.0
    %867 = vmatpush2.xpose.msra.mxu0 0.0
    %868 = vmatprep.subr.mxu0 0.0
    %869 = vmatpush2.xpose.msra.mxu0 0.0
    %870 = vmatprep.subr.mxu0 0.0
    %871 = vmatpush2.xpose.msra.mxu0 0.0
    %872 = vmatprep.subr.mxu0 0.0
    %873 = vmatpush2.xpose.msra.mxu0 0.0
    %874 = vmatprep.subr.mxu0 0.0
    %875 = vmatpush2.xpose.msra.mxu0 0.0
    %876 = vmatprep.subr.mxu0 0.0
    %877 = vmatpush2.xpose.msra.mxu0 0.0
    %878 = vmatprep.subr.mxu0 0.0
    %879 = vmatpush2.xpose.msra.mxu0 0.0
    %880 = vmatprep.subr.mxu0 0.0
    %881 = vmatpush2.xpose.msra.mxu0 0.0
    %882 = vmatprep.subr.mxu0 0.0
    %883 = vmatpush2.xpose.msra.mxu0 0.0
    %884 = vmatprep.subr.mxu0 0.0
    %885 = vmatpush2.xpose.msra.mxu0 0.0
    %886 = vmatprep.subr.mxu0 0.0
    %887 = vmatpush2.xpose.msra.mxu0 0.0
    %888 = vmatprep.subr.mxu0 0.0
    %889 = vmatpush2.xpose.msra.mxu0 0.0
    %890 = vmatprep.subr.mxu0 0.0
    %891 = vmatpush2.xpose.msra.mxu0 0.0
    %892 = vmatprep.mubr.f32.mxu0 %v408
    %893 = vmatmul.mubr.f32.gmra.mxu0 %v407
    %v894 = vpop.f32.mrf.mxu0
    %v895 = vadd.f32 0.0, %v894
    %v896 = vpop.f32.mrf.mxu0
    %897 = vdwg.mxu0
    %v898 = vmax.f32 %v895, 1e-12
    %v899 = vrcp.pop %v898
    %v900 = vmul.f32 1.0, %v899
    %v903 = vcombine.low %v407, %v408
    %v904 = vcombine.high %v407, %v408
    %v906 = vunpack.c.l.s4 1966171168
    %v907 = vunpack.c.0.s8 %v906
    %v908 = vlaneseq
    %v909 = vshrl.u32 %v908, 7
    %v910 = vsub.s32 %v907, %v909
    %v911 = vrot.slane %v903, %v910
    %v913 = vunpack.c.l.s4 1966171168
    %v914 = vunpack.c.0.s8 %v913
    %v915 = vlaneseq
    %v916 = vshrl.u32 %v915, 7
    %v917 = vsub.s32 %v914, %v916
    %v918 = vrot.slane %v904, %v917
    %v919 = vcombine.high %v911, %v911
    %v920 = vcombine.high %v918, %v918
    %v922 = vunpack.c.l.s4 1966171168
    %v923 = vunpack.c.0.s8 %v922
    %v924 = vlaneseq
    %v925 = vshrl.u32 %v924, 7
    %v926 = vsub.s32 %v923, %v925
    %v927 = vrot.slane %v911, %v926
    %v929 = vunpack.c.l.s4 1966171168
    %v930 = vunpack.c.0.s8 %v929
    %v931 = vlaneseq
    %v932 = vshrl.u32 %v931, 7
    %v933 = vsub.s32 %v930, %v932
    %v934 = vrot.slane %v918, %v933
    %v936 = vunpack.c.l.s4 1966171168
    %v937 = vunpack.c.0.s8 %v936
    %v938 = vlaneseq
    %v939 = vshrl.u32 %v938, 7
    %v940 = vsub.s32 %v937, %v939
    %v941 = vrot.slane %v919, %v940
    %v943 = vunpack.c.l.s4 1966171168
    %v944 = vunpack.c.0.s8 %v943
    %v945 = vlaneseq
    %v946 = vshrl.u32 %v945, 7
    %v947 = vsub.s32 %v944, %v946
    %v948 = vrot.slane %v920, %v947
    %v949 = vcombine.high %v927, %v927
    %v950 = vcombine.high %v934, %v934
    %v951 = vcombine.high %v941, %v941
    %v952 = vcombine.high %v948, %v948
    %v953 = vlaneseq
    %v954 = vshrl.u32 %v953, 7
    %v955 = vsub.s32 0, %v954
    %v956 = vrot.slane %v927, %v955
    %v957 = vlaneseq
    %v958 = vshrl.u32 %v957, 7
    %v959 = vsub.s32 1, %v958
    %v960 = vrot.slane %v927, %v959
    %v961 = vlaneseq
    %v962 = vshrl.u32 %v961, 7
    %v963 = vsub.s32 0, %v962
    %v964 = vrot.slane %v941, %v963
    %v965 = vlaneseq
    %v966 = vshrl.u32 %v965, 7
    %v967 = vsub.s32 1, %v966
    %v968 = vrot.slane %v941, %v967
    %v969 = vlaneseq
    %v970 = vshrl.u32 %v969, 7
    %v971 = vsub.s32 0, %v970
    %v972 = vrot.slane %v949, %v971
    %v973 = vlaneseq
    %v974 = vshrl.u32 %v973, 7
    %v975 = vsub.s32 1, %v974
    %v976 = vrot.slane %v949, %v975
    %v977 = vlaneseq
    %v978 = vshrl.u32 %v977, 7
    %v979 = vsub.s32 0, %v978
    %v980 = vrot.slane %v951, %v979
    %v981 = vlaneseq
    %v982 = vshrl.u32 %v981, 7
    %v983 = vsub.s32 1, %v982
    %v984 = vrot.slane %v951, %v983
    %v985 = vlaneseq
    %v986 = vshrl.u32 %v985, 7
    %v987 = vsub.s32 0, %v986
    %v988 = vrot.slane %v934, %v987
    %v989 = vlaneseq
    %v990 = vshrl.u32 %v989, 7
    %v991 = vsub.s32 1, %v990
    %v992 = vrot.slane %v934, %v991
    %v993 = vlaneseq
    %v994 = vshrl.u32 %v993, 7
    %v995 = vsub.s32 0, %v994
    %v996 = vrot.slane %v948, %v995
    %v997 = vlaneseq
    %v998 = vshrl.u32 %v997, 7
    %v999 = vsub.s32 1, %v998
    %v1000 = vrot.slane %v948, %v999
    %v1001 = vlaneseq
    %v1002 = vshrl.u32 %v1001, 7
    %v1003 = vsub.s32 0, %v1002
    %v1004 = vrot.slane %v950, %v1003
    %v1005 = vlaneseq
    %v1006 = vshrl.u32 %v1005, 7
    %v1007 = vsub.s32 1, %v1006
    %v1008 = vrot.slane %v950, %v1007
    %v1009 = vlaneseq
    %v1010 = vshrl.u32 %v1009, 7
    %v1011 = vsub.s32 0, %v1010
    %v1012 = vrot.slane %v952, %v1011
    %v1013 = vlaneseq
    %v1014 = vshrl.u32 %v1013, 7
    %v1015 = vsub.s32 1, %v1014
    %v1016 = vrot.slane %v952, %v1015
    %v1033 = vmul.f32 %v796, %v956
    %v1034 = vmul.f32 %v797, %v960
    %v1035 = vmul.f32 %v798, %v956
    %v1036 = vmul.f32 %v799, %v960
    %v1037 = vmul.f32 %v800, %v956
    %v1038 = vmul.f32 %v801, %v960
    %v1039 = vmul.f32 %v802, %v956
    %v1040 = vmul.f32 %v803, %v960
    %v1041 = vmul.f32 %v804, %v956
    %v1042 = vmul.f32 %v805, %v960
    %v1043 = vmul.f32 %v806, %v956
    %v1044 = vmul.f32 %v807, %v960
    %v1045 = vmul.f32 %v808, %v956
    %v1046 = vmul.f32 %v809, %v960
    %v1047 = vmul.f32 %v810, %v956
    %v1048 = vmul.f32 %v811, %v960
    %v1049 = vmul.f32 %v812, %v956
    %v1050 = vmul.f32 %v813, %v960
    %v1051 = vmul.f32 %v814, %v956
    %v1052 = vmul.f32 %v815, %v960
    %v1053 = vmul.f32 %v816, %v956
    %v1054 = vmul.f32 %v817, %v960
    %v1055 = vmul.f32 %v818, %v956
    %v1056 = vmul.f32 %v819, %v960
    %v1057 = vmul.f32 %v820, %v956
    %v1058 = vmul.f32 %v821, %v960
    %v1059 = vmul.f32 %v822, %v956
    %v1060 = vmul.f32 %v823, %v960
    %v1061 = vmul.f32 %v824, %v956
    %v1062 = vmul.f32 %v825, %v960
    %v1063 = vmul.f32 %v826, %v956
    %v1064 = vmul.f32 %v827, %v960
    %v1065 = vmul.f32 %v796, %v964
    %v1066 = vmul.f32 %v797, %v968
    %v1067 = vmul.f32 %v798, %v964
    %v1068 = vmul.f32 %v799, %v968
    %v1069 = vmul.f32 %v800, %v964
    %v1070 = vmul.f32 %v801, %v968
    %v1071 = vmul.f32 %v802, %v964
    %v1072 = vmul.f32 %v803, %v968
    %v1073 = vmul.f32 %v804, %v964
    %v1074 = vmul.f32 %v805, %v968
    %v1075 = vmul.f32 %v806, %v964
    %v1076 = vmul.f32 %v807, %v968
    %v1077 = vmul.f32 %v808, %v964
    %v1078 = vmul.f32 %v809, %v968
    %v1079 = vmul.f32 %v810, %v964
    %v1080 = vmul.f32 %v811, %v968
    %v1081 = vmul.f32 %v812, %v964
    %v1082 = vmul.f32 %v813, %v968
    %v1083 = vmul.f32 %v814, %v964
    %v1084 = vmul.f32 %v815, %v968
    %v1085 = vmul.f32 %v816, %v964
    %v1086 = vmul.f32 %v817, %v968
    %v1087 = vmul.f32 %v818, %v964
    %v1088 = vmul.f32 %v819, %v968
    %v1089 = vmul.f32 %v820, %v964
    %v1090 = vmul.f32 %v821, %v968
    %v1091 = vmul.f32 %v822, %v964
    %v1092 = vmul.f32 %v823, %v968
    %v1093 = vmul.f32 %v824, %v964
    %v1094 = vmul.f32 %v825, %v968
    %v1095 = vmul.f32 %v826, %v964
    %v1096 = vmul.f32 %v827, %v968
    %v1097 = vmul.f32 %v796, %v972
    %v1098 = vmul.f32 %v797, %v976
    %v1099 = vmul.f32 %v798, %v972
    %v1100 = vmul.f32 %v799, %v976
    %v1101 = vmul.f32 %v800, %v972
    %v1102 = vmul.f32 %v801, %v976
    %v1103 = vmul.f32 %v802, %v972
    %v1104 = vmul.f32 %v803, %v976
    %v1105 = vmul.f32 %v804, %v972
    %v1106 = vmul.f32 %v805, %v976
    %v1107 = vmul.f32 %v806, %v972
    %v1108 = vmul.f32 %v807, %v976
    %v1109 = vmul.f32 %v808, %v972
    %v1110 = vmul.f32 %v809, %v976
    %v1111 = vmul.f32 %v810, %v972
    %v1112 = vmul.f32 %v811, %v976
    %v1113 = vmul.f32 %v812, %v972
    %v1114 = vmul.f32 %v813, %v976
    %v1115 = vmul.f32 %v814, %v972
    %v1116 = vmul.f32 %v815, %v976
    %v1117 = vmul.f32 %v816, %v972
    %v1118 = vmul.f32 %v817, %v976
    %v1119 = vmul.f32 %v818, %v972
    %v1120 = vmul.f32 %v819, %v976
    %v1121 = vmul.f32 %v820, %v972
    %v1122 = vmul.f32 %v821, %v976
    %v1123 = vmul.f32 %v822, %v972
    %v1124 = vmul.f32 %v823, %v976
    %v1125 = vmul.f32 %v824, %v972
    %v1126 = vmul.f32 %v825, %v976
    %v1127 = vmul.f32 %v826, %v972
    %v1128 = vmul.f32 %v827, %v976
    %v1129 = vmul.f32 %v796, %v980
    %v1130 = vmul.f32 %v797, %v984
    %v1131 = vmul.f32 %v798, %v980
    %v1132 = vmul.f32 %v799, %v984
    %v1133 = vmul.f32 %v800, %v980
    %v1134 = vmul.f32 %v801, %v984
    %v1135 = vmul.f32 %v802, %v980
    %v1136 = vmul.f32 %v803, %v984
    %v1137 = vmul.f32 %v804, %v980
    %v1138 = vmul.f32 %v805, %v984
    %v1139 = vmul.f32 %v806, %v980
    %v1140 = vmul.f32 %v807, %v984
    %v1141 = vmul.f32 %v808, %v980
    %v1142 = vmul.f32 %v809, %v984
    %v1143 = vmul.f32 %v810, %v980
    %v1144 = vmul.f32 %v811, %v984
    %v1145 = vmul.f32 %v812, %v980
    %v1146 = vmul.f32 %v813, %v984
    %v1147 = vmul.f32 %v814, %v980
    %v1148 = vmul.f32 %v815, %v984
    %v1149 = vmul.f32 %v816, %v980
    %v1150 = vmul.f32 %v817, %v984
    %v1151 = vmul.f32 %v818, %v980
    %v1152 = vmul.f32 %v819, %v984
    %v1153 = vmul.f32 %v820, %v980
    %v1154 = vmul.f32 %v821, %v984
    %v1155 = vmul.f32 %v822, %v980
    %v1156 = vmul.f32 %v823, %v984
    %v1157 = vmul.f32 %v824, %v980
    %v1158 = vmul.f32 %v825, %v984
    %v1159 = vmul.f32 %v826, %v980
    %v1160 = vmul.f32 %v827, %v984
    %v1161 = vmul.f32 %v796, %v988
    %v1162 = vmul.f32 %v797, %v992
    %v1163 = vmul.f32 %v798, %v988
    %v1164 = vmul.f32 %v799, %v992
    %v1165 = vmul.f32 %v800, %v988
    %v1166 = vmul.f32 %v801, %v992
    %v1167 = vmul.f32 %v802, %v988
    %v1168 = vmul.f32 %v803, %v992
    %v1169 = vmul.f32 %v804, %v988
    %v1170 = vmul.f32 %v805, %v992
    %v1171 = vmul.f32 %v806, %v988
    %v1172 = vmul.f32 %v807, %v992
    %v1173 = vmul.f32 %v808, %v988
    %v1174 = vmul.f32 %v809, %v992
    %v1175 = vmul.f32 %v810, %v988
    %v1176 = vmul.f32 %v811, %v992
    %v1177 = vmul.f32 %v812, %v988
    %v1178 = vmul.f32 %v813, %v992
    %v1179 = vmul.f32 %v814, %v988
    %v1180 = vmul.f32 %v815, %v992
    %v1181 = vmul.f32 %v816, %v988
    %v1182 = vmul.f32 %v817, %v992
    %v1183 = vmul.f32 %v818, %v988
    %v1184 = vmul.f32 %v819, %v992
    %v1185 = vmul.f32 %v820, %v988
    %v1186 = vmul.f32 %v821, %v992
    %v1187 = vmul.f32 %v822, %v988
    %v1188 = vmul.f32 %v823, %v992
    %v1189 = vmul.f32 %v824, %v988
    %v1190 = vmul.f32 %v825, %v992
    %v1191 = vmul.f32 %v826, %v988
    %v1192 = vmul.f32 %v827, %v992
    %v1193 = vmul.f32 %v796, %v996
    %v1194 = vmul.f32 %v797, %v1000
    %v1195 = vmul.f32 %v798, %v996
    %v1196 = vmul.f32 %v799, %v1000
    %v1197 = vmul.f32 %v800, %v996
    %v1198 = vmul.f32 %v801, %v1000
    %v1199 = vmul.f32 %v802, %v996
    %v1200 = vmul.f32 %v803, %v1000
    %v1201 = vmul.f32 %v804, %v996
    %v1202 = vmul.f32 %v805, %v1000
    %v1203 = vmul.f32 %v806, %v996
    %v1204 = vmul.f32 %v807, %v1000
    %v1205 = vmul.f32 %v808, %v996
    %v1206 = vmul.f32 %v809, %v1000
    %v1207 = vmul.f32 %v810, %v996
    %v1208 = vmul.f32 %v811, %v1000
    %v1209 = vmul.f32 %v812, %v996
    %v1210 = vmul.f32 %v813, %v1000
    %v1211 = vmul.f32 %v814, %v996
    %v1212 = vmul.f32 %v815, %v1000
    %v1213 = vmul.f32 %v816, %v996
    %v1214 = vmul.f32 %v817, %v1000
    %v1215 = vmul.f32 %v818, %v996
    %v1216 = vmul.f32 %v819, %v1000
    %v1217 = vmul.f32 %v820, %v996
    %v1218 = vmul.f32 %v821, %v1000
    %v1219 = vmul.f32 %v822, %v996
    %v1220 = vmul.f32 %v823, %v1000
    %v1221 = vmul.f32 %v824, %v996
    %v1222 = vmul.f32 %v825, %v1000
    %v1223 = vmul.f32 %v826, %v996
    %v1224 = vmul.f32 %v827, %v1000
    %v1225 = vmul.f32 %v796, %v1004
    %v1226 = vmul.f32 %v797, %v1008
    %v1227 = vmul.f32 %v798, %v1004
    %v1228 = vmul.f32 %v799, %v1008
    %v1229 = vmul.f32 %v800, %v1004
    %v1230 = vmul.f32 %v801, %v1008
    %v1231 = vmul.f32 %v802, %v1004
    %v1232 = vmul.f32 %v803, %v1008
    %v1233 = vmul.f32 %v804, %v1004
    %v1234 = vmul.f32 %v805, %v1008
    %v1235 = vmul.f32 %v806, %v1004
    %v1236 = vmul.f32 %v807, %v1008
    %v1237 = vmul.f32 %v808, %v1004
    %v1238 = vmul.f32 %v809, %v1008
    %v1239 = vmul.f32 %v810, %v1004
    %v1240 = vmul.f32 %v811, %v1008
    %v1241 = vmul.f32 %v812, %v1004
    %v1242 = vmul.f32 %v813, %v1008
    %v1243 = vmul.f32 %v814, %v1004
    %v1244 = vmul.f32 %v815, %v1008
    %v1245 = vmul.f32 %v816, %v1004
    %v1246 = vmul.f32 %v817, %v1008
    %v1247 = vmul.f32 %v818, %v1004
    %v1248 = vmul.f32 %v819, %v1008
    %v1249 = vmul.f32 %v820, %v1004
    %v1250 = vmul.f32 %v821, %v1008
    %v1251 = vmul.f32 %v822, %v1004
    %v1252 = vmul.f32 %v823, %v1008
    %v1253 = vmul.f32 %v824, %v1004
    %v1254 = vmul.f32 %v825, %v1008
    %v1255 = vmul.f32 %v826, %v1004
    %v1256 = vmul.f32 %v827, %v1008
    %v1257 = vmul.f32 %v796, %v1012
    %v1258 = vmul.f32 %v797, %v1016
    %v1259 = vmul.f32 %v798, %v1012
    %v1260 = vmul.f32 %v799, %v1016
    %v1261 = vmul.f32 %v800, %v1012
    %v1262 = vmul.f32 %v801, %v1016
    %v1263 = vmul.f32 %v802, %v1012
    %v1264 = vmul.f32 %v803, %v1016
    %v1265 = vmul.f32 %v804, %v1012
    %v1266 = vmul.f32 %v805, %v1016
    %v1267 = vmul.f32 %v806, %v1012
    %v1268 = vmul.f32 %v807, %v1016
    %v1269 = vmul.f32 %v808, %v1012
    %v1270 = vmul.f32 %v809, %v1016
    %v1271 = vmul.f32 %v810, %v1012
    %v1272 = vmul.f32 %v811, %v1016
    %v1273 = vmul.f32 %v812, %v1012
    %v1274 = vmul.f32 %v813, %v1016
    %v1275 = vmul.f32 %v814, %v1012
    %v1276 = vmul.f32 %v815, %v1016
    %v1277 = vmul.f32 %v816, %v1012
    %v1278 = vmul.f32 %v817, %v1016
    %v1279 = vmul.f32 %v818, %v1012
    %v1280 = vmul.f32 %v819, %v1016
    %v1281 = vmul.f32 %v820, %v1012
    %v1282 = vmul.f32 %v821, %v1016
    %v1283 = vmul.f32 %v822, %v1012
    %v1284 = vmul.f32 %v823, %v1016
    %v1285 = vmul.f32 %v824, %v1012
    %v1286 = vmul.f32 %v825, %v1016
    %v1287 = vmul.f32 %v826, %v1012
    %v1288 = vmul.f32 %v827, %v1016
    %1289 = vmatprep.subr.mxu0 %v374
    %1290 = vmatpush1.msra.mxu0 %v373
    %1291 = vmatprep.subr.mxu0 %v372
    %1292 = vmatpush1.msra.mxu0 %v371
    %1293 = vmatprep.subr.mxu0 %v370
    %1294 = vmatpush1.msra.mxu0 %v369
    %1295 = vmatprep.subr.mxu0 %v368
    %1296 = vmatpush1.msra.mxu0 %v367
    %1297 = vmatprep.subr.mxu0 %v366
    %1298 = vmatpush1.msra.mxu0 %v365
    %1299 = vmatprep.subr.mxu0 %v364
    %1300 = vmatpush1.msra.mxu0 %v363
    %1301 = vmatprep.subr.mxu0 %v362
    %1302 = vmatpush1.msra.mxu0 %v361
    %1303 = vmatprep.subr.mxu0 %v360
    %1304 = vmatpush1.msra.mxu0 %v359
    %1305 = vmatprep.subr.mxu0 %v358
    %1306 = vmatpush1.msra.mxu0 %v357
    %1307 = vmatprep.subr.mxu0 %v356
    %1308 = vmatpush1.msra.mxu0 %v355
    %1309 = vmatprep.subr.mxu0 %v354
    %1310 = vmatpush1.msra.mxu0 %v353
    %1311 = vmatprep.subr.mxu0 %v352
    %1312 = vmatpush1.msra.mxu0 %v351
    %1313 = vmatprep.subr.mxu0 %v350
    %1314 = vmatpush1.msra.mxu0 %v349
    %1315 = vmatprep.subr.mxu0 %v348
    %1316 = vmatpush1.msra.mxu0 %v347
    %1317 = vmatprep.subr.mxu0 %v346
    %1318 = vmatpush1.msra.mxu0 %v345
    %1319 = vmatprep.subr.mxu0 %v344
    %1320 = vmatpush1.msra.mxu0 %v343
    %1321 = vmatprep.subr.mxu0 %v406
    %1322 = vmatpush2.msra.mxu0 %v405
    %1323 = vmatprep.subr.mxu0 %v404
    %1324 = vmatpush2.msra.mxu0 %v403
    %1325 = vmatprep.subr.mxu0 %v402
    %1326 = vmatpush2.msra.mxu0 %v401
    %1327 = vmatprep.subr.mxu0 %v400
    %1328 = vmatpush2.msra.mxu0 %v399
    %1329 = vmatprep.subr.mxu0 %v398
    %1330 = vmatpush2.msra.mxu0 %v397
    %1331 = vmatprep.subr.mxu0 %v396
    %1332 = vmatpush2.msra.mxu0 %v395
    %1333 = vmatprep.subr.mxu0 %v394
    %1334 = vmatpush2.msra.mxu0 %v393
    %1335 = vmatprep.subr.mxu0 %v392
    %1336 = vmatpush2.msra.mxu0 %v391
    %1337 = vmatprep.subr.mxu0 %v390
    %1338 = vmatpush2.msra.mxu0 %v389
    %1339 = vmatprep.subr.mxu0 %v388
    %1340 = vmatpush2.msra.mxu0 %v387
    %1341 = vmatprep.subr.mxu0 %v386
    %1342 = vmatpush2.msra.mxu0 %v385
    %1343 = vmatprep.subr.mxu0 %v384
    %1344 = vmatpush2.msra.mxu0 %v383
    %1345 = vmatprep.subr.mxu0 %v382
    %1346 = vmatpush2.msra.mxu0 %v381
    %1347 = vmatprep.subr.mxu0 %v380
    %1348 = vmatpush2.msra.mxu0 %v379
    %1349 = vmatprep.subr.mxu0 %v378
    %1350 = vmatpush2.msra.mxu0 %v377
    %1351 = vmatprep.subr.mxu0 %v376
    %1352 = vmatpush2.msra.mxu0 %v375
    %1353 = vmatprep.mubr.f32.mxu0 %v1034
    %1354 = vmatmul.mubr.f32.gmra.mxu0 %v1033
    %v1355 = vpop.f32.mrf.mxu0
    %v1356 = vadd.f32 0.0, %v1355
    %v1357 = vpop.f32.mrf.mxu0
    %v1358 = vadd.f32 0.0, %v1357
    %1359 = vmatprep.mubr.f32.mxu0 %v1036
    %1360 = vmatmul.mubr.f32.gmra.mxu0 %v1035
    %v1361 = vpop.f32.mrf.mxu0
    %v1362 = vadd.f32 0.0, %v1361
    %v1363 = vpop.f32.mrf.mxu0
    %v1364 = vadd.f32 0.0, %v1363
    %1365 = vmatprep.mubr.f32.mxu0 %v1038
    %1366 = vmatmul.mubr.f32.gmra.mxu0 %v1037
    %v1367 = vpop.f32.mrf.mxu0
    %v1368 = vadd.f32 0.0, %v1367
    %v1369 = vpop.f32.mrf.mxu0
    %v1370 = vadd.f32 0.0, %v1369
    %1371 = vmatprep.mubr.f32.mxu0 %v1040
    %1372 = vmatmul.mubr.f32.gmra.mxu0 %v1039
    %v1373 = vpop.f32.mrf.mxu0
    %v1374 = vadd.f32 0.0, %v1373
    %v1375 = vpop.f32.mrf.mxu0
    %v1376 = vadd.f32 0.0, %v1375
    %1377 = vmatprep.mubr.f32.mxu0 %v1042
    %1378 = vmatmul.mubr.f32.gmra.mxu0 %v1041
    %v1379 = vpop.f32.mrf.mxu0
    %v1380 = vadd.f32 0.0, %v1379
    %v1381 = vpop.f32.mrf.mxu0
    %v1382 = vadd.f32 0.0, %v1381
    %1383 = vmatprep.mubr.f32.mxu0 %v1044
    %1384 = vmatmul.mubr.f32.gmra.mxu0 %v1043
    %v1385 = vpop.f32.mrf.mxu0
    %v1386 = vadd.f32 0.0, %v1385
    %v1387 = vpop.f32.mrf.mxu0
    %v1388 = vadd.f32 0.0, %v1387
    %1389 = vmatprep.mubr.f32.mxu0 %v1046
    %1390 = vmatmul.mubr.f32.gmra.mxu0 %v1045
    %v1391 = vpop.f32.mrf.mxu0
    %v1392 = vadd.f32 0.0, %v1391
    %v1393 = vpop.f32.mrf.mxu0
    %v1394 = vadd.f32 0.0, %v1393
    %1395 = vmatprep.mubr.f32.mxu0 %v1048
    %1396 = vmatmul.mubr.f32.gmra.mxu0 %v1047
    %v1397 = vpop.f32.mrf.mxu0
    %v1398 = vadd.f32 0.0, %v1397
    %v1399 = vpop.f32.mrf.mxu0
    %v1400 = vadd.f32 0.0, %v1399
    %1401 = vmatprep.mubr.f32.mxu0 %v1050
    %1402 = vmatmul.mubr.f32.gmra.mxu0 %v1049
    %v1403 = vpop.f32.mrf.mxu0
    %v1404 = vadd.f32 0.0, %v1403
    %v1405 = vpop.f32.mrf.mxu0
    %v1406 = vadd.f32 0.0, %v1405
    %1407 = vmatprep.mubr.f32.mxu0 %v1052
    %1408 = vmatmul.mubr.f32.gmra.mxu0 %v1051
    %v1409 = vpop.f32.mrf.mxu0
    %v1410 = vadd.f32 0.0, %v1409
    %v1411 = vpop.f32.mrf.mxu0
    %v1412 = vadd.f32 0.0, %v1411
    %1413 = vmatprep.mubr.f32.mxu0 %v1054
    %1414 = vmatmul.mubr.f32.gmra.mxu0 %v1053
    %v1415 = vpop.f32.mrf.mxu0
    %v1416 = vadd.f32 0.0, %v1415
    %v1417 = vpop.f32.mrf.mxu0
    %v1418 = vadd.f32 0.0, %v1417
    %1419 = vmatprep.mubr.f32.mxu0 %v1056
    %1420 = vmatmul.mubr.f32.gmra.mxu0 %v1055
    %v1421 = vpop.f32.mrf.mxu0
    %v1422 = vadd.f32 0.0, %v1421
    %v1423 = vpop.f32.mrf.mxu0
    %v1424 = vadd.f32 0.0, %v1423
    %1425 = vmatprep.mubr.f32.mxu0 %v1058
    %1426 = vmatmul.mubr.f32.gmra.mxu0 %v1057
    %v1427 = vpop.f32.mrf.mxu0
    %v1428 = vadd.f32 0.0, %v1427
    %v1429 = vpop.f32.mrf.mxu0
    %v1430 = vadd.f32 0.0, %v1429
    %1431 = vmatprep.mubr.f32.mxu0 %v1060
    %1432 = vmatmul.mubr.f32.gmra.mxu0 %v1059
    %v1433 = vpop.f32.mrf.mxu0
    %v1434 = vadd.f32 0.0, %v1433
    %v1435 = vpop.f32.mrf.mxu0
    %v1436 = vadd.f32 0.0, %v1435
    %1437 = vmatprep.mubr.f32.mxu0 %v1062
    %1438 = vmatmul.mubr.f32.gmra.mxu0 %v1061
    %v1439 = vpop.f32.mrf.mxu0
    %v1440 = vadd.f32 0.0, %v1439
    %v1441 = vpop.f32.mrf.mxu0
    %v1442 = vadd.f32 0.0, %v1441
    %1443 = vmatprep.mubr.f32.mxu0 %v1064
    %1444 = vmatmul.mubr.f32.gmra.mxu0 %v1063
    %v1445 = vpop.f32.mrf.mxu0
    %v1446 = vadd.f32 0.0, %v1445
    %v1447 = vpop.f32.mrf.mxu0
    %v1448 = vadd.f32 0.0, %v1447
    %1449 = vmatprep.mubr.f32.mxu0 %v1066
    %1450 = vmatmul.mubr.f32.gmra.mxu0 %v1065
    %v1451 = vpop.f32.mrf.mxu0
    %v1452 = vadd.f32 0.0, %v1451
    %v1453 = vpop.f32.mrf.mxu0
    %v1454 = vadd.f32 0.0, %v1453
    %1455 = vmatprep.mubr.f32.mxu0 %v1068
    %1456 = vmatmul.mubr.f32.gmra.mxu0 %v1067
    %v1457 = vpop.f32.mrf.mxu0
    %v1458 = vadd.f32 0.0, %v1457
    %v1459 = vpop.f32.mrf.mxu0
    %v1460 = vadd.f32 0.0, %v1459
    %1461 = vmatprep.mubr.f32.mxu0 %v1070
    %1462 = vmatmul.mubr.f32.gmra.mxu0 %v1069
    %v1463 = vpop.f32.mrf.mxu0
    %v1464 = vadd.f32 0.0, %v1463
    %v1465 = vpop.f32.mrf.mxu0
    %v1466 = vadd.f32 0.0, %v1465
    %1467 = vmatprep.mubr.f32.mxu0 %v1072
    %1468 = vmatmul.mubr.f32.gmra.mxu0 %v1071
    %v1469 = vpop.f32.mrf.mxu0
    %v1470 = vadd.f32 0.0, %v1469
    %v1471 = vpop.f32.mrf.mxu0
    %v1472 = vadd.f32 0.0, %v1471
    %1473 = vmatprep.mubr.f32.mxu0 %v1074
    %1474 = vmatmul.mubr.f32.gmra.mxu0 %v1073
    %v1475 = vpop.f32.mrf.mxu0
    %v1476 = vadd.f32 0.0, %v1475
    %v1477 = vpop.f32.mrf.mxu0
    %v1478 = vadd.f32 0.0, %v1477
    %1479 = vmatprep.mubr.f32.mxu0 %v1076
    %1480 = vmatmul.mubr.f32.gmra.mxu0 %v1075
    %v1481 = vpop.f32.mrf.mxu0
    %v1482 = vadd.f32 0.0, %v1481
    %v1483 = vpop.f32.mrf.mxu0
    %v1484 = vadd.f32 0.0, %v1483
    %1485 = vmatprep.mubr.f32.mxu0 %v1078
    %1486 = vmatmul.mubr.f32.gmra.mxu0 %v1077
    %v1487 = vpop.f32.mrf.mxu0
    %v1488 = vadd.f32 0.0, %v1487
    %v1489 = vpop.f32.mrf.mxu0
    %v1490 = vadd.f32 0.0, %v1489
    %1491 = vmatprep.mubr.f32.mxu0 %v1080
    %1492 = vmatmul.mubr.f32.gmra.mxu0 %v1079
    %v1493 = vpop.f32.mrf.mxu0
    %v1494 = vadd.f32 0.0, %v1493
    %v1495 = vpop.f32.mrf.mxu0
    %v1496 = vadd.f32 0.0, %v1495
    %1497 = vmatprep.mubr.f32.mxu0 %v1082
    %1498 = vmatmul.mubr.f32.gmra.mxu0 %v1081
    %v1499 = vpop.f32.mrf.mxu0
    %v1500 = vadd.f32 0.0, %v1499
    %v1501 = vpop.f32.mrf.mxu0
    %v1502 = vadd.f32 0.0, %v1501
    %1503 = vmatprep.mubr.f32.mxu0 %v1084
    %1504 = vmatmul.mubr.f32.gmra.mxu0 %v1083
    %v1505 = vpop.f32.mrf.mxu0
    %v1506 = vadd.f32 0.0, %v1505
    %v1507 = vpop.f32.mrf.mxu0
    %v1508 = vadd.f32 0.0, %v1507
    %1509 = vmatprep.mubr.f32.mxu0 %v1086
    %1510 = vmatmul.mubr.f32.gmra.mxu0 %v1085
    %v1511 = vpop.f32.mrf.mxu0
    %v1512 = vadd.f32 0.0, %v1511
    %v1513 = vpop.f32.mrf.mxu0
    %v1514 = vadd.f32 0.0, %v1513
    %1515 = vmatprep.mubr.f32.mxu0 %v1088
    %1516 = vmatmul.mubr.f32.gmra.mxu0 %v1087
    %v1517 = vpop.f32.mrf.mxu0
    %v1518 = vadd.f32 0.0, %v1517
    %v1519 = vpop.f32.mrf.mxu0
    %v1520 = vadd.f32 0.0, %v1519
    %1521 = vmatprep.mubr.f32.mxu0 %v1090
    %1522 = vmatmul.mubr.f32.gmra.mxu0 %v1089
    %v1523 = vpop.f32.mrf.mxu0
    %v1524 = vadd.f32 0.0, %v1523
    %v1525 = vpop.f32.mrf.mxu0
    %v1526 = vadd.f32 0.0, %v1525
    %1527 = vmatprep.mubr.f32.mxu0 %v1092
    %1528 = vmatmul.mubr.f32.gmra.mxu0 %v1091
    %v1529 = vpop.f32.mrf.mxu0
    %v1530 = vadd.f32 0.0, %v1529
    %v1531 = vpop.f32.mrf.mxu0
    %v1532 = vadd.f32 0.0, %v1531
    %1533 = vmatprep.mubr.f32.mxu0 %v1094
    %1534 = vmatmul.mubr.f32.gmra.mxu0 %v1093
    %v1535 = vpop.f32.mrf.mxu0
    %v1536 = vadd.f32 0.0, %v1535
    %v1537 = vpop.f32.mrf.mxu0
    %v1538 = vadd.f32 0.0, %v1537
    %1539 = vmatprep.mubr.f32.mxu0 %v1096
    %1540 = vmatmul.mubr.f32.gmra.mxu0 %v1095
    %v1541 = vpop.f32.mrf.mxu0
    %v1542 = vadd.f32 0.0, %v1541
    %v1543 = vpop.f32.mrf.mxu0
    %v1544 = vadd.f32 0.0, %v1543
    %1545 = vmatprep.mubr.f32.mxu0 %v1098
    %1546 = vmatmul.mubr.f32.gmra.mxu0 %v1097
    %v1547 = vpop.f32.mrf.mxu0
    %v1548 = vadd.f32 0.0, %v1547
    %v1549 = vpop.f32.mrf.mxu0
    %v1550 = vadd.f32 0.0, %v1549
    %1551 = vmatprep.mubr.f32.mxu0 %v1100
    %1552 = vmatmul.mubr.f32.gmra.mxu0 %v1099
    %v1553 = vpop.f32.mrf.mxu0
    %v1554 = vadd.f32 0.0, %v1553
    %v1555 = vpop.f32.mrf.mxu0
    %v1556 = vadd.f32 0.0, %v1555
    %1557 = vmatprep.mubr.f32.mxu0 %v1102
    %1558 = vmatmul.mubr.f32.gmra.mxu0 %v1101
    %v1559 = vpop.f32.mrf.mxu0
    %v1560 = vadd.f32 0.0, %v1559
    %v1561 = vpop.f32.mrf.mxu0
    %v1562 = vadd.f32 0.0, %v1561
    %1563 = vmatprep.mubr.f32.mxu0 %v1104
    %1564 = vmatmul.mubr.f32.gmra.mxu0 %v1103
    %v1565 = vpop.f32.mrf.mxu0
    %v1566 = vadd.f32 0.0, %v1565
    %v1567 = vpop.f32.mrf.mxu0
    %v1568 = vadd.f32 0.0, %v1567
    %1569 = vmatprep.mubr.f32.mxu0 %v1106
    %1570 = vmatmul.mubr.f32.gmra.mxu0 %v1105
    %v1571 = vpop.f32.mrf.mxu0
    %v1572 = vadd.f32 0.0, %v1571
    %v1573 = vpop.f32.mrf.mxu0
    %v1574 = vadd.f32 0.0, %v1573
    %1575 = vmatprep.mubr.f32.mxu0 %v1108
    %1576 = vmatmul.mubr.f32.gmra.mxu0 %v1107
    %v1577 = vpop.f32.mrf.mxu0
    %v1578 = vadd.f32 0.0, %v1577
    %v1579 = vpop.f32.mrf.mxu0
    %v1580 = vadd.f32 0.0, %v1579
    %1581 = vmatprep.mubr.f32.mxu0 %v1110
    %1582 = vmatmul.mubr.f32.gmra.mxu0 %v1109
    %v1583 = vpop.f32.mrf.mxu0
    %v1584 = vadd.f32 0.0, %v1583
    %v1585 = vpop.f32.mrf.mxu0
    %v1586 = vadd.f32 0.0, %v1585
    %1587 = vmatprep.mubr.f32.mxu0 %v1112
    %1588 = vmatmul.mubr.f32.gmra.mxu0 %v1111
    %v1589 = vpop.f32.mrf.mxu0
    %v1590 = vadd.f32 0.0, %v1589
    %v1591 = vpop.f32.mrf.mxu0
    %v1592 = vadd.f32 0.0, %v1591
    %1593 = vmatprep.mubr.f32.mxu0 %v1114
    %1594 = vmatmul.mubr.f32.gmra.mxu0 %v1113
    %v1595 = vpop.f32.mrf.mxu0
    %v1596 = vadd.f32 0.0, %v1595
    %v1597 = vpop.f32.mrf.mxu0
    %v1598 = vadd.f32 0.0, %v1597
    %1599 = vmatprep.mubr.f32.mxu0 %v1116
    %1600 = vmatmul.mubr.f32.gmra.mxu0 %v1115
    %v1601 = vpop.f32.mrf.mxu0
    %v1602 = vadd.f32 0.0, %v1601
    %v1603 = vpop.f32.mrf.mxu0
    %v1604 = vadd.f32 0.0, %v1603
    %1605 = vmatprep.mubr.f32.mxu0 %v1118
    %1606 = vmatmul.mubr.f32.gmra.mxu0 %v1117
    %v1607 = vpop.f32.mrf.mxu0
    %v1608 = vadd.f32 0.0, %v1607
    %v1609 = vpop.f32.mrf.mxu0
    %v1610 = vadd.f32 0.0, %v1609
    %1611 = vmatprep.mubr.f32.mxu0 %v1120
    %1612 = vmatmul.mubr.f32.gmra.mxu0 %v1119
    %v1613 = vpop.f32.mrf.mxu0
    %v1614 = vadd.f32 0.0, %v1613
    %v1615 = vpop.f32.mrf.mxu0
    %v1616 = vadd.f32 0.0, %v1615
    %1617 = vmatprep.mubr.f32.mxu0 %v1122
    %1618 = vmatmul.mubr.f32.gmra.mxu0 %v1121
    %v1619 = vpop.f32.mrf.mxu0
    %v1620 = vadd.f32 0.0, %v1619
    %v1621 = vpop.f32.mrf.mxu0
    %v1622 = vadd.f32 0.0, %v1621
    %1623 = vmatprep.mubr.f32.mxu0 %v1124
    %1624 = vmatmul.mubr.f32.gmra.mxu0 %v1123
    %v1625 = vpop.f32.mrf.mxu0
    %v1626 = vadd.f32 0.0, %v1625
    %v1627 = vpop.f32.mrf.mxu0
    %v1628 = vadd.f32 0.0, %v1627
    %1629 = vmatprep.mubr.f32.mxu0 %v1126
    %1630 = vmatmul.mubr.f32.gmra.mxu0 %v1125
    %v1631 = vpop.f32.mrf.mxu0
    %v1632 = vadd.f32 0.0, %v1631
    %v1633 = vpop.f32.mrf.mxu0
    %v1634 = vadd.f32 0.0, %v1633
    %1635 = vmatprep.mubr.f32.mxu0 %v1128
    %1636 = vmatmul.mubr.f32.gmra.mxu0 %v1127
    %v1637 = vpop.f32.mrf.mxu0
    %v1638 = vadd.f32 0.0, %v1637
    %v1639 = vpop.f32.mrf.mxu0
    %v1640 = vadd.f32 0.0, %v1639
    %1641 = vmatprep.mubr.f32.mxu0 %v1130
    %1642 = vmatmul.mubr.f32.gmra.mxu0 %v1129
    %v1643 = vpop.f32.mrf.mxu0
    %v1644 = vadd.f32 0.0, %v1643
    %v1645 = vpop.f32.mrf.mxu0
    %v1646 = vadd.f32 0.0, %v1645
    %1647 = vmatprep.mubr.f32.mxu0 %v1132
    %1648 = vmatmul.mubr.f32.gmra.mxu0 %v1131
    %v1649 = vpop.f32.mrf.mxu0
    %v1650 = vadd.f32 0.0, %v1649
    %v1651 = vpop.f32.mrf.mxu0
    %v1652 = vadd.f32 0.0, %v1651
    %1653 = vmatprep.mubr.f32.mxu0 %v1134
    %1654 = vmatmul.mubr.f32.gmra.mxu0 %v1133
    %v1655 = vpop.f32.mrf.mxu0
    %v1656 = vadd.f32 0.0, %v1655
    %v1657 = vpop.f32.mrf.mxu0
    %v1658 = vadd.f32 0.0, %v1657
    %1659 = vmatprep.mubr.f32.mxu0 %v1136
    %1660 = vmatmul.mubr.f32.gmra.mxu0 %v1135
    %v1661 = vpop.f32.mrf.mxu0
    %v1662 = vadd.f32 0.0, %v1661
    %v1663 = vpop.f32.mrf.mxu0
    %v1664 = vadd.f32 0.0, %v1663
    %1665 = vmatprep.mubr.f32.mxu0 %v1138
    %1666 = vmatmul.mubr.f32.gmra.mxu0 %v1137
    %v1667 = vpop.f32.mrf.mxu0
    %v1668 = vadd.f32 0.0, %v1667
    %v1669 = vpop.f32.mrf.mxu0
    %v1670 = vadd.f32 0.0, %v1669
    %1671 = vmatprep.mubr.f32.mxu0 %v1140
    %1672 = vmatmul.mubr.f32.gmra.mxu0 %v1139
    %v1673 = vpop.f32.mrf.mxu0
    %v1674 = vadd.f32 0.0, %v1673
    %v1675 = vpop.f32.mrf.mxu0
    %v1676 = vadd.f32 0.0, %v1675
    %1677 = vmatprep.mubr.f32.mxu0 %v1142
    %1678 = vmatmul.mubr.f32.gmra.mxu0 %v1141
    %v1679 = vpop.f32.mrf.mxu0
    %v1680 = vadd.f32 0.0, %v1679
    %v1681 = vpop.f32.mrf.mxu0
    %v1682 = vadd.f32 0.0, %v1681
    %1683 = vmatprep.mubr.f32.mxu0 %v1144
    %1684 = vmatmul.mubr.f32.gmra.mxu0 %v1143
    %v1685 = vpop.f32.mrf.mxu0
    %v1686 = vadd.f32 0.0, %v1685
    %v1687 = vpop.f32.mrf.mxu0
    %v1688 = vadd.f32 0.0, %v1687
    %1689 = vmatprep.mubr.f32.mxu0 %v1146
    %1690 = vmatmul.mubr.f32.gmra.mxu0 %v1145
    %v1691 = vpop.f32.mrf.mxu0
    %v1692 = vadd.f32 0.0, %v1691
    %v1693 = vpop.f32.mrf.mxu0
    %v1694 = vadd.f32 0.0, %v1693
    %1695 = vmatprep.mubr.f32.mxu0 %v1148
    %1696 = vmatmul.mubr.f32.gmra.mxu0 %v1147
    %v1697 = vpop.f32.mrf.mxu0
    %v1698 = vadd.f32 0.0, %v1697
    %v1699 = vpop.f32.mrf.mxu0
    %v1700 = vadd.f32 0.0, %v1699
    %1701 = vmatprep.mubr.f32.mxu0 %v1150
    %1702 = vmatmul.mubr.f32.gmra.mxu0 %v1149
    %v1703 = vpop.f32.mrf.mxu0
    %v1704 = vadd.f32 0.0, %v1703
    %v1705 = vpop.f32.mrf.mxu0
    %v1706 = vadd.f32 0.0, %v1705
    %1707 = vmatprep.mubr.f32.mxu0 %v1152
    %1708 = vmatmul.mubr.f32.gmra.mxu0 %v1151
    %v1709 = vpop.f32.mrf.mxu0
    %v1710 = vadd.f32 0.0, %v1709
    %v1711 = vpop.f32.mrf.mxu0
    %v1712 = vadd.f32 0.0, %v1711
    %1713 = vmatprep.mubr.f32.mxu0 %v1154
    %1714 = vmatmul.mubr.f32.gmra.mxu0 %v1153
    %v1715 = vpop.f32.mrf.mxu0
    %v1716 = vadd.f32 0.0, %v1715
    %v1717 = vpop.f32.mrf.mxu0
    %v1718 = vadd.f32 0.0, %v1717
    %1719 = vmatprep.mubr.f32.mxu0 %v1156
    %1720 = vmatmul.mubr.f32.gmra.mxu0 %v1155
    %v1721 = vpop.f32.mrf.mxu0
    %v1722 = vadd.f32 0.0, %v1721
    %v1723 = vpop.f32.mrf.mxu0
    %v1724 = vadd.f32 0.0, %v1723
    %1725 = vmatprep.mubr.f32.mxu0 %v1158
    %1726 = vmatmul.mubr.f32.gmra.mxu0 %v1157
    %v1727 = vpop.f32.mrf.mxu0
    %v1728 = vadd.f32 0.0, %v1727
    %v1729 = vpop.f32.mrf.mxu0
    %v1730 = vadd.f32 0.0, %v1729
    %1731 = vmatprep.mubr.f32.mxu0 %v1160
    %1732 = vmatmul.mubr.f32.gmra.mxu0 %v1159
    %v1733 = vpop.f32.mrf.mxu0
    %v1734 = vadd.f32 0.0, %v1733
    %v1735 = vpop.f32.mrf.mxu0
    %v1736 = vadd.f32 0.0, %v1735
    %1737 = vmatprep.mubr.f32.mxu0 %v1162
    %1738 = vmatmul.mubr.f32.gmra.mxu0 %v1161
    %v1739 = vpop.f32.mrf.mxu0
    %v1740 = vadd.f32 0.0, %v1739
    %v1741 = vpop.f32.mrf.mxu0
    %v1742 = vadd.f32 0.0, %v1741
    %1743 = vmatprep.mubr.f32.mxu0 %v1164
    %1744 = vmatmul.mubr.f32.gmra.mxu0 %v1163
    %v1745 = vpop.f32.mrf.mxu0
    %v1746 = vadd.f32 0.0, %v1745
    %v1747 = vpop.f32.mrf.mxu0
    %v1748 = vadd.f32 0.0, %v1747
    %1749 = vmatprep.mubr.f32.mxu0 %v1166
    %1750 = vmatmul.mubr.f32.gmra.mxu0 %v1165
    %v1751 = vpop.f32.mrf.mxu0
    %v1752 = vadd.f32 0.0, %v1751
    %v1753 = vpop.f32.mrf.mxu0
    %v1754 = vadd.f32 0.0, %v1753
    %1755 = vmatprep.mubr.f32.mxu0 %v1168
    %1756 = vmatmul.mubr.f32.gmra.mxu0 %v1167
    %v1757 = vpop.f32.mrf.mxu0
    %v1758 = vadd.f32 0.0, %v1757
    %v1759 = vpop.f32.mrf.mxu0
    %v1760 = vadd.f32 0.0, %v1759
    %1761 = vmatprep.mubr.f32.mxu0 %v1170
    %1762 = vmatmul.mubr.f32.gmra.mxu0 %v1169
    %v1763 = vpop.f32.mrf.mxu0
    %v1764 = vadd.f32 0.0, %v1763
    %v1765 = vpop.f32.mrf.mxu0
    %v1766 = vadd.f32 0.0, %v1765
    %1767 = vmatprep.mubr.f32.mxu0 %v1172
    %1768 = vmatmul.mubr.f32.gmra.mxu0 %v1171
    %v1769 = vpop.f32.mrf.mxu0
    %v1770 = vadd.f32 0.0, %v1769
    %v1771 = vpop.f32.mrf.mxu0
    %v1772 = vadd.f32 0.0, %v1771
    %1773 = vmatprep.mubr.f32.mxu0 %v1174
    %1774 = vmatmul.mubr.f32.gmra.mxu0 %v1173
    %v1775 = vpop.f32.mrf.mxu0
    %v1776 = vadd.f32 0.0, %v1775
    %v1777 = vpop.f32.mrf.mxu0
    %v1778 = vadd.f32 0.0, %v1777
    %1779 = vmatprep.mubr.f32.mxu0 %v1176
    %1780 = vmatmul.mubr.f32.gmra.mxu0 %v1175
    %v1781 = vpop.f32.mrf.mxu0
    %v1782 = vadd.f32 0.0, %v1781
    %v1783 = vpop.f32.mrf.mxu0
    %v1784 = vadd.f32 0.0, %v1783
    %1785 = vmatprep.mubr.f32.mxu0 %v1178
    %1786 = vmatmul.mubr.f32.gmra.mxu0 %v1177
    %v1787 = vpop.f32.mrf.mxu0
    %v1788 = vadd.f32 0.0, %v1787
    %v1789 = vpop.f32.mrf.mxu0
    %v1790 = vadd.f32 0.0, %v1789
    %1791 = vmatprep.mubr.f32.mxu0 %v1180
    %1792 = vmatmul.mubr.f32.gmra.mxu0 %v1179
    %v1793 = vpop.f32.mrf.mxu0
    %v1794 = vadd.f32 0.0, %v1793
    %v1795 = vpop.f32.mrf.mxu0
    %v1796 = vadd.f32 0.0, %v1795
    %1797 = vmatprep.mubr.f32.mxu0 %v1182
    %1798 = vmatmul.mubr.f32.gmra.mxu0 %v1181
    %v1799 = vpop.f32.mrf.mxu0
    %v1800 = vadd.f32 0.0, %v1799
    %v1801 = vpop.f32.mrf.mxu0
    %v1802 = vadd.f32 0.0, %v1801
    %1803 = vmatprep.mubr.f32.mxu0 %v1184
    %1804 = vmatmul.mubr.f32.gmra.mxu0 %v1183
    %v1805 = vpop.f32.mrf.mxu0
    %v1806 = vadd.f32 0.0, %v1805
    %v1807 = vpop.f32.mrf.mxu0
    %v1808 = vadd.f32 0.0, %v1807
    %1809 = vmatprep.mubr.f32.mxu0 %v1186
    %1810 = vmatmul.mubr.f32.gmra.mxu0 %v1185
    %v1811 = vpop.f32.mrf.mxu0
    %v1812 = vadd.f32 0.0, %v1811
    %v1813 = vpop.f32.mrf.mxu0
    %v1814 = vadd.f32 0.0, %v1813
    %1815 = vmatprep.mubr.f32.mxu0 %v1188
    %1816 = vmatmul.mubr.f32.gmra.mxu0 %v1187
    %v1817 = vpop.f32.mrf.mxu0
    %v1818 = vadd.f32 0.0, %v1817
    %v1819 = vpop.f32.mrf.mxu0
    %v1820 = vadd.f32 0.0, %v1819
    %1821 = vmatprep.mubr.f32.mxu0 %v1190
    %1822 = vmatmul.mubr.f32.gmra.mxu0 %v1189
    %v1823 = vpop.f32.mrf.mxu0
    %v1824 = vadd.f32 0.0, %v1823
    %v1825 = vpop.f32.mrf.mxu0
    %v1826 = vadd.f32 0.0, %v1825
    %1827 = vmatprep.mubr.f32.mxu0 %v1192
    %1828 = vmatmul.mubr.f32.gmra.mxu0 %v1191
    %v1829 = vpop.f32.mrf.mxu0
    %v1830 = vadd.f32 0.0, %v1829
    %v1831 = vpop.f32.mrf.mxu0
    %v1832 = vadd.f32 0.0, %v1831
    %1833 = vmatprep.mubr.f32.mxu0 %v1194
    %1834 = vmatmul.mubr.f32.gmra.mxu0 %v1193
    %v1835 = vpop.f32.mrf.mxu0
    %v1836 = vadd.f32 0.0, %v1835
    %v1837 = vpop.f32.mrf.mxu0
    %v1838 = vadd.f32 0.0, %v1837
    %1839 = vmatprep.mubr.f32.mxu0 %v1196
    %1840 = vmatmul.mubr.f32.gmra.mxu0 %v1195
    %v1841 = vpop.f32.mrf.mxu0
    %v1842 = vadd.f32 0.0, %v1841
    %v1843 = vpop.f32.mrf.mxu0
    %v1844 = vadd.f32 0.0, %v1843
    %1845 = vmatprep.mubr.f32.mxu0 %v1198
    %1846 = vmatmul.mubr.f32.gmra.mxu0 %v1197
    %v1847 = vpop.f32.mrf.mxu0
    %v1848 = vadd.f32 0.0, %v1847
    %v1849 = vpop.f32.mrf.mxu0
    %v1850 = vadd.f32 0.0, %v1849
    %1851 = vmatprep.mubr.f32.mxu0 %v1200
    %1852 = vmatmul.mubr.f32.gmra.mxu0 %v1199
    %v1853 = vpop.f32.mrf.mxu0
    %v1854 = vadd.f32 0.0, %v1853
    %v1855 = vpop.f32.mrf.mxu0
    %v1856 = vadd.f32 0.0, %v1855
    %1857 = vmatprep.mubr.f32.mxu0 %v1202
    %1858 = vmatmul.mubr.f32.gmra.mxu0 %v1201
    %v1859 = vpop.f32.mrf.mxu0
    %v1860 = vadd.f32 0.0, %v1859
    %v1861 = vpop.f32.mrf.mxu0
    %v1862 = vadd.f32 0.0, %v1861
    %1863 = vmatprep.mubr.f32.mxu0 %v1204
    %1864 = vmatmul.mubr.f32.gmra.mxu0 %v1203
    %v1865 = vpop.f32.mrf.mxu0
    %v1866 = vadd.f32 0.0, %v1865
    %v1867 = vpop.f32.mrf.mxu0
    %v1868 = vadd.f32 0.0, %v1867
    %1869 = vmatprep.mubr.f32.mxu0 %v1206
    %1870 = vmatmul.mubr.f32.gmra.mxu0 %v1205
    %v1871 = vpop.f32.mrf.mxu0
    %v1872 = vadd.f32 0.0, %v1871
    %v1873 = vpop.f32.mrf.mxu0
    %v1874 = vadd.f32 0.0, %v1873
    %1875 = vmatprep.mubr.f32.mxu0 %v1208
    %1876 = vmatmul.mubr.f32.gmra.mxu0 %v1207
    %v1877 = vpop.f32.mrf.mxu0
    %v1878 = vadd.f32 0.0, %v1877
    %v1879 = vpop.f32.mrf.mxu0
    %v1880 = vadd.f32 0.0, %v1879
    %1881 = vmatprep.mubr.f32.mxu0 %v1210
    %1882 = vmatmul.mubr.f32.gmra.mxu0 %v1209
    %v1883 = vpop.f32.mrf.mxu0
    %v1884 = vadd.f32 0.0, %v1883
    %v1885 = vpop.f32.mrf.mxu0
    %v1886 = vadd.f32 0.0, %v1885
    %1887 = vmatprep.mubr.f32.mxu0 %v1212
    %1888 = vmatmul.mubr.f32.gmra.mxu0 %v1211
    %v1889 = vpop.f32.mrf.mxu0
    %v1890 = vadd.f32 0.0, %v1889
    %v1891 = vpop.f32.mrf.mxu0
    %v1892 = vadd.f32 0.0, %v1891
    %1893 = vmatprep.mubr.f32.mxu0 %v1214
    %1894 = vmatmul.mubr.f32.gmra.mxu0 %v1213
    %v1895 = vpop.f32.mrf.mxu0
    %v1896 = vadd.f32 0.0, %v1895
    %v1897 = vpop.f32.mrf.mxu0
    %v1898 = vadd.f32 0.0, %v1897
    %1899 = vmatprep.mubr.f32.mxu0 %v1216
    %1900 = vmatmul.mubr.f32.gmra.mxu0 %v1215
    %v1901 = vpop.f32.mrf.mxu0
    %v1902 = vadd.f32 0.0, %v1901
    %v1903 = vpop.f32.mrf.mxu0
    %v1904 = vadd.f32 0.0, %v1903
    %1905 = vmatprep.mubr.f32.mxu0 %v1218
    %1906 = vmatmul.mubr.f32.gmra.mxu0 %v1217
    %v1907 = vpop.f32.mrf.mxu0
    %v1908 = vadd.f32 0.0, %v1907
    %v1909 = vpop.f32.mrf.mxu0
    %v1910 = vadd.f32 0.0, %v1909
    %1911 = vmatprep.mubr.f32.mxu0 %v1220
    %1912 = vmatmul.mubr.f32.gmra.mxu0 %v1219
    %v1913 = vpop.f32.mrf.mxu0
    %v1914 = vadd.f32 0.0, %v1913
    %v1915 = vpop.f32.mrf.mxu0
    %v1916 = vadd.f32 0.0, %v1915
    %1917 = vmatprep.mubr.f32.mxu0 %v1222
    %1918 = vmatmul.mubr.f32.gmra.mxu0 %v1221
    %v1919 = vpop.f32.mrf.mxu0
    %v1920 = vadd.f32 0.0, %v1919
    %v1921 = vpop.f32.mrf.mxu0
    %v1922 = vadd.f32 0.0, %v1921
    %1923 = vmatprep.mubr.f32.mxu0 %v1224
    %1924 = vmatmul.mubr.f32.gmra.mxu0 %v1223
    %v1925 = vpop.f32.mrf.mxu0
    %v1926 = vadd.f32 0.0, %v1925
    %v1927 = vpop.f32.mrf.mxu0
    %v1928 = vadd.f32 0.0, %v1927
    %1929 = vmatprep.mubr.f32.mxu0 %v1226
    %1930 = vmatmul.mubr.f32.gmra.mxu0 %v1225
    %v1931 = vpop.f32.mrf.mxu0
    %v1932 = vadd.f32 0.0, %v1931
    %v1933 = vpop.f32.mrf.mxu0
    %v1934 = vadd.f32 0.0, %v1933
    %1935 = vmatprep.mubr.f32.mxu0 %v1228
    %1936 = vmatmul.mubr.f32.gmra.mxu0 %v1227
    %v1937 = vpop.f32.mrf.mxu0
    %v1938 = vadd.f32 0.0, %v1937
    %v1939 = vpop.f32.mrf.mxu0
    %v1940 = vadd.f32 0.0, %v1939
    %1941 = vmatprep.mubr.f32.mxu0 %v1230
    %1942 = vmatmul.mubr.f32.gmra.mxu0 %v1229
    %v1943 = vpop.f32.mrf.mxu0
    %v1944 = vadd.f32 0.0, %v1943
    %v1945 = vpop.f32.mrf.mxu0
    %v1946 = vadd.f32 0.0, %v1945
    %1947 = vmatprep.mubr.f32.mxu0 %v1232
    %1948 = vmatmul.mubr.f32.gmra.mxu0 %v1231
    %v1949 = vpop.f32.mrf.mxu0
    %v1950 = vadd.f32 0.0, %v1949
    %v1951 = vpop.f32.mrf.mxu0
    %v1952 = vadd.f32 0.0, %v1951
    %1953 = vmatprep.mubr.f32.mxu0 %v1234
    %1954 = vmatmul.mubr.f32.gmra.mxu0 %v1233
    %v1955 = vpop.f32.mrf.mxu0
    %v1956 = vadd.f32 0.0, %v1955
    %v1957 = vpop.f32.mrf.mxu0
    %v1958 = vadd.f32 0.0, %v1957
    %1959 = vmatprep.mubr.f32.mxu0 %v1236
    %1960 = vmatmul.mubr.f32.gmra.mxu0 %v1235
    %v1961 = vpop.f32.mrf.mxu0
    %v1962 = vadd.f32 0.0, %v1961
    %v1963 = vpop.f32.mrf.mxu0
    %v1964 = vadd.f32 0.0, %v1963
    %1965 = vmatprep.mubr.f32.mxu0 %v1238
    %1966 = vmatmul.mubr.f32.gmra.mxu0 %v1237
    %v1967 = vpop.f32.mrf.mxu0
    %v1968 = vadd.f32 0.0, %v1967
    %v1969 = vpop.f32.mrf.mxu0
    %v1970 = vadd.f32 0.0, %v1969
    %1971 = vmatprep.mubr.f32.mxu0 %v1240
    %1972 = vmatmul.mubr.f32.gmra.mxu0 %v1239
    %v1973 = vpop.f32.mrf.mxu0
    %v1974 = vadd.f32 0.0, %v1973
    %v1975 = vpop.f32.mrf.mxu0
    %v1976 = vadd.f32 0.0, %v1975
    %1977 = vmatprep.mubr.f32.mxu0 %v1242
    %1978 = vmatmul.mubr.f32.gmra.mxu0 %v1241
    %v1979 = vpop.f32.mrf.mxu0
    %v1980 = vadd.f32 0.0, %v1979
    %v1981 = vpop.f32.mrf.mxu0
    %v1982 = vadd.f32 0.0, %v1981
    %1983 = vmatprep.mubr.f32.mxu0 %v1244
    %1984 = vmatmul.mubr.f32.gmra.mxu0 %v1243
    %v1985 = vpop.f32.mrf.mxu0
    %v1986 = vadd.f32 0.0, %v1985
    %v1987 = vpop.f32.mrf.mxu0
    %v1988 = vadd.f32 0.0, %v1987
    %1989 = vmatprep.mubr.f32.mxu0 %v1246
    %1990 = vmatmul.mubr.f32.gmra.mxu0 %v1245
    %v1991 = vpop.f32.mrf.mxu0
    %v1992 = vadd.f32 0.0, %v1991
    %v1993 = vpop.f32.mrf.mxu0
    %v1994 = vadd.f32 0.0, %v1993
    %1995 = vmatprep.mubr.f32.mxu0 %v1248
    %1996 = vmatmul.mubr.f32.gmra.mxu0 %v1247
    %v1997 = vpop.f32.mrf.mxu0
    %v1998 = vadd.f32 0.0, %v1997
    %v1999 = vpop.f32.mrf.mxu0
    %v2000 = vadd.f32 0.0, %v1999
    %2001 = vmatprep.mubr.f32.mxu0 %v1250
    %2002 = vmatmul.mubr.f32.gmra.mxu0 %v1249
    %v2003 = vpop.f32.mrf.mxu0
    %v2004 = vadd.f32 0.0, %v2003
    %v2005 = vpop.f32.mrf.mxu0
    %v2006 = vadd.f32 0.0, %v2005
    %2007 = vmatprep.mubr.f32.mxu0 %v1252
    %2008 = vmatmul.mubr.f32.gmra.mxu0 %v1251
    %v2009 = vpop.f32.mrf.mxu0
    %v2010 = vadd.f32 0.0, %v2009
    %v2011 = vpop.f32.mrf.mxu0
    %v2012 = vadd.f32 0.0, %v2011
    %2013 = vmatprep.mubr.f32.mxu0 %v1254
    %2014 = vmatmul.mubr.f32.gmra.mxu0 %v1253
    %v2015 = vpop.f32.mrf.mxu0
    %v2016 = vadd.f32 0.0, %v2015
    %v2017 = vpop.f32.mrf.mxu0
    %v2018 = vadd.f32 0.0, %v2017
    %2019 = vmatprep.mubr.f32.mxu0 %v1256
    %2020 = vmatmul.mubr.f32.gmra.mxu0 %v1255
    %v2021 = vpop.f32.mrf.mxu0
    %v2022 = vadd.f32 0.0, %v2021
    %v2023 = vpop.f32.mrf.mxu0
    %v2024 = vadd.f32 0.0, %v2023
    %2025 = vmatprep.mubr.f32.mxu0 %v1258
    %2026 = vmatmul.mubr.f32.gmra.mxu0 %v1257
    %v2027 = vpop.f32.mrf.mxu0
    %v2028 = vadd.f32 0.0, %v2027
    %v2029 = vpop.f32.mrf.mxu0
    %v2030 = vadd.f32 0.0, %v2029
    %2031 = vmatprep.mubr.f32.mxu0 %v1260
    %2032 = vmatmul.mubr.f32.gmra.mxu0 %v1259
    %v2033 = vpop.f32.mrf.mxu0
    %v2034 = vadd.f32 0.0, %v2033
    %v2035 = vpop.f32.mrf.mxu0
    %v2036 = vadd.f32 0.0, %v2035
    %2037 = vmatprep.mubr.f32.mxu0 %v1262
    %2038 = vmatmul.mubr.f32.gmra.mxu0 %v1261
    %v2039 = vpop.f32.mrf.mxu0
    %v2040 = vadd.f32 0.0, %v2039
    %v2041 = vpop.f32.mrf.mxu0
    %v2042 = vadd.f32 0.0, %v2041
    %2043 = vmatprep.mubr.f32.mxu0 %v1264
    %2044 = vmatmul.mubr.f32.gmra.mxu0 %v1263
    %v2045 = vpop.f32.mrf.mxu0
    %v2046 = vadd.f32 0.0, %v2045
    %v2047 = vpop.f32.mrf.mxu0
    %v2048 = vadd.f32 0.0, %v2047
    %2049 = vmatprep.mubr.f32.mxu0 %v1266
    %2050 = vmatmul.mubr.f32.gmra.mxu0 %v1265
    %v2051 = vpop.f32.mrf.mxu0
    %v2052 = vadd.f32 0.0, %v2051
    %v2053 = vpop.f32.mrf.mxu0
    %v2054 = vadd.f32 0.0, %v2053
    %2055 = vmatprep.mubr.f32.mxu0 %v1268
    %2056 = vmatmul.mubr.f32.gmra.mxu0 %v1267
    %v2057 = vpop.f32.mrf.mxu0
    %v2058 = vadd.f32 0.0, %v2057
    %v2059 = vpop.f32.mrf.mxu0
    %v2060 = vadd.f32 0.0, %v2059
    %2061 = vmatprep.mubr.f32.mxu0 %v1270
    %2062 = vmatmul.mubr.f32.gmra.mxu0 %v1269
    %v2063 = vpop.f32.mrf.mxu0
    %v2064 = vadd.f32 0.0, %v2063
    %v2065 = vpop.f32.mrf.mxu0
    %v2066 = vadd.f32 0.0, %v2065
    %2067 = vmatprep.mubr.f32.mxu0 %v1272
    %2068 = vmatmul.mubr.f32.gmra.mxu0 %v1271
    %v2069 = vpop.f32.mrf.mxu0
    %v2070 = vadd.f32 0.0, %v2069
    %v2071 = vpop.f32.mrf.mxu0
    %v2072 = vadd.f32 0.0, %v2071
    %2073 = vmatprep.mubr.f32.mxu0 %v1274
    %2074 = vmatmul.mubr.f32.gmra.mxu0 %v1273
    %v2075 = vpop.f32.mrf.mxu0
    %v2076 = vadd.f32 0.0, %v2075
    %v2077 = vpop.f32.mrf.mxu0
    %v2078 = vadd.f32 0.0, %v2077
    %2079 = vmatprep.mubr.f32.mxu0 %v1276
    %2080 = vmatmul.mubr.f32.gmra.mxu0 %v1275
    %v2081 = vpop.f32.mrf.mxu0
    %v2082 = vadd.f32 0.0, %v2081
    %v2083 = vpop.f32.mrf.mxu0
    %v2084 = vadd.f32 0.0, %v2083
    %2085 = vmatprep.mubr.f32.mxu0 %v1278
    %2086 = vmatmul.mubr.f32.gmra.mxu0 %v1277
    %v2087 = vpop.f32.mrf.mxu0
    %v2088 = vadd.f32 0.0, %v2087
    %v2089 = vpop.f32.mrf.mxu0
    %v2090 = vadd.f32 0.0, %v2089
    %2091 = vmatprep.mubr.f32.mxu0 %v1280
    %2092 = vmatmul.mubr.f32.gmra.mxu0 %v1279
    %v2093 = vpop.f32.mrf.mxu0
    %v2094 = vadd.f32 0.0, %v2093
    %v2095 = vpop.f32.mrf.mxu0
    %v2096 = vadd.f32 0.0, %v2095
    %2097 = vmatprep.mubr.f32.mxu0 %v1282
    %2098 = vmatmul.mubr.f32.gmra.mxu0 %v1281
    %v2099 = vpop.f32.mrf.mxu0
    %v2100 = vadd.f32 0.0, %v2099
    %v2101 = vpop.f32.mrf.mxu0
    %v2102 = vadd.f32 0.0, %v2101
    %2103 = vmatprep.mubr.f32.mxu0 %v1284
    %2104 = vmatmul.mubr.f32.gmra.mxu0 %v1283
    %v2105 = vpop.f32.mrf.mxu0
    %v2106 = vadd.f32 0.0, %v2105
    %v2107 = vpop.f32.mrf.mxu0
    %v2108 = vadd.f32 0.0, %v2107
    %2109 = vmatprep.mubr.f32.mxu0 %v1286
    %2110 = vmatmul.mubr.f32.gmra.mxu0 %v1285
    %v2111 = vpop.f32.mrf.mxu0
    %v2112 = vadd.f32 0.0, %v2111
    %v2113 = vpop.f32.mrf.mxu0
    %v2114 = vadd.f32 0.0, %v2113
    %2115 = vmatprep.mubr.f32.mxu0 %v1288
    %2116 = vmatmul.mubr.f32.gmra.mxu0 %v1287
    %v2117 = vpop.f32.mrf.mxu0
    %v2118 = vadd.f32 0.0, %v2117
    %v2119 = vpop.f32.mrf.mxu0
    %v2120 = vadd.f32 0.0, %v2119
    %2121 = vdwg.mxu0
    %v2122 = vlaneseq
    %v2123 = vshrl.u32 %v2122, 7
    %v2124 = vsub.s32 0, %v2123
    %v2125 = vrot.slane %v900, %v2124
    %2127 = vbcast.lane.b32.xlu0 %v2125, 256
    %v2128 = vpop.permute.xlu0 %2127
    %s2130 = sor.u32 256, 8
    %2131 = vbcast.lane.b32.xlu0 %v2125, %s2130
    %v2132 = vpop.permute.xlu0 %2131
    %s2134 = sor.u32 256, 16
    %2135 = vbcast.lane.b32.xlu0 %v2125, %s2134
    %v2136 = vpop.permute.xlu0 %2135
    %s2138 = sor.u32 256, 24
    %2139 = vbcast.lane.b32.xlu0 %v2125, %s2138
    %v2140 = vpop.permute.xlu0 %2139
    %s2142 = sor.u32 256, 32
    %2143 = vbcast.lane.b32.xlu0 %v2125, %s2142
    %v2144 = vpop.permute.xlu0 %2143
    %s2146 = sor.u32 256, 40
    %2147 = vbcast.lane.b32.xlu0 %v2125, %s2146
    %v2148 = vpop.permute.xlu0 %2147
    %s2150 = sor.u32 256, 48
    %2151 = vbcast.lane.b32.xlu0 %v2125, %s2150
    %v2152 = vpop.permute.xlu0 %2151
    %s2154 = sor.u32 256, 56
    %2155 = vbcast.lane.b32.xlu0 %v2125, %s2154
    %v2156 = vpop.permute.xlu0 %2155
    %s2158 = sor.u32 256, 64
    %2159 = vbcast.lane.b32.xlu0 %v2125, %s2158
    %v2160 = vpop.permute.xlu0 %2159
    %s2162 = sor.u32 256, 72
    %2163 = vbcast.lane.b32.xlu0 %v2125, %s2162
    %v2164 = vpop.permute.xlu0 %2163
    %s2166 = sor.u32 256, 80
    %2167 = vbcast.lane.b32.xlu0 %v2125, %s2166
    %v2168 = vpop.permute.xlu0 %2167
    %s2170 = sor.u32 256, 88
    %2171 = vbcast.lane.b32.xlu0 %v2125, %s2170
    %v2172 = vpop.permute.xlu0 %2171
    %s2174 = sor.u32 256, 96
    %2175 = vbcast.lane.b32.xlu0 %v2125, %s2174
    %v2176 = vpop.permute.xlu0 %2175
    %s2178 = sor.u32 256, 104
    %2179 = vbcast.lane.b32.xlu0 %v2125, %s2178
    %v2180 = vpop.permute.xlu0 %2179
    %s2182 = sor.u32 256, 112
    %2183 = vbcast.lane.b32.xlu0 %v2125, %s2182
    %v2184 = vpop.permute.xlu0 %2183
    %s2186 = sor.u32 256, 120
    %2187 = vbcast.lane.b32.xlu0 %v2125, %s2186
    %v2188 = vpop.permute.xlu0 %2187
    %v2189 = vlaneseq
    %v2190 = vshrl.u32 %v2189, 7
    %v2191 = vsub.s32 1, %v2190
    %v2192 = vrot.slane %v900, %v2191
    %2194 = vbcast.lane.b32.xlu0 %v2192, 256
    %v2195 = vpop.permute.xlu0 %2194
    %s2197 = sor.u32 256, 8
    %2198 = vbcast.lane.b32.xlu0 %v2192, %s2197
    %v2199 = vpop.permute.xlu0 %2198
    %s2201 = sor.u32 256, 16
    %2202 = vbcast.lane.b32.xlu0 %v2192, %s2201
    %v2203 = vpop.permute.xlu0 %2202
    %s2205 = sor.u32 256, 24
    %2206 = vbcast.lane.b32.xlu0 %v2192, %s2205
    %v2207 = vpop.permute.xlu0 %2206
    %s2209 = sor.u32 256, 32
    %2210 = vbcast.lane.b32.xlu0 %v2192, %s2209
    %v2211 = vpop.permute.xlu0 %2210
    %s2213 = sor.u32 256, 40
    %2214 = vbcast.lane.b32.xlu0 %v2192, %s2213
    %v2215 = vpop.permute.xlu0 %2214
    %s2217 = sor.u32 256, 48
    %2218 = vbcast.lane.b32.xlu0 %v2192, %s2217
    %v2219 = vpop.permute.xlu0 %2218
    %s2221 = sor.u32 256, 56
    %2222 = vbcast.lane.b32.xlu0 %v2192, %s2221
    %v2223 = vpop.permute.xlu0 %2222
    %s2225 = sor.u32 256, 64
    %2226 = vbcast.lane.b32.xlu0 %v2192, %s2225
    %v2227 = vpop.permute.xlu0 %2226
    %s2229 = sor.u32 256, 72
    %2230 = vbcast.lane.b32.xlu0 %v2192, %s2229
    %v2231 = vpop.permute.xlu0 %2230
    %s2233 = sor.u32 256, 80
    %2234 = vbcast.lane.b32.xlu0 %v2192, %s2233
    %v2235 = vpop.permute.xlu0 %2234
    %s2237 = sor.u32 256, 88
    %2238 = vbcast.lane.b32.xlu0 %v2192, %s2237
    %v2239 = vpop.permute.xlu0 %2238
    %s2241 = sor.u32 256, 96
    %2242 = vbcast.lane.b32.xlu0 %v2192, %s2241
    %v2243 = vpop.permute.xlu0 %2242
    %s2245 = sor.u32 256, 104
    %2246 = vbcast.lane.b32.xlu0 %v2192, %s2245
    %v2247 = vpop.permute.xlu0 %2246
    %s2249 = sor.u32 256, 112
    %2250 = vbcast.lane.b32.xlu0 %v2192, %s2249
    %v2251 = vpop.permute.xlu0 %2250
    %s2253 = sor.u32 256, 120
    %2254 = vbcast.lane.b32.xlu0 %v2192, %s2253
    %v2255 = vpop.permute.xlu0 %2254
    %v2256 = vlaneseq
    %v2257 = vshrl.u32 %v2256, 7
    %v2258 = vsub.s32 2, %v2257
    %v2259 = vrot.slane %v900, %v2258
    %2261 = vbcast.lane.b32.xlu0 %v2259, 256
    %v2262 = vpop.permute.xlu0 %2261
    %s2264 = sor.u32 256, 8
    %2265 = vbcast.lane.b32.xlu0 %v2259, %s2264
    %v2266 = vpop.permute.xlu0 %2265
    %s2268 = sor.u32 256, 16
    %2269 = vbcast.lane.b32.xlu0 %v2259, %s2268
    %v2270 = vpop.permute.xlu0 %2269
    %s2272 = sor.u32 256, 24
    %2273 = vbcast.lane.b32.xlu0 %v2259, %s2272
    %v2274 = vpop.permute.xlu0 %2273
    %s2276 = sor.u32 256, 32
    %2277 = vbcast.lane.b32.xlu0 %v2259, %s2276
    %v2278 = vpop.permute.xlu0 %2277
    %s2280 = sor.u32 256, 40
    %2281 = vbcast.lane.b32.xlu0 %v2259, %s2280
    %v2282 = vpop.permute.xlu0 %2281
    %s2284 = sor.u32 256, 48
    %2285 = vbcast.lane.b32.xlu0 %v2259, %s2284
    %v2286 = vpop.permute.xlu0 %2285
    %s2288 = sor.u32 256, 56
    %2289 = vbcast.lane.b32.xlu0 %v2259, %s2288
    %v2290 = vpop.permute.xlu0 %2289
    %s2292 = sor.u32 256, 64
    %2293 = vbcast.lane.b32.xlu0 %v2259, %s2292
    %v2294 = vpop.permute.xlu0 %2293
    %s2296 = sor.u32 256, 72
    %2297 = vbcast.lane.b32.xlu0 %v2259, %s2296
    %v2298 = vpop.permute.xlu0 %2297
    %s2300 = sor.u32 256, 80
    %2301 = vbcast.lane.b32.xlu0 %v2259, %s2300
    %v2302 = vpop.permute.xlu0 %2301
    %s2304 = sor.u32 256, 88
    %2305 = vbcast.lane.b32.xlu0 %v2259, %s2304
    %v2306 = vpop.permute.xlu0 %2305
    %s2308 = sor.u32 256, 96
    %2309 = vbcast.lane.b32.xlu0 %v2259, %s2308
    %v2310 = vpop.permute.xlu0 %2309
    %s2312 = sor.u32 256, 104
    %2313 = vbcast.lane.b32.xlu0 %v2259, %s2312
    %v2314 = vpop.permute.xlu0 %2313
    %s2316 = sor.u32 256, 112
    %2317 = vbcast.lane.b32.xlu0 %v2259, %s2316
    %v2318 = vpop.permute.xlu0 %2317
    %s2320 = sor.u32 256, 120
    %2321 = vbcast.lane.b32.xlu0 %v2259, %s2320
    %v2322 = vpop.permute.xlu0 %2321
    %v2323 = vlaneseq
    %v2324 = vshrl.u32 %v2323, 7
    %v2325 = vsub.s32 3, %v2324
    %v2326 = vrot.slane %v900, %v2325
    %2328 = vbcast.lane.b32.xlu0 %v2326, 256
    %v2329 = vpop.permute.xlu0 %2328
    %s2331 = sor.u32 256, 8
    %2332 = vbcast.lane.b32.xlu0 %v2326, %s2331
    %v2333 = vpop.permute.xlu0 %2332
    %s2335 = sor.u32 256, 16
    %2336 = vbcast.lane.b32.xlu0 %v2326, %s2335
    %v2337 = vpop.permute.xlu0 %2336
    %s2339 = sor.u32 256, 24
    %2340 = vbcast.lane.b32.xlu0 %v2326, %s2339
    %v2341 = vpop.permute.xlu0 %2340
    %s2343 = sor.u32 256, 32
    %2344 = vbcast.lane.b32.xlu0 %v2326, %s2343
    %v2345 = vpop.permute.xlu0 %2344
    %s2347 = sor.u32 256, 40
    %2348 = vbcast.lane.b32.xlu0 %v2326, %s2347
    %v2349 = vpop.permute.xlu0 %2348
    %s2351 = sor.u32 256, 48
    %2352 = vbcast.lane.b32.xlu0 %v2326, %s2351
    %v2353 = vpop.permute.xlu0 %2352
    %s2355 = sor.u32 256, 56
    %2356 = vbcast.lane.b32.xlu0 %v2326, %s2355
    %v2357 = vpop.permute.xlu0 %2356
    %s2359 = sor.u32 256, 64
    %2360 = vbcast.lane.b32.xlu0 %v2326, %s2359
    %v2361 = vpop.permute.xlu0 %2360
    %s2363 = sor.u32 256, 72
    %2364 = vbcast.lane.b32.xlu0 %v2326, %s2363
    %v2365 = vpop.permute.xlu0 %2364
    %s2367 = sor.u32 256, 80
    %2368 = vbcast.lane.b32.xlu0 %v2326, %s2367
    %v2369 = vpop.permute.xlu0 %2368
    %s2371 = sor.u32 256, 88
    %2372 = vbcast.lane.b32.xlu0 %v2326, %s2371
    %v2373 = vpop.permute.xlu0 %2372
    %s2375 = sor.u32 256, 96
    %2376 = vbcast.lane.b32.xlu0 %v2326, %s2375
    %v2377 = vpop.permute.xlu0 %2376
    %s2379 = sor.u32 256, 104
    %2380 = vbcast.lane.b32.xlu0 %v2326, %s2379
    %v2381 = vpop.permute.xlu0 %2380
    %s2383 = sor.u32 256, 112
    %2384 = vbcast.lane.b32.xlu0 %v2326, %s2383
    %v2385 = vpop.permute.xlu0 %2384
    %s2387 = sor.u32 256, 120
    %2388 = vbcast.lane.b32.xlu0 %v2326, %s2387
    %v2389 = vpop.permute.xlu0 %2388
    %v2390 = vlaneseq
    %v2391 = vshrl.u32 %v2390, 7
    %v2392 = vsub.s32 4, %v2391
    %v2393 = vrot.slane %v900, %v2392
    %2395 = vbcast.lane.b32.xlu0 %v2393, 256
    %v2396 = vpop.permute.xlu0 %2395
    %s2398 = sor.u32 256, 8
    %2399 = vbcast.lane.b32.xlu0 %v2393, %s2398
    %v2400 = vpop.permute.xlu0 %2399
    %s2402 = sor.u32 256, 16
    %2403 = vbcast.lane.b32.xlu0 %v2393, %s2402
    %v2404 = vpop.permute.xlu0 %2403
    %s2406 = sor.u32 256, 24
    %2407 = vbcast.lane.b32.xlu0 %v2393, %s2406
    %v2408 = vpop.permute.xlu0 %2407
    %s2410 = sor.u32 256, 32
    %2411 = vbcast.lane.b32.xlu0 %v2393, %s2410
    %v2412 = vpop.permute.xlu0 %2411
    %s2414 = sor.u32 256, 40
    %2415 = vbcast.lane.b32.xlu0 %v2393, %s2414
    %v2416 = vpop.permute.xlu0 %2415
    %s2418 = sor.u32 256, 48
    %2419 = vbcast.lane.b32.xlu0 %v2393, %s2418
    %v2420 = vpop.permute.xlu0 %2419
    %s2422 = sor.u32 256, 56
    %2423 = vbcast.lane.b32.xlu0 %v2393, %s2422
    %v2424 = vpop.permute.xlu0 %2423
    %s2426 = sor.u32 256, 64
    %2427 = vbcast.lane.b32.xlu0 %v2393, %s2426
    %v2428 = vpop.permute.xlu0 %2427
    %s2430 = sor.u32 256, 72
    %2431 = vbcast.lane.b32.xlu0 %v2393, %s2430
    %v2432 = vpop.permute.xlu0 %2431
    %s2434 = sor.u32 256, 80
    %2435 = vbcast.lane.b32.xlu0 %v2393, %s2434
    %v2436 = vpop.permute.xlu0 %2435
    %s2438 = sor.u32 256, 88
    %2439 = vbcast.lane.b32.xlu0 %v2393, %s2438
    %v2440 = vpop.permute.xlu0 %2439
    %s2442 = sor.u32 256, 96
    %2443 = vbcast.lane.b32.xlu0 %v2393, %s2442
    %v2444 = vpop.permute.xlu0 %2443
    %s2446 = sor.u32 256, 104
    %2447 = vbcast.lane.b32.xlu0 %v2393, %s2446
    %v2448 = vpop.permute.xlu0 %2447
    %s2450 = sor.u32 256, 112
    %2451 = vbcast.lane.b32.xlu0 %v2393, %s2450
    %v2452 = vpop.permute.xlu0 %2451
    %s2454 = sor.u32 256, 120
    %2455 = vbcast.lane.b32.xlu0 %v2393, %s2454
    %v2456 = vpop.permute.xlu0 %2455
    %v2457 = vlaneseq
    %v2458 = vshrl.u32 %v2457, 7
    %v2459 = vsub.s32 5, %v2458
    %v2460 = vrot.slane %v900, %v2459
    %2462 = vbcast.lane.b32.xlu0 %v2460, 256
    %v2463 = vpop.permute.xlu0 %2462
    %s2465 = sor.u32 256, 8
    %2466 = vbcast.lane.b32.xlu0 %v2460, %s2465
    %v2467 = vpop.permute.xlu0 %2466
    %s2469 = sor.u32 256, 16
    %2470 = vbcast.lane.b32.xlu0 %v2460, %s2469
    %v2471 = vpop.permute.xlu0 %2470
    %s2473 = sor.u32 256, 24
    %2474 = vbcast.lane.b32.xlu0 %v2460, %s2473
    %v2475 = vpop.permute.xlu0 %2474
    %s2477 = sor.u32 256, 32
    %2478 = vbcast.lane.b32.xlu0 %v2460, %s2477
    %v2479 = vpop.permute.xlu0 %2478
    %s2481 = sor.u32 256, 40
    %2482 = vbcast.lane.b32.xlu0 %v2460, %s2481
    %v2483 = vpop.permute.xlu0 %2482
    %s2485 = sor.u32 256, 48
    %2486 = vbcast.lane.b32.xlu0 %v2460, %s2485
    %v2487 = vpop.permute.xlu0 %2486
    %s2489 = sor.u32 256, 56
    %2490 = vbcast.lane.b32.xlu0 %v2460, %s2489
    %v2491 = vpop.permute.xlu0 %2490
    %s2493 = sor.u32 256, 64
    %2494 = vbcast.lane.b32.xlu0 %v2460, %s2493
    %v2495 = vpop.permute.xlu0 %2494
    %s2497 = sor.u32 256, 72
    %2498 = vbcast.lane.b32.xlu0 %v2460, %s2497
    %v2499 = vpop.permute.xlu0 %2498
    %s2501 = sor.u32 256, 80
    %2502 = vbcast.lane.b32.xlu0 %v2460, %s2501
    %v2503 = vpop.permute.xlu0 %2502
    %s2505 = sor.u32 256, 88
    %2506 = vbcast.lane.b32.xlu0 %v2460, %s2505
    %v2507 = vpop.permute.xlu0 %2506
    %s2509 = sor.u32 256, 96
    %2510 = vbcast.lane.b32.xlu0 %v2460, %s2509
    %v2511 = vpop.permute.xlu0 %2510
    %s2513 = sor.u32 256, 104
    %2514 = vbcast.lane.b32.xlu0 %v2460, %s2513
    %v2515 = vpop.permute.xlu0 %2514
    %s2517 = sor.u32 256, 112
    %2518 = vbcast.lane.b32.xlu0 %v2460, %s2517
    %v2519 = vpop.permute.xlu0 %2518
    %s2521 = sor.u32 256, 120
    %2522 = vbcast.lane.b32.xlu0 %v2460, %s2521
    %v2523 = vpop.permute.xlu0 %2522
    %v2524 = vlaneseq
    %v2525 = vshrl.u32 %v2524, 7
    %v2526 = vsub.s32 6, %v2525
    %v2527 = vrot.slane %v900, %v2526
    %2529 = vbcast.lane.b32.xlu0 %v2527, 256
    %v2530 = vpop.permute.xlu0 %2529
    %s2532 = sor.u32 256, 8
    %2533 = vbcast.lane.b32.xlu0 %v2527, %s2532
    %v2534 = vpop.permute.xlu0 %2533
    %s2536 = sor.u32 256, 16
    %2537 = vbcast.lane.b32.xlu0 %v2527, %s2536
    %v2538 = vpop.permute.xlu0 %2537
    %s2540 = sor.u32 256, 24
    %2541 = vbcast.lane.b32.xlu0 %v2527, %s2540
    %v2542 = vpop.permute.xlu0 %2541
    %s2544 = sor.u32 256, 32
    %2545 = vbcast.lane.b32.xlu0 %v2527, %s2544
    %v2546 = vpop.permute.xlu0 %2545
    %s2548 = sor.u32 256, 40
    %2549 = vbcast.lane.b32.xlu0 %v2527, %s2548
    %v2550 = vpop.permute.xlu0 %2549
    %s2552 = sor.u32 256, 48
    %2553 = vbcast.lane.b32.xlu0 %v2527, %s2552
    %v2554 = vpop.permute.xlu0 %2553
    %s2556 = sor.u32 256, 56
    %2557 = vbcast.lane.b32.xlu0 %v2527, %s2556
    %v2558 = vpop.permute.xlu0 %2557
    %s2560 = sor.u32 256, 64
    %2561 = vbcast.lane.b32.xlu0 %v2527, %s2560
    %v2562 = vpop.permute.xlu0 %2561
    %s2564 = sor.u32 256, 72
    %2565 = vbcast.lane.b32.xlu0 %v2527, %s2564
    %v2566 = vpop.permute.xlu0 %2565
    %s2568 = sor.u32 256, 80
    %2569 = vbcast.lane.b32.xlu0 %v2527, %s2568
    %v2570 = vpop.permute.xlu0 %2569
    %s2572 = sor.u32 256, 88
    %2573 = vbcast.lane.b32.xlu0 %v2527, %s2572
    %v2574 = vpop.permute.xlu0 %2573
    %s2576 = sor.u32 256, 96
    %2577 = vbcast.lane.b32.xlu0 %v2527, %s2576
    %v2578 = vpop.permute.xlu0 %2577
    %s2580 = sor.u32 256, 104
    %2581 = vbcast.lane.b32.xlu0 %v2527, %s2580
    %v2582 = vpop.permute.xlu0 %2581
    %s2584 = sor.u32 256, 112
    %2585 = vbcast.lane.b32.xlu0 %v2527, %s2584
    %v2586 = vpop.permute.xlu0 %2585
    %s2588 = sor.u32 256, 120
    %2589 = vbcast.lane.b32.xlu0 %v2527, %s2588
    %v2590 = vpop.permute.xlu0 %2589
    %v2591 = vlaneseq
    %v2592 = vshrl.u32 %v2591, 7
    %v2593 = vsub.s32 7, %v2592
    %v2594 = vrot.slane %v900, %v2593
    %2596 = vbcast.lane.b32.xlu0 %v2594, 256
    %v2597 = vpop.permute.xlu0 %2596
    %s2599 = sor.u32 256, 8
    %2600 = vbcast.lane.b32.xlu0 %v2594, %s2599
    %v2601 = vpop.permute.xlu0 %2600
    %s2603 = sor.u32 256, 16
    %2604 = vbcast.lane.b32.xlu0 %v2594, %s2603
    %v2605 = vpop.permute.xlu0 %2604
    %s2607 = sor.u32 256, 24
    %2608 = vbcast.lane.b32.xlu0 %v2594, %s2607
    %v2609 = vpop.permute.xlu0 %2608
    %s2611 = sor.u32 256, 32
    %2612 = vbcast.lane.b32.xlu0 %v2594, %s2611
    %v2613 = vpop.permute.xlu0 %2612
    %s2615 = sor.u32 256, 40
    %2616 = vbcast.lane.b32.xlu0 %v2594, %s2615
    %v2617 = vpop.permute.xlu0 %2616
    %s2619 = sor.u32 256, 48
    %2620 = vbcast.lane.b32.xlu0 %v2594, %s2619
    %v2621 = vpop.permute.xlu0 %2620
    %s2623 = sor.u32 256, 56
    %2624 = vbcast.lane.b32.xlu0 %v2594, %s2623
    %v2625 = vpop.permute.xlu0 %2624
    %s2627 = sor.u32 256, 64
    %2628 = vbcast.lane.b32.xlu0 %v2594, %s2627
    %v2629 = vpop.permute.xlu0 %2628
    %s2631 = sor.u32 256, 72
    %2632 = vbcast.lane.b32.xlu0 %v2594, %s2631
    %v2633 = vpop.permute.xlu0 %2632
    %s2635 = sor.u32 256, 80
    %2636 = vbcast.lane.b32.xlu0 %v2594, %s2635
    %v2637 = vpop.permute.xlu0 %2636
    %s2639 = sor.u32 256, 88
    %2640 = vbcast.lane.b32.xlu0 %v2594, %s2639
    %v2641 = vpop.permute.xlu0 %2640
    %s2643 = sor.u32 256, 96
    %2644 = vbcast.lane.b32.xlu0 %v2594, %s2643
    %v2645 = vpop.permute.xlu0 %2644
    %s2647 = sor.u32 256, 104
    %2648 = vbcast.lane.b32.xlu0 %v2594, %s2647
    %v2649 = vpop.permute.xlu0 %2648
    %s2651 = sor.u32 256, 112
    %2652 = vbcast.lane.b32.xlu0 %v2594, %s2651
    %v2653 = vpop.permute.xlu0 %2652
    %s2655 = sor.u32 256, 120
    %2656 = vbcast.lane.b32.xlu0 %v2594, %s2655
    %v2657 = vpop.permute.xlu0 %2656
    %v2658 = vmul.f32 %v1356, %v2128
    %v2659 = vmul.f32 %v1358, %v2128
    %v2660 = vmul.f32 %v1362, %v2132
    %v2661 = vmul.f32 %v1364, %v2132
    %v2662 = vmul.f32 %v1368, %v2136
    %v2663 = vmul.f32 %v1370, %v2136
    %v2664 = vmul.f32 %v1374, %v2140
    %v2665 = vmul.f32 %v1376, %v2140
    %v2666 = vmul.f32 %v1380, %v2144
    %v2667 = vmul.f32 %v1382, %v2144
    %v2668 = vmul.f32 %v1386, %v2148
    %v2669 = vmul.f32 %v1388, %v2148
    %v2670 = vmul.f32 %v1392, %v2152
    %v2671 = vmul.f32 %v1394, %v2152
    %v2672 = vmul.f32 %v1398, %v2156
    %v2673 = vmul.f32 %v1400, %v2156
    %v2674 = vmul.f32 %v1404, %v2160
    %v2675 = vmul.f32 %v1406, %v2160
    %v2676 = vmul.f32 %v1410, %v2164
    %v2677 = vmul.f32 %v1412, %v2164
    %v2678 = vmul.f32 %v1416, %v2168
    %v2679 = vmul.f32 %v1418, %v2168
    %v2680 = vmul.f32 %v1422, %v2172
    %v2681 = vmul.f32 %v1424, %v2172
    %v2682 = vmul.f32 %v1428, %v2176
    %v2683 = vmul.f32 %v1430, %v2176
    %v2684 = vmul.f32 %v1434, %v2180
    %v2685 = vmul.f32 %v1436, %v2180
    %v2686 = vmul.f32 %v1440, %v2184
    %v2687 = vmul.f32 %v1442, %v2184
    %v2688 = vmul.f32 %v1446, %v2188
    %v2689 = vmul.f32 %v1448, %v2188
    %v2690 = vmul.f32 %v1452, %v2195
    %v2691 = vmul.f32 %v1454, %v2195
    %v2692 = vmul.f32 %v1458, %v2199
    %v2693 = vmul.f32 %v1460, %v2199
    %v2694 = vmul.f32 %v1464, %v2203
    %v2695 = vmul.f32 %v1466, %v2203
    %v2696 = vmul.f32 %v1470, %v2207
    %v2697 = vmul.f32 %v1472, %v2207
    %v2698 = vmul.f32 %v1476, %v2211
    %v2699 = vmul.f32 %v1478, %v2211
    %v2700 = vmul.f32 %v1482, %v2215
    %v2701 = vmul.f32 %v1484, %v2215
    %v2702 = vmul.f32 %v1488, %v2219
    %v2703 = vmul.f32 %v1490, %v2219
    %v2704 = vmul.f32 %v1494, %v2223
    %v2705 = vmul.f32 %v1496, %v2223
    %v2706 = vmul.f32 %v1500, %v2227
    %v2707 = vmul.f32 %v1502, %v2227
    %v2708 = vmul.f32 %v1506, %v2231
    %v2709 = vmul.f32 %v1508, %v2231
    %v2710 = vmul.f32 %v1512, %v2235
    %v2711 = vmul.f32 %v1514, %v2235
    %v2712 = vmul.f32 %v1518, %v2239
    %v2713 = vmul.f32 %v1520, %v2239
    %v2714 = vmul.f32 %v1524, %v2243
    %v2715 = vmul.f32 %v1526, %v2243
    %v2716 = vmul.f32 %v1530, %v2247
    %v2717 = vmul.f32 %v1532, %v2247
    %v2718 = vmul.f32 %v1536, %v2251
    %v2719 = vmul.f32 %v1538, %v2251
    %v2720 = vmul.f32 %v1542, %v2255
    %v2721 = vmul.f32 %v1544, %v2255
    %v2722 = vmul.f32 %v1548, %v2262
    %v2723 = vmul.f32 %v1550, %v2262
    %v2724 = vmul.f32 %v1554, %v2266
    %v2725 = vmul.f32 %v1556, %v2266
    %v2726 = vmul.f32 %v1560, %v2270
    %v2727 = vmul.f32 %v1562, %v2270
    %v2728 = vmul.f32 %v1566, %v2274
    %v2729 = vmul.f32 %v1568, %v2274
    %v2730 = vmul.f32 %v1572, %v2278
    %v2731 = vmul.f32 %v1574, %v2278
    %v2732 = vmul.f32 %v1578, %v2282
    %v2733 = vmul.f32 %v1580, %v2282
    %v2734 = vmul.f32 %v1584, %v2286
    %v2735 = vmul.f32 %v1586, %v2286
    %v2736 = vmul.f32 %v1590, %v2290
    %v2737 = vmul.f32 %v1592, %v2290
    %v2738 = vmul.f32 %v1596, %v2294
    %v2739 = vmul.f32 %v1598, %v2294
    %v2740 = vmul.f32 %v1602, %v2298
    %v2741 = vmul.f32 %v1604, %v2298
    %v2742 = vmul.f32 %v1608, %v2302
    %v2743 = vmul.f32 %v1610, %v2302
    %v2744 = vmul.f32 %v1614, %v2306
    %v2745 = vmul.f32 %v1616, %v2306
    %v2746 = vmul.f32 %v1620, %v2310
    %v2747 = vmul.f32 %v1622, %v2310
    %v2748 = vmul.f32 %v1626, %v2314
    %v2749 = vmul.f32 %v1628, %v2314
    %v2750 = vmul.f32 %v1632, %v2318
    %v2751 = vmul.f32 %v1634, %v2318
    %v2752 = vmul.f32 %v1638, %v2322
    %v2753 = vmul.f32 %v1640, %v2322
    %v2754 = vmul.f32 %v1644, %v2329
    %v2755 = vmul.f32 %v1646, %v2329
    %v2756 = vmul.f32 %v1650, %v2333
    %v2757 = vmul.f32 %v1652, %v2333
    %v2758 = vmul.f32 %v1656, %v2337
    %v2759 = vmul.f32 %v1658, %v2337
    %v2760 = vmul.f32 %v1662, %v2341
    %v2761 = vmul.f32 %v1664, %v2341
    %v2762 = vmul.f32 %v1668, %v2345
    %v2763 = vmul.f32 %v1670, %v2345
    %v2764 = vmul.f32 %v1674, %v2349
    %v2765 = vmul.f32 %v1676, %v2349
    %v2766 = vmul.f32 %v1680, %v2353
    %v2767 = vmul.f32 %v1682, %v2353
    %v2768 = vmul.f32 %v1686, %v2357
    %v2769 = vmul.f32 %v1688, %v2357
    %v2770 = vmul.f32 %v1692, %v2361
    %v2771 = vmul.f32 %v1694, %v2361
    %v2772 = vmul.f32 %v1698, %v2365
    %v2773 = vmul.f32 %v1700, %v2365
    %v2774 = vmul.f32 %v1704, %v2369
    %v2775 = vmul.f32 %v1706, %v2369
    %v2776 = vmul.f32 %v1710, %v2373
    %v2777 = vmul.f32 %v1712, %v2373
    %v2778 = vmul.f32 %v1716, %v2377
    %v2779 = vmul.f32 %v1718, %v2377
    %v2780 = vmul.f32 %v1722, %v2381
    %v2781 = vmul.f32 %v1724, %v2381
    %v2782 = vmul.f32 %v1728, %v2385
    %v2783 = vmul.f32 %v1730, %v2385
    %v2784 = vmul.f32 %v1734, %v2389
    %v2785 = vmul.f32 %v1736, %v2389
    %v2786 = vmul.f32 %v1740, %v2396
    %v2787 = vmul.f32 %v1742, %v2396
    %v2788 = vmul.f32 %v1746, %v2400
    %v2789 = vmul.f32 %v1748, %v2400
    %v2790 = vmul.f32 %v1752, %v2404
    %v2791 = vmul.f32 %v1754, %v2404
    %v2792 = vmul.f32 %v1758, %v2408
    %v2793 = vmul.f32 %v1760, %v2408
    %v2794 = vmul.f32 %v1764, %v2412
    %v2795 = vmul.f32 %v1766, %v2412
    %v2796 = vmul.f32 %v1770, %v2416
    %v2797 = vmul.f32 %v1772, %v2416
    %v2798 = vmul.f32 %v1776, %v2420
    %v2799 = vmul.f32 %v1778, %v2420
    %v2800 = vmul.f32 %v1782, %v2424
    %v2801 = vmul.f32 %v1784, %v2424
    %v2802 = vmul.f32 %v1788, %v2428
    %v2803 = vmul.f32 %v1790, %v2428
    %v2804 = vmul.f32 %v1794, %v2432
    %v2805 = vmul.f32 %v1796, %v2432
    %v2806 = vmul.f32 %v1800, %v2436
    %v2807 = vmul.f32 %v1802, %v2436
    %v2808 = vmul.f32 %v1806, %v2440
    %v2809 = vmul.f32 %v1808, %v2440
    %v2810 = vmul.f32 %v1812, %v2444
    %v2811 = vmul.f32 %v1814, %v2444
    %v2812 = vmul.f32 %v1818, %v2448
    %v2813 = vmul.f32 %v1820, %v2448
    %v2814 = vmul.f32 %v1824, %v2452
    %v2815 = vmul.f32 %v1826, %v2452
    %v2816 = vmul.f32 %v1830, %v2456
    %v2817 = vmul.f32 %v1832, %v2456
    %v2818 = vmul.f32 %v1836, %v2463
    %v2819 = vmul.f32 %v1838, %v2463
    %v2820 = vmul.f32 %v1842, %v2467
    %v2821 = vmul.f32 %v1844, %v2467
    %v2822 = vmul.f32 %v1848, %v2471
    %v2823 = vmul.f32 %v1850, %v2471
    %v2824 = vmul.f32 %v1854, %v2475
    %v2825 = vmul.f32 %v1856, %v2475
    %v2826 = vmul.f32 %v1860, %v2479
    %v2827 = vmul.f32 %v1862, %v2479
    %v2828 = vmul.f32 %v1866, %v2483
    %v2829 = vmul.f32 %v1868, %v2483
    %v2830 = vmul.f32 %v1872, %v2487
    %v2831 = vmul.f32 %v1874, %v2487
    %v2832 = vmul.f32 %v1878, %v2491
    %v2833 = vmul.f32 %v1880, %v2491
    %v2834 = vmul.f32 %v1884, %v2495
    %v2835 = vmul.f32 %v1886, %v2495
    %v2836 = vmul.f32 %v1890, %v2499
    %v2837 = vmul.f32 %v1892, %v2499
    %v2838 = vmul.f32 %v1896, %v2503
    %v2839 = vmul.f32 %v1898, %v2503
    %v2840 = vmul.f32 %v1902, %v2507
    %v2841 = vmul.f32 %v1904, %v2507
    %v2842 = vmul.f32 %v1908, %v2511
    %v2843 = vmul.f32 %v1910, %v2511
    %v2844 = vmul.f32 %v1914, %v2515
    %v2845 = vmul.f32 %v1916, %v2515
    %v2846 = vmul.f32 %v1920, %v2519
    %v2847 = vmul.f32 %v1922, %v2519
    %v2848 = vmul.f32 %v1926, %v2523
    %v2849 = vmul.f32 %v1928, %v2523
    %v2850 = vmul.f32 %v1932, %v2530
    %v2851 = vmul.f32 %v1934, %v2530
    %v2852 = vmul.f32 %v1938, %v2534
    %v2853 = vmul.f32 %v1940, %v2534
    %v2854 = vmul.f32 %v1944, %v2538
    %v2855 = vmul.f32 %v1946, %v2538
    %v2856 = vmul.f32 %v1950, %v2542
    %v2857 = vmul.f32 %v1952, %v2542
    %v2858 = vmul.f32 %v1956, %v2546
    %v2859 = vmul.f32 %v1958, %v2546
    %v2860 = vmul.f32 %v1962, %v2550
    %v2861 = vmul.f32 %v1964, %v2550
    %v2862 = vmul.f32 %v1968, %v2554
    %v2863 = vmul.f32 %v1970, %v2554
    %v2864 = vmul.f32 %v1974, %v2558
    %v2865 = vmul.f32 %v1976, %v2558
    %v2866 = vmul.f32 %v1980, %v2562
    %v2867 = vmul.f32 %v1982, %v2562
    %v2868 = vmul.f32 %v1986, %v2566
    %v2869 = vmul.f32 %v1988, %v2566
    %v2870 = vmul.f32 %v1992, %v2570
    %v2871 = vmul.f32 %v1994, %v2570
    %v2872 = vmul.f32 %v1998, %v2574
    %v2873 = vmul.f32 %v2000, %v2574
    %v2874 = vmul.f32 %v2004, %v2578
    %v2875 = vmul.f32 %v2006, %v2578
    %v2876 = vmul.f32 %v2010, %v2582
    %v2877 = vmul.f32 %v2012, %v2582
    %v2878 = vmul.f32 %v2016, %v2586
    %v2879 = vmul.f32 %v2018, %v2586
    %v2880 = vmul.f32 %v2022, %v2590
    %v2881 = vmul.f32 %v2024, %v2590
    %v2882 = vmul.f32 %v2028, %v2597
    %v2883 = vmul.f32 %v2030, %v2597
    %v2884 = vmul.f32 %v2034, %v2601
    %v2885 = vmul.f32 %v2036, %v2601
    %v2886 = vmul.f32 %v2040, %v2605
    %v2887 = vmul.f32 %v2042, %v2605
    %v2888 = vmul.f32 %v2046, %v2609
    %v2889 = vmul.f32 %v2048, %v2609
    %v2890 = vmul.f32 %v2052, %v2613
    %v2891 = vmul.f32 %v2054, %v2613
    %v2892 = vmul.f32 %v2058, %v2617
    %v2893 = vmul.f32 %v2060, %v2617
    %v2894 = vmul.f32 %v2064, %v2621
    %v2895 = vmul.f32 %v2066, %v2621
    %v2896 = vmul.f32 %v2070, %v2625
    %v2897 = vmul.f32 %v2072, %v2625
    %v2898 = vmul.f32 %v2076, %v2629
    %v2899 = vmul.f32 %v2078, %v2629
    %v2900 = vmul.f32 %v2082, %v2633
    %v2901 = vmul.f32 %v2084, %v2633
    %v2902 = vmul.f32 %v2088, %v2637
    %v2903 = vmul.f32 %v2090, %v2637
    %v2904 = vmul.f32 %v2094, %v2641
    %v2905 = vmul.f32 %v2096, %v2641
    %v2906 = vmul.f32 %v2100, %v2645
    %v2907 = vmul.f32 %v2102, %v2645
    %v2908 = vmul.f32 %v2106, %v2649
    %v2909 = vmul.f32 %v2108, %v2649
    %v2910 = vmul.f32 %v2112, %v2653
    %v2911 = vmul.f32 %v2114, %v2653
    %v2912 = vmul.f32 %v2118, %v2657
    %v2913 = vmul.f32 %v2120, %v2657
    %v2914 = vsub.f32 %v2658, %v249
    %v2915 = vsub.f32 %v2659, %v251
    %v2916 = vsub.f32 %v2660, %v255
    %v2917 = vsub.f32 %v2661, %v257
    %v2918 = vsub.f32 %v2662, %v261
    %v2919 = vsub.f32 %v2663, %v263
    %v2920 = vsub.f32 %v2664, %v267
    %v2921 = vsub.f32 %v2665, %v269
    %v2922 = vsub.f32 %v2666, %v273
    %v2923 = vsub.f32 %v2667, %v275
    %v2924 = vsub.f32 %v2668, %v279
    %v2925 = vsub.f32 %v2669, %v281
    %v2926 = vsub.f32 %v2670, %v285
    %v2927 = vsub.f32 %v2671, %v287
    %v2928 = vsub.f32 %v2672, %v291
    %v2929 = vsub.f32 %v2673, %v293
    %v2930 = vsub.f32 %v2674, %v297
    %v2931 = vsub.f32 %v2675, %v299
    %v2932 = vsub.f32 %v2676, %v303
    %v2933 = vsub.f32 %v2677, %v305
    %v2934 = vsub.f32 %v2678, %v309
    %v2935 = vsub.f32 %v2679, %v311
    %v2936 = vsub.f32 %v2680, %v315
    %v2937 = vsub.f32 %v2681, %v317
    %v2938 = vsub.f32 %v2682, %v321
    %v2939 = vsub.f32 %v2683, %v323
    %v2940 = vsub.f32 %v2684, %v327
    %v2941 = vsub.f32 %v2685, %v329
    %v2942 = vsub.f32 %v2686, %v333
    %v2943 = vsub.f32 %v2687, %v335
    %v2944 = vsub.f32 %v2688, %v339
    %v2945 = vsub.f32 %v2689, %v341
    %v2946 = vsub.f32 %v2690, %v249
    %v2947 = vsub.f32 %v2691, %v251
    %v2948 = vsub.f32 %v2692, %v255
    %v2949 = vsub.f32 %v2693, %v257
    %v2950 = vsub.f32 %v2694, %v261
    %v2951 = vsub.f32 %v2695, %v263
    %v2952 = vsub.f32 %v2696, %v267
    %v2953 = vsub.f32 %v2697, %v269
    %v2954 = vsub.f32 %v2698, %v273
    %v2955 = vsub.f32 %v2699, %v275
    %v2956 = vsub.f32 %v2700, %v279
    %v2957 = vsub.f32 %v2701, %v281
    %v2958 = vsub.f32 %v2702, %v285
    %v2959 = vsub.f32 %v2703, %v287
    %v2960 = vsub.f32 %v2704, %v291
    %v2961 = vsub.f32 %v2705, %v293
    %v2962 = vsub.f32 %v2706, %v297
    %v2963 = vsub.f32 %v2707, %v299
    %v2964 = vsub.f32 %v2708, %v303
    %v2965 = vsub.f32 %v2709, %v305
    %v2966 = vsub.f32 %v2710, %v309
    %v2967 = vsub.f32 %v2711, %v311
    %v2968 = vsub.f32 %v2712, %v315
    %v2969 = vsub.f32 %v2713, %v317
    %v2970 = vsub.f32 %v2714, %v321
    %v2971 = vsub.f32 %v2715, %v323
    %v2972 = vsub.f32 %v2716, %v327
    %v2973 = vsub.f32 %v2717, %v329
    %v2974 = vsub.f32 %v2718, %v333
    %v2975 = vsub.f32 %v2719, %v335
    %v2976 = vsub.f32 %v2720, %v339
    %v2977 = vsub.f32 %v2721, %v341
    %v2978 = vsub.f32 %v2722, %v249
    %v2979 = vsub.f32 %v2723, %v251
    %v2980 = vsub.f32 %v2724, %v255
    %v2981 = vsub.f32 %v2725, %v257
    %v2982 = vsub.f32 %v2726, %v261
    %v2983 = vsub.f32 %v2727, %v263
    %v2984 = vsub.f32 %v2728, %v267
    %v2985 = vsub.f32 %v2729, %v269
    %v2986 = vsub.f32 %v2730, %v273
    %v2987 = vsub.f32 %v2731, %v275
    %v2988 = vsub.f32 %v2732, %v279
    %v2989 = vsub.f32 %v2733, %v281
    %v2990 = vsub.f32 %v2734, %v285
    %v2991 = vsub.f32 %v2735, %v287
    %v2992 = vsub.f32 %v2736, %v291
    %v2993 = vsub.f32 %v2737, %v293
    %v2994 = vsub.f32 %v2738, %v297
    %v2995 = vsub.f32 %v2739, %v299
    %v2996 = vsub.f32 %v2740, %v303
    %v2997 = vsub.f32 %v2741, %v305
    %v2998 = vsub.f32 %v2742, %v309
    %v2999 = vsub.f32 %v2743, %v311
    %v3000 = vsub.f32 %v2744, %v315
    %v3001 = vsub.f32 %v2745, %v317
    %v3002 = vsub.f32 %v2746, %v321
    %v3003 = vsub.f32 %v2747, %v323
    %v3004 = vsub.f32 %v2748, %v327
    %v3005 = vsub.f32 %v2749, %v329
    %v3006 = vsub.f32 %v2750, %v333
    %v3007 = vsub.f32 %v2751, %v335
    %v3008 = vsub.f32 %v2752, %v339
    %v3009 = vsub.f32 %v2753, %v341
    %v3010 = vsub.f32 %v2754, %v249
    %v3011 = vsub.f32 %v2755, %v251
    %v3012 = vsub.f32 %v2756, %v255
    %v3013 = vsub.f32 %v2757, %v257
    %v3014 = vsub.f32 %v2758, %v261
    %v3015 = vsub.f32 %v2759, %v263
    %v3016 = vsub.f32 %v2760, %v267
    %v3017 = vsub.f32 %v2761, %v269
    %v3018 = vsub.f32 %v2762, %v273
    %v3019 = vsub.f32 %v2763, %v275
    %v3020 = vsub.f32 %v2764, %v279
    %v3021 = vsub.f32 %v2765, %v281
    %v3022 = vsub.f32 %v2766, %v285
    %v3023 = vsub.f32 %v2767, %v287
    %v3024 = vsub.f32 %v2768, %v291
    %v3025 = vsub.f32 %v2769, %v293
    %v3026 = vsub.f32 %v2770, %v297
    %v3027 = vsub.f32 %v2771, %v299
    %v3028 = vsub.f32 %v2772, %v303
    %v3029 = vsub.f32 %v2773, %v305
    %v3030 = vsub.f32 %v2774, %v309
    %v3031 = vsub.f32 %v2775, %v311
    %v3032 = vsub.f32 %v2776, %v315
    %v3033 = vsub.f32 %v2777, %v317
    %v3034 = vsub.f32 %v2778, %v321
    %v3035 = vsub.f32 %v2779, %v323
    %v3036 = vsub.f32 %v2780, %v327
    %v3037 = vsub.f32 %v2781, %v329
    %v3038 = vsub.f32 %v2782, %v333
    %v3039 = vsub.f32 %v2783, %v335
    %v3040 = vsub.f32 %v2784, %v339
    %v3041 = vsub.f32 %v2785, %v341
    %v3042 = vsub.f32 %v2786, %v249
    %v3043 = vsub.f32 %v2787, %v251
    %v3044 = vsub.f32 %v2788, %v255
    %v3045 = vsub.f32 %v2789, %v257
    %v3046 = vsub.f32 %v2790, %v261
    %v3047 = vsub.f32 %v2791, %v263
    %v3048 = vsub.f32 %v2792, %v267
    %v3049 = vsub.f32 %v2793, %v269
    %v3050 = vsub.f32 %v2794, %v273
    %v3051 = vsub.f32 %v2795, %v275
    %v3052 = vsub.f32 %v2796, %v279
    %v3053 = vsub.f32 %v2797, %v281
    %v3054 = vsub.f32 %v2798, %v285
    %v3055 = vsub.f32 %v2799, %v287
    %v3056 = vsub.f32 %v2800, %v291
    %v3057 = vsub.f32 %v2801, %v293
    %v3058 = vsub.f32 %v2802, %v297
    %v3059 = vsub.f32 %v2803, %v299
    %v3060 = vsub.f32 %v2804, %v303
    %v3061 = vsub.f32 %v2805, %v305
    %v3062 = vsub.f32 %v2806, %v309
    %v3063 = vsub.f32 %v2807, %v311
    %v3064 = vsub.f32 %v2808, %v315
    %v3065 = vsub.f32 %v2809, %v317
    %v3066 = vsub.f32 %v2810, %v321
    %v3067 = vsub.f32 %v2811, %v323
    %v3068 = vsub.f32 %v2812, %v327
    %v3069 = vsub.f32 %v2813, %v329
    %v3070 = vsub.f32 %v2814, %v333
    %v3071 = vsub.f32 %v2815, %v335
    %v3072 = vsub.f32 %v2816, %v339
    %v3073 = vsub.f32 %v2817, %v341
    %v3074 = vsub.f32 %v2818, %v249
    %v3075 = vsub.f32 %v2819, %v251
    %v3076 = vsub.f32 %v2820, %v255
    %v3077 = vsub.f32 %v2821, %v257
    %v3078 = vsub.f32 %v2822, %v261
    %v3079 = vsub.f32 %v2823, %v263
    %v3080 = vsub.f32 %v2824, %v267
    %v3081 = vsub.f32 %v2825, %v269
    %v3082 = vsub.f32 %v2826, %v273
    %v3083 = vsub.f32 %v2827, %v275
    %v3084 = vsub.f32 %v2828, %v279
    %v3085 = vsub.f32 %v2829, %v281
    %v3086 = vsub.f32 %v2830, %v285
    %v3087 = vsub.f32 %v2831, %v287
    %v3088 = vsub.f32 %v2832, %v291
    %v3089 = vsub.f32 %v2833, %v293
    %v3090 = vsub.f32 %v2834, %v297
    %v3091 = vsub.f32 %v2835, %v299
    %v3092 = vsub.f32 %v2836, %v303
    %v3093 = vsub.f32 %v2837, %v305
    %v3094 = vsub.f32 %v2838, %v309
    %v3095 = vsub.f32 %v2839, %v311
    %v3096 = vsub.f32 %v2840, %v315
    %v3097 = vsub.f32 %v2841, %v317
    %v3098 = vsub.f32 %v2842, %v321
    %v3099 = vsub.f32 %v2843, %v323
    %v3100 = vsub.f32 %v2844, %v327
    %v3101 = vsub.f32 %v2845, %v329
    %v3102 = vsub.f32 %v2846, %v333
    %v3103 = vsub.f32 %v2847, %v335
    %v3104 = vsub.f32 %v2848, %v339
    %v3105 = vsub.f32 %v2849, %v341
    %v3106 = vsub.f32 %v2850, %v249
    %v3107 = vsub.f32 %v2851, %v251
    %v3108 = vsub.f32 %v2852, %v255
    %v3109 = vsub.f32 %v2853, %v257
    %v3110 = vsub.f32 %v2854, %v261
    %v3111 = vsub.f32 %v2855, %v263
    %v3112 = vsub.f32 %v2856, %v267
    %v3113 = vsub.f32 %v2857, %v269
    %v3114 = vsub.f32 %v2858, %v273
    %v3115 = vsub.f32 %v2859, %v275
    %v3116 = vsub.f32 %v2860, %v279
    %v3117 = vsub.f32 %v2861, %v281
    %v3118 = vsub.f32 %v2862, %v285
    %v3119 = vsub.f32 %v2863, %v287
    %v3120 = vsub.f32 %v2864, %v291
    %v3121 = vsub.f32 %v2865, %v293
    %v3122 = vsub.f32 %v2866, %v297
    %v3123 = vsub.f32 %v2867, %v299
    %v3124 = vsub.f32 %v2868, %v303
    %v3125 = vsub.f32 %v2869, %v305
    %v3126 = vsub.f32 %v2870, %v309
    %v3127 = vsub.f32 %v2871, %v311
    %v3128 = vsub.f32 %v2872, %v315
    %v3129 = vsub.f32 %v2873, %v317
    %v3130 = vsub.f32 %v2874, %v321
    %v3131 = vsub.f32 %v2875, %v323
    %v3132 = vsub.f32 %v2876, %v327
    %v3133 = vsub.f32 %v2877, %v329
    %v3134 = vsub.f32 %v2878, %v333
    %v3135 = vsub.f32 %v2879, %v335
    %v3136 = vsub.f32 %v2880, %v339
    %v3137 = vsub.f32 %v2881, %v341
    %v3138 = vsub.f32 %v2882, %v249
    %v3139 = vsub.f32 %v2883, %v251
    %v3140 = vsub.f32 %v2884, %v255
    %v3141 = vsub.f32 %v2885, %v257
    %v3142 = vsub.f32 %v2886, %v261
    %v3143 = vsub.f32 %v2887, %v263
    %v3144 = vsub.f32 %v2888, %v267
    %v3145 = vsub.f32 %v2889, %v269
    %v3146 = vsub.f32 %v2890, %v273
    %v3147 = vsub.f32 %v2891, %v275
    %v3148 = vsub.f32 %v2892, %v279
    %v3149 = vsub.f32 %v2893, %v281
    %v3150 = vsub.f32 %v2894, %v285
    %v3151 = vsub.f32 %v2895, %v287
    %v3152 = vsub.f32 %v2896, %v291
    %v3153 = vsub.f32 %v2897, %v293
    %v3154 = vsub.f32 %v2898, %v297
    %v3155 = vsub.f32 %v2899, %v299
    %v3156 = vsub.f32 %v2900, %v303
    %v3157 = vsub.f32 %v2901, %v305
    %v3158 = vsub.f32 %v2902, %v309
    %v3159 = vsub.f32 %v2903, %v311
    %v3160 = vsub.f32 %v2904, %v315
    %v3161 = vsub.f32 %v2905, %v317
    %v3162 = vsub.f32 %v2906, %v321
    %v3163 = vsub.f32 %v2907, %v323
    %v3164 = vsub.f32 %v2908, %v327
    %v3165 = vsub.f32 %v2909, %v329
    %v3166 = vsub.f32 %v2910, %v333
    %v3167 = vsub.f32 %v2911, %v335
    %v3168 = vsub.f32 %v2912, %v339
    %v3169 = vsub.f32 %v2913, %v341
    %v3170 = vmul.f32 %v2914, %v2914
    %v3171 = vmul.f32 %v2915, %v2915
    %v3172 = vmul.f32 %v2916, %v2916
    %v3173 = vmul.f32 %v2917, %v2917
    %v3174 = vmul.f32 %v2918, %v2918
    %v3175 = vmul.f32 %v2919, %v2919
    %v3176 = vmul.f32 %v2920, %v2920
    %v3177 = vmul.f32 %v2921, %v2921
    %v3178 = vmul.f32 %v2922, %v2922
    %v3179 = vmul.f32 %v2923, %v2923
    %v3180 = vmul.f32 %v2924, %v2924
    %v3181 = vmul.f32 %v2925, %v2925
    %v3182 = vmul.f32 %v2926, %v2926
    %v3183 = vmul.f32 %v2927, %v2927
    %v3184 = vmul.f32 %v2928, %v2928
    %v3185 = vmul.f32 %v2929, %v2929
    %v3186 = vmul.f32 %v2930, %v2930
    %v3187 = vmul.f32 %v2931, %v2931
    %v3188 = vmul.f32 %v2932, %v2932
    %v3189 = vmul.f32 %v2933, %v2933
    %v3190 = vmul.f32 %v2934, %v2934
    %v3191 = vmul.f32 %v2935, %v2935
    %v3192 = vmul.f32 %v2936, %v2936
    %v3193 = vmul.f32 %v2937, %v2937
    %v3194 = vmul.f32 %v2938, %v2938
    %v3195 = vmul.f32 %v2939, %v2939
    %v3196 = vmul.f32 %v2940, %v2940
    %v3197 = vmul.f32 %v2941, %v2941
    %v3198 = vmul.f32 %v2942, %v2942
    %v3199 = vmul.f32 %v2943, %v2943
    %v3200 = vmul.f32 %v2944, %v2944
    %v3201 = vmul.f32 %v2945, %v2945
    %v3202 = vmul.f32 %v2946, %v2946
    %v3203 = vmul.f32 %v2947, %v2947
    %v3204 = vmul.f32 %v2948, %v2948
    %v3205 = vmul.f32 %v2949, %v2949
    %v3206 = vmul.f32 %v2950, %v2950
    %v3207 = vmul.f32 %v2951, %v2951
    %v3208 = vmul.f32 %v2952, %v2952
    %v3209 = vmul.f32 %v2953, %v2953
    %v3210 = vmul.f32 %v2954, %v2954
    %v3211 = vmul.f32 %v2955, %v2955
    %v3212 = vmul.f32 %v2956, %v2956
    %v3213 = vmul.f32 %v2957, %v2957
    %v3214 = vmul.f32 %v2958, %v2958
    %v3215 = vmul.f32 %v2959, %v2959
    %v3216 = vmul.f32 %v2960, %v2960
    %v3217 = vmul.f32 %v2961, %v2961
    %v3218 = vmul.f32 %v2962, %v2962
    %v3219 = vmul.f32 %v2963, %v2963
    %v3220 = vmul.f32 %v2964, %v2964
    %v3221 = vmul.f32 %v2965, %v2965
    %v3222 = vmul.f32 %v2966, %v2966
    %v3223 = vmul.f32 %v2967, %v2967
    %v3224 = vmul.f32 %v2968, %v2968
    %v3225 = vmul.f32 %v2969, %v2969
    %v3226 = vmul.f32 %v2970, %v2970
    %v3227 = vmul.f32 %v2971, %v2971
    %v3228 = vmul.f32 %v2972, %v2972
    %v3229 = vmul.f32 %v2973, %v2973
    %v3230 = vmul.f32 %v2974, %v2974
    %v3231 = vmul.f32 %v2975, %v2975
    %v3232 = vmul.f32 %v2976, %v2976
    %v3233 = vmul.f32 %v2977, %v2977
    %v3234 = vmul.f32 %v2978, %v2978
    %v3235 = vmul.f32 %v2979, %v2979
    %v3236 = vmul.f32 %v2980, %v2980
    %v3237 = vmul.f32 %v2981, %v2981
    %v3238 = vmul.f32 %v2982, %v2982
    %v3239 = vmul.f32 %v2983, %v2983
    %v3240 = vmul.f32 %v2984, %v2984
    %v3241 = vmul.f32 %v2985, %v2985
    %v3242 = vmul.f32 %v2986, %v2986
    %v3243 = vmul.f32 %v2987, %v2987
    %v3244 = vmul.f32 %v2988, %v2988
    %v3245 = vmul.f32 %v2989, %v2989
    %v3246 = vmul.f32 %v2990, %v2990
    %v3247 = vmul.f32 %v2991, %v2991
    %v3248 = vmul.f32 %v2992, %v2992
    %v3249 = vmul.f32 %v2993, %v2993
    %v3250 = vmul.f32 %v2994, %v2994
    %v3251 = vmul.f32 %v2995, %v2995
    %v3252 = vmul.f32 %v2996, %v2996
    %v3253 = vmul.f32 %v2997, %v2997
    %v3254 = vmul.f32 %v2998, %v2998
    %v3255 = vmul.f32 %v2999, %v2999
    %v3256 = vmul.f32 %v3000, %v3000
    %v3257 = vmul.f32 %v3001, %v3001
    %v3258 = vmul.f32 %v3002, %v3002
    %v3259 = vmul.f32 %v3003, %v3003
    %v3260 = vmul.f32 %v3004, %v3004
    %v3261 = vmul.f32 %v3005, %v3005
    %v3262 = vmul.f32 %v3006, %v3006
    %v3263 = vmul.f32 %v3007, %v3007
    %v3264 = vmul.f32 %v3008, %v3008
    %v3265 = vmul.f32 %v3009, %v3009
    %v3266 = vmul.f32 %v3010, %v3010
    %v3267 = vmul.f32 %v3011, %v3011
    %v3268 = vmul.f32 %v3012, %v3012
    %v3269 = vmul.f32 %v3013, %v3013
    %v3270 = vmul.f32 %v3014, %v3014
    %v3271 = vmul.f32 %v3015, %v3015
    %v3272 = vmul.f32 %v3016, %v3016
    %v3273 = vmul.f32 %v3017, %v3017
    %v3274 = vmul.f32 %v3018, %v3018
    %v3275 = vmul.f32 %v3019, %v3019
    %v3276 = vmul.f32 %v3020, %v3020
    %v3277 = vmul.f32 %v3021, %v3021
    %v3278 = vmul.f32 %v3022, %v3022
    %v3279 = vmul.f32 %v3023, %v3023
    %v3280 = vmul.f32 %v3024, %v3024
    %v3281 = vmul.f32 %v3025, %v3025
    %v3282 = vmul.f32 %v3026, %v3026
    %v3283 = vmul.f32 %v3027, %v3027
    %v3284 = vmul.f32 %v3028, %v3028
    %v3285 = vmul.f32 %v3029, %v3029
    %v3286 = vmul.f32 %v3030, %v3030
    %v3287 = vmul.f32 %v3031, %v3031
    %v3288 = vmul.f32 %v3032, %v3032
    %v3289 = vmul.f32 %v3033, %v3033
    %v3290 = vmul.f32 %v3034, %v3034
    %v3291 = vmul.f32 %v3035, %v3035
    %v3292 = vmul.f32 %v3036, %v3036
    %v3293 = vmul.f32 %v3037, %v3037
    %v3294 = vmul.f32 %v3038, %v3038
    %v3295 = vmul.f32 %v3039, %v3039
    %v3296 = vmul.f32 %v3040, %v3040
    %v3297 = vmul.f32 %v3041, %v3041
    %v3298 = vmul.f32 %v3042, %v3042
    %v3299 = vmul.f32 %v3043, %v3043
    %v3300 = vmul.f32 %v3044, %v3044
    %v3301 = vmul.f32 %v3045, %v3045
    %v3302 = vmul.f32 %v3046, %v3046
    %v3303 = vmul.f32 %v3047, %v3047
    %v3304 = vmul.f32 %v3048, %v3048
    %v3305 = vmul.f32 %v3049, %v3049
    %v3306 = vmul.f32 %v3050, %v3050
    %v3307 = vmul.f32 %v3051, %v3051
    %v3308 = vmul.f32 %v3052, %v3052
    %v3309 = vmul.f32 %v3053, %v3053
    %v3310 = vmul.f32 %v3054, %v3054
    %v3311 = vmul.f32 %v3055, %v3055
    %v3312 = vmul.f32 %v3056, %v3056
    %v3313 = vmul.f32 %v3057, %v3057
    %v3314 = vmul.f32 %v3058, %v3058
    %v3315 = vmul.f32 %v3059, %v3059
    %v3316 = vmul.f32 %v3060, %v3060
    %v3317 = vmul.f32 %v3061, %v3061
    %v3318 = vmul.f32 %v3062, %v3062
    %v3319 = vmul.f32 %v3063, %v3063
    %v3320 = vmul.f32 %v3064, %v3064
    %v3321 = vmul.f32 %v3065, %v3065
    %v3322 = vmul.f32 %v3066, %v3066
    %v3323 = vmul.f32 %v3067, %v3067
    %v3324 = vmul.f32 %v3068, %v3068
    %v3325 = vmul.f32 %v3069, %v3069
    %v3326 = vmul.f32 %v3070, %v3070
    %v3327 = vmul.f32 %v3071, %v3071
    %v3328 = vmul.f32 %v3072, %v3072
    %v3329 = vmul.f32 %v3073, %v3073
    %v3330 = vmul.f32 %v3074, %v3074
    %v3331 = vmul.f32 %v3075, %v3075
    %v3332 = vmul.f32 %v3076, %v3076
    %v3333 = vmul.f32 %v3077, %v3077
    %v3334 = vmul.f32 %v3078, %v3078
    %v3335 = vmul.f32 %v3079, %v3079
    %v3336 = vmul.f32 %v3080, %v3080
    %v3337 = vmul.f32 %v3081, %v3081
    %v3338 = vmul.f32 %v3082, %v3082
    %v3339 = vmul.f32 %v3083, %v3083
    %v3340 = vmul.f32 %v3084, %v3084
    %v3341 = vmul.f32 %v3085, %v3085
    %v3342 = vmul.f32 %v3086, %v3086
    %v3343 = vmul.f32 %v3087, %v3087
    %v3344 = vmul.f32 %v3088, %v3088
    %v3345 = vmul.f32 %v3089, %v3089
    %v3346 = vmul.f32 %v3090, %v3090
    %v3347 = vmul.f32 %v3091, %v3091
    %v3348 = vmul.f32 %v3092, %v3092
    %v3349 = vmul.f32 %v3093, %v3093
    %v3350 = vmul.f32 %v3094, %v3094
    %v3351 = vmul.f32 %v3095, %v3095
    %v3352 = vmul.f32 %v3096, %v3096
    %v3353 = vmul.f32 %v3097, %v3097
    %v3354 = vmul.f32 %v3098, %v3098
    %v3355 = vmul.f32 %v3099, %v3099
    %v3356 = vmul.f32 %v3100, %v3100
    %v3357 = vmul.f32 %v3101, %v3101
    %v3358 = vmul.f32 %v3102, %v3102
    %v3359 = vmul.f32 %v3103, %v3103
    %v3360 = vmul.f32 %v3104, %v3104
    %v3361 = vmul.f32 %v3105, %v3105
    %v3362 = vmul.f32 %v3106, %v3106
    %v3363 = vmul.f32 %v3107, %v3107
    %v3364 = vmul.f32 %v3108, %v3108
    %v3365 = vmul.f32 %v3109, %v3109
    %v3366 = vmul.f32 %v3110, %v3110
    %v3367 = vmul.f32 %v3111, %v3111
    %v3368 = vmul.f32 %v3112, %v3112
    %v3369 = vmul.f32 %v3113, %v3113
    %v3370 = vmul.f32 %v3114, %v3114
    %v3371 = vmul.f32 %v3115, %v3115
    %v3372 = vmul.f32 %v3116, %v3116
    %v3373 = vmul.f32 %v3117, %v3117
    %v3374 = vmul.f32 %v3118, %v3118
    %v3375 = vmul.f32 %v3119, %v3119
    %v3376 = vmul.f32 %v3120, %v3120
    %v3377 = vmul.f32 %v3121, %v3121
    %v3378 = vmul.f32 %v3122, %v3122
    %v3379 = vmul.f32 %v3123, %v3123
    %v3380 = vmul.f32 %v3124, %v3124
    %v3381 = vmul.f32 %v3125, %v3125
    %v3382 = vmul.f32 %v3126, %v3126
    %v3383 = vmul.f32 %v3127, %v3127
    %v3384 = vmul.f32 %v3128, %v3128
    %v3385 = vmul.f32 %v3129, %v3129
    %v3386 = vmul.f32 %v3130, %v3130
    %v3387 = vmul.f32 %v3131, %v3131
    %v3388 = vmul.f32 %v3132, %v3132
    %v3389 = vmul.f32 %v3133, %v3133
    %v3390 = vmul.f32 %v3134, %v3134
    %v3391 = vmul.f32 %v3135, %v3135
    %v3392 = vmul.f32 %v3136, %v3136
    %v3393 = vmul.f32 %v3137, %v3137
    %v3394 = vmul.f32 %v3138, %v3138
    %v3395 = vmul.f32 %v3139, %v3139
    %v3396 = vmul.f32 %v3140, %v3140
    %v3397 = vmul.f32 %v3141, %v3141
    %v3398 = vmul.f32 %v3142, %v3142
    %v3399 = vmul.f32 %v3143, %v3143
    %v3400 = vmul.f32 %v3144, %v3144
    %v3401 = vmul.f32 %v3145, %v3145
    %v3402 = vmul.f32 %v3146, %v3146
    %v3403 = vmul.f32 %v3147, %v3147
    %v3404 = vmul.f32 %v3148, %v3148
    %v3405 = vmul.f32 %v3149, %v3149
    %v3406 = vmul.f32 %v3150, %v3150
    %v3407 = vmul.f32 %v3151, %v3151
    %v3408 = vmul.f32 %v3152, %v3152
    %v3409 = vmul.f32 %v3153, %v3153
    %v3410 = vmul.f32 %v3154, %v3154
    %v3411 = vmul.f32 %v3155, %v3155
    %v3412 = vmul.f32 %v3156, %v3156
    %v3413 = vmul.f32 %v3157, %v3157
    %v3414 = vmul.f32 %v3158, %v3158
    %v3415 = vmul.f32 %v3159, %v3159
    %v3416 = vmul.f32 %v3160, %v3160
    %v3417 = vmul.f32 %v3161, %v3161
    %v3418 = vmul.f32 %v3162, %v3162
    %v3419 = vmul.f32 %v3163, %v3163
    %v3420 = vmul.f32 %v3164, %v3164
    %v3421 = vmul.f32 %v3165, %v3165
    %v3422 = vmul.f32 %v3166, %v3166
    %v3423 = vmul.f32 %v3167, %v3167
    %v3424 = vmul.f32 %v3168, %v3168
    %v3425 = vmul.f32 %v3169, %v3169
    %v3426 = vadd.f32 %v3170, %v3171
    %3427 = vadd.xlane.f32.xlu0 %v3426
    %v3428 = vpop.xlane.xlu0 %3427
    %v3429 = vadd.f32 %v3172, %v3173
    %3430 = vadd.xlane.f32.xlu0 %v3429
    %v3431 = vpop.xlane.xlu0 %3430
    %v3432 = vadd.f32 %v3174, %v3175
    %3433 = vadd.xlane.f32.xlu0 %v3432
    %v3434 = vpop.xlane.xlu0 %3433
    %v3435 = vadd.f32 %v3176, %v3177
    %3436 = vadd.xlane.f32.xlu0 %v3435
    %v3437 = vpop.xlane.xlu0 %3436
    %v3438 = vadd.f32 %v3178, %v3179
    %3439 = vadd.xlane.f32.xlu0 %v3438
    %v3440 = vpop.xlane.xlu0 %3439
    %v3441 = vadd.f32 %v3180, %v3181
    %3442 = vadd.xlane.f32.xlu0 %v3441
    %v3443 = vpop.xlane.xlu0 %3442
    %v3444 = vadd.f32 %v3182, %v3183
    %3445 = vadd.xlane.f32.xlu0 %v3444
    %v3446 = vpop.xlane.xlu0 %3445
    %v3447 = vadd.f32 %v3184, %v3185
    %3448 = vadd.xlane.f32.xlu0 %v3447
    %v3449 = vpop.xlane.xlu0 %3448
    %v3450 = vadd.f32 %v3186, %v3187
    %3451 = vadd.xlane.f32.xlu0 %v3450
    %v3452 = vpop.xlane.xlu0 %3451
    %v3453 = vadd.f32 %v3188, %v3189
    %3454 = vadd.xlane.f32.xlu0 %v3453
    %v3455 = vpop.xlane.xlu0 %3454
    %v3456 = vadd.f32 %v3190, %v3191
    %3457 = vadd.xlane.f32.xlu0 %v3456
    %v3458 = vpop.xlane.xlu0 %3457
    %v3459 = vadd.f32 %v3192, %v3193
    %3460 = vadd.xlane.f32.xlu0 %v3459
    %v3461 = vpop.xlane.xlu0 %3460
    %v3462 = vadd.f32 %v3194, %v3195
    %3463 = vadd.xlane.f32.xlu0 %v3462
    %v3464 = vpop.xlane.xlu0 %3463
    %v3465 = vadd.f32 %v3196, %v3197
    %3466 = vadd.xlane.f32.xlu0 %v3465
    %v3467 = vpop.xlane.xlu0 %3466
    %v3468 = vadd.f32 %v3198, %v3199
    %3469 = vadd.xlane.f32.xlu0 %v3468
    %v3470 = vpop.xlane.xlu0 %3469
    %v3471 = vadd.f32 %v3200, %v3201
    %3472 = vadd.xlane.f32.xlu0 %v3471
    %v3473 = vpop.xlane.xlu0 %3472
    %v3474 = vadd.f32 %v3202, %v3203
    %3475 = vadd.xlane.f32.xlu0 %v3474
    %v3476 = vpop.xlane.xlu0 %3475
    %v3477 = vadd.f32 %v3204, %v3205
    %3478 = vadd.xlane.f32.xlu0 %v3477
    %v3479 = vpop.xlane.xlu0 %3478
    %v3480 = vadd.f32 %v3206, %v3207
    %3481 = vadd.xlane.f32.xlu0 %v3480
    %v3482 = vpop.xlane.xlu0 %3481
    %v3483 = vadd.f32 %v3208, %v3209
    %3484 = vadd.xlane.f32.xlu0 %v3483
    %v3485 = vpop.xlane.xlu0 %3484
    %v3486 = vadd.f32 %v3210, %v3211
    %3487 = vadd.xlane.f32.xlu0 %v3486
    %v3488 = vpop.xlane.xlu0 %3487
    %v3489 = vadd.f32 %v3212, %v3213
    %3490 = vadd.xlane.f32.xlu0 %v3489
    %v3491 = vpop.xlane.xlu0 %3490
    %v3492 = vadd.f32 %v3214, %v3215
    %3493 = vadd.xlane.f32.xlu0 %v3492
    %v3494 = vpop.xlane.xlu0 %3493
    %v3495 = vadd.f32 %v3216, %v3217
    %3496 = vadd.xlane.f32.xlu0 %v3495
    %v3497 = vpop.xlane.xlu0 %3496
    %v3498 = vadd.f32 %v3218, %v3219
    %3499 = vadd.xlane.f32.xlu0 %v3498
    %v3500 = vpop.xlane.xlu0 %3499
    %v3501 = vadd.f32 %v3220, %v3221
    %3502 = vadd.xlane.f32.xlu0 %v3501
    %v3503 = vpop.xlane.xlu0 %3502
    %v3504 = vadd.f32 %v3222, %v3223
    %3505 = vadd.xlane.f32.xlu0 %v3504
    %v3506 = vpop.xlane.xlu0 %3505
    %v3507 = vadd.f32 %v3224, %v3225
    %3508 = vadd.xlane.f32.xlu0 %v3507
    %v3509 = vpop.xlane.xlu0 %3508
    %v3510 = vadd.f32 %v3226, %v3227
    %3511 = vadd.xlane.f32.xlu0 %v3510
    %v3512 = vpop.xlane.xlu0 %3511
    %v3513 = vadd.f32 %v3228, %v3229
    %3514 = vadd.xlane.f32.xlu0 %v3513
    %v3515 = vpop.xlane.xlu0 %3514
    %v3516 = vadd.f32 %v3230, %v3231
    %3517 = vadd.xlane.f32.xlu0 %v3516
    %v3518 = vpop.xlane.xlu0 %3517
    %v3519 = vadd.f32 %v3232, %v3233
    %3520 = vadd.xlane.f32.xlu0 %v3519
    %v3521 = vpop.xlane.xlu0 %3520
    %v3522 = vadd.f32 %v3234, %v3235
    %3523 = vadd.xlane.f32.xlu0 %v3522
    %v3524 = vpop.xlane.xlu0 %3523
    %v3525 = vadd.f32 %v3236, %v3237
    %3526 = vadd.xlane.f32.xlu0 %v3525
    %v3527 = vpop.xlane.xlu0 %3526
    %v3528 = vadd.f32 %v3238, %v3239
    %3529 = vadd.xlane.f32.xlu0 %v3528
    %v3530 = vpop.xlane.xlu0 %3529
    %v3531 = vadd.f32 %v3240, %v3241
    %3532 = vadd.xlane.f32.xlu0 %v3531
    %v3533 = vpop.xlane.xlu0 %3532
    %v3534 = vadd.f32 %v3242, %v3243
    %3535 = vadd.xlane.f32.xlu0 %v3534
    %v3536 = vpop.xlane.xlu0 %3535
    %v3537 = vadd.f32 %v3244, %v3245
    %3538 = vadd.xlane.f32.xlu0 %v3537
    %v3539 = vpop.xlane.xlu0 %3538
    %v3540 = vadd.f32 %v3246, %v3247
    %3541 = vadd.xlane.f32.xlu0 %v3540
    %v3542 = vpop.xlane.xlu0 %3541
    %v3543 = vadd.f32 %v3248, %v3249
    %3544 = vadd.xlane.f32.xlu0 %v3543
    %v3545 = vpop.xlane.xlu0 %3544
    %v3546 = vadd.f32 %v3250, %v3251
    %3547 = vadd.xlane.f32.xlu0 %v3546
    %v3548 = vpop.xlane.xlu0 %3547
    %v3549 = vadd.f32 %v3252, %v3253
    %3550 = vadd.xlane.f32.xlu0 %v3549
    %v3551 = vpop.xlane.xlu0 %3550
    %v3552 = vadd.f32 %v3254, %v3255
    %3553 = vadd.xlane.f32.xlu0 %v3552
    %v3554 = vpop.xlane.xlu0 %3553
    %v3555 = vadd.f32 %v3256, %v3257
    %3556 = vadd.xlane.f32.xlu0 %v3555
    %v3557 = vpop.xlane.xlu0 %3556
    %v3558 = vadd.f32 %v3258, %v3259
    %3559 = vadd.xlane.f32.xlu0 %v3558
    %v3560 = vpop.xlane.xlu0 %3559
    %v3561 = vadd.f32 %v3260, %v3261
    %3562 = vadd.xlane.f32.xlu0 %v3561
    %v3563 = vpop.xlane.xlu0 %3562
    %v3564 = vadd.f32 %v3262, %v3263
    %3565 = vadd.xlane.f32.xlu0 %v3564
    %v3566 = vpop.xlane.xlu0 %3565
    %v3567 = vadd.f32 %v3264, %v3265
    %3568 = vadd.xlane.f32.xlu0 %v3567
    %v3569 = vpop.xlane.xlu0 %3568
    %v3570 = vadd.f32 %v3266, %v3267
    %3571 = vadd.xlane.f32.xlu0 %v3570
    %v3572 = vpop.xlane.xlu0 %3571
    %v3573 = vadd.f32 %v3268, %v3269
    %3574 = vadd.xlane.f32.xlu0 %v3573
    %v3575 = vpop.xlane.xlu0 %3574
    %v3576 = vadd.f32 %v3270, %v3271
    %3577 = vadd.xlane.f32.xlu0 %v3576
    %v3578 = vpop.xlane.xlu0 %3577
    %v3579 = vadd.f32 %v3272, %v3273
    %3580 = vadd.xlane.f32.xlu0 %v3579
    %v3581 = vpop.xlane.xlu0 %3580
    %v3582 = vadd.f32 %v3274, %v3275
    %3583 = vadd.xlane.f32.xlu0 %v3582
    %v3584 = vpop.xlane.xlu0 %3583
    %v3585 = vadd.f32 %v3276, %v3277
    %3586 = vadd.xlane.f32.xlu0 %v3585
    %v3587 = vpop.xlane.xlu0 %3586
    %v3588 = vadd.f32 %v3278, %v3279
    %3589 = vadd.xlane.f32.xlu0 %v3588
    %v3590 = vpop.xlane.xlu0 %3589
    %v3591 = vadd.f32 %v3280, %v3281
    %3592 = vadd.xlane.f32.xlu0 %v3591
    %v3593 = vpop.xlane.xlu0 %3592
    %v3594 = vadd.f32 %v3282, %v3283
    %3595 = vadd.xlane.f32.xlu0 %v3594
    %v3596 = vpop.xlane.xlu0 %3595
    %v3597 = vadd.f32 %v3284, %v3285
    %3598 = vadd.xlane.f32.xlu0 %v3597
    %v3599 = vpop.xlane.xlu0 %3598
    %v3600 = vadd.f32 %v3286, %v3287
    %3601 = vadd.xlane.f32.xlu0 %v3600
    %v3602 = vpop.xlane.xlu0 %3601
    %v3603 = vadd.f32 %v3288, %v3289
    %3604 = vadd.xlane.f32.xlu0 %v3603
    %v3605 = vpop.xlane.xlu0 %3604
    %v3606 = vadd.f32 %v3290, %v3291
    %3607 = vadd.xlane.f32.xlu0 %v3606
    %v3608 = vpop.xlane.xlu0 %3607
    %v3609 = vadd.f32 %v3292, %v3293
    %3610 = vadd.xlane.f32.xlu0 %v3609
    %v3611 = vpop.xlane.xlu0 %3610
    %v3612 = vadd.f32 %v3294, %v3295
    %3613 = vadd.xlane.f32.xlu0 %v3612
    %v3614 = vpop.xlane.xlu0 %3613
    %v3615 = vadd.f32 %v3296, %v3297
    %3616 = vadd.xlane.f32.xlu0 %v3615
    %v3617 = vpop.xlane.xlu0 %3616
    %v3618 = vadd.f32 %v3298, %v3299
    %3619 = vadd.xlane.f32.xlu0 %v3618
    %v3620 = vpop.xlane.xlu0 %3619
    %v3621 = vadd.f32 %v3300, %v3301
    %3622 = vadd.xlane.f32.xlu0 %v3621
    %v3623 = vpop.xlane.xlu0 %3622
    %v3624 = vadd.f32 %v3302, %v3303
    %3625 = vadd.xlane.f32.xlu0 %v3624
    %v3626 = vpop.xlane.xlu0 %3625
    %v3627 = vadd.f32 %v3304, %v3305
    %3628 = vadd.xlane.f32.xlu0 %v3627
    %v3629 = vpop.xlane.xlu0 %3628
    %v3630 = vadd.f32 %v3306, %v3307
    %3631 = vadd.xlane.f32.xlu0 %v3630
    %v3632 = vpop.xlane.xlu0 %3631
    %v3633 = vadd.f32 %v3308, %v3309
    %3634 = vadd.xlane.f32.xlu0 %v3633
    %v3635 = vpop.xlane.xlu0 %3634
    %v3636 = vadd.f32 %v3310, %v3311
    %3637 = vadd.xlane.f32.xlu0 %v3636
    %v3638 = vpop.xlane.xlu0 %3637
    %v3639 = vadd.f32 %v3312, %v3313
    %3640 = vadd.xlane.f32.xlu0 %v3639
    %v3641 = vpop.xlane.xlu0 %3640
    %v3642 = vadd.f32 %v3314, %v3315
    %3643 = vadd.xlane.f32.xlu0 %v3642
    %v3644 = vpop.xlane.xlu0 %3643
    %v3645 = vadd.f32 %v3316, %v3317
    %3646 = vadd.xlane.f32.xlu0 %v3645
    %v3647 = vpop.xlane.xlu0 %3646
    %v3648 = vadd.f32 %v3318, %v3319
    %3649 = vadd.xlane.f32.xlu0 %v3648
    %v3650 = vpop.xlane.xlu0 %3649
    %v3651 = vadd.f32 %v3320, %v3321
    %3652 = vadd.xlane.f32.xlu0 %v3651
    %v3653 = vpop.xlane.xlu0 %3652
    %v3654 = vadd.f32 %v3322, %v3323
    %3655 = vadd.xlane.f32.xlu0 %v3654
    %v3656 = vpop.xlane.xlu0 %3655
    %v3657 = vadd.f32 %v3324, %v3325
    %3658 = vadd.xlane.f32.xlu0 %v3657
    %v3659 = vpop.xlane.xlu0 %3658
    %v3660 = vadd.f32 %v3326, %v3327
    %3661 = vadd.xlane.f32.xlu0 %v3660
    %v3662 = vpop.xlane.xlu0 %3661
    %v3663 = vadd.f32 %v3328, %v3329
    %3664 = vadd.xlane.f32.xlu0 %v3663
    %v3665 = vpop.xlane.xlu0 %3664
    %v3666 = vadd.f32 %v3330, %v3331
    %3667 = vadd.xlane.f32.xlu0 %v3666
    %v3668 = vpop.xlane.xlu0 %3667
    %v3669 = vadd.f32 %v3332, %v3333
    %3670 = vadd.xlane.f32.xlu0 %v3669
    %v3671 = vpop.xlane.xlu0 %3670
    %v3672 = vadd.f32 %v3334, %v3335
    %3673 = vadd.xlane.f32.xlu0 %v3672
    %v3674 = vpop.xlane.xlu0 %3673
    %v3675 = vadd.f32 %v3336, %v3337
    %3676 = vadd.xlane.f32.xlu0 %v3675
    %v3677 = vpop.xlane.xlu0 %3676
    %v3678 = vadd.f32 %v3338, %v3339
    %3679 = vadd.xlane.f32.xlu0 %v3678
    %v3680 = vpop.xlane.xlu0 %3679
    %v3681 = vadd.f32 %v3340, %v3341
    %3682 = vadd.xlane.f32.xlu0 %v3681
    %v3683 = vpop.xlane.xlu0 %3682
    %v3684 = vadd.f32 %v3342, %v3343
    %3685 = vadd.xlane.f32.xlu0 %v3684
    %v3686 = vpop.xlane.xlu0 %3685
    %v3687 = vadd.f32 %v3344, %v3345
    %3688 = vadd.xlane.f32.xlu0 %v3687
    %v3689 = vpop.xlane.xlu0 %3688
    %v3690 = vadd.f32 %v3346, %v3347
    %3691 = vadd.xlane.f32.xlu0 %v3690
    %v3692 = vpop.xlane.xlu0 %3691
    %v3693 = vadd.f32 %v3348, %v3349
    %3694 = vadd.xlane.f32.xlu0 %v3693
    %v3695 = vpop.xlane.xlu0 %3694
    %v3696 = vadd.f32 %v3350, %v3351
    %3697 = vadd.xlane.f32.xlu0 %v3696
    %v3698 = vpop.xlane.xlu0 %3697
    %v3699 = vadd.f32 %v3352, %v3353
    %3700 = vadd.xlane.f32.xlu0 %v3699
    %v3701 = vpop.xlane.xlu0 %3700
    %v3702 = vadd.f32 %v3354, %v3355
    %3703 = vadd.xlane.f32.xlu0 %v3702
    %v3704 = vpop.xlane.xlu0 %3703
    %v3705 = vadd.f32 %v3356, %v3357
    %3706 = vadd.xlane.f32.xlu0 %v3705
    %v3707 = vpop.xlane.xlu0 %3706
    %v3708 = vadd.f32 %v3358, %v3359
    %3709 = vadd.xlane.f32.xlu0 %v3708
    %v3710 = vpop.xlane.xlu0 %3709
    %v3711 = vadd.f32 %v3360, %v3361
    %3712 = vadd.xlane.f32.xlu0 %v3711
    %v3713 = vpop.xlane.xlu0 %3712
    %v3714 = vadd.f32 %v3362, %v3363
    %3715 = vadd.xlane.f32.xlu0 %v3714
    %v3716 = vpop.xlane.xlu0 %3715
    %v3717 = vadd.f32 %v3364, %v3365
    %3718 = vadd.xlane.f32.xlu0 %v3717
    %v3719 = vpop.xlane.xlu0 %3718
    %v3720 = vadd.f32 %v3366, %v3367
    %3721 = vadd.xlane.f32.xlu0 %v3720
    %v3722 = vpop.xlane.xlu0 %3721
    %v3723 = vadd.f32 %v3368, %v3369
    %3724 = vadd.xlane.f32.xlu0 %v3723
    %v3725 = vpop.xlane.xlu0 %3724
    %v3726 = vadd.f32 %v3370, %v3371
    %3727 = vadd.xlane.f32.xlu0 %v3726
    %v3728 = vpop.xlane.xlu0 %3727
    %v3729 = vadd.f32 %v3372, %v3373
    %3730 = vadd.xlane.f32.xlu0 %v3729
    %v3731 = vpop.xlane.xlu0 %3730
    %v3732 = vadd.f32 %v3374, %v3375
    %3733 = vadd.xlane.f32.xlu0 %v3732
    %v3734 = vpop.xlane.xlu0 %3733
    %v3735 = vadd.f32 %v3376, %v3377
    %3736 = vadd.xlane.f32.xlu0 %v3735
    %v3737 = vpop.xlane.xlu0 %3736
    %v3738 = vadd.f32 %v3378, %v3379
    %3739 = vadd.xlane.f32.xlu0 %v3738
    %v3740 = vpop.xlane.xlu0 %3739
    %v3741 = vadd.f32 %v3380, %v3381
    %3742 = vadd.xlane.f32.xlu0 %v3741
    %v3743 = vpop.xlane.xlu0 %3742
    %v3744 = vadd.f32 %v3382, %v3383
    %3745 = vadd.xlane.f32.xlu0 %v3744
    %v3746 = vpop.xlane.xlu0 %3745
    %v3747 = vadd.f32 %v3384, %v3385
    %3748 = vadd.xlane.f32.xlu0 %v3747
    %v3749 = vpop.xlane.xlu0 %3748
    %v3750 = vadd.f32 %v3386, %v3387
    %3751 = vadd.xlane.f32.xlu0 %v3750
    %v3752 = vpop.xlane.xlu0 %3751
    %v3753 = vadd.f32 %v3388, %v3389
    %3754 = vadd.xlane.f32.xlu0 %v3753
    %v3755 = vpop.xlane.xlu0 %3754
    %v3756 = vadd.f32 %v3390, %v3391
    %3757 = vadd.xlane.f32.xlu0 %v3756
    %v3758 = vpop.xlane.xlu0 %3757
    %v3759 = vadd.f32 %v3392, %v3393
    %3760 = vadd.xlane.f32.xlu0 %v3759
    %v3761 = vpop.xlane.xlu0 %3760
    %v3762 = vadd.f32 %v3394, %v3395
    %3763 = vadd.xlane.f32.xlu0 %v3762
    %v3764 = vpop.xlane.xlu0 %3763
    %v3765 = vadd.f32 %v3396, %v3397
    %3766 = vadd.xlane.f32.xlu0 %v3765
    %v3767 = vpop.xlane.xlu0 %3766
    %v3768 = vadd.f32 %v3398, %v3399
    %3769 = vadd.xlane.f32.xlu0 %v3768
    %v3770 = vpop.xlane.xlu0 %3769
    %v3771 = vadd.f32 %v3400, %v3401
    %3772 = vadd.xlane.f32.xlu0 %v3771
    %v3773 = vpop.xlane.xlu0 %3772
    %v3774 = vadd.f32 %v3402, %v3403
    %3775 = vadd.xlane.f32.xlu0 %v3774
    %v3776 = vpop.xlane.xlu0 %3775
    %v3777 = vadd.f32 %v3404, %v3405
    %3778 = vadd.xlane.f32.xlu0 %v3777
    %v3779 = vpop.xlane.xlu0 %3778
    %v3780 = vadd.f32 %v3406, %v3407
    %3781 = vadd.xlane.f32.xlu0 %v3780
    %v3782 = vpop.xlane.xlu0 %3781
    %v3783 = vadd.f32 %v3408, %v3409
    %3784 = vadd.xlane.f32.xlu0 %v3783
    %v3785 = vpop.xlane.xlu0 %3784
    %v3786 = vadd.f32 %v3410, %v3411
    %3787 = vadd.xlane.f32.xlu0 %v3786
    %v3788 = vpop.xlane.xlu0 %3787
    %v3789 = vadd.f32 %v3412, %v3413
    %3790 = vadd.xlane.f32.xlu0 %v3789
    %v3791 = vpop.xlane.xlu0 %3790
    %v3792 = vadd.f32 %v3414, %v3415
    %3793 = vadd.xlane.f32.xlu0 %v3792
    %v3794 = vpop.xlane.xlu0 %3793
    %v3795 = vadd.f32 %v3416, %v3417
    %3796 = vadd.xlane.f32.xlu0 %v3795
    %v3797 = vpop.xlane.xlu0 %3796
    %v3798 = vadd.f32 %v3418, %v3419
    %3799 = vadd.xlane.f32.xlu0 %v3798
    %v3800 = vpop.xlane.xlu0 %3799
    %v3801 = vadd.f32 %v3420, %v3421
    %3802 = vadd.xlane.f32.xlu0 %v3801
    %v3803 = vpop.xlane.xlu0 %3802
    %v3804 = vadd.f32 %v3422, %v3423
    %3805 = vadd.xlane.f32.xlu0 %v3804
    %v3806 = vpop.xlane.xlu0 %3805
    %v3807 = vadd.f32 %v3424, %v3425
    %3808 = vadd.xlane.f32.xlu0 %v3807
    %v3809 = vpop.xlane.xlu0 %3808
    %v3810 = vsub.f32 0.0, %v3428
    %v3811 = vsub.f32 0.0, %v3431
    %v3812 = vsub.f32 0.0, %v3434
    %v3813 = vsub.f32 0.0, %v3437
    %v3814 = vsub.f32 0.0, %v3440
    %v3815 = vsub.f32 0.0, %v3443
    %v3816 = vsub.f32 0.0, %v3446
    %v3817 = vsub.f32 0.0, %v3449
    %v3818 = vsub.f32 0.0, %v3452
    %v3819 = vsub.f32 0.0, %v3455
    %v3820 = vsub.f32 0.0, %v3458
    %v3821 = vsub.f32 0.0, %v3461
    %v3822 = vsub.f32 0.0, %v3464
    %v3823 = vsub.f32 0.0, %v3467
    %v3824 = vsub.f32 0.0, %v3470
    %v3825 = vsub.f32 0.0, %v3473
    %v3826 = vsub.f32 0.0, %v3476
    %v3827 = vsub.f32 0.0, %v3479
    %v3828 = vsub.f32 0.0, %v3482
    %v3829 = vsub.f32 0.0, %v3485
    %v3830 = vsub.f32 0.0, %v3488
    %v3831 = vsub.f32 0.0, %v3491
    %v3832 = vsub.f32 0.0, %v3494
    %v3833 = vsub.f32 0.0, %v3497
    %v3834 = vsub.f32 0.0, %v3500
    %v3835 = vsub.f32 0.0, %v3503
    %v3836 = vsub.f32 0.0, %v3506
    %v3837 = vsub.f32 0.0, %v3509
    %v3838 = vsub.f32 0.0, %v3512
    %v3839 = vsub.f32 0.0, %v3515
    %v3840 = vsub.f32 0.0, %v3518
    %v3841 = vsub.f32 0.0, %v3521
    %v3842 = vsub.f32 0.0, %v3524
    %v3843 = vsub.f32 0.0, %v3527
    %v3844 = vsub.f32 0.0, %v3530
    %v3845 = vsub.f32 0.0, %v3533
    %v3846 = vsub.f32 0.0, %v3536
    %v3847 = vsub.f32 0.0, %v3539
    %v3848 = vsub.f32 0.0, %v3542
    %v3849 = vsub.f32 0.0, %v3545
    %v3850 = vsub.f32 0.0, %v3548
    %v3851 = vsub.f32 0.0, %v3551
    %v3852 = vsub.f32 0.0, %v3554
    %v3853 = vsub.f32 0.0, %v3557
    %v3854 = vsub.f32 0.0, %v3560
    %v3855 = vsub.f32 0.0, %v3563
    %v3856 = vsub.f32 0.0, %v3566
    %v3857 = vsub.f32 0.0, %v3569
    %v3858 = vsub.f32 0.0, %v3572
    %v3859 = vsub.f32 0.0, %v3575
    %v3860 = vsub.f32 0.0, %v3578
    %v3861 = vsub.f32 0.0, %v3581
    %v3862 = vsub.f32 0.0, %v3584
    %v3863 = vsub.f32 0.0, %v3587
    %v3864 = vsub.f32 0.0, %v3590
    %v3865 = vsub.f32 0.0, %v3593
    %v3866 = vsub.f32 0.0, %v3596
    %v3867 = vsub.f32 0.0, %v3599
    %v3868 = vsub.f32 0.0, %v3602
    %v3869 = vsub.f32 0.0, %v3605
    %v3870 = vsub.f32 0.0, %v3608
    %v3871 = vsub.f32 0.0, %v3611
    %v3872 = vsub.f32 0.0, %v3614
    %v3873 = vsub.f32 0.0, %v3617
    %v3874 = vsub.f32 0.0, %v3620
    %v3875 = vsub.f32 0.0, %v3623
    %v3876 = vsub.f32 0.0, %v3626
    %v3877 = vsub.f32 0.0, %v3629
    %v3878 = vsub.f32 0.0, %v3632
    %v3879 = vsub.f32 0.0, %v3635
    %v3880 = vsub.f32 0.0, %v3638
    %v3881 = vsub.f32 0.0, %v3641
    %v3882 = vsub.f32 0.0, %v3644
    %v3883 = vsub.f32 0.0, %v3647
    %v3884 = vsub.f32 0.0, %v3650
    %v3885 = vsub.f32 0.0, %v3653
    %v3886 = vsub.f32 0.0, %v3656
    %v3887 = vsub.f32 0.0, %v3659
    %v3888 = vsub.f32 0.0, %v3662
    %v3889 = vsub.f32 0.0, %v3665
    %v3890 = vsub.f32 0.0, %v3668
    %v3891 = vsub.f32 0.0, %v3671
    %v3892 = vsub.f32 0.0, %v3674
    %v3893 = vsub.f32 0.0, %v3677
    %v3894 = vsub.f32 0.0, %v3680
    %v3895 = vsub.f32 0.0, %v3683
    %v3896 = vsub.f32 0.0, %v3686
    %v3897 = vsub.f32 0.0, %v3689
    %v3898 = vsub.f32 0.0, %v3692
    %v3899 = vsub.f32 0.0, %v3695
    %v3900 = vsub.f32 0.0, %v3698
    %v3901 = vsub.f32 0.0, %v3701
    %v3902 = vsub.f32 0.0, %v3704
    %v3903 = vsub.f32 0.0, %v3707
    %v3904 = vsub.f32 0.0, %v3710
    %v3905 = vsub.f32 0.0, %v3713
    %v3906 = vsub.f32 0.0, %v3716
    %v3907 = vsub.f32 0.0, %v3719
    %v3908 = vsub.f32 0.0, %v3722
    %v3909 = vsub.f32 0.0, %v3725
    %v3910 = vsub.f32 0.0, %v3728
    %v3911 = vsub.f32 0.0, %v3731
    %v3912 = vsub.f32 0.0, %v3734
    %v3913 = vsub.f32 0.0, %v3737
    %v3914 = vsub.f32 0.0, %v3740
    %v3915 = vsub.f32 0.0, %v3743
    %v3916 = vsub.f32 0.0, %v3746
    %v3917 = vsub.f32 0.0, %v3749
    %v3918 = vsub.f32 0.0, %v3752
    %v3919 = vsub.f32 0.0, %v3755
    %v3920 = vsub.f32 0.0, %v3758
    %v3921 = vsub.f32 0.0, %v3761
    %v3922 = vsub.f32 0.0, %v3764
    %v3923 = vsub.f32 0.0, %v3767
    %v3924 = vsub.f32 0.0, %v3770
    %v3925 = vsub.f32 0.0, %v3773
    %v3926 = vsub.f32 0.0, %v3776
    %v3927 = vsub.f32 0.0, %v3779
    %v3928 = vsub.f32 0.0, %v3782
    %v3929 = vsub.f32 0.0, %v3785
    %v3930 = vsub.f32 0.0, %v3788
    %v3931 = vsub.f32 0.0, %v3791
    %v3932 = vsub.f32 0.0, %v3794
    %v3933 = vsub.f32 0.0, %v3797
    %v3934 = vsub.f32 0.0, %v3800
    %v3935 = vsub.f32 0.0, %v3803
    %v3936 = vsub.f32 0.0, %v3806
    %v3937 = vsub.f32 0.0, %v3809
    %v4066 = vlaneseq
    %v4067 = vand.u32 %v4066, 127
    %v4068 = vlaneseq
    %v4069 = vshrl.u32 %v4068, 7
    %v4070 = vsub.s32 %v4067, %v4069
    %v4071 = vrot.slane %v3810, %v4070
    %v4072 = vadd.s32 %v4067, 4294967288
    %v4073 = vlaneseq
    %v4074 = vshrl.u32 %v4073, 7
    %v4075 = vsub.s32 %v4072, %v4074
    %v4076 = vrot.slane %v3811, %v4075
    %vm4077 = vcmask 130112
    %v4078 = vsel %vm4077, %v4076, %v4071
    %v4079 = vadd.s32 %v4067, 4294967280
    %v4080 = vlaneseq
    %v4081 = vshrl.u32 %v4080, 7
    %v4082 = vsub.s32 %v4079, %v4081
    %v4083 = vrot.slane %v3812, %v4082
    %vm4084 = vcmask 195712
    %v4085 = vsel %vm4084, %v4083, %v4078
    %v4086 = vadd.s32 %v4067, 4294967272
    %v4087 = vlaneseq
    %v4088 = vshrl.u32 %v4087, 7
    %v4089 = vsub.s32 %v4086, %v4088
    %v4090 = vrot.slane %v3813, %v4089
    %vm4091 = vcmask 261312
    %v4092 = vsel %vm4091, %v4090, %v4085
    %v4093 = vadd.s32 %v4067, 4294967264
    %v4094 = vlaneseq
    %v4095 = vshrl.u32 %v4094, 7
    %v4096 = vsub.s32 %v4093, %v4095
    %v4097 = vrot.slane %v3814, %v4096
    %vm4098 = vcmask 326912
    %v4099 = vsel %vm4098, %v4097, %v4092
    %v4100 = vadd.s32 %v4067, 4294967256
    %v4101 = vlaneseq
    %v4102 = vshrl.u32 %v4101, 7
    %v4103 = vsub.s32 %v4100, %v4102
    %v4104 = vrot.slane %v3815, %v4103
    %vm4105 = vcmask 392512
    %v4106 = vsel %vm4105, %v4104, %v4099
    %v4107 = vadd.s32 %v4067, 4294967248
    %v4108 = vlaneseq
    %v4109 = vshrl.u32 %v4108, 7
    %v4110 = vsub.s32 %v4107, %v4109
    %v4111 = vrot.slane %v3816, %v4110
    %vm4112 = vcmask 458112
    %v4113 = vsel %vm4112, %v4111, %v4106
    %v4114 = vadd.s32 %v4067, 4294967240
    %v4115 = vlaneseq
    %v4116 = vshrl.u32 %v4115, 7
    %v4117 = vsub.s32 %v4114, %v4116
    %v4118 = vrot.slane %v3817, %v4117
    %vm4119 = vcmask 523712
    %v4120 = vsel %vm4119, %v4118, %v4113
    %v4121 = vadd.s32 %v4067, 4294967232
    %v4122 = vlaneseq
    %v4123 = vshrl.u32 %v4122, 7
    %v4124 = vsub.s32 %v4121, %v4123
    %v4125 = vrot.slane %v3818, %v4124
    %vm4126 = vcmask 589312
    %v4127 = vsel %vm4126, %v4125, %v4120
    %v4128 = vadd.s32 %v4067, 4294967224
    %v4129 = vlaneseq
    %v4130 = vshrl.u32 %v4129, 7
    %v4131 = vsub.s32 %v4128, %v4130
    %v4132 = vrot.slane %v3819, %v4131
    %vm4133 = vcmask 654912
    %v4134 = vsel %vm4133, %v4132, %v4127
    %v4135 = vadd.s32 %v4067, 4294967216
    %v4136 = vlaneseq
    %v4137 = vshrl.u32 %v4136, 7
    %v4138 = vsub.s32 %v4135, %v4137
    %v4139 = vrot.slane %v3820, %v4138
    %vm4140 = vcmask 720512
    %v4141 = vsel %vm4140, %v4139, %v4134
    %v4142 = vadd.s32 %v4067, 4294967208
    %v4143 = vlaneseq
    %v4144 = vshrl.u32 %v4143, 7
    %v4145 = vsub.s32 %v4142, %v4144
    %v4146 = vrot.slane %v3821, %v4145
    %vm4147 = vcmask 786112
    %v4148 = vsel %vm4147, %v4146, %v4141
    %v4149 = vadd.s32 %v4067, 4294967200
    %v4150 = vlaneseq
    %v4151 = vshrl.u32 %v4150, 7
    %v4152 = vsub.s32 %v4149, %v4151
    %v4153 = vrot.slane %v3822, %v4152
    %vm4154 = vcmask 851712
    %v4155 = vsel %vm4154, %v4153, %v4148
    %v4156 = vadd.s32 %v4067, 4294967192
    %v4157 = vlaneseq
    %v4158 = vshrl.u32 %v4157, 7
    %v4159 = vsub.s32 %v4156, %v4158
    %v4160 = vrot.slane %v3823, %v4159
    %vm4161 = vcmask 917312
    %v4162 = vsel %vm4161, %v4160, %v4155
    %v4163 = vadd.s32 %v4067, 4294967184
    %v4164 = vlaneseq
    %v4165 = vshrl.u32 %v4164, 7
    %v4166 = vsub.s32 %v4163, %v4165
    %v4167 = vrot.slane %v3824, %v4166
    %vm4168 = vcmask 982912
    %v4169 = vsel %vm4168, %v4167, %v4162
    %v4170 = vadd.s32 %v4067, 4294967176
    %v4171 = vlaneseq
    %v4172 = vshrl.u32 %v4171, 7
    %v4173 = vsub.s32 %v4170, %v4172
    %v4174 = vrot.slane %v3825, %v4173
    %vm4175 = vcmask 1048512
    %v4176 = vsel %vm4175, %v4174, %v4169
    %v4177 = vlaneseq
    %v4178 = vshrl.u32 %v4177, 7
    %v4179 = vsub.s32 %v4067, %v4178
    %v4180 = vrot.slane %v3826, %v4179
    %v4181 = vlaneseq
    %v4182 = vshrl.u32 %v4181, 7
    %v4183 = vsub.s32 %v4072, %v4182
    %v4184 = vrot.slane %v3827, %v4183
    %v4185 = vsel %vm4077, %v4184, %v4180
    %v4186 = vlaneseq
    %v4187 = vshrl.u32 %v4186, 7
    %v4188 = vsub.s32 %v4079, %v4187
    %v4189 = vrot.slane %v3828, %v4188
    %v4190 = vsel %vm4084, %v4189, %v4185
    %v4191 = vlaneseq
    %v4192 = vshrl.u32 %v4191, 7
    %v4193 = vsub.s32 %v4086, %v4192
    %v4194 = vrot.slane %v3829, %v4193
    %v4195 = vsel %vm4091, %v4194, %v4190
    %v4196 = vlaneseq
    %v4197 = vshrl.u32 %v4196, 7
    %v4198 = vsub.s32 %v4093, %v4197
    %v4199 = vrot.slane %v3830, %v4198
    %v4200 = vsel %vm4098, %v4199, %v4195
    %v4201 = vlaneseq
    %v4202 = vshrl.u32 %v4201, 7
    %v4203 = vsub.s32 %v4100, %v4202
    %v4204 = vrot.slane %v3831, %v4203
    %v4205 = vsel %vm4105, %v4204, %v4200
    %v4206 = vlaneseq
    %v4207 = vshrl.u32 %v4206, 7
    %v4208 = vsub.s32 %v4107, %v4207
    %v4209 = vrot.slane %v3832, %v4208
    %v4210 = vsel %vm4112, %v4209, %v4205
    %v4211 = vlaneseq
    %v4212 = vshrl.u32 %v4211, 7
    %v4213 = vsub.s32 %v4114, %v4212
    %v4214 = vrot.slane %v3833, %v4213
    %v4215 = vsel %vm4119, %v4214, %v4210
    %v4216 = vlaneseq
    %v4217 = vshrl.u32 %v4216, 7
    %v4218 = vsub.s32 %v4121, %v4217
    %v4219 = vrot.slane %v3834, %v4218
    %v4220 = vsel %vm4126, %v4219, %v4215
    %v4221 = vlaneseq
    %v4222 = vshrl.u32 %v4221, 7
    %v4223 = vsub.s32 %v4128, %v4222
    %v4224 = vrot.slane %v3835, %v4223
    %v4225 = vsel %vm4133, %v4224, %v4220
    %v4226 = vlaneseq
    %v4227 = vshrl.u32 %v4226, 7
    %v4228 = vsub.s32 %v4135, %v4227
    %v4229 = vrot.slane %v3836, %v4228
    %v4230 = vsel %vm4140, %v4229, %v4225
    %v4231 = vlaneseq
    %v4232 = vshrl.u32 %v4231, 7
    %v4233 = vsub.s32 %v4142, %v4232
    %v4234 = vrot.slane %v3837, %v4233
    %v4235 = vsel %vm4147, %v4234, %v4230
    %v4236 = vlaneseq
    %v4237 = vshrl.u32 %v4236, 7
    %v4238 = vsub.s32 %v4149, %v4237
    %v4239 = vrot.slane %v3838, %v4238
    %v4240 = vsel %vm4154, %v4239, %v4235
    %v4241 = vlaneseq
    %v4242 = vshrl.u32 %v4241, 7
    %v4243 = vsub.s32 %v4156, %v4242
    %v4244 = vrot.slane %v3839, %v4243
    %v4245 = vsel %vm4161, %v4244, %v4240
    %v4246 = vlaneseq
    %v4247 = vshrl.u32 %v4246, 7
    %v4248 = vsub.s32 %v4163, %v4247
    %v4249 = vrot.slane %v3840, %v4248
    %v4250 = vsel %vm4168, %v4249, %v4245
    %v4251 = vlaneseq
    %v4252 = vshrl.u32 %v4251, 7
    %v4253 = vsub.s32 %v4170, %v4252
    %v4254 = vrot.slane %v3841, %v4253
    %v4255 = vsel %vm4175, %v4254, %v4250
    %v4256 = vlaneseq
    %v4257 = vshrl.u32 %v4256, 7
    %v4258 = vsub.s32 %v4067, %v4257
    %v4259 = vrot.slane %v3842, %v4258
    %v4260 = vlaneseq
    %v4261 = vshrl.u32 %v4260, 7
    %v4262 = vsub.s32 %v4072, %v4261
    %v4263 = vrot.slane %v3843, %v4262
    %v4264 = vsel %vm4077, %v4263, %v4259
    %v4265 = vlaneseq
    %v4266 = vshrl.u32 %v4265, 7
    %v4267 = vsub.s32 %v4079, %v4266
    %v4268 = vrot.slane %v3844, %v4267
    %v4269 = vsel %vm4084, %v4268, %v4264
    %v4270 = vlaneseq
    %v4271 = vshrl.u32 %v4270, 7
    %v4272 = vsub.s32 %v4086, %v4271
    %v4273 = vrot.slane %v3845, %v4272
    %v4274 = vsel %vm4091, %v4273, %v4269
    %v4275 = vlaneseq
    %v4276 = vshrl.u32 %v4275, 7
    %v4277 = vsub.s32 %v4093, %v4276
    %v4278 = vrot.slane %v3846, %v4277
    %v4279 = vsel %vm4098, %v4278, %v4274
    %v4280 = vlaneseq
    %v4281 = vshrl.u32 %v4280, 7
    %v4282 = vsub.s32 %v4100, %v4281
    %v4283 = vrot.slane %v3847, %v4282
    %v4284 = vsel %vm4105, %v4283, %v4279
    %v4285 = vlaneseq
    %v4286 = vshrl.u32 %v4285, 7
    %v4287 = vsub.s32 %v4107, %v4286
    %v4288 = vrot.slane %v3848, %v4287
    %v4289 = vsel %vm4112, %v4288, %v4284
    %v4290 = vlaneseq
    %v4291 = vshrl.u32 %v4290, 7
    %v4292 = vsub.s32 %v4114, %v4291
    %v4293 = vrot.slane %v3849, %v4292
    %v4294 = vsel %vm4119, %v4293, %v4289
    %v4295 = vlaneseq
    %v4296 = vshrl.u32 %v4295, 7
    %v4297 = vsub.s32 %v4121, %v4296
    %v4298 = vrot.slane %v3850, %v4297
    %v4299 = vsel %vm4126, %v4298, %v4294
    %v4300 = vlaneseq
    %v4301 = vshrl.u32 %v4300, 7
    %v4302 = vsub.s32 %v4128, %v4301
    %v4303 = vrot.slane %v3851, %v4302
    %v4304 = vsel %vm4133, %v4303, %v4299
    %v4305 = vlaneseq
    %v4306 = vshrl.u32 %v4305, 7
    %v4307 = vsub.s32 %v4135, %v4306
    %v4308 = vrot.slane %v3852, %v4307
    %v4309 = vsel %vm4140, %v4308, %v4304
    %v4310 = vlaneseq
    %v4311 = vshrl.u32 %v4310, 7
    %v4312 = vsub.s32 %v4142, %v4311
    %v4313 = vrot.slane %v3853, %v4312
    %v4314 = vsel %vm4147, %v4313, %v4309
    %v4315 = vlaneseq
    %v4316 = vshrl.u32 %v4315, 7
    %v4317 = vsub.s32 %v4149, %v4316
    %v4318 = vrot.slane %v3854, %v4317
    %v4319 = vsel %vm4154, %v4318, %v4314
    %v4320 = vlaneseq
    %v4321 = vshrl.u32 %v4320, 7
    %v4322 = vsub.s32 %v4156, %v4321
    %v4323 = vrot.slane %v3855, %v4322
    %v4324 = vsel %vm4161, %v4323, %v4319
    %v4325 = vlaneseq
    %v4326 = vshrl.u32 %v4325, 7
    %v4327 = vsub.s32 %v4163, %v4326
    %v4328 = vrot.slane %v3856, %v4327
    %v4329 = vsel %vm4168, %v4328, %v4324
    %v4330 = vlaneseq
    %v4331 = vshrl.u32 %v4330, 7
    %v4332 = vsub.s32 %v4170, %v4331
    %v4333 = vrot.slane %v3857, %v4332
    %v4334 = vsel %vm4175, %v4333, %v4329
    %v4335 = vlaneseq
    %v4336 = vshrl.u32 %v4335, 7
    %v4337 = vsub.s32 %v4067, %v4336
    %v4338 = vrot.slane %v3858, %v4337
    %v4339 = vlaneseq
    %v4340 = vshrl.u32 %v4339, 7
    %v4341 = vsub.s32 %v4072, %v4340
    %v4342 = vrot.slane %v3859, %v4341
    %v4343 = vsel %vm4077, %v4342, %v4338
    %v4344 = vlaneseq
    %v4345 = vshrl.u32 %v4344, 7
    %v4346 = vsub.s32 %v4079, %v4345
    %v4347 = vrot.slane %v3860, %v4346
    %v4348 = vsel %vm4084, %v4347, %v4343
    %v4349 = vlaneseq
    %v4350 = vshrl.u32 %v4349, 7
    %v4351 = vsub.s32 %v4086, %v4350
    %v4352 = vrot.slane %v3861, %v4351
    %v4353 = vsel %vm4091, %v4352, %v4348
    %v4354 = vlaneseq
    %v4355 = vshrl.u32 %v4354, 7
    %v4356 = vsub.s32 %v4093, %v4355
    %v4357 = vrot.slane %v3862, %v4356
    %v4358 = vsel %vm4098, %v4357, %v4353
    %v4359 = vlaneseq
    %v4360 = vshrl.u32 %v4359, 7
    %v4361 = vsub.s32 %v4100, %v4360
    %v4362 = vrot.slane %v3863, %v4361
    %v4363 = vsel %vm4105, %v4362, %v4358
    %v4364 = vlaneseq
    %v4365 = vshrl.u32 %v4364, 7
    %v4366 = vsub.s32 %v4107, %v4365
    %v4367 = vrot.slane %v3864, %v4366
    %v4368 = vsel %vm4112, %v4367, %v4363
    %v4369 = vlaneseq
    %v4370 = vshrl.u32 %v4369, 7
    %v4371 = vsub.s32 %v4114, %v4370
    %v4372 = vrot.slane %v3865, %v4371
    %v4373 = vsel %vm4119, %v4372, %v4368
    %v4374 = vlaneseq
    %v4375 = vshrl.u32 %v4374, 7
    %v4376 = vsub.s32 %v4121, %v4375
    %v4377 = vrot.slane %v3866, %v4376
    %v4378 = vsel %vm4126, %v4377, %v4373
    %v4379 = vlaneseq
    %v4380 = vshrl.u32 %v4379, 7
    %v4381 = vsub.s32 %v4128, %v4380
    %v4382 = vrot.slane %v3867, %v4381
    %v4383 = vsel %vm4133, %v4382, %v4378
    %v4384 = vlaneseq
    %v4385 = vshrl.u32 %v4384, 7
    %v4386 = vsub.s32 %v4135, %v4385
    %v4387 = vrot.slane %v3868, %v4386
    %v4388 = vsel %vm4140, %v4387, %v4383
    %v4389 = vlaneseq
    %v4390 = vshrl.u32 %v4389, 7
    %v4391 = vsub.s32 %v4142, %v4390
    %v4392 = vrot.slane %v3869, %v4391
    %v4393 = vsel %vm4147, %v4392, %v4388
    %v4394 = vlaneseq
    %v4395 = vshrl.u32 %v4394, 7
    %v4396 = vsub.s32 %v4149, %v4395
    %v4397 = vrot.slane %v3870, %v4396
    %v4398 = vsel %vm4154, %v4397, %v4393
    %v4399 = vlaneseq
    %v4400 = vshrl.u32 %v4399, 7
    %v4401 = vsub.s32 %v4156, %v4400
    %v4402 = vrot.slane %v3871, %v4401
    %v4403 = vsel %vm4161, %v4402, %v4398
    %v4404 = vlaneseq
    %v4405 = vshrl.u32 %v4404, 7
    %v4406 = vsub.s32 %v4163, %v4405
    %v4407 = vrot.slane %v3872, %v4406
    %v4408 = vsel %vm4168, %v4407, %v4403
    %v4409 = vlaneseq
    %v4410 = vshrl.u32 %v4409, 7
    %v4411 = vsub.s32 %v4170, %v4410
    %v4412 = vrot.slane %v3873, %v4411
    %v4413 = vsel %vm4175, %v4412, %v4408
    %v4414 = vlaneseq
    %v4415 = vshrl.u32 %v4414, 7
    %v4416 = vsub.s32 %v4067, %v4415
    %v4417 = vrot.slane %v3874, %v4416
    %v4418 = vlaneseq
    %v4419 = vshrl.u32 %v4418, 7
    %v4420 = vsub.s32 %v4072, %v4419
    %v4421 = vrot.slane %v3875, %v4420
    %v4422 = vsel %vm4077, %v4421, %v4417
    %v4423 = vlaneseq
    %v4424 = vshrl.u32 %v4423, 7
    %v4425 = vsub.s32 %v4079, %v4424
    %v4426 = vrot.slane %v3876, %v4425
    %v4427 = vsel %vm4084, %v4426, %v4422
    %v4428 = vlaneseq
    %v4429 = vshrl.u32 %v4428, 7
    %v4430 = vsub.s32 %v4086, %v4429
    %v4431 = vrot.slane %v3877, %v4430
    %v4432 = vsel %vm4091, %v4431, %v4427
    %v4433 = vlaneseq
    %v4434 = vshrl.u32 %v4433, 7
    %v4435 = vsub.s32 %v4093, %v4434
    %v4436 = vrot.slane %v3878, %v4435
    %v4437 = vsel %vm4098, %v4436, %v4432
    %v4438 = vlaneseq
    %v4439 = vshrl.u32 %v4438, 7
    %v4440 = vsub.s32 %v4100, %v4439
    %v4441 = vrot.slane %v3879, %v4440
    %v4442 = vsel %vm4105, %v4441, %v4437
    %v4443 = vlaneseq
    %v4444 = vshrl.u32 %v4443, 7
    %v4445 = vsub.s32 %v4107, %v4444
    %v4446 = vrot.slane %v3880, %v4445
    %v4447 = vsel %vm4112, %v4446, %v4442
    %v4448 = vlaneseq
    %v4449 = vshrl.u32 %v4448, 7
    %v4450 = vsub.s32 %v4114, %v4449
    %v4451 = vrot.slane %v3881, %v4450
    %v4452 = vsel %vm4119, %v4451, %v4447
    %v4453 = vlaneseq
    %v4454 = vshrl.u32 %v4453, 7
    %v4455 = vsub.s32 %v4121, %v4454
    %v4456 = vrot.slane %v3882, %v4455
    %v4457 = vsel %vm4126, %v4456, %v4452
    %v4458 = vlaneseq
    %v4459 = vshrl.u32 %v4458, 7
    %v4460 = vsub.s32 %v4128, %v4459
    %v4461 = vrot.slane %v3883, %v4460
    %v4462 = vsel %vm4133, %v4461, %v4457
    %v4463 = vlaneseq
    %v4464 = vshrl.u32 %v4463, 7
    %v4465 = vsub.s32 %v4135, %v4464
    %v4466 = vrot.slane %v3884, %v4465
    %v4467 = vsel %vm4140, %v4466, %v4462
    %v4468 = vlaneseq
    %v4469 = vshrl.u32 %v4468, 7
    %v4470 = vsub.s32 %v4142, %v4469
    %v4471 = vrot.slane %v3885, %v4470
    %v4472 = vsel %vm4147, %v4471, %v4467
    %v4473 = vlaneseq
    %v4474 = vshrl.u32 %v4473, 7
    %v4475 = vsub.s32 %v4149, %v4474
    %v4476 = vrot.slane %v3886, %v4475
    %v4477 = vsel %vm4154, %v4476, %v4472
    %v4478 = vlaneseq
    %v4479 = vshrl.u32 %v4478, 7
    %v4480 = vsub.s32 %v4156, %v4479
    %v4481 = vrot.slane %v3887, %v4480
    %v4482 = vsel %vm4161, %v4481, %v4477
    %v4483 = vlaneseq
    %v4484 = vshrl.u32 %v4483, 7
    %v4485 = vsub.s32 %v4163, %v4484
    %v4486 = vrot.slane %v3888, %v4485
    %v4487 = vsel %vm4168, %v4486, %v4482
    %v4488 = vlaneseq
    %v4489 = vshrl.u32 %v4488, 7
    %v4490 = vsub.s32 %v4170, %v4489
    %v4491 = vrot.slane %v3889, %v4490
    %v4492 = vsel %vm4175, %v4491, %v4487
    %v4493 = vlaneseq
    %v4494 = vshrl.u32 %v4493, 7
    %v4495 = vsub.s32 %v4067, %v4494
    %v4496 = vrot.slane %v3890, %v4495
    %v4497 = vlaneseq
    %v4498 = vshrl.u32 %v4497, 7
    %v4499 = vsub.s32 %v4072, %v4498
    %v4500 = vrot.slane %v3891, %v4499
    %v4501 = vsel %vm4077, %v4500, %v4496
    %v4502 = vlaneseq
    %v4503 = vshrl.u32 %v4502, 7
    %v4504 = vsub.s32 %v4079, %v4503
    %v4505 = vrot.slane %v3892, %v4504
    %v4506 = vsel %vm4084, %v4505, %v4501
    %v4507 = vlaneseq
    %v4508 = vshrl.u32 %v4507, 7
    %v4509 = vsub.s32 %v4086, %v4508
    %v4510 = vrot.slane %v3893, %v4509
    %v4511 = vsel %vm4091, %v4510, %v4506
    %v4512 = vlaneseq
    %v4513 = vshrl.u32 %v4512, 7
    %v4514 = vsub.s32 %v4093, %v4513
    %v4515 = vrot.slane %v3894, %v4514
    %v4516 = vsel %vm4098, %v4515, %v4511
    %v4517 = vlaneseq
    %v4518 = vshrl.u32 %v4517, 7
    %v4519 = vsub.s32 %v4100, %v4518
    %v4520 = vrot.slane %v3895, %v4519
    %v4521 = vsel %vm4105, %v4520, %v4516
    %v4522 = vlaneseq
    %v4523 = vshrl.u32 %v4522, 7
    %v4524 = vsub.s32 %v4107, %v4523
    %v4525 = vrot.slane %v3896, %v4524
    %v4526 = vsel %vm4112, %v4525, %v4521
    %v4527 = vlaneseq
    %v4528 = vshrl.u32 %v4527, 7
    %v4529 = vsub.s32 %v4114, %v4528
    %v4530 = vrot.slane %v3897, %v4529
    %v4531 = vsel %vm4119, %v4530, %v4526
    %v4532 = vlaneseq
    %v4533 = vshrl.u32 %v4532, 7
    %v4534 = vsub.s32 %v4121, %v4533
    %v4535 = vrot.slane %v3898, %v4534
    %v4536 = vsel %vm4126, %v4535, %v4531
    %v4537 = vlaneseq
    %v4538 = vshrl.u32 %v4537, 7
    %v4539 = vsub.s32 %v4128, %v4538
    %v4540 = vrot.slane %v3899, %v4539
    %v4541 = vsel %vm4133, %v4540, %v4536
    %v4542 = vlaneseq
    %v4543 = vshrl.u32 %v4542, 7
    %v4544 = vsub.s32 %v4135, %v4543
    %v4545 = vrot.slane %v3900, %v4544
    %v4546 = vsel %vm4140, %v4545, %v4541
    %v4547 = vlaneseq
    %v4548 = vshrl.u32 %v4547, 7
    %v4549 = vsub.s32 %v4142, %v4548
    %v4550 = vrot.slane %v3901, %v4549
    %v4551 = vsel %vm4147, %v4550, %v4546
    %v4552 = vlaneseq
    %v4553 = vshrl.u32 %v4552, 7
    %v4554 = vsub.s32 %v4149, %v4553
    %v4555 = vrot.slane %v3902, %v4554
    %v4556 = vsel %vm4154, %v4555, %v4551
    %v4557 = vlaneseq
    %v4558 = vshrl.u32 %v4557, 7
    %v4559 = vsub.s32 %v4156, %v4558
    %v4560 = vrot.slane %v3903, %v4559
    %v4561 = vsel %vm4161, %v4560, %v4556
    %v4562 = vlaneseq
    %v4563 = vshrl.u32 %v4562, 7
    %v4564 = vsub.s32 %v4163, %v4563
    %v4565 = vrot.slane %v3904, %v4564
    %v4566 = vsel %vm4168, %v4565, %v4561
    %v4567 = vlaneseq
    %v4568 = vshrl.u32 %v4567, 7
    %v4569 = vsub.s32 %v4170, %v4568
    %v4570 = vrot.slane %v3905, %v4569
    %v4571 = vsel %vm4175, %v4570, %v4566
    %v4572 = vlaneseq
    %v4573 = vshrl.u32 %v4572, 7
    %v4574 = vsub.s32 %v4067, %v4573
    %v4575 = vrot.slane %v3906, %v4574
    %v4576 = vlaneseq
    %v4577 = vshrl.u32 %v4576, 7
    %v4578 = vsub.s32 %v4072, %v4577
    %v4579 = vrot.slane %v3907, %v4578
    %v4580 = vsel %vm4077, %v4579, %v4575
    %v4581 = vlaneseq
    %v4582 = vshrl.u32 %v4581, 7
    %v4583 = vsub.s32 %v4079, %v4582
    %v4584 = vrot.slane %v3908, %v4583
    %v4585 = vsel %vm4084, %v4584, %v4580
    %v4586 = vlaneseq
    %v4587 = vshrl.u32 %v4586, 7
    %v4588 = vsub.s32 %v4086, %v4587
    %v4589 = vrot.slane %v3909, %v4588
    %v4590 = vsel %vm4091, %v4589, %v4585
    %v4591 = vlaneseq
    %v4592 = vshrl.u32 %v4591, 7
    %v4593 = vsub.s32 %v4093, %v4592
    %v4594 = vrot.slane %v3910, %v4593
    %v4595 = vsel %vm4098, %v4594, %v4590
    %v4596 = vlaneseq
    %v4597 = vshrl.u32 %v4596, 7
    %v4598 = vsub.s32 %v4100, %v4597
    %v4599 = vrot.slane %v3911, %v4598
    %v4600 = vsel %vm4105, %v4599, %v4595
    %v4601 = vlaneseq
    %v4602 = vshrl.u32 %v4601, 7
    %v4603 = vsub.s32 %v4107, %v4602
    %v4604 = vrot.slane %v3912, %v4603
    %v4605 = vsel %vm4112, %v4604, %v4600
    %v4606 = vlaneseq
    %v4607 = vshrl.u32 %v4606, 7
    %v4608 = vsub.s32 %v4114, %v4607
    %v4609 = vrot.slane %v3913, %v4608
    %v4610 = vsel %vm4119, %v4609, %v4605
    %v4611 = vlaneseq
    %v4612 = vshrl.u32 %v4611, 7
    %v4613 = vsub.s32 %v4121, %v4612
    %v4614 = vrot.slane %v3914, %v4613
    %v4615 = vsel %vm4126, %v4614, %v4610
    %v4616 = vlaneseq
    %v4617 = vshrl.u32 %v4616, 7
    %v4618 = vsub.s32 %v4128, %v4617
    %v4619 = vrot.slane %v3915, %v4618
    %v4620 = vsel %vm4133, %v4619, %v4615
    %v4621 = vlaneseq
    %v4622 = vshrl.u32 %v4621, 7
    %v4623 = vsub.s32 %v4135, %v4622
    %v4624 = vrot.slane %v3916, %v4623
    %v4625 = vsel %vm4140, %v4624, %v4620
    %v4626 = vlaneseq
    %v4627 = vshrl.u32 %v4626, 7
    %v4628 = vsub.s32 %v4142, %v4627
    %v4629 = vrot.slane %v3917, %v4628
    %v4630 = vsel %vm4147, %v4629, %v4625
    %v4631 = vlaneseq
    %v4632 = vshrl.u32 %v4631, 7
    %v4633 = vsub.s32 %v4149, %v4632
    %v4634 = vrot.slane %v3918, %v4633
    %v4635 = vsel %vm4154, %v4634, %v4630
    %v4636 = vlaneseq
    %v4637 = vshrl.u32 %v4636, 7
    %v4638 = vsub.s32 %v4156, %v4637
    %v4639 = vrot.slane %v3919, %v4638
    %v4640 = vsel %vm4161, %v4639, %v4635
    %v4641 = vlaneseq
    %v4642 = vshrl.u32 %v4641, 7
    %v4643 = vsub.s32 %v4163, %v4642
    %v4644 = vrot.slane %v3920, %v4643
    %v4645 = vsel %vm4168, %v4644, %v4640
    %v4646 = vlaneseq
    %v4647 = vshrl.u32 %v4646, 7
    %v4648 = vsub.s32 %v4170, %v4647
    %v4649 = vrot.slane %v3921, %v4648
    %v4650 = vsel %vm4175, %v4649, %v4645
    %v4651 = vlaneseq
    %v4652 = vshrl.u32 %v4651, 7
    %v4653 = vsub.s32 %v4067, %v4652
    %v4654 = vrot.slane %v3922, %v4653
    %v4655 = vlaneseq
    %v4656 = vshrl.u32 %v4655, 7
    %v4657 = vsub.s32 %v4072, %v4656
    %v4658 = vrot.slane %v3923, %v4657
    %v4659 = vsel %vm4077, %v4658, %v4654
    %v4660 = vlaneseq
    %v4661 = vshrl.u32 %v4660, 7
    %v4662 = vsub.s32 %v4079, %v4661
    %v4663 = vrot.slane %v3924, %v4662
    %v4664 = vsel %vm4084, %v4663, %v4659
    %v4665 = vlaneseq
    %v4666 = vshrl.u32 %v4665, 7
    %v4667 = vsub.s32 %v4086, %v4666
    %v4668 = vrot.slane %v3925, %v4667
    %v4669 = vsel %vm4091, %v4668, %v4664
    %v4670 = vlaneseq
    %v4671 = vshrl.u32 %v4670, 7
    %v4672 = vsub.s32 %v4093, %v4671
    %v4673 = vrot.slane %v3926, %v4672
    %v4674 = vsel %vm4098, %v4673, %v4669
    %v4675 = vlaneseq
    %v4676 = vshrl.u32 %v4675, 7
    %v4677 = vsub.s32 %v4100, %v4676
    %v4678 = vrot.slane %v3927, %v4677
    %v4679 = vsel %vm4105, %v4678, %v4674
    %v4680 = vlaneseq
    %v4681 = vshrl.u32 %v4680, 7
    %v4682 = vsub.s32 %v4107, %v4681
    %v4683 = vrot.slane %v3928, %v4682
    %v4684 = vsel %vm4112, %v4683, %v4679
    %v4685 = vlaneseq
    %v4686 = vshrl.u32 %v4685, 7
    %v4687 = vsub.s32 %v4114, %v4686
    %v4688 = vrot.slane %v3929, %v4687
    %v4689 = vsel %vm4119, %v4688, %v4684
    %v4690 = vlaneseq
    %v4691 = vshrl.u32 %v4690, 7
    %v4692 = vsub.s32 %v4121, %v4691
    %v4693 = vrot.slane %v3930, %v4692
    %v4694 = vsel %vm4126, %v4693, %v4689
    %v4695 = vlaneseq
    %v4696 = vshrl.u32 %v4695, 7
    %v4697 = vsub.s32 %v4128, %v4696
    %v4698 = vrot.slane %v3931, %v4697
    %v4699 = vsel %vm4133, %v4698, %v4694
    %v4700 = vlaneseq
    %v4701 = vshrl.u32 %v4700, 7
    %v4702 = vsub.s32 %v4135, %v4701
    %v4703 = vrot.slane %v3932, %v4702
    %v4704 = vsel %vm4140, %v4703, %v4699
    %v4705 = vlaneseq
    %v4706 = vshrl.u32 %v4705, 7
    %v4707 = vsub.s32 %v4142, %v4706
    %v4708 = vrot.slane %v3933, %v4707
    %v4709 = vsel %vm4147, %v4708, %v4704
    %v4710 = vlaneseq
    %v4711 = vshrl.u32 %v4710, 7
    %v4712 = vsub.s32 %v4149, %v4711
    %v4713 = vrot.slane %v3934, %v4712
    %v4714 = vsel %vm4154, %v4713, %v4709
    %v4715 = vlaneseq
    %v4716 = vshrl.u32 %v4715, 7
    %v4717 = vsub.s32 %v4156, %v4716
    %v4718 = vrot.slane %v3935, %v4717
    %v4719 = vsel %vm4161, %v4718, %v4714
    %v4720 = vlaneseq
    %v4721 = vshrl.u32 %v4720, 7
    %v4722 = vsub.s32 %v4163, %v4721
    %v4723 = vrot.slane %v3936, %v4722
    %v4724 = vsel %vm4168, %v4723, %v4719
    %v4725 = vlaneseq
    %v4726 = vshrl.u32 %v4725, 7
    %v4727 = vsub.s32 %v4170, %v4726
    %v4728 = vrot.slane %v3937, %v4727
    %v4729 = vsel %vm4175, %v4728, %v4724
    %vm4730 = vcmask 1041409
    %v4731 = vsel %vm4730, %v4255, %v4176
    %vm4732 = vcmask 1042434
    %v4733 = vsel %vm4732, %v4334, %v4731
    %vm4734 = vcmask 1043459
    %v4735 = vsel %vm4734, %v4413, %v4733
    %vm4736 = vcmask 1044484
    %v4737 = vsel %vm4736, %v4492, %v4735
    %vm4738 = vcmask 1045509
    %v4739 = vsel %vm4738, %v4571, %v4737
    %vm4740 = vcmask 1046534
    %v4741 = vsel %vm4740, %v4650, %v4739
    %vm4742 = vcmask 1047559
    %v4743 = vsel %vm4742, %v4729, %v4741
    %4745 = vst [vmem:[#allocation10] sm:$0xff] %v4743
    // Predicated region
    $region38: #{tpu_custom_call.1} parent=1 // pred_check
      _
    $region39: #{tpu_custom_call.1} parent=1 // pred_check_branch
      %4747 = sbr.rel (0) target = $region41
    $region40: #{tpu_custom_call.1} parent=1 // pred_region
      %s4749 = ssub.s32 128, 128
      %4750 = vsyncadd [#allocation4], %s4749
      %s4752 = sshll.u32 [#allocation10], 4
      %s4753 = int_to_ptr.vmem [resolvable:$true] %s4752
      %4755 = dma.vmem_to_hbm [thread:$0]  %s4753, 128, %s5, [#allocation4]
    $region41: #{tpu_custom_call.1} parent=1 // pred_fallthru
      _
    // Predicated region
    $region42: #{tpu_custom_call.1} parent=1 // pred_check
      _
    $region43: #{tpu_custom_call.1} parent=1 // pred_check_branch
      %4757 = sbr.rel (0) target = $region45
    $region44: #{tpu_custom_call.1} parent=1 // pred_region
      %4758 = dma.done [#allocation4], 128
    $region45: #{tpu_custom_call.1} parent=1 // pred_fallthru
      _
    %4759 = vsyncpa [#allocation3], 1
    %4760 = vsyncpa [#allocation6], 1
    %4761 = vsyncpa [#allocation9], 1
    %4762 = vsyncpa [#allocation4], 1

</llo_original>
